<compile_context>
chip_gen: v7x
topology: tpu7x:2x2x1
jax: 0.10.0
libtpu: 0.0.40
codegen_flags: <defaults>
</compile_context>

<pallas_src>
import jax
import jax.numpy as jnp
from jax.experimental import pallas as pl
from jax.experimental.pallas import tpu as pltpu

HIDDEN = 150
LANE = 128


def _round_up(x, m):
    return (x + m - 1) // m * m


def _fused_lstm_fc_kernel(x_ref, w_ih1_ref, w_hh1_ref, b1_ref,
                          w_ih2_ref, w_hh2_ref, b2_ref,
                          w_fc_ref, b_fc_ref,
                          out_ref,
                          g1x):
    """Whole model in one kernel invocation (grid has a single step).

    x_ref     : (S*Bp, 1)   f32   time-major, batch-padded, flattened input
    w_ih1_ref : (1, 4*Hp)   f32   layer-1 input weights (row; input_size == 1)
    w_hh1_ref : (Hp, 4*Hp)  bf16  layer-1 recurrent weights (transposed, padded)
    b1_ref    : (1, 4*Hp)   f32   b_ih1 + b_hh1 (padded)
    w_ih2_ref : (Hp, 4*Hp)  bf16  layer-2 input weights (transposed, padded)
    w_hh2_ref : (Hp, 4*Hp)  bf16  layer-2 recurrent weights (transposed, padded)
    b2_ref    : (1, 4*Hp)   f32   b_ih2 + b_hh2 (padded)
    w_fc_ref  : (Hp, 128)   bf16  FC weights (column 0 real, rest zero)
    b_fc_ref  : (1, 128)    f32   FC bias (column 0 real)
    out_ref   : (Bp, 128)   f32   FC output (column 0 real)
    g1x       : (S*Bp, 4*Hp) f32  VMEM scratch: precomputed layer-1 input gates
    """
    Bp = out_ref.shape[0]
    S = x_ref.shape[0] // Bp
    Hp = w_hh1_ref.shape[0]
    unroll = True if S <= 32 else 8

    def sigm(x):
        # sigmoid(x) == 0.5 * tanh(0.5 * x) + 0.5 : single EUP op + VPU FMA.
        return 0.5 * jnp.tanh(0.5 * x) + 0.5

    def lstm_gates(gates, c_prev):
        # PyTorch gate order i, f, g, o; slice starts (0/Hp/2Hp/3Hp) are
        # 128-lane aligned because Hp is a multiple of 128.
        i_g = sigm(gates[:, 0 * Hp:1 * Hp])
        f_g = sigm(gates[:, 1 * Hp:2 * Hp])
        g_g = jnp.tanh(gates[:, 2 * Hp:3 * Hp])
        o_g = sigm(gates[:, 3 * Hp:4 * Hp])
        c_new = f_g * c_prev + i_g * g_g
        h_new = o_g * jnp.tanh(c_new)
        return h_new, c_new

    zeros = jnp.zeros((Bp, Hp), jnp.float32)

    # ---- layer-1 input gates for the whole sequence: one vectorized VPU pass ----
    g1x[...] = x_ref[...] * w_ih1_ref[...] + b1_ref[...]

    # layer-2 bias broadcast hoisted once (JAX does not CSE broadcast_in_dim).
    b2b = jnp.broadcast_to(b2_ref[...], (Bp, 4 * Hp))

    def dot_bf16(a_f32, w_ref):
        return jnp.dot(a_f32.astype(jnp.bfloat16), w_ref[...],
                       preferred_element_type=jnp.float32)

    # ---- t = 0: layer-1 step (h1_prev = c1_prev = 0 => gates are just g1x_0) ----
    h1, c1 = lstm_gates(g1x[0:Bp, :], zeros)
    gx2 = dot_bf16(h1, w_ih2_ref) + b2b          # layer-2 input gates for t=0

    # ---- wavefront loop: layer-1 step t  ||  layer-2 step t-1 ----
    def wavefront_step(t, carry):
        h1, c1, h2, c2, gx2 = carry
        g1x_t = g1x[pl.ds(pl.multiple_of(t * Bp, Bp), Bp), :]
        # The two recurrent matmuls below are independent -> overlap on the MXU.
        gates1 = g1x_t + dot_bf16(h1, w_hh1_ref)
        gates2 = gx2 + dot_bf16(h2, w_hh2_ref)
        h1n, c1n = lstm_gates(gates1, c1)
        h2n, c2n = lstm_gates(gates2, c2)
        gx2n = dot_bf16(h1n, w_ih2_ref) + b2b    # off the h2 chain
        return h1n, c1n, h2n, c2n, gx2n

    h1, c1, h2, c2, gx2 = jax.lax.fori_loop(
        1, S, wavefront_step, (h1, c1, zeros, zeros, gx2), unroll=unroll)

    # ---- final layer-2 step (t = S-1) ----
    gates2 = gx2 + dot_bf16(h2, w_hh2_ref)
    h2_last, _ = lstm_gates(gates2, c2)

    # ---- fused FC on the last timestep (lane-padded, column 0 is real) ----
    out_ref[...] = dot_bf16(h2_last, w_fc_ref) + b_fc_ref[...]


# ---------------------------------------------------------------------------
# Parameter packing (done once, not per forward call)
# ---------------------------------------------------------------------------
def _pack_gate_weight_t(w, hidden, hp, in_rows):
    """(4H, in_dim) PyTorch weight -> transposed (in_rows, 4*Hp) with each
    gate's columns at a lane-aligned offset; all padding is zero."""
    w = jnp.asarray(w, jnp.float32)
    in_dim = w.shape[1]
    wt = w.T                                           # (in_dim, 4H)
    out = jnp.zeros((in_rows, 4 * hp), jnp.float32)
    for g in range(4):
        out = out.at[:in_dim, g * hp:g * hp + hidden].set(
            wt[:, g * hidden:(g + 1) * hidden])
    return out


def _pack_bias(b_ih, b_hh, hidden, hp):
    b = jnp.asarray(b_ih, jnp.float32) + jnp.asarray(b_hh, jnp.float32)
    out = jnp.zeros((1, 4 * hp), jnp.float32)
    for g in range(4):
        out = out.at[0, g * hp:g * hp + hidden].set(
            b[g * hidden:(g + 1) * hidden])
    return out


def prepare_params(raw, hidden=HIDDEN):
    """One-time weight re-layout: transpose, lane-align, pre-add biases,
    cast MXU operands to bf16."""
    hp = _round_up(hidden, LANE)                       # 150 -> 256
    w_fc = jnp.asarray(raw["w_fc"], jnp.float32)       # (1, hidden)
    b_fc = jnp.asarray(raw["b_fc"], jnp.float32)       # (1,)
    bf16 = jnp.bfloat16
    return {
        # VPU-side operands stay f32
        "w_ih1": _pack_gate_weight_t(raw["w_ih1"], hidden, hp, in_rows=1),
        "b1": _pack_bias(raw["b_ih1"], raw["b_hh1"], hidden, hp),
        "b2": _pack_bias(raw["b_ih2"], raw["b_hh2"], hidden, hp),
        "b_fc": jnp.zeros((1, LANE), jnp.float32).at[0, 0].set(b_fc[0]),
        # MXU operands packed as bf16 (single-pass matmul, half the DMA)
        "w_hh1": _pack_gate_weight_t(raw["w_hh1"], hidden, hp,
                                     in_rows=hp).astype(bf16),
        "w_ih2": _pack_gate_weight_t(raw["w_ih2"], hidden, hp,
                                     in_rows=hp).astype(bf16),
        "w_hh2": _pack_gate_weight_t(raw["w_hh2"], hidden, hp,
                                     in_rows=hp).astype(bf16),
        "w_fc": jnp.zeros((hp, LANE), jnp.float32)
                  .at[:hidden, 0].set(w_fc[0]).astype(bf16),
    }


# ---------------------------------------------------------------------------
# Forward pass
# ---------------------------------------------------------------------------
@jax.jit
def lstm_model_forward(x, params):
    """x: (B, S, 1) float32 (PyTorch batch_first). Returns (B, 1)."""
    B, S, _ = x.shape
    Hp = params["w_hh1"].shape[0]
    Bp = _round_up(max(B, 8), 8)    # >= 8 sublanes, keeps tiles aligned

    # time-major + zero-pad batch rows (padded rows never mix with real ones),
    # then flatten to (S*Bp, 1) so the kernel indexes timestep blocks directly.
    x_tmaj = jnp.transpose(x.astype(jnp.float32), (1, 0, 2))        # (S, B, 1)
    x_pad = jnp.zeros((S, Bp, 1), jnp.float32).at[:, :B, :].set(x_tmaj)
    x_flat = x_pad.reshape(S * Bp, 1)

    out_pad = pl.pallas_call(
        _fused_lstm_fc_kernel,
        out_shape=jax.ShapeDtypeStruct((Bp, LANE), jnp.float32),
        grid_spec=pltpu.PrefetchScalarGridSpec(
            num_scalar_prefetch=0,
            grid=(1,),                                   # single fused invocation
            in_specs=[
                pl.BlockSpec((S * Bp, 1), lambda i: (0, 0)),         # x
                pl.BlockSpec((1, 4 * Hp), lambda i: (0, 0)),         # w_ih1
                pl.BlockSpec((Hp, 4 * Hp), lambda i: (0, 0)),        # w_hh1
                pl.BlockSpec((1, 4 * Hp), lambda i: (0, 0)),         # b1
                pl.BlockSpec((Hp, 4 * Hp), lambda i: (0, 0)),        # w_ih2
                pl.BlockSpec((Hp, 4 * Hp), lambda i: (0, 0)),        # w_hh2
                pl.BlockSpec((1, 4 * Hp), lambda i: (0, 0)),         # b2
                pl.BlockSpec((Hp, LANE), lambda i: (0, 0)),          # w_fc
                pl.BlockSpec((1, LANE), lambda i: (0, 0)),           # b_fc
            ],
            out_specs=pl.BlockSpec((Bp, LANE), lambda i: (0, 0)),
            scratch_shapes=[
                pltpu.VMEM((S * Bp, 4 * Hp), jnp.float32),   # layer-1 input gates
            ],
        ),
        compiler_params=pltpu.CompilerParams(
            dimension_semantics=("arbitrary",)),
    )(x_flat, params["w_ih1"], params["w_hh1"], params["b1"],
      params["w_ih2"], params["w_hh2"], params["b2"],
      params["w_fc"], params["b_fc"])

    return out_pad[:B, 0:1]


# ---------------------------------------------------------------------------
# Synthetic init (PyTorch layouts) + pure-JAX reference for a sanity check
# ---------------------------------------------------------------------------
def init_params(key, hidden=HIDDEN):
    ks = jax.random.split(key, 10)
    bound = 1.0 / jnp.sqrt(jnp.float32(hidden))

    def u(k, shape):
        return jax.random.uniform(k, shape, jnp.float32, -bound, bound)

    return {
        "w_ih1": u(ks[0], (4 * hidden, 1)),
        "w_hh1": u(ks[1], (4 * hidden, hidden)),
        "b_ih1": u(ks[2], (4 * hidden,)),
        "b_hh1": u(ks[3], (4 * hidden,)),
        "w_ih2": u(ks[4], (4 * hidden, hidden)),
        "w_hh2": u(ks[5], (4 * hidden, hidden)),
        "b_ih2": u(ks[6], (4 * hidden,)),
        "b_hh2": u(ks[7], (4 * hidden,)),
        "w_fc": u(ks[8], (1, hidden)),
        "b_fc": u(ks[9], (1,)),
    }


def _lstm_layer_ref(x_tmaj, w_ih, w_hh, b_ih, b_hh):
    S, B, _ = x_tmaj.shape
    H = w_hh.shape[1]

    def step(carry, x_t):
        h, c = carry
        g = x_t @ w_ih.T + h @ w_hh.T + b_ih + b_hh
        i = jax.nn.sigmoid(g[:, :H])
        f = jax.nn.sigmoid(g[:, H:2 * H])
        gg = jnp.tanh(g[:, 2 * H:3 * H])
        o = jax.nn.sigmoid(g[:, 3 * H:])
        c = f * c + i * gg
        h = o * jnp.tanh(c)
        return (h, c), h

    init = (jnp.zeros((B, H), jnp.float32), jnp.zeros((B, H), jnp.float32))
    _, hs = jax.lax.scan(step, init, x_tmaj)
    return hs                                                    # (S, B, H)


def model_reference(x, raw):
    x_tmaj = jnp.transpose(x.astype(jnp.float32), (1, 0, 2))
    h1 = _lstm_layer_ref(x_tmaj, raw["w_ih1"], raw["w_hh1"],
                         raw["b_ih1"], raw["b_hh1"])
    h2 = _lstm_layer_ref(h1, raw["w_ih2"], raw["w_hh2"],
                         raw["b_ih2"], raw["b_hh2"])
    return h2[-1] @ jnp.asarray(raw["w_fc"], jnp.float32).T + raw["b_fc"]


if __name__ == "__main__":
    key = jax.random.PRNGKey(0)
    k_x, k_p = jax.random.split(key)

    B, S = 2, 8
    x = jax.random.normal(k_x, (B, S, 1), jnp.float32)
    raw = init_params(k_p)
    params = prepare_params(raw)

    out = lstm_model_forward(x, params)
    jax.block_until_ready(out)
    assert out.shape == (B, 1), out.shape

    # Sanity check vs pure-JAX f32 reference. Tolerance covers bf16 MXU
    # operands with f32 accumulation over two stacked recurrences.
    ref = model_reference(x, raw)
    assert jnp.allclose(out, ref, atol=5e-2, rtol=5e-2), (out, ref)

    print("KERNEL_OK")
</pallas_src>

<mosaic_0001>
module attributes {stable_mosaic.version = 11 : i64} {
  func.func @_fused_lstm_fc_kernel(%arg0: i32, %arg1: memref<64x1xf32, #tpu.memory_space<vmem>>, %arg2: memref<1x1024xf32, #tpu.memory_space<vmem>>, %arg3: memref<256x1024xbf16, #tpu.memory_space<vmem>>, %arg4: memref<1x1024xf32, #tpu.memory_space<vmem>>, %arg5: memref<256x1024xbf16, #tpu.memory_space<vmem>>, %arg6: memref<256x1024xbf16, #tpu.memory_space<vmem>>, %arg7: memref<1x1024xf32, #tpu.memory_space<vmem>>, %arg8: memref<256x128xbf16, #tpu.memory_space<vmem>>, %arg9: memref<1x128xf32, #tpu.memory_space<vmem>>, %arg10: memref<8x128xf32, #tpu.memory_space<vmem>>, %arg11: memref<64x1024xf32, #tpu.memory_space<vmem>>) attributes {dimension_semantics = [#tpu.dimension_semantics<arbitrary>], iteration_bounds = array<i64: 1>, scalar_prefetch = 0 : i64, scratch_operands = 1 : i64, tpu.core_type = #tpu.core_type<tc>, window_params = [{pipeline_mode = #tpu.pipeline_mode<synchronous>, transform_indices = @transform_0, window_bounds = array<i64: 64, 1>}, {pipeline_mode = #tpu.pipeline_mode<synchronous>, transform_indices = @transform_1, window_bounds = array<i64: 1, 1024>}, {pipeline_mode = #tpu.pipeline_mode<synchronous>, transform_indices = @transform_2, window_bounds = array<i64: 256, 1024>}, {pipeline_mode = #tpu.pipeline_mode<synchronous>, transform_indices = @transform_3, window_bounds = array<i64: 1, 1024>}, {pipeline_mode = #tpu.pipeline_mode<synchronous>, transform_indices = @transform_4, window_bounds = array<i64: 256, 1024>}, {pipeline_mode = #tpu.pipeline_mode<synchronous>, transform_indices = @transform_5, window_bounds = array<i64: 256, 1024>}, {pipeline_mode = #tpu.pipeline_mode<synchronous>, transform_indices = @transform_6, window_bounds = array<i64: 1, 1024>}, {pipeline_mode = #tpu.pipeline_mode<synchronous>, transform_indices = @transform_7, window_bounds = array<i64: 256, 128>}, {pipeline_mode = #tpu.pipeline_mode<synchronous>, transform_indices = @transform_8, window_bounds = array<i64: 1, 128>}, {pipeline_mode = #tpu.pipeline_mode<synchronous>, transform_indices = @transform_9, window_bounds = array<i64: 8, 128>}]} {
    %cst = arith.constant 0.000000e+00 : f32
    %0 = vector.broadcast %cst : f32 to vector<8x256xf32>
    %c0 = arith.constant 0 : index
    %c0_0 = arith.constant 0 : index
    %1 = vector.load %arg1[%c0, %c0_0] : memref<64x1xf32, #tpu.memory_space<vmem>>, vector<64x1xf32>
    %c0_1 = arith.constant 0 : index
    %c0_2 = arith.constant 0 : index
    %2 = vector.load %arg2[%c0_1, %c0_2] : memref<1x1024xf32, #tpu.memory_space<vmem>>, vector<1x1024xf32>
    %3 = vector.broadcast %1 : vector<64x1xf32> to vector<64x1024xf32>
    %4 = vector.broadcast %2 : vector<1x1024xf32> to vector<64x1024xf32>
    %5 = arith.mulf %3, %4 : vector<64x1024xf32>
    %c0_3 = arith.constant 0 : index
    %c0_4 = arith.constant 0 : index
    %6 = vector.load %arg4[%c0_3, %c0_4] : memref<1x1024xf32, #tpu.memory_space<vmem>>, vector<1x1024xf32>
    %7 = vector.broadcast %6 : vector<1x1024xf32> to vector<64x1024xf32>
    %8 = arith.addf %5, %7 : vector<64x1024xf32>
    %c0_5 = arith.constant 0 : index
    %c0_6 = arith.constant 0 : index
    %9 = vector.load %arg11[%c0_5, %c0_6] : memref<64x1024xf32, #tpu.memory_space<vmem>>, vector<64x1024xf32>
    tpu.vector_store %arg11[%c0_5, %c0_6], %8 {strides = array<i32>} : memref<64x1024xf32, #tpu.memory_space<vmem>>, vector<64x1024xf32>,
    %c0_7 = arith.constant 0 : index
    %c0_8 = arith.constant 0 : index
    %10 = vector.load %arg7[%c0_7, %c0_8] : memref<1x1024xf32, #tpu.memory_space<vmem>>, vector<1x1024xf32>
    %11 = vector.shape_cast %10 : vector<1x1024xf32> to vector<1x1024xf32>
    %12 = vector.broadcast %11 : vector<1x1024xf32> to vector<8x1024xf32>
    %c0_9 = arith.constant 0 : index
    %c0_10 = arith.constant 0 : index
    %13 = vector.load %arg11[%c0_9, %c0_10] : memref<64x1024xf32, #tpu.memory_space<vmem>>, vector<8x1024xf32>
    %14 = vector.extract_strided_slice %13 {offsets = [0, 0], sizes = [8, 256], strides = [1, 1]} : vector<8x1024xf32> to vector<8x256xf32>
    %cst_11 = arith.constant 5.000000e-01 : f32
    %15 = vector.broadcast %cst_11 : f32 to vector<8x256xf32>
    %16 = arith.mulf %15, %14 : vector<8x256xf32>
    %17 = math.tanh %16 : vector<8x256xf32>
    %cst_12 = arith.constant 5.000000e-01 : f32
    %18 = vector.broadcast %cst_12 : f32 to vector<8x256xf32>
    %19 = arith.mulf %18, %17 : vector<8x256xf32>
    %cst_13 = arith.constant 5.000000e-01 : f32
    %20 = vector.broadcast %cst_13 : f32 to vector<8x256xf32>
    %21 = arith.addf %19, %20 : vector<8x256xf32>
    %22 = vector.extract_strided_slice %13 {offsets = [0, 256], sizes = [8, 256], strides = [1, 1]} : vector<8x1024xf32> to vector<8x256xf32>
    %cst_14 = arith.constant 5.000000e-01 : f32
    %23 = vector.broadcast %cst_14 : f32 to vector<8x256xf32>
    %24 = arith.mulf %23, %22 : vector<8x256xf32>
    %25 = math.tanh %24 : vector<8x256xf32>
    %cst_15 = arith.constant 5.000000e-01 : f32
    %26 = vector.broadcast %cst_15 : f32 to vector<8x256xf32>
    %27 = arith.mulf %26, %25 : vector<8x256xf32>
    %cst_16 = arith.constant 5.000000e-01 : f32
    %28 = vector.broadcast %cst_16 : f32 to vector<8x256xf32>
    %29 = arith.addf %27, %28 : vector<8x256xf32>
    %30 = vector.extract_strided_slice %13 {offsets = [0, 512], sizes = [8, 256], strides = [1, 1]} : vector<8x1024xf32> to vector<8x256xf32>
    %31 = math.tanh %30 : vector<8x256xf32>
    %32 = vector.extract_strided_slice %13 {offsets = [0, 768], sizes = [8, 256], strides = [1, 1]} : vector<8x1024xf32> to vector<8x256xf32>
    %cst_17 = arith.constant 5.000000e-01 : f32
    %33 = vector.broadcast %cst_17 : f32 to vector<8x256xf32>
    %34 = arith.mulf %33, %32 : vector<8x256xf32>
    %35 = math.tanh %34 : vector<8x256xf32>
    %cst_18 = arith.constant 5.000000e-01 : f32
    %36 = vector.broadcast %cst_18 : f32 to vector<8x256xf32>
    %37 = arith.mulf %36, %35 : vector<8x256xf32>
    %cst_19 = arith.constant 5.000000e-01 : f32
    %38 = vector.broadcast %cst_19 : f32 to vector<8x256xf32>
    %39 = arith.addf %37, %38 : vector<8x256xf32>
    %40 = arith.mulf %29, %0 : vector<8x256xf32>
    %41 = arith.mulf %21, %31 : vector<8x256xf32>
    %42 = arith.addf %40, %41 : vector<8x256xf32>
    %43 = math.tanh %42 : vector<8x256xf32>
    %44 = arith.mulf %39, %43 : vector<8x256xf32>
    %45 = arith.truncf %44 : vector<8x256xf32> to vector<8x256xbf16>
    %c0_20 = arith.constant 0 : index
    %c0_21 = arith.constant 0 : index
    %46 = vector.load %arg5[%c0_20, %c0_21] : memref<256x1024xbf16, #tpu.memory_space<vmem>>, vector<256x1024xbf16>
    %cst_22 = arith.constant dense<0.000000e+00> : vector<8x1024xf32>
    %47 = tpu.matmul %45, %46, %cst_22 {dimension_numbers = #tpu.dot_dimension_numbers<[1], [0], [0], [1], [0, 0, 1, 1], [], []>} : vector<8x256xbf16>, vector<256x1024xbf16>, vector<8x1024xf32> -> vector<8x1024xf32>
    %48 = arith.addf %47, %12 : vector<8x1024xf32>
    %c1_i32 = arith.constant 1 : i32
    %c8_i32 = arith.constant 8 : i32
    %49 = arith.muli %c1_i32, %c8_i32 : i32
    %50 = tpu.assume_multiple %49, 8 : i32
    %51 = arith.index_cast %50 : i32 to index
    %c0_23 = arith.constant 0 : index
    %52 = vector.load %arg11[%51, %c0_23] : memref<64x1024xf32, #tpu.memory_space<vmem>>, vector<8x1024xf32>
    %53 = arith.truncf %44 : vector<8x256xf32> to vector<8x256xbf16>
    %c0_24 = arith.constant 0 : index
    %c0_25 = arith.constant 0 : index
    %54 = vector.load %arg3[%c0_24, %c0_25] : memref<256x1024xbf16, #tpu.memory_space<vmem>>, vector<256x1024xbf16>
    %cst_26 = arith.constant dense<0.000000e+00> : vector<8x1024xf32>
    %55 = tpu.matmul %53, %54, %cst_26 {dimension_numbers = #tpu.dot_dimension_numbers<[1], [0], [0], [1], [0, 0, 1, 1], [], []>} : vector<8x256xbf16>, vector<256x1024xbf16>, vector<8x1024xf32> -> vector<8x1024xf32>
    %56 = arith.addf %52, %55 : vector<8x1024xf32>
    %57 = arith.truncf %0 : vector<8x256xf32> to vector<8x256xbf16>
    %c0_27 = arith.constant 0 : index
    %c0_28 = arith.constant 0 : index
    %58 = vector.load %arg6[%c0_27, %c0_28] : memref<256x1024xbf16, #tpu.memory_space<vmem>>, vector<256x1024xbf16>
    %cst_29 = arith.constant dense<0.000000e+00> : vector<8x1024xf32>
    %59 = tpu.matmul %57, %58, %cst_29 {dimension_numbers = #tpu.dot_dimension_numbers<[1], [0], [0], [1], [0, 0, 1, 1], [], []>} : vector<8x256xbf16>, vector<256x1024xbf16>, vector<8x1024xf32> -> vector<8x1024xf32>
    %60 = arith.addf %48, %59 : vector<8x1024xf32>
    %61 = vector.extract_strided_slice %56 {offsets = [0, 0], sizes = [8, 256], strides = [1, 1]} : vector<8x1024xf32> to vector<8x256xf32>
    %cst_30 = arith.constant 5.000000e-01 : f32
    %62 = vector.broadcast %cst_30 : f32 to vector<8x256xf32>
    %63 = arith.mulf %62, %61 : vector<8x256xf32>
    %64 = math.tanh %63 : vector<8x256xf32>
    %cst_31 = arith.constant 5.000000e-01 : f32
    %65 = vector.broadcast %cst_31 : f32 to vector<8x256xf32>
    %66 = arith.mulf %65, %64 : vector<8x256xf32>
    %cst_32 = arith.constant 5.000000e-01 : f32
    %67 = vector.broadcast %cst_32 : f32 to vector<8x256xf32>
    %68 = arith.addf %66, %67 : vector<8x256xf32>
    %69 = vector.extract_strided_slice %56 {offsets = [0, 256], sizes = [8, 256], strides = [1, 1]} : vector<8x1024xf32> to vector<8x256xf32>
    %cst_33 = arith.constant 5.000000e-01 : f32
    %70 = vector.broadcast %cst_33 : f32 to vector<8x256xf32>
    %71 = arith.mulf %70, %69 : vector<8x256xf32>
    %72 = math.tanh %71 : vector<8x256xf32>
    %cst_34 = arith.constant 5.000000e-01 : f32
    %73 = vector.broadcast %cst_34 : f32 to vector<8x256xf32>
    %74 = arith.mulf %73, %72 : vector<8x256xf32>
    %cst_35 = arith.constant 5.000000e-01 : f32
    %75 = vector.broadcast %cst_35 : f32 to vector<8x256xf32>
    %76 = arith.addf %74, %75 : vector<8x256xf32>
    %77 = vector.extract_strided_slice %56 {offsets = [0, 512], sizes = [8, 256], strides = [1, 1]} : vector<8x1024xf32> to vector<8x256xf32>
    %78 = math.tanh %77 : vector<8x256xf32>
    %79 = vector.extract_strided_slice %56 {offsets = [0, 768], sizes = [8, 256], strides = [1, 1]} : vector<8x1024xf32> to vector<8x256xf32>
    %cst_36 = arith.constant 5.000000e-01 : f32
    %80 = vector.broadcast %cst_36 : f32 to vector<8x256xf32>
    %81 = arith.mulf %80, %79 : vector<8x256xf32>
    %82 = math.tanh %81 : vector<8x256xf32>
    %cst_37 = arith.constant 5.000000e-01 : f32
    %83 = vector.broadcast %cst_37 : f32 to vector<8x256xf32>
    %84 = arith.mulf %83, %82 : vector<8x256xf32>
    %cst_38 = arith.constant 5.000000e-01 : f32
    %85 = vector.broadcast %cst_38 : f32 to vector<8x256xf32>
    %86 = arith.addf %84, %85 : vector<8x256xf32>
    %87 = arith.mulf %76, %42 : vector<8x256xf32>
    %88 = arith.mulf %68, %78 : vector<8x256xf32>
    %89 = arith.addf %87, %88 : vector<8x256xf32>
    %90 = math.tanh %89 : vector<8x256xf32>
    %91 = arith.mulf %86, %90 : vector<8x256xf32>
    %92 = vector.extract_strided_slice %60 {offsets = [0, 0], sizes = [8, 256], strides = [1, 1]} : vector<8x1024xf32> to vector<8x256xf32>
    %cst_39 = arith.constant 5.000000e-01 : f32
    %93 = vector.broadcast %cst_39 : f32 to vector<8x256xf32>
    %94 = arith.mulf %93, %92 : vector<8x256xf32>
    %95 = math.tanh %94 : vector<8x256xf32>
    %cst_40 = arith.constant 5.000000e-01 : f32
    %96 = vector.broadcast %cst_40 : f32 to vector<8x256xf32>
    %97 = arith.mulf %96, %95 : vector<8x256xf32>
    %cst_41 = arith.constant 5.000000e-01 : f32
    %98 = vector.broadcast %cst_41 : f32 to vector<8x256xf32>
    %99 = arith.addf %97, %98 : vector<8x256xf32>
    %100 = vector.extract_strided_slice %60 {offsets = [0, 256], sizes = [8, 256], strides = [1, 1]} : vector<8x1024xf32> to vector<8x256xf32>
    %cst_42 = arith.constant 5.000000e-01 : f32
    %101 = vector.broadcast %cst_42 : f32 to vector<8x256xf32>
    %102 = arith.mulf %101, %100 : vector<8x256xf32>
    %103 = math.tanh %102 : vector<8x256xf32>
    %cst_43 = arith.constant 5.000000e-01 : f32
    %104 = vector.broadcast %cst_43 : f32 to vector<8x256xf32>
    %105 = arith.mulf %104, %103 : vector<8x256xf32>
    %cst_44 = arith.constant 5.000000e-01 : f32
    %106 = vector.broadcast %cst_44 : f32 to vector<8x256xf32>
    %107 = arith.addf %105, %106 : vector<8x256xf32>
    %108 = vector.extract_strided_slice %60 {offsets = [0, 512], sizes = [8, 256], strides = [1, 1]} : vector<8x1024xf32> to vector<8x256xf32>
    %109 = math.tanh %108 : vector<8x256xf32>
    %110 = vector.extract_strided_slice %60 {offsets = [0, 768], sizes = [8, 256], strides = [1, 1]} : vector<8x1024xf32> to vector<8x256xf32>
    %cst_45 = arith.constant 5.000000e-01 : f32
    %111 = vector.broadcast %cst_45 : f32 to vector<8x256xf32>
    %112 = arith.mulf %111, %110 : vector<8x256xf32>
    %113 = math.tanh %112 : vector<8x256xf32>
    %cst_46 = arith.constant 5.000000e-01 : f32
    %114 = vector.broadcast %cst_46 : f32 to vector<8x256xf32>
    %115 = arith.mulf %114, %113 : vector<8x256xf32>
    %cst_47 = arith.constant 5.000000e-01 : f32
    %116 = vector.broadcast %cst_47 : f32 to vector<8x256xf32>
    %117 = arith.addf %115, %116 : vector<8x256xf32>
    %118 = arith.mulf %107, %0 : vector<8x256xf32>
    %119 = arith.mulf %99, %109 : vector<8x256xf32>
    %120 = arith.addf %118, %119 : vector<8x256xf32>
    %121 = math.tanh %120 : vector<8x256xf32>
    %122 = arith.mulf %117, %121 : vector<8x256xf32>
    %123 = arith.truncf %91 : vector<8x256xf32> to vector<8x256xbf16>
    %c0_48 = arith.constant 0 : index
    %c0_49 = arith.constant 0 : index
    %124 = vector.load %arg5[%c0_48, %c0_49] : memref<256x1024xbf16, #tpu.memory_space<vmem>>, vector<256x1024xbf16>
    %cst_50 = arith.constant dense<0.000000e+00> : vector<8x1024xf32>
    %125 = tpu.matmul %123, %124, %cst_50 {dimension_numbers = #tpu.dot_dimension_numbers<[1], [0], [0], [1], [0, 0, 1, 1], [], []>} : vector<8x256xbf16>, vector<256x1024xbf16>, vector<8x1024xf32> -> vector<8x1024xf32>
    %126 = arith.addf %125, %12 : vector<8x1024xf32>
    %c2_i32 = arith.constant 2 : i32
    %c8_i32_51 = arith.constant 8 : i32
    %127 = arith.muli %c2_i32, %c8_i32_51 : i32
    %128 = tpu.assume_multiple %127, 8 : i32
    %129 = arith.index_cast %128 : i32 to index
    %c0_52 = arith.constant 0 : index
    %130 = vector.load %arg11[%129, %c0_52] : memref<64x1024xf32, #tpu.memory_space<vmem>>, vector<8x1024xf32>
    %131 = arith.truncf %91 : vector<8x256xf32> to vector<8x256xbf16>
    %c0_53 = arith.constant 0 : index
    %c0_54 = arith.constant 0 : index
    %132 = vector.load %arg3[%c0_53, %c0_54] : memref<256x1024xbf16, #tpu.memory_space<vmem>>, vector<256x1024xbf16>
    %cst_55 = arith.constant dense<0.000000e+00> : vector<8x1024xf32>
    %133 = tpu.matmul %131, %132, %cst_55 {dimension_numbers = #tpu.dot_dimension_numbers<[1], [0], [0], [1], [0, 0, 1, 1], [], []>} : vector<8x256xbf16>, vector<256x1024xbf16>, vector<8x1024xf32> -> vector<8x1024xf32>
    %134 = arith.addf %130, %133 : vector<8x1024xf32>
    %135 = arith.truncf %122 : vector<8x256xf32> to vector<8x256xbf16>
    %c0_56 = arith.constant 0 : index
    %c0_57 = arith.constant 0 : index
    %136 = vector.load %arg6[%c0_56, %c0_57] : memref<256x1024xbf16, #tpu.memory_space<vmem>>, vector<256x1024xbf16>
    %cst_58 = arith.constant dense<0.000000e+00> : vector<8x1024xf32>
    %137 = tpu.matmul %135, %136, %cst_58 {dimension_numbers = #tpu.dot_dimension_numbers<[1], [0], [0], [1], [0, 0, 1, 1], [], []>} : vector<8x256xbf16>, vector<256x1024xbf16>, vector<8x1024xf32> -> vector<8x1024xf32>
    %138 = arith.addf %126, %137 : vector<8x1024xf32>
    %139 = vector.extract_strided_slice %134 {offsets = [0, 0], sizes = [8, 256], strides = [1, 1]} : vector<8x1024xf32> to vector<8x256xf32>
    %cst_59 = arith.constant 5.000000e-01 : f32
    %140 = vector.broadcast %cst_59 : f32 to vector<8x256xf32>
    %141 = arith.mulf %140, %139 : vector<8x256xf32>
    %142 = math.tanh %141 : vector<8x256xf32>
    %cst_60 = arith.constant 5.000000e-01 : f32
    %143 = vector.broadcast %cst_60 : f32 to vector<8x256xf32>
    %144 = arith.mulf %143, %142 : vector<8x256xf32>
    %cst_61 = arith.constant 5.000000e-01 : f32
    %145 = vector.broadcast %cst_61 : f32 to vector<8x256xf32>
    %146 = arith.addf %144, %145 : vector<8x256xf32>
    %147 = vector.extract_strided_slice %134 {offsets = [0, 256], sizes = [8, 256], strides = [1, 1]} : vector<8x1024xf32> to vector<8x256xf32>
    %cst_62 = arith.constant 5.000000e-01 : f32
    %148 = vector.broadcast %cst_62 : f32 to vector<8x256xf32>
    %149 = arith.mulf %148, %147 : vector<8x256xf32>
    %150 = math.tanh %149 : vector<8x256xf32>
    %cst_63 = arith.constant 5.000000e-01 : f32
    %151 = vector.broadcast %cst_63 : f32 to vector<8x256xf32>
    %152 = arith.mulf %151, %150 : vector<8x256xf32>
    %cst_64 = arith.constant 5.000000e-01 : f32
    %153 = vector.broadcast %cst_64 : f32 to vector<8x256xf32>
    %154 = arith.addf %152, %153 : vector<8x256xf32>
    %155 = vector.extract_strided_slice %134 {offsets = [0, 512], sizes = [8, 256], strides = [1, 1]} : vector<8x1024xf32> to vector<8x256xf32>
    %156 = math.tanh %155 : vector<8x256xf32>
    %157 = vector.extract_strided_slice %134 {offsets = [0, 768], sizes = [8, 256], strides = [1, 1]} : vector<8x1024xf32> to vector<8x256xf32>
    %cst_65 = arith.constant 5.000000e-01 : f32
    %158 = vector.broadcast %cst_65 : f32 to vector<8x256xf32>
    %159 = arith.mulf %158, %157 : vector<8x256xf32>
    %160 = math.tanh %159 : vector<8x256xf32>
    %cst_66 = arith.constant 5.000000e-01 : f32
    %161 = vector.broadcast %cst_66 : f32 to vector<8x256xf32>
    %162 = arith.mulf %161, %160 : vector<8x256xf32>
    %cst_67 = arith.constant 5.000000e-01 : f32
    %163 = vector.broadcast %cst_67 : f32 to vector<8x256xf32>
    %164 = arith.addf %162, %163 : vector<8x256xf32>
    %165 = arith.mulf %154, %89 : vector<8x256xf32>
    %166 = arith.mulf %146, %156 : vector<8x256xf32>
    %167 = arith.addf %165, %166 : vector<8x256xf32>
    %168 = math.tanh %167 : vector<8x256xf32>
    %169 = arith.mulf %164, %168 : vector<8x256xf32>
    %170 = vector.extract_strided_slice %138 {offsets = [0, 0], sizes = [8, 256], strides = [1, 1]} : vector<8x1024xf32> to vector<8x256xf32>
    %cst_68 = arith.constant 5.000000e-01 : f32
    %171 = vector.broadcast %cst_68 : f32 to vector<8x256xf32>
    %172 = arith.mulf %171, %170 : vector<8x256xf32>
    %173 = math.tanh %172 : vector<8x256xf32>
    %cst_69 = arith.constant 5.000000e-01 : f32
    %174 = vector.broadcast %cst_69 : f32 to vector<8x256xf32>
    %175 = arith.mulf %174, %173 : vector<8x256xf32>
    %cst_70 = arith.constant 5.000000e-01 : f32
    %176 = vector.broadcast %cst_70 : f32 to vector<8x256xf32>
    %177 = arith.addf %175, %176 : vector<8x256xf32>
    %178 = vector.extract_strided_slice %138 {offsets = [0, 256], sizes = [8, 256], strides = [1, 1]} : vector<8x1024xf32> to vector<8x256xf32>
    %cst_71 = arith.constant 5.000000e-01 : f32
    %179 = vector.broadcast %cst_71 : f32 to vector<8x256xf32>
    %180 = arith.mulf %179, %178 : vector<8x256xf32>
    %181 = math.tanh %180 : vector<8x256xf32>
    %cst_72 = arith.constant 5.000000e-01 : f32
    %182 = vector.broadcast %cst_72 : f32 to vector<8x256xf32>
    %183 = arith.mulf %182, %181 : vector<8x256xf32>
    %cst_73 = arith.constant 5.000000e-01 : f32
    %184 = vector.broadcast %cst_73 : f32 to vector<8x256xf32>
    %185 = arith.addf %183, %184 : vector<8x256xf32>
    %186 = vector.extract_strided_slice %138 {offsets = [0, 512], sizes = [8, 256], strides = [1, 1]} : vector<8x1024xf32> to vector<8x256xf32>
    %187 = math.tanh %186 : vector<8x256xf32>
    %188 = vector.extract_strided_slice %138 {offsets = [0, 768], sizes = [8, 256], strides = [1, 1]} : vector<8x1024xf32> to vector<8x256xf32>
    %cst_74 = arith.constant 5.000000e-01 : f32
    %189 = vector.broadcast %cst_74 : f32 to vector<8x256xf32>
    %190 = arith.mulf %189, %188 : vector<8x256xf32>
    %191 = math.tanh %190 : vector<8x256xf32>
    %cst_75 = arith.constant 5.000000e-01 : f32
    %192 = vector.broadcast %cst_75 : f32 to vector<8x256xf32>
    %193 = arith.mulf %192, %191 : vector<8x256xf32>
    %cst_76 = arith.constant 5.000000e-01 : f32
    %194 = vector.broadcast %cst_76 : f32 to vector<8x256xf32>
    %195 = arith.addf %193, %194 : vector<8x256xf32>
    %196 = arith.mulf %185, %120 : vector<8x256xf32>
    %197 = arith.mulf %177, %187 : vector<8x256xf32>
    %198 = arith.addf %196, %197 : vector<8x256xf32>
    %199 = math.tanh %198 : vector<8x256xf32>
    %200 = arith.mulf %195, %199 : vector<8x256xf32>
    %201 = arith.truncf %169 : vector<8x256xf32> to vector<8x256xbf16>
    %c0_77 = arith.constant 0 : index
    %c0_78 = arith.constant 0 : index
    %202 = vector.load %arg5[%c0_77, %c0_78] : memref<256x1024xbf16, #tpu.memory_space<vmem>>, vector<256x1024xbf16>
    %cst_79 = arith.constant dense<0.000000e+00> : vector<8x1024xf32>
    %203 = tpu.matmul %201, %202, %cst_79 {dimension_numbers = #tpu.dot_dimension_numbers<[1], [0], [0], [1], [0, 0, 1, 1], [], []>} : vector<8x256xbf16>, vector<256x1024xbf16>, vector<8x1024xf32> -> vector<8x1024xf32>
    %204 = arith.addf %203, %12 : vector<8x1024xf32>
    %c3_i32 = arith.constant 3 : i32
    %c8_i32_80 = arith.constant 8 : i32
    %205 = arith.muli %c3_i32, %c8_i32_80 : i32
    %206 = tpu.assume_multiple %205, 8 : i32
    %207 = arith.index_cast %206 : i32 to index
    %c0_81 = arith.constant 0 : index
    %208 = vector.load %arg11[%207, %c0_81] : memref<64x1024xf32, #tpu.memory_space<vmem>>, vector<8x1024xf32>
    %209 = arith.truncf %169 : vector<8x256xf32> to vector<8x256xbf16>
    %c0_82 = arith.constant 0 : index
    %c0_83 = arith.constant 0 : index
    %210 = vector.load %arg3[%c0_82, %c0_83] : memref<256x1024xbf16, #tpu.memory_space<vmem>>, vector<256x1024xbf16>
    %cst_84 = arith.constant dense<0.000000e+00> : vector<8x1024xf32>
    %211 = tpu.matmul %209, %210, %cst_84 {dimension_numbers = #tpu.dot_dimension_numbers<[1], [0], [0], [1], [0, 0, 1, 1], [], []>} : vector<8x256xbf16>, vector<256x1024xbf16>, vector<8x1024xf32> -> vector<8x1024xf32>
    %212 = arith.addf %208, %211 : vector<8x1024xf32>
    %213 = arith.truncf %200 : vector<8x256xf32> to vector<8x256xbf16>
    %c0_85 = arith.constant 0 : index
    %c0_86 = arith.constant 0 : index
    %214 = vector.load %arg6[%c0_85, %c0_86] : memref<256x1024xbf16, #tpu.memory_space<vmem>>, vector<256x1024xbf16>
    %cst_87 = arith.constant dense<0.000000e+00> : vector<8x1024xf32>
    %215 = tpu.matmul %213, %214, %cst_87 {dimension_numbers = #tpu.dot_dimension_numbers<[1], [0], [0], [1], [0, 0, 1, 1], [], []>} : vector<8x256xbf16>, vector<256x1024xbf16>, vector<8x1024xf32> -> vector<8x1024xf32>
    %216 = arith.addf %204, %215 : vector<8x1024xf32>
    %217 = vector.extract_strided_slice %212 {offsets = [0, 0], sizes = [8, 256], strides = [1, 1]} : vector<8x1024xf32> to vector<8x256xf32>
    %cst_88 = arith.constant 5.000000e-01 : f32
    %218 = vector.broadcast %cst_88 : f32 to vector<8x256xf32>
    %219 = arith.mulf %218, %217 : vector<8x256xf32>
    %220 = math.tanh %219 : vector<8x256xf32>
    %cst_89 = arith.constant 5.000000e-01 : f32
    %221 = vector.broadcast %cst_89 : f32 to vector<8x256xf32>
    %222 = arith.mulf %221, %220 : vector<8x256xf32>
    %cst_90 = arith.constant 5.000000e-01 : f32
    %223 = vector.broadcast %cst_90 : f32 to vector<8x256xf32>
    %224 = arith.addf %222, %223 : vector<8x256xf32>
    %225 = vector.extract_strided_slice %212 {offsets = [0, 256], sizes = [8, 256], strides = [1, 1]} : vector<8x1024xf32> to vector<8x256xf32>
    %cst_91 = arith.constant 5.000000e-01 : f32
    %226 = vector.broadcast %cst_91 : f32 to vector<8x256xf32>
    %227 = arith.mulf %226, %225 : vector<8x256xf32>
    %228 = math.tanh %227 : vector<8x256xf32>
    %cst_92 = arith.constant 5.000000e-01 : f32
    %229 = vector.broadcast %cst_92 : f32 to vector<8x256xf32>
    %230 = arith.mulf %229, %228 : vector<8x256xf32>
    %cst_93 = arith.constant 5.000000e-01 : f32
    %231 = vector.broadcast %cst_93 : f32 to vector<8x256xf32>
    %232 = arith.addf %230, %231 : vector<8x256xf32>
    %233 = vector.extract_strided_slice %212 {offsets = [0, 512], sizes = [8, 256], strides = [1, 1]} : vector<8x1024xf32> to vector<8x256xf32>
    %234 = math.tanh %233 : vector<8x256xf32>
    %235 = vector.extract_strided_slice %212 {offsets = [0, 768], sizes = [8, 256], strides = [1, 1]} : vector<8x1024xf32> to vector<8x256xf32>
    %cst_94 = arith.constant 5.000000e-01 : f32
    %236 = vector.broadcast %cst_94 : f32 to vector<8x256xf32>
    %237 = arith.mulf %236, %235 : vector<8x256xf32>
    %238 = math.tanh %237 : vector<8x256xf32>
    %cst_95 = arith.constant 5.000000e-01 : f32
    %239 = vector.broadcast %cst_95 : f32 to vector<8x256xf32>
    %240 = arith.mulf %239, %238 : vector<8x256xf32>
    %cst_96 = arith.constant 5.000000e-01 : f32
    %241 = vector.broadcast %cst_96 : f32 to vector<8x256xf32>
    %242 = arith.addf %240, %241 : vector<8x256xf32>
    %243 = arith.mulf %232, %167 : vector<8x256xf32>
    %244 = arith.mulf %224, %234 : vector<8x256xf32>
    %245 = arith.addf %243, %244 : vector<8x256xf32>
    %246 = math.tanh %245 : vector<8x256xf32>
    %247 = arith.mulf %242, %246 : vector<8x256xf32>
    %248 = vector.extract_strided_slice %216 {offsets = [0, 0], sizes = [8, 256], strides = [1, 1]} : vector<8x1024xf32> to vector<8x256xf32>
    %cst_97 = arith.constant 5.000000e-01 : f32
    %249 = vector.broadcast %cst_97 : f32 to vector<8x256xf32>
    %250 = arith.mulf %249, %248 : vector<8x256xf32>
    %251 = math.tanh %250 : vector<8x256xf32>
    %cst_98 = arith.constant 5.000000e-01 : f32
    %252 = vector.broadcast %cst_98 : f32 to vector<8x256xf32>
    %253 = arith.mulf %252, %251 : vector<8x256xf32>
    %cst_99 = arith.constant 5.000000e-01 : f32
    %254 = vector.broadcast %cst_99 : f32 to vector<8x256xf32>
    %255 = arith.addf %253, %254 : vector<8x256xf32>
    %256 = vector.extract_strided_slice %216 {offsets = [0, 256], sizes = [8, 256], strides = [1, 1]} : vector<8x1024xf32> to vector<8x256xf32>
    %cst_100 = arith.constant 5.000000e-01 : f32
    %257 = vector.broadcast %cst_100 : f32 to vector<8x256xf32>
    %258 = arith.mulf %257, %256 : vector<8x256xf32>
    %259 = math.tanh %258 : vector<8x256xf32>
    %cst_101 = arith.constant 5.000000e-01 : f32
    %260 = vector.broadcast %cst_101 : f32 to vector<8x256xf32>
    %261 = arith.mulf %260, %259 : vector<8x256xf32>
    %cst_102 = arith.constant 5.000000e-01 : f32
    %262 = vector.broadcast %cst_102 : f32 to vector<8x256xf32>
    %263 = arith.addf %261, %262 : vector<8x256xf32>
    %264 = vector.extract_strided_slice %216 {offsets = [0, 512], sizes = [8, 256], strides = [1, 1]} : vector<8x1024xf32> to vector<8x256xf32>
    %265 = math.tanh %264 : vector<8x256xf32>
    %266 = vector.extract_strided_slice %216 {offsets = [0, 768], sizes = [8, 256], strides = [1, 1]} : vector<8x1024xf32> to vector<8x256xf32>
    %cst_103 = arith.constant 5.000000e-01 : f32
    %267 = vector.broadcast %cst_103 : f32 to vector<8x256xf32>
    %268 = arith.mulf %267, %266 : vector<8x256xf32>
    %269 = math.tanh %268 : vector<8x256xf32>
    %cst_104 = arith.constant 5.000000e-01 : f32
    %270 = vector.broadcast %cst_104 : f32 to vector<8x256xf32>
    %271 = arith.mulf %270, %269 : vector<8x256xf32>
    %cst_105 = arith.constant 5.000000e-01 : f32
    %272 = vector.broadcast %cst_105 : f32 to vector<8x256xf32>
    %273 = arith.addf %271, %272 : vector<8x256xf32>
    %274 = arith.mulf %263, %198 : vector<8x256xf32>
    %275 = arith.mulf %255, %265 : vector<8x256xf32>
    %276 = arith.addf %274, %275 : vector<8x256xf32>
    %277 = math.tanh %276 : vector<8x256xf32>
    %278 = arith.mulf %273, %277 : vector<8x256xf32>
    %279 = arith.truncf %247 : vector<8x256xf32> to vector<8x256xbf16>
    %c0_106 = arith.constant 0 : index
    %c0_107 = arith.constant 0 : index
    %280 = vector.load %arg5[%c0_106, %c0_107] : memref<256x1024xbf16, #tpu.memory_space<vmem>>, vector<256x1024xbf16>
    %cst_108 = arith.constant dense<0.000000e+00> : vector<8x1024xf32>
    %281 = tpu.matmul %279, %280, %cst_108 {dimension_numbers = #tpu.dot_dimension_numbers<[1], [0], [0], [1], [0, 0, 1, 1], [], []>} : vector<8x256xbf16>, vector<256x1024xbf16>, vector<8x1024xf32> -> vector<8x1024xf32>
    %282 = arith.addf %281, %12 : vector<8x1024xf32>
    %c4_i32 = arith.constant 4 : i32
    %c8_i32_109 = arith.constant 8 : i32
    %283 = arith.muli %c4_i32, %c8_i32_109 : i32
    %284 = tpu.assume_multiple %283, 8 : i32
    %285 = arith.index_cast %284 : i32 to index
    %c0_110 = arith.constant 0 : index
    %286 = vector.load %arg11[%285, %c0_110] : memref<64x1024xf32, #tpu.memory_space<vmem>>, vector<8x1024xf32>
    %287 = arith.truncf %247 : vector<8x256xf32> to vector<8x256xbf16>
    %c0_111 = arith.constant 0 : index
    %c0_112 = arith.constant 0 : index
    %288 = vector.load %arg3[%c0_111, %c0_112] : memref<256x1024xbf16, #tpu.memory_space<vmem>>, vector<256x1024xbf16>
    %cst_113 = arith.constant dense<0.000000e+00> : vector<8x1024xf32>
    %289 = tpu.matmul %287, %288, %cst_113 {dimension_numbers = #tpu.dot_dimension_numbers<[1], [0], [0], [1], [0, 0, 1, 1], [], []>} : vector<8x256xbf16>, vector<256x1024xbf16>, vector<8x1024xf32> -> vector<8x1024xf32>
    %290 = arith.addf %286, %289 : vector<8x1024xf32>
    %291 = arith.truncf %278 : vector<8x256xf32> to vector<8x256xbf16>
    %c0_114 = arith.constant 0 : index
    %c0_115 = arith.constant 0 : index
    %292 = vector.load %arg6[%c0_114, %c0_115] : memref<256x1024xbf16, #tpu.memory_space<vmem>>, vector<256x1024xbf16>
    %cst_116 = arith.constant dense<0.000000e+00> : vector<8x1024xf32>
    %293 = tpu.matmul %291, %292, %cst_116 {dimension_numbers = #tpu.dot_dimension_numbers<[1], [0], [0], [1], [0, 0, 1, 1], [], []>} : vector<8x256xbf16>, vector<256x1024xbf16>, vector<8x1024xf32> -> vector<8x1024xf32>
    %294 = arith.addf %282, %293 : vector<8x1024xf32>
    %295 = vector.extract_strided_slice %290 {offsets = [0, 0], sizes = [8, 256], strides = [1, 1]} : vector<8x1024xf32> to vector<8x256xf32>
    %cst_117 = arith.constant 5.000000e-01 : f32
    %296 = vector.broadcast %cst_117 : f32 to vector<8x256xf32>
    %297 = arith.mulf %296, %295 : vector<8x256xf32>
    %298 = math.tanh %297 : vector<8x256xf32>
    %cst_118 = arith.constant 5.000000e-01 : f32
    %299 = vector.broadcast %cst_118 : f32 to vector<8x256xf32>
    %300 = arith.mulf %299, %298 : vector<8x256xf32>
    %cst_119 = arith.constant 5.000000e-01 : f32
    %301 = vector.broadcast %cst_119 : f32 to vector<8x256xf32>
    %302 = arith.addf %300, %301 : vector<8x256xf32>
    %303 = vector.extract_strided_slice %290 {offsets = [0, 256], sizes = [8, 256], strides = [1, 1]} : vector<8x1024xf32> to vector<8x256xf32>
    %cst_120 = arith.constant 5.000000e-01 : f32
    %304 = vector.broadcast %cst_120 : f32 to vector<8x256xf32>
    %305 = arith.mulf %304, %303 : vector<8x256xf32>
    %306 = math.tanh %305 : vector<8x256xf32>
    %cst_121 = arith.constant 5.000000e-01 : f32
    %307 = vector.broadcast %cst_121 : f32 to vector<8x256xf32>
    %308 = arith.mulf %307, %306 : vector<8x256xf32>
    %cst_122 = arith.constant 5.000000e-01 : f32
    %309 = vector.broadcast %cst_122 : f32 to vector<8x256xf32>
    %310 = arith.addf %308, %309 : vector<8x256xf32>
    %311 = vector.extract_strided_slice %290 {offsets = [0, 512], sizes = [8, 256], strides = [1, 1]} : vector<8x1024xf32> to vector<8x256xf32>
    %312 = math.tanh %311 : vector<8x256xf32>
    %313 = vector.extract_strided_slice %290 {offsets = [0, 768], sizes = [8, 256], strides = [1, 1]} : vector<8x1024xf32> to vector<8x256xf32>
    %cst_123 = arith.constant 5.000000e-01 : f32
    %314 = vector.broadcast %cst_123 : f32 to vector<8x256xf32>
    %315 = arith.mulf %314, %313 : vector<8x256xf32>
    %316 = math.tanh %315 : vector<8x256xf32>
    %cst_124 = arith.constant 5.000000e-01 : f32
    %317 = vector.broadcast %cst_124 : f32 to vector<8x256xf32>
    %318 = arith.mulf %317, %316 : vector<8x256xf32>
    %cst_125 = arith.constant 5.000000e-01 : f32
    %319 = vector.broadcast %cst_125 : f32 to vector<8x256xf32>
    %320 = arith.addf %318, %319 : vector<8x256xf32>
    %321 = arith.mulf %310, %245 : vector<8x256xf32>
    %322 = arith.mulf %302, %312 : vector<8x256xf32>
    %323 = arith.addf %321, %322 : vector<8x256xf32>
    %324 = math.tanh %323 : vector<8x256xf32>
    %325 = arith.mulf %320, %324 : vector<8x256xf32>
    %326 = vector.extract_strided_slice %294 {offsets = [0, 0], sizes = [8, 256], strides = [1, 1]} : vector<8x1024xf32> to vector<8x256xf32>
    %cst_126 = arith.constant 5.000000e-01 : f32
    %327 = vector.broadcast %cst_126 : f32 to vector<8x256xf32>
    %328 = arith.mulf %327, %326 : vector<8x256xf32>
    %329 = math.tanh %328 : vector<8x256xf32>
    %cst_127 = arith.constant 5.000000e-01 : f32
    %330 = vector.broadcast %cst_127 : f32 to vector<8x256xf32>
    %331 = arith.mulf %330, %329 : vector<8x256xf32>
    %cst_128 = arith.constant 5.000000e-01 : f32
    %332 = vector.broadcast %cst_128 : f32 to vector<8x256xf32>
    %333 = arith.addf %331, %332 : vector<8x256xf32>
    %334 = vector.extract_strided_slice %294 {offsets = [0, 256], sizes = [8, 256], strides = [1, 1]} : vector<8x1024xf32> to vector<8x256xf32>
    %cst_129 = arith.constant 5.000000e-01 : f32
    %335 = vector.broadcast %cst_129 : f32 to vector<8x256xf32>
    %336 = arith.mulf %335, %334 : vector<8x256xf32>
    %337 = math.tanh %336 : vector<8x256xf32>
    %cst_130 = arith.constant 5.000000e-01 : f32
    %338 = vector.broadcast %cst_130 : f32 to vector<8x256xf32>
    %339 = arith.mulf %338, %337 : vector<8x256xf32>
    %cst_131 = arith.constant 5.000000e-01 : f32
    %340 = vector.broadcast %cst_131 : f32 to vector<8x256xf32>
    %341 = arith.addf %339, %340 : vector<8x256xf32>
    %342 = vector.extract_strided_slice %294 {offsets = [0, 512], sizes = [8, 256], strides = [1, 1]} : vector<8x1024xf32> to vector<8x256xf32>
    %343 = math.tanh %342 : vector<8x256xf32>
    %344 = vector.extract_strided_slice %294 {offsets = [0, 768], sizes = [8, 256], strides = [1, 1]} : vector<8x1024xf32> to vector<8x256xf32>
    %cst_132 = arith.constant 5.000000e-01 : f32
    %345 = vector.broadcast %cst_132 : f32 to vector<8x256xf32>
    %346 = arith.mulf %345, %344 : vector<8x256xf32>
    %347 = math.tanh %346 : vector<8x256xf32>
    %cst_133 = arith.constant 5.000000e-01 : f32
    %348 = vector.broadcast %cst_133 : f32 to vector<8x256xf32>
    %349 = arith.mulf %348, %347 : vector<8x256xf32>
    %cst_134 = arith.constant 5.000000e-01 : f32
    %350 = vector.broadcast %cst_134 : f32 to vector<8x256xf32>
    %351 = arith.addf %349, %350 : vector<8x256xf32>
    %352 = arith.mulf %341, %276 : vector<8x256xf32>
    %353 = arith.mulf %333, %343 : vector<8x256xf32>
    %354 = arith.addf %352, %353 : vector<8x256xf32>
    %355 = math.tanh %354 : vector<8x256xf32>
    %356 = arith.mulf %351, %355 : vector<8x256xf32>
    %357 = arith.truncf %325 : vector<8x256xf32> to vector<8x256xbf16>
    %c0_135 = arith.constant 0 : index
    %c0_136 = arith.constant 0 : index
    %358 = vector.load %arg5[%c0_135, %c0_136] : memref<256x1024xbf16, #tpu.memory_space<vmem>>, vector<256x1024xbf16>
    %cst_137 = arith.constant dense<0.000000e+00> : vector<8x1024xf32>
    %359 = tpu.matmul %357, %358, %cst_137 {dimension_numbers = #tpu.dot_dimension_numbers<[1], [0], [0], [1], [0, 0, 1, 1], [], []>} : vector<8x256xbf16>, vector<256x1024xbf16>, vector<8x1024xf32> -> vector<8x1024xf32>
    %360 = arith.addf %359, %12 : vector<8x1024xf32>
    %c5_i32 = arith.constant 5 : i32
    %c8_i32_138 = arith.constant 8 : i32
    %361 = arith.muli %c5_i32, %c8_i32_138 : i32
    %362 = tpu.assume_multiple %361, 8 : i32
    %363 = arith.index_cast %362 : i32 to index
    %c0_139 = arith.constant 0 : index
    %364 = vector.load %arg11[%363, %c0_139] : memref<64x1024xf32, #tpu.memory_space<vmem>>, vector<8x1024xf32>
    %365 = arith.truncf %325 : vector<8x256xf32> to vector<8x256xbf16>
    %c0_140 = arith.constant 0 : index
    %c0_141 = arith.constant 0 : index
    %366 = vector.load %arg3[%c0_140, %c0_141] : memref<256x1024xbf16, #tpu.memory_space<vmem>>, vector<256x1024xbf16>
    %cst_142 = arith.constant dense<0.000000e+00> : vector<8x1024xf32>
    %367 = tpu.matmul %365, %366, %cst_142 {dimension_numbers = #tpu.dot_dimension_numbers<[1], [0], [0], [1], [0, 0, 1, 1], [], []>} : vector<8x256xbf16>, vector<256x1024xbf16>, vector<8x1024xf32> -> vector<8x1024xf32>
    %368 = arith.addf %364, %367 : vector<8x1024xf32>
    %369 = arith.truncf %356 : vector<8x256xf32> to vector<8x256xbf16>
    %c0_143 = arith.constant 0 : index
    %c0_144 = arith.constant 0 : index
    %370 = vector.load %arg6[%c0_143, %c0_144] : memref<256x1024xbf16, #tpu.memory_space<vmem>>, vector<256x1024xbf16>
    %cst_145 = arith.constant dense<0.000000e+00> : vector<8x1024xf32>
    %371 = tpu.matmul %369, %370, %cst_145 {dimension_numbers = #tpu.dot_dimension_numbers<[1], [0], [0], [1], [0, 0, 1, 1], [], []>} : vector<8x256xbf16>, vector<256x1024xbf16>, vector<8x1024xf32> -> vector<8x1024xf32>
    %372 = arith.addf %360, %371 : vector<8x1024xf32>
    %373 = vector.extract_strided_slice %368 {offsets = [0, 0], sizes = [8, 256], strides = [1, 1]} : vector<8x1024xf32> to vector<8x256xf32>
    %cst_146 = arith.constant 5.000000e-01 : f32
    %374 = vector.broadcast %cst_146 : f32 to vector<8x256xf32>
    %375 = arith.mulf %374, %373 : vector<8x256xf32>
    %376 = math.tanh %375 : vector<8x256xf32>
    %cst_147 = arith.constant 5.000000e-01 : f32
    %377 = vector.broadcast %cst_147 : f32 to vector<8x256xf32>
    %378 = arith.mulf %377, %376 : vector<8x256xf32>
    %cst_148 = arith.constant 5.000000e-01 : f32
    %379 = vector.broadcast %cst_148 : f32 to vector<8x256xf32>
    %380 = arith.addf %378, %379 : vector<8x256xf32>
    %381 = vector.extract_strided_slice %368 {offsets = [0, 256], sizes = [8, 256], strides = [1, 1]} : vector<8x1024xf32> to vector<8x256xf32>
    %cst_149 = arith.constant 5.000000e-01 : f32
    %382 = vector.broadcast %cst_149 : f32 to vector<8x256xf32>
    %383 = arith.mulf %382, %381 : vector<8x256xf32>
    %384 = math.tanh %383 : vector<8x256xf32>
    %cst_150 = arith.constant 5.000000e-01 : f32
    %385 = vector.broadcast %cst_150 : f32 to vector<8x256xf32>
    %386 = arith.mulf %385, %384 : vector<8x256xf32>
    %cst_151 = arith.constant 5.000000e-01 : f32
    %387 = vector.broadcast %cst_151 : f32 to vector<8x256xf32>
    %388 = arith.addf %386, %387 : vector<8x256xf32>
    %389 = vector.extract_strided_slice %368 {offsets = [0, 512], sizes = [8, 256], strides = [1, 1]} : vector<8x1024xf32> to vector<8x256xf32>
    %390 = math.tanh %389 : vector<8x256xf32>
    %391 = vector.extract_strided_slice %368 {offsets = [0, 768], sizes = [8, 256], strides = [1, 1]} : vector<8x1024xf32> to vector<8x256xf32>
    %cst_152 = arith.constant 5.000000e-01 : f32
    %392 = vector.broadcast %cst_152 : f32 to vector<8x256xf32>
    %393 = arith.mulf %392, %391 : vector<8x256xf32>
    %394 = math.tanh %393 : vector<8x256xf32>
    %cst_153 = arith.constant 5.000000e-01 : f32
    %395 = vector.broadcast %cst_153 : f32 to vector<8x256xf32>
    %396 = arith.mulf %395, %394 : vector<8x256xf32>
    %cst_154 = arith.constant 5.000000e-01 : f32
    %397 = vector.broadcast %cst_154 : f32 to vector<8x256xf32>
    %398 = arith.addf %396, %397 : vector<8x256xf32>
    %399 = arith.mulf %388, %323 : vector<8x256xf32>
    %400 = arith.mulf %380, %390 : vector<8x256xf32>
    %401 = arith.addf %399, %400 : vector<8x256xf32>
    %402 = math.tanh %401 : vector<8x256xf32>
    %403 = arith.mulf %398, %402 : vector<8x256xf32>
    %404 = vector.extract_strided_slice %372 {offsets = [0, 0], sizes = [8, 256], strides = [1, 1]} : vector<8x1024xf32> to vector<8x256xf32>
    %cst_155 = arith.constant 5.000000e-01 : f32
    %405 = vector.broadcast %cst_155 : f32 to vector<8x256xf32>
    %406 = arith.mulf %405, %404 : vector<8x256xf32>
    %407 = math.tanh %406 : vector<8x256xf32>
    %cst_156 = arith.constant 5.000000e-01 : f32
    %408 = vector.broadcast %cst_156 : f32 to vector<8x256xf32>
    %409 = arith.mulf %408, %407 : vector<8x256xf32>
    %cst_157 = arith.constant 5.000000e-01 : f32
    %410 = vector.broadcast %cst_157 : f32 to vector<8x256xf32>
    %411 = arith.addf %409, %410 : vector<8x256xf32>
    %412 = vector.extract_strided_slice %372 {offsets = [0, 256], sizes = [8, 256], strides = [1, 1]} : vector<8x1024xf32> to vector<8x256xf32>
    %cst_158 = arith.constant 5.000000e-01 : f32
    %413 = vector.broadcast %cst_158 : f32 to vector<8x256xf32>
    %414 = arith.mulf %413, %412 : vector<8x256xf32>
    %415 = math.tanh %414 : vector<8x256xf32>
    %cst_159 = arith.constant 5.000000e-01 : f32
    %416 = vector.broadcast %cst_159 : f32 to vector<8x256xf32>
    %417 = arith.mulf %416, %415 : vector<8x256xf32>
    %cst_160 = arith.constant 5.000000e-01 : f32
    %418 = vector.broadcast %cst_160 : f32 to vector<8x256xf32>
    %419 = arith.addf %417, %418 : vector<8x256xf32>
    %420 = vector.extract_strided_slice %372 {offsets = [0, 512], sizes = [8, 256], strides = [1, 1]} : vector<8x1024xf32> to vector<8x256xf32>
    %421 = math.tanh %420 : vector<8x256xf32>
    %422 = vector.extract_strided_slice %372 {offsets = [0, 768], sizes = [8, 256], strides = [1, 1]} : vector<8x1024xf32> to vector<8x256xf32>
    %cst_161 = arith.constant 5.000000e-01 : f32
    %423 = vector.broadcast %cst_161 : f32 to vector<8x256xf32>
    %424 = arith.mulf %423, %422 : vector<8x256xf32>
    %425 = math.tanh %424 : vector<8x256xf32>
    %cst_162 = arith.constant 5.000000e-01 : f32
    %426 = vector.broadcast %cst_162 : f32 to vector<8x256xf32>
    %427 = arith.mulf %426, %425 : vector<8x256xf32>
    %cst_163 = arith.constant 5.000000e-01 : f32
    %428 = vector.broadcast %cst_163 : f32 to vector<8x256xf32>
    %429 = arith.addf %427, %428 : vector<8x256xf32>
    %430 = arith.mulf %419, %354 : vector<8x256xf32>
    %431 = arith.mulf %411, %421 : vector<8x256xf32>
    %432 = arith.addf %430, %431 : vector<8x256xf32>
    %433 = math.tanh %432 : vector<8x256xf32>
    %434 = arith.mulf %429, %433 : vector<8x256xf32>
    %435 = arith.truncf %403 : vector<8x256xf32> to vector<8x256xbf16>
    %c0_164 = arith.constant 0 : index
    %c0_165 = arith.constant 0 : index
    %436 = vector.load %arg5[%c0_164, %c0_165] : memref<256x1024xbf16, #tpu.memory_space<vmem>>, vector<256x1024xbf16>
    %cst_166 = arith.constant dense<0.000000e+00> : vector<8x1024xf32>
    %437 = tpu.matmul %435, %436, %cst_166 {dimension_numbers = #tpu.dot_dimension_numbers<[1], [0], [0], [1], [0, 0, 1, 1], [], []>} : vector<8x256xbf16>, vector<256x1024xbf16>, vector<8x1024xf32> -> vector<8x1024xf32>
    %438 = arith.addf %437, %12 : vector<8x1024xf32>
    %c6_i32 = arith.constant 6 : i32
    %c8_i32_167 = arith.constant 8 : i32
    %439 = arith.muli %c6_i32, %c8_i32_167 : i32
    %440 = tpu.assume_multiple %439, 8 : i32
    %441 = arith.index_cast %440 : i32 to index
    %c0_168 = arith.constant 0 : index
    %442 = vector.load %arg11[%441, %c0_168] : memref<64x1024xf32, #tpu.memory_space<vmem>>, vector<8x1024xf32>
    %443 = arith.truncf %403 : vector<8x256xf32> to vector<8x256xbf16>
    %c0_169 = arith.constant 0 : index
    %c0_170 = arith.constant 0 : index
    %444 = vector.load %arg3[%c0_169, %c0_170] : memref<256x1024xbf16, #tpu.memory_space<vmem>>, vector<256x1024xbf16>
    %cst_171 = arith.constant dense<0.000000e+00> : vector<8x1024xf32>
    %445 = tpu.matmul %443, %444, %cst_171 {dimension_numbers = #tpu.dot_dimension_numbers<[1], [0], [0], [1], [0, 0, 1, 1], [], []>} : vector<8x256xbf16>, vector<256x1024xbf16>, vector<8x1024xf32> -> vector<8x1024xf32>
    %446 = arith.addf %442, %445 : vector<8x1024xf32>
    %447 = arith.truncf %434 : vector<8x256xf32> to vector<8x256xbf16>
    %c0_172 = arith.constant 0 : index
    %c0_173 = arith.constant 0 : index
    %448 = vector.load %arg6[%c0_172, %c0_173] : memref<256x1024xbf16, #tpu.memory_space<vmem>>, vector<256x1024xbf16>
    %cst_174 = arith.constant dense<0.000000e+00> : vector<8x1024xf32>
    %449 = tpu.matmul %447, %448, %cst_174 {dimension_numbers = #tpu.dot_dimension_numbers<[1], [0], [0], [1], [0, 0, 1, 1], [], []>} : vector<8x256xbf16>, vector<256x1024xbf16>, vector<8x1024xf32> -> vector<8x1024xf32>
    %450 = arith.addf %438, %449 : vector<8x1024xf32>
    %451 = vector.extract_strided_slice %446 {offsets = [0, 0], sizes = [8, 256], strides = [1, 1]} : vector<8x1024xf32> to vector<8x256xf32>
    %cst_175 = arith.constant 5.000000e-01 : f32
    %452 = vector.broadcast %cst_175 : f32 to vector<8x256xf32>
    %453 = arith.mulf %452, %451 : vector<8x256xf32>
    %454 = math.tanh %453 : vector<8x256xf32>
    %cst_176 = arith.constant 5.000000e-01 : f32
    %455 = vector.broadcast %cst_176 : f32 to vector<8x256xf32>
    %456 = arith.mulf %455, %454 : vector<8x256xf32>
    %cst_177 = arith.constant 5.000000e-01 : f32
    %457 = vector.broadcast %cst_177 : f32 to vector<8x256xf32>
    %458 = arith.addf %456, %457 : vector<8x256xf32>
    %459 = vector.extract_strided_slice %446 {offsets = [0, 256], sizes = [8, 256], strides = [1, 1]} : vector<8x1024xf32> to vector<8x256xf32>
    %cst_178 = arith.constant 5.000000e-01 : f32
    %460 = vector.broadcast %cst_178 : f32 to vector<8x256xf32>
    %461 = arith.mulf %460, %459 : vector<8x256xf32>
    %462 = math.tanh %461 : vector<8x256xf32>
    %cst_179 = arith.constant 5.000000e-01 : f32
    %463 = vector.broadcast %cst_179 : f32 to vector<8x256xf32>
    %464 = arith.mulf %463, %462 : vector<8x256xf32>
    %cst_180 = arith.constant 5.000000e-01 : f32
    %465 = vector.broadcast %cst_180 : f32 to vector<8x256xf32>
    %466 = arith.addf %464, %465 : vector<8x256xf32>
    %467 = vector.extract_strided_slice %446 {offsets = [0, 512], sizes = [8, 256], strides = [1, 1]} : vector<8x1024xf32> to vector<8x256xf32>
    %468 = math.tanh %467 : vector<8x256xf32>
    %469 = vector.extract_strided_slice %446 {offsets = [0, 768], sizes = [8, 256], strides = [1, 1]} : vector<8x1024xf32> to vector<8x256xf32>
    %cst_181 = arith.constant 5.000000e-01 : f32
    %470 = vector.broadcast %cst_181 : f32 to vector<8x256xf32>
    %471 = arith.mulf %470, %469 : vector<8x256xf32>
    %472 = math.tanh %471 : vector<8x256xf32>
    %cst_182 = arith.constant 5.000000e-01 : f32
    %473 = vector.broadcast %cst_182 : f32 to vector<8x256xf32>
    %474 = arith.mulf %473, %472 : vector<8x256xf32>
    %cst_183 = arith.constant 5.000000e-01 : f32
    %475 = vector.broadcast %cst_183 : f32 to vector<8x256xf32>
    %476 = arith.addf %474, %475 : vector<8x256xf32>
    %477 = arith.mulf %466, %401 : vector<8x256xf32>
    %478 = arith.mulf %458, %468 : vector<8x256xf32>
    %479 = arith.addf %477, %478 : vector<8x256xf32>
    %480 = math.tanh %479 : vector<8x256xf32>
    %481 = arith.mulf %476, %480 : vector<8x256xf32>
    %482 = vector.extract_strided_slice %450 {offsets = [0, 0], sizes = [8, 256], strides = [1, 1]} : vector<8x1024xf32> to vector<8x256xf32>
    %cst_184 = arith.constant 5.000000e-01 : f32
    %483 = vector.broadcast %cst_184 : f32 to vector<8x256xf32>
    %484 = arith.mulf %483, %482 : vector<8x256xf32>
    %485 = math.tanh %484 : vector<8x256xf32>
    %cst_185 = arith.constant 5.000000e-01 : f32
    %486 = vector.broadcast %cst_185 : f32 to vector<8x256xf32>
    %487 = arith.mulf %486, %485 : vector<8x256xf32>
    %cst_186 = arith.constant 5.000000e-01 : f32
    %488 = vector.broadcast %cst_186 : f32 to vector<8x256xf32>
    %489 = arith.addf %487, %488 : vector<8x256xf32>
    %490 = vector.extract_strided_slice %450 {offsets = [0, 256], sizes = [8, 256], strides = [1, 1]} : vector<8x1024xf32> to vector<8x256xf32>
    %cst_187 = arith.constant 5.000000e-01 : f32
    %491 = vector.broadcast %cst_187 : f32 to vector<8x256xf32>
    %492 = arith.mulf %491, %490 : vector<8x256xf32>
    %493 = math.tanh %492 : vector<8x256xf32>
    %cst_188 = arith.constant 5.000000e-01 : f32
    %494 = vector.broadcast %cst_188 : f32 to vector<8x256xf32>
    %495 = arith.mulf %494, %493 : vector<8x256xf32>
    %cst_189 = arith.constant 5.000000e-01 : f32
    %496 = vector.broadcast %cst_189 : f32 to vector<8x256xf32>
    %497 = arith.addf %495, %496 : vector<8x256xf32>
    %498 = vector.extract_strided_slice %450 {offsets = [0, 512], sizes = [8, 256], strides = [1, 1]} : vector<8x1024xf32> to vector<8x256xf32>
    %499 = math.tanh %498 : vector<8x256xf32>
    %500 = vector.extract_strided_slice %450 {offsets = [0, 768], sizes = [8, 256], strides = [1, 1]} : vector<8x1024xf32> to vector<8x256xf32>
    %cst_190 = arith.constant 5.000000e-01 : f32
    %501 = vector.broadcast %cst_190 : f32 to vector<8x256xf32>
    %502 = arith.mulf %501, %500 : vector<8x256xf32>
    %503 = math.tanh %502 : vector<8x256xf32>
    %cst_191 = arith.constant 5.000000e-01 : f32
    %504 = vector.broadcast %cst_191 : f32 to vector<8x256xf32>
    %505 = arith.mulf %504, %503 : vector<8x256xf32>
    %cst_192 = arith.constant 5.000000e-01 : f32
    %506 = vector.broadcast %cst_192 : f32 to vector<8x256xf32>
    %507 = arith.addf %505, %506 : vector<8x256xf32>
    %508 = arith.mulf %497, %432 : vector<8x256xf32>
    %509 = arith.mulf %489, %499 : vector<8x256xf32>
    %510 = arith.addf %508, %509 : vector<8x256xf32>
    %511 = math.tanh %510 : vector<8x256xf32>
    %512 = arith.mulf %507, %511 : vector<8x256xf32>
    %513 = arith.truncf %481 : vector<8x256xf32> to vector<8x256xbf16>
    %c0_193 = arith.constant 0 : index
    %c0_194 = arith.constant 0 : index
    %514 = vector.load %arg5[%c0_193, %c0_194] : memref<256x1024xbf16, #tpu.memory_space<vmem>>, vector<256x1024xbf16>
    %cst_195 = arith.constant dense<0.000000e+00> : vector<8x1024xf32>
    %515 = tpu.matmul %513, %514, %cst_195 {dimension_numbers = #tpu.dot_dimension_numbers<[1], [0], [0], [1], [0, 0, 1, 1], [], []>} : vector<8x256xbf16>, vector<256x1024xbf16>, vector<8x1024xf32> -> vector<8x1024xf32>
    %516 = arith.addf %515, %12 : vector<8x1024xf32>
    %c7_i32 = arith.constant 7 : i32
    %c8_i32_196 = arith.constant 8 : i32
    %517 = arith.muli %c7_i32, %c8_i32_196 : i32
    %518 = tpu.assume_multiple %517, 8 : i32
    %519 = arith.index_cast %518 : i32 to index
    %c0_197 = arith.constant 0 : index
    %520 = vector.load %arg11[%519, %c0_197] : memref<64x1024xf32, #tpu.memory_space<vmem>>, vector<8x1024xf32>
    %521 = arith.truncf %481 : vector<8x256xf32> to vector<8x256xbf16>
    %c0_198 = arith.constant 0 : index
    %c0_199 = arith.constant 0 : index
    %522 = vector.load %arg3[%c0_198, %c0_199] : memref<256x1024xbf16, #tpu.memory_space<vmem>>, vector<256x1024xbf16>
    %cst_200 = arith.constant dense<0.000000e+00> : vector<8x1024xf32>
    %523 = tpu.matmul %521, %522, %cst_200 {dimension_numbers = #tpu.dot_dimension_numbers<[1], [0], [0], [1], [0, 0, 1, 1], [], []>} : vector<8x256xbf16>, vector<256x1024xbf16>, vector<8x1024xf32> -> vector<8x1024xf32>
    %524 = arith.addf %520, %523 : vector<8x1024xf32>
    %525 = arith.truncf %512 : vector<8x256xf32> to vector<8x256xbf16>
    %c0_201 = arith.constant 0 : index
    %c0_202 = arith.constant 0 : index
    %526 = vector.load %arg6[%c0_201, %c0_202] : memref<256x1024xbf16, #tpu.memory_space<vmem>>, vector<256x1024xbf16>
    %cst_203 = arith.constant dense<0.000000e+00> : vector<8x1024xf32>
    %527 = tpu.matmul %525, %526, %cst_203 {dimension_numbers = #tpu.dot_dimension_numbers<[1], [0], [0], [1], [0, 0, 1, 1], [], []>} : vector<8x256xbf16>, vector<256x1024xbf16>, vector<8x1024xf32> -> vector<8x1024xf32>
    %528 = arith.addf %516, %527 : vector<8x1024xf32>
    %529 = vector.extract_strided_slice %524 {offsets = [0, 0], sizes = [8, 256], strides = [1, 1]} : vector<8x1024xf32> to vector<8x256xf32>
    %cst_204 = arith.constant 5.000000e-01 : f32
    %530 = vector.broadcast %cst_204 : f32 to vector<8x256xf32>
    %531 = arith.mulf %530, %529 : vector<8x256xf32>
    %532 = math.tanh %531 : vector<8x256xf32>
    %cst_205 = arith.constant 5.000000e-01 : f32
    %533 = vector.broadcast %cst_205 : f32 to vector<8x256xf32>
    %534 = arith.mulf %533, %532 : vector<8x256xf32>
    %cst_206 = arith.constant 5.000000e-01 : f32
    %535 = vector.broadcast %cst_206 : f32 to vector<8x256xf32>
    %536 = arith.addf %534, %535 : vector<8x256xf32>
    %537 = vector.extract_strided_slice %524 {offsets = [0, 256], sizes = [8, 256], strides = [1, 1]} : vector<8x1024xf32> to vector<8x256xf32>
    %cst_207 = arith.constant 5.000000e-01 : f32
    %538 = vector.broadcast %cst_207 : f32 to vector<8x256xf32>
    %539 = arith.mulf %538, %537 : vector<8x256xf32>
    %540 = math.tanh %539 : vector<8x256xf32>
    %cst_208 = arith.constant 5.000000e-01 : f32
    %541 = vector.broadcast %cst_208 : f32 to vector<8x256xf32>
    %542 = arith.mulf %541, %540 : vector<8x256xf32>
    %cst_209 = arith.constant 5.000000e-01 : f32
    %543 = vector.broadcast %cst_209 : f32 to vector<8x256xf32>
    %544 = arith.addf %542, %543 : vector<8x256xf32>
    %545 = vector.extract_strided_slice %524 {offsets = [0, 512], sizes = [8, 256], strides = [1, 1]} : vector<8x1024xf32> to vector<8x256xf32>
    %546 = math.tanh %545 : vector<8x256xf32>
    %547 = vector.extract_strided_slice %524 {offsets = [0, 768], sizes = [8, 256], strides = [1, 1]} : vector<8x1024xf32> to vector<8x256xf32>
    %cst_210 = arith.constant 5.000000e-01 : f32
    %548 = vector.broadcast %cst_210 : f32 to vector<8x256xf32>
    %549 = arith.mulf %548, %547 : vector<8x256xf32>
    %550 = math.tanh %549 : vector<8x256xf32>
    %cst_211 = arith.constant 5.000000e-01 : f32
    %551 = vector.broadcast %cst_211 : f32 to vector<8x256xf32>
    %552 = arith.mulf %551, %550 : vector<8x256xf32>
    %cst_212 = arith.constant 5.000000e-01 : f32
    %553 = vector.broadcast %cst_212 : f32 to vector<8x256xf32>
    %554 = arith.addf %552, %553 : vector<8x256xf32>
    %555 = arith.mulf %544, %479 : vector<8x256xf32>
    %556 = arith.mulf %536, %546 : vector<8x256xf32>
    %557 = arith.addf %555, %556 : vector<8x256xf32>
    %558 = math.tanh %557 : vector<8x256xf32>
    %559 = arith.mulf %554, %558 : vector<8x256xf32>
    %560 = vector.extract_strided_slice %528 {offsets = [0, 0], sizes = [8, 256], strides = [1, 1]} : vector<8x1024xf32> to vector<8x256xf32>
    %cst_213 = arith.constant 5.000000e-01 : f32
    %561 = vector.broadcast %cst_213 : f32 to vector<8x256xf32>
    %562 = arith.mulf %561, %560 : vector<8x256xf32>
    %563 = math.tanh %562 : vector<8x256xf32>
    %cst_214 = arith.constant 5.000000e-01 : f32
    %564 = vector.broadcast %cst_214 : f32 to vector<8x256xf32>
    %565 = arith.mulf %564, %563 : vector<8x256xf32>
    %cst_215 = arith.constant 5.000000e-01 : f32
    %566 = vector.broadcast %cst_215 : f32 to vector<8x256xf32>
    %567 = arith.addf %565, %566 : vector<8x256xf32>
    %568 = vector.extract_strided_slice %528 {offsets = [0, 256], sizes = [8, 256], strides = [1, 1]} : vector<8x1024xf32> to vector<8x256xf32>
    %cst_216 = arith.constant 5.000000e-01 : f32
    %569 = vector.broadcast %cst_216 : f32 to vector<8x256xf32>
    %570 = arith.mulf %569, %568 : vector<8x256xf32>
    %571 = math.tanh %570 : vector<8x256xf32>
    %cst_217 = arith.constant 5.000000e-01 : f32
    %572 = vector.broadcast %cst_217 : f32 to vector<8x256xf32>
    %573 = arith.mulf %572, %571 : vector<8x256xf32>
    %cst_218 = arith.constant 5.000000e-01 : f32
    %574 = vector.broadcast %cst_218 : f32 to vector<8x256xf32>
    %575 = arith.addf %573, %574 : vector<8x256xf32>
    %576 = vector.extract_strided_slice %528 {offsets = [0, 512], sizes = [8, 256], strides = [1, 1]} : vector<8x1024xf32> to vector<8x256xf32>
    %577 = math.tanh %576 : vector<8x256xf32>
    %578 = vector.extract_strided_slice %528 {offsets = [0, 768], sizes = [8, 256], strides = [1, 1]} : vector<8x1024xf32> to vector<8x256xf32>
    %cst_219 = arith.constant 5.000000e-01 : f32
    %579 = vector.broadcast %cst_219 : f32 to vector<8x256xf32>
    %580 = arith.mulf %579, %578 : vector<8x256xf32>
    %581 = math.tanh %580 : vector<8x256xf32>
    %cst_220 = arith.constant 5.000000e-01 : f32
    %582 = vector.broadcast %cst_220 : f32 to vector<8x256xf32>
    %583 = arith.mulf %582, %581 : vector<8x256xf32>
    %cst_221 = arith.constant 5.000000e-01 : f32
    %584 = vector.broadcast %cst_221 : f32 to vector<8x256xf32>
    %585 = arith.addf %583, %584 : vector<8x256xf32>
    %586 = arith.mulf %575, %510 : vector<8x256xf32>
    %587 = arith.mulf %567, %577 : vector<8x256xf32>
    %588 = arith.addf %586, %587 : vector<8x256xf32>
    %589 = math.tanh %588 : vector<8x256xf32>
    %590 = arith.mulf %585, %589 : vector<8x256xf32>
    %591 = arith.truncf %559 : vector<8x256xf32> to vector<8x256xbf16>
    %c0_222 = arith.constant 0 : index
    %c0_223 = arith.constant 0 : index
    %592 = vector.load %arg5[%c0_222, %c0_223] : memref<256x1024xbf16, #tpu.memory_space<vmem>>, vector<256x1024xbf16>
    %cst_224 = arith.constant dense<0.000000e+00> : vector<8x1024xf32>
    %593 = tpu.matmul %591, %592, %cst_224 {dimension_numbers = #tpu.dot_dimension_numbers<[1], [0], [0], [1], [0, 0, 1, 1], [], []>} : vector<8x256xbf16>, vector<256x1024xbf16>, vector<8x1024xf32> -> vector<8x1024xf32>
    %594 = arith.addf %593, %12 : vector<8x1024xf32>
    %c7_i32_225 = arith.constant 7 : i32
    %595 = arith.truncf %590 : vector<8x256xf32> to vector<8x256xbf16>
    %c0_226 = arith.constant 0 : index
    %c0_227 = arith.constant 0 : index
    %596 = vector.load %arg6[%c0_226, %c0_227] : memref<256x1024xbf16, #tpu.memory_space<vmem>>, vector<256x1024xbf16>
    %cst_228 = arith.constant dense<0.000000e+00> : vector<8x1024xf32>
    %597 = tpu.matmul %595, %596, %cst_228 {dimension_numbers = #tpu.dot_dimension_numbers<[1], [0], [0], [1], [0, 0, 1, 1], [], []>} : vector<8x256xbf16>, vector<256x1024xbf16>, vector<8x1024xf32> -> vector<8x1024xf32>
    %598 = arith.addf %594, %597 : vector<8x1024xf32>
    %599 = vector.extract_strided_slice %598 {offsets = [0, 0], sizes = [8, 256], strides = [1, 1]} : vector<8x1024xf32> to vector<8x256xf32>
    %cst_229 = arith.constant 5.000000e-01 : f32
    %600 = vector.broadcast %cst_229 : f32 to vector<8x256xf32>
    %601 = arith.mulf %600, %599 : vector<8x256xf32>
    %602 = math.tanh %601 : vector<8x256xf32>
    %cst_230 = arith.constant 5.000000e-01 : f32
    %603 = vector.broadcast %cst_230 : f32 to vector<8x256xf32>
    %604 = arith.mulf %603, %602 : vector<8x256xf32>
    %cst_231 = arith.constant 5.000000e-01 : f32
    %605 = vector.broadcast %cst_231 : f32 to vector<8x256xf32>
    %606 = arith.addf %604, %605 : vector<8x256xf32>
    %607 = vector.extract_strided_slice %598 {offsets = [0, 256], sizes = [8, 256], strides = [1, 1]} : vector<8x1024xf32> to vector<8x256xf32>
    %cst_232 = arith.constant 5.000000e-01 : f32
    %608 = vector.broadcast %cst_232 : f32 to vector<8x256xf32>
    %609 = arith.mulf %608, %607 : vector<8x256xf32>
    %610 = math.tanh %609 : vector<8x256xf32>
    %cst_233 = arith.constant 5.000000e-01 : f32
    %611 = vector.broadcast %cst_233 : f32 to vector<8x256xf32>
    %612 = arith.mulf %611, %610 : vector<8x256xf32>
    %cst_234 = arith.constant 5.000000e-01 : f32
    %613 = vector.broadcast %cst_234 : f32 to vector<8x256xf32>
    %614 = arith.addf %612, %613 : vector<8x256xf32>
    %615 = vector.extract_strided_slice %598 {offsets = [0, 512], sizes = [8, 256], strides = [1, 1]} : vector<8x1024xf32> to vector<8x256xf32>
    %616 = math.tanh %615 : vector<8x256xf32>
    %617 = vector.extract_strided_slice %598 {offsets = [0, 768], sizes = [8, 256], strides = [1, 1]} : vector<8x1024xf32> to vector<8x256xf32>
    %cst_235 = arith.constant 5.000000e-01 : f32
    %618 = vector.broadcast %cst_235 : f32 to vector<8x256xf32>
    %619 = arith.mulf %618, %617 : vector<8x256xf32>
    %620 = math.tanh %619 : vector<8x256xf32>
    %cst_236 = arith.constant 5.000000e-01 : f32
    %621 = vector.broadcast %cst_236 : f32 to vector<8x256xf32>
    %622 = arith.mulf %621, %620 : vector<8x256xf32>
    %cst_237 = arith.constant 5.000000e-01 : f32
    %623 = vector.broadcast %cst_237 : f32 to vector<8x256xf32>
    %624 = arith.addf %622, %623 : vector<8x256xf32>
    %625 = arith.mulf %614, %588 : vector<8x256xf32>
    %626 = arith.mulf %606, %616 : vector<8x256xf32>
    %627 = arith.addf %625, %626 : vector<8x256xf32>
    %628 = math.tanh %627 : vector<8x256xf32>
    %629 = arith.mulf %624, %628 : vector<8x256xf32>
    %630 = arith.truncf %629 : vector<8x256xf32> to vector<8x256xbf16>
    %c0_238 = arith.constant 0 : index
    %c0_239 = arith.constant 0 : index
    %631 = vector.load %arg8[%c0_238, %c0_239] : memref<256x128xbf16, #tpu.memory_space<vmem>>, vector<256x128xbf16>
    %cst_240 = arith.constant dense<0.000000e+00> : vector<8x128xf32>
    %632 = tpu.matmul %630, %631, %cst_240 {dimension_numbers = #tpu.dot_dimension_numbers<[1], [0], [0], [1], [0, 0, 1, 1], [], []>} : vector<8x256xbf16>, vector<256x128xbf16>, vector<8x128xf32> -> vector<8x128xf32>
    %c0_241 = arith.constant 0 : index
    %c0_242 = arith.constant 0 : index
    %633 = vector.load %arg9[%c0_241, %c0_242] : memref<1x128xf32, #tpu.memory_space<vmem>>, vector<1x128xf32>
    %634 = vector.broadcast %633 : vector<1x128xf32> to vector<8x128xf32>
    %635 = arith.addf %632, %634 : vector<8x128xf32>
    %c0_243 = arith.constant 0 : index
    %c0_244 = arith.constant 0 : index
    %636 = vector.load %arg10[%c0_243, %c0_244] : memref<8x128xf32, #tpu.memory_space<vmem>>, vector<8x128xf32>
    tpu.vector_store %arg10[%c0_243, %c0_244], %635 {strides = array<i32>} : memref<8x128xf32, #tpu.memory_space<vmem>>, vector<8x128xf32>,
    return
  }
  func.func @transform_0(%arg0: i32) -> (i32, i32) {
    %c0_i32 = arith.constant 0 : i32
    %c0_i32_0 = arith.constant 0 : i32
    %c0_i32_1 = arith.constant 0 : i32
    return %c0_i32, %c0_i32_0 : i32, i32
  }
  func.func @transform_1(%arg0: i32) -> (i32, i32) {
    %c0_i32 = arith.constant 0 : i32
    %c0_i32_0 = arith.constant 0 : i32
    %c0_i32_1 = arith.constant 0 : i32
    return %c0_i32, %c0_i32_0 : i32, i32
  }
  func.func @transform_2(%arg0: i32) -> (i32, i32) {
    %c0_i32 = arith.constant 0 : i32
    %c0_i32_0 = arith.constant 0 : i32
    %c0_i32_1 = arith.constant 0 : i32
    return %c0_i32, %c0_i32_0 : i32, i32
  }
  func.func @transform_3(%arg0: i32) -> (i32, i32) {
    %c0_i32 = arith.constant 0 : i32
    %c0_i32_0 = arith.constant 0 : i32
    %c0_i32_1 = arith.constant 0 : i32
    return %c0_i32, %c0_i32_0 : i32, i32
  }
  func.func @transform_4(%arg0: i32) -> (i32, i32) {
    %c0_i32 = arith.constant 0 : i32
    %c0_i32_0 = arith.constant 0 : i32
    %c0_i32_1 = arith.constant 0 : i32
    return %c0_i32, %c0_i32_0 : i32, i32
  }
  func.func @transform_5(%arg0: i32) -> (i32, i32) {
    %c0_i32 = arith.constant 0 : i32
    %c0_i32_0 = arith.constant 0 : i32
    %c0_i32_1 = arith.constant 0 : i32
    return %c0_i32, %c0_i32_0 : i32, i32
  }
  func.func @transform_6(%arg0: i32) -> (i32, i32) {
    %c0_i32 = arith.constant 0 : i32
    %c0_i32_0 = arith.constant 0 : i32
    %c0_i32_1 = arith.constant 0 : i32
    return %c0_i32, %c0_i32_0 : i32, i32
  }
  func.func @transform_7(%arg0: i32) -> (i32, i32) {
    %c0_i32 = arith.constant 0 : i32
    %c0_i32_0 = arith.constant 0 : i32
    %c0_i32_1 = arith.constant 0 : i32
    return %c0_i32, %c0_i32_0 : i32, i32
  }
  func.func @transform_8(%arg0: i32) -> (i32, i32) {
    %c0_i32 = arith.constant 0 : i32
    %c0_i32_0 = arith.constant 0 : i32
    %c0_i32_1 = arith.constant 0 : i32
    return %c0_i32, %c0_i32_0 : i32, i32
  }
  func.func @transform_9(%arg0: i32) -> (i32, i32) {
    %c0_i32 = arith.constant 0 : i32
    %c0_i32_0 = arith.constant 0 : i32
    %c0_i32_1 = arith.constant 0 : i32
    return %c0_i32, %c0_i32_0 : i32, i32
  }
}

</mosaic_0001>

<llo_original>
// kernel: lstm_model_forward.1
$region0: #{lstm_model_forward.1}
  #allocation0 [shape = 'u32[]', space=smem, size = 0x4, offset = 0x4, fixed_abs, tag = 'smem constant byte address 0x4 - core index']
  #allocation1 [shape = 'u32[144,128]{1,0:T(1,128)}', space=vmem, size = 0x12000, scoped, tag = 'internal scratch']
  #allocation2 [shape = 'f32[64,1024]{1,0:T(8,128)}', space=vmem, size = 0x40000, scoped, tag = 'scratch operand']
  %s0 = inlined_call_operand.vmem [shape: f32[64,1], index: 0, kind: input, shape index: {}]
  %s1 = inlined_call_operand.vmem [shape: f32[1,1024], index: 1, kind: input, shape index: {}]
  %s2 = inlined_call_operand.hbm [shape: bf16[256,1024], index: 2, kind: input, shape index: {}]
  %s3 = inlined_call_operand.vmem [shape: f32[1,1024], index: 3, kind: input, shape index: {}]
  %s4 = inlined_call_operand.hbm [shape: bf16[256,1024], index: 4, kind: input, shape index: {}]
  %s5 = inlined_call_operand.hbm [shape: bf16[256,1024], index: 5, kind: input, shape index: {}]
  %s6 = inlined_call_operand.vmem [shape: f32[1,1024], index: 6, kind: input, shape index: {}]
  %s7 = inlined_call_operand.hbm [shape: bf16[256,128], index: 7, kind: input, shape index: {}]
  %s8 = inlined_call_operand.vmem [shape: f32[1,128], index: 8, kind: input, shape index: {}]
  %s9 = inlined_call_operand.vmem [shape: f32[8,128], index: 9, kind: output, shape index: {}]
  %s10 = sld [smem:[#allocation0]]
  $region62: #{lstm_model_forward.1} parent=0
    _
  %s12 = ssub.s32 1, %s10
  %s13 = scalar_select 0, %s12, %s10
  $region1: #{lstm_model_forward.1} parent=0
    #allocation3 [shape = 'u8[524288]{0}', space=vmem, size = 0x80000, scoped, tag = 'input window, operand 2, single buffered']
    #allocation4 [shape = 's32[1]{0}', space=sflag, size = 0x4, scoped, tag = 'scoped memory for lstm_model_forward.1']
    #allocation5 [shape = 'u8[524288]{0}', space=vmem, size = 0x80000, scoped, tag = 'input window, operand 4, single buffered']
    #allocation6 [shape = 's32[1]{0}', space=sflag, size = 0x4, scoped, tag = 'scoped memory for lstm_model_forward.1']
    #allocation7 [shape = 'u8[524288]{0}', space=vmem, size = 0x80000, scoped, tag = 'input window, operand 5, single buffered']
    #allocation8 [shape = 'u8[65536]{0}', space=vmem, size = 0x10000, scoped, tag = 'input window, operand 7, single buffered']
    #allocation9 [shape = 's32[1]{0}', space=sflag, size = 0x4, scoped, tag = 'scoped memory for lstm_model_forward.1']
    %14 = vsyncpa [#allocation4], 0
    %15 = vsyncpa [#allocation6], 0
    %16 = vsyncpa [#allocation9], 0
    // Predicated region
    $region2: #{lstm_model_forward.1} parent=1 // pred_check
      _
    $region3: #{lstm_model_forward.1} parent=1 // pred_check_branch
      %18 = sbr.rel (0) target = $region5
    $region4: #{lstm_model_forward.1} parent=1 // pred_region
      _
    $region5: #{lstm_model_forward.1} parent=1 // pred_fallthru
      _
    // Predicated region
    $region6: #{lstm_model_forward.1} parent=1 // pred_check
      _
    $region7: #{lstm_model_forward.1} parent=1 // pred_check_branch
      %20 = sbr.rel (0) target = $region9
    $region8: #{lstm_model_forward.1} parent=1 // pred_region
      _
    $region9: #{lstm_model_forward.1} parent=1 // pred_fallthru
      _
    // Predicated region
    $region10: #{lstm_model_forward.1} parent=1 // pred_check
      _
    $region11: #{lstm_model_forward.1} parent=1 // pred_check_branch
      %22 = sbr.rel (0) target = $region13
    $region12: #{lstm_model_forward.1} parent=1 // pred_region
      %s24 = ssub.s32 16384, 16384
      %25 = vsyncadd [#allocation4], %s24
      %s26 = sshll.u32 [#allocation3], 4
      %s27 = int_to_ptr.vmem [resolvable:$true] %s26
      %32 = dma.hbm_to_vmem [thread:$0]  %s2, 16384, %s27, [#allocation4], 512, 512, 32
    $region13: #{lstm_model_forward.1} parent=1 // pred_fallthru
      _
    // Predicated region
    $region14: #{lstm_model_forward.1} parent=1 // pred_check
      _
    $region15: #{lstm_model_forward.1} parent=1 // pred_check_branch
      %34 = sbr.rel (0) target = $region17
    $region16: #{lstm_model_forward.1} parent=1 // pred_region
      _
    $region17: #{lstm_model_forward.1} parent=1 // pred_fallthru
      _
    // Predicated region
    $region18: #{lstm_model_forward.1} parent=1 // pred_check
      _
    $region19: #{lstm_model_forward.1} parent=1 // pred_check_branch
      %36 = sbr.rel (0) target = $region21
    $region20: #{lstm_model_forward.1} parent=1 // pred_region
      %s38 = ssub.s32 16384, 16384
      %39 = vsyncadd [#allocation6], %s38
      %s40 = sshll.u32 [#allocation5], 4
      %s41 = int_to_ptr.vmem [resolvable:$true] %s40
      %46 = dma.hbm_to_vmem [thread:$0]  %s4, 16384, %s41, [#allocation6], 512, 512, 32
    $region21: #{lstm_model_forward.1} parent=1 // pred_fallthru
      _
    // Predicated region
    $region22: #{lstm_model_forward.1} parent=1 // pred_check
      _
    $region23: #{lstm_model_forward.1} parent=1 // pred_check_branch
      %48 = sbr.rel (0) target = $region25
    $region24: #{lstm_model_forward.1} parent=1 // pred_region
      %s50 = ssub.s32 16384, 16384
      %51 = vsyncadd [#allocation6], %s50
      %s52 = sshll.u32 [#allocation7], 4
      %s53 = int_to_ptr.vmem [resolvable:$true] %s52
      %58 = dma.hbm_to_vmem [thread:$0]  %s5, 16384, %s53, [#allocation6], 512, 512, 32
    $region25: #{lstm_model_forward.1} parent=1 // pred_fallthru
      _
    // Predicated region
    $region26: #{lstm_model_forward.1} parent=1 // pred_check
      _
    $region27: #{lstm_model_forward.1} parent=1 // pred_check_branch
      %60 = sbr.rel (0) target = $region29
    $region28: #{lstm_model_forward.1} parent=1 // pred_region
      _
    $region29: #{lstm_model_forward.1} parent=1 // pred_fallthru
      _
    // Predicated region
    $region30: #{lstm_model_forward.1} parent=1 // pred_check
      _
    $region31: #{lstm_model_forward.1} parent=1 // pred_check_branch
      %62 = sbr.rel (0) target = $region33
    $region32: #{lstm_model_forward.1} parent=1 // pred_region
      %s64 = ssub.s32 2048, 2048
      %65 = vsyncadd [#allocation9], %s64
      %s66 = sshll.u32 [#allocation8], 4
      %s67 = int_to_ptr.vmem [resolvable:$true] %s66
      %72 = dma.hbm_to_vmem [thread:$0]  %s7, 2048, %s67, [#allocation9], 64, 64, 4
    $region33: #{lstm_model_forward.1} parent=1 // pred_fallthru
      _
    // Predicated region
    $region34: #{lstm_model_forward.1} parent=1 // pred_check
      _
    $region35: #{lstm_model_forward.1} parent=1 // pred_check_branch
      %74 = sbr.rel (0) target = $region37
    $region36: #{lstm_model_forward.1} parent=1 // pred_region
      _
    $region37: #{lstm_model_forward.1} parent=1 // pred_fallthru
      _
    // Predicated region
    $region38: #{lstm_model_forward.1} parent=1 // pred_check
      _
    $region39: #{lstm_model_forward.1} parent=1 // pred_check_branch
      %76 = sbr.rel (0) target = $region41
    $region40: #{lstm_model_forward.1} parent=1 // pred_region
      %77 = dma.done [#allocation4], 16384
    $region41: #{lstm_model_forward.1} parent=1 // pred_fallthru
      _
    // Predicated region
    $region42: #{lstm_model_forward.1} parent=1 // pred_check
      _
    $region43: #{lstm_model_forward.1} parent=1 // pred_check_branch
      %79 = sbr.rel (0) target = $region45
    $region44: #{lstm_model_forward.1} parent=1 // pred_region
      %80 = dma.done [#allocation6], 16384
    $region45: #{lstm_model_forward.1} parent=1 // pred_fallthru
      _
    // Predicated region
    $region46: #{lstm_model_forward.1} parent=1 // pred_check
      _
    $region47: #{lstm_model_forward.1} parent=1 // pred_check_branch
      %82 = sbr.rel (0) target = $region49
    $region48: #{lstm_model_forward.1} parent=1 // pred_region
      %83 = dma.done [#allocation6], 16384
    $region49: #{lstm_model_forward.1} parent=1 // pred_fallthru
      _
    // Predicated region
    $region50: #{lstm_model_forward.1} parent=1 // pred_check
      _
    $region51: #{lstm_model_forward.1} parent=1 // pred_check_branch
      %85 = sbr.rel (0) target = $region53
    $region52: #{lstm_model_forward.1} parent=1 // pred_region
      %86 = dma.done [#allocation9], 2048
    $region53: #{lstm_model_forward.1} parent=1 // pred_fallthru
      _
    %v88 = vld [vmem:[%s0] sm:$0xff]
    %v89 = vld [vmem:[%s0 + $0x8] sm:$0xff]
    %v90 = vld [vmem:[%s0 + $0x10] sm:$0xff]
    %v91 = vld [vmem:[%s0 + $0x18] sm:$0xff]
    %v92 = vld [vmem:[%s0 + $0x20] sm:$0xff]
    %v93 = vld [vmem:[%s0 + $0x28] sm:$0xff]
    %v94 = vld [vmem:[%s0 + $0x30] sm:$0xff]
    %v95 = vld [vmem:[%s0 + $0x38] sm:$0xff]
    %v96 = vld [vmem:[%s1] sm:$0xff]
    %98 = vset.pattern.permute.xlu0 0
    %99 = vperm.xlu0 %98, %v88
    %v100 = vpop.permute.xlu0 %99
    %103 = vset.pattern.permute.xlu0 0
    %104 = vperm.xlu0 %103, %v89
    %v105 = vpop.permute.xlu0 %104
    %108 = vset.pattern.permute.xlu0 0
    %109 = vperm.xlu0 %108, %v90
    %v110 = vpop.permute.xlu0 %109
    %113 = vset.pattern.permute.xlu0 0
    %114 = vperm.xlu0 %113, %v91
    %v115 = vpop.permute.xlu0 %114
    %118 = vset.pattern.permute.xlu0 0
    %119 = vperm.xlu0 %118, %v92
    %v120 = vpop.permute.xlu0 %119
    %123 = vset.pattern.permute.xlu0 0
    %124 = vperm.xlu0 %123, %v93
    %v125 = vpop.permute.xlu0 %124
    %128 = vset.pattern.permute.xlu0 0
    %129 = vperm.xlu0 %128, %v94
    %v130 = vpop.permute.xlu0 %129
    %133 = vset.pattern.permute.xlu0 0
    %134 = vperm.xlu0 %133, %v95
    %v135 = vpop.permute.xlu0 %134
    %v138 = vlaneseq
    %v139 = vshrl.u32 %v138, 7
    %v140 = vsub.s32 0, %v139
    %v141 = vrot.slane %v96, %v140
    %v142 = vlaneseq
    %v143 = vshrl.u32 %v142, 7
    %v144 = vsub.s32 1, %v143
    %v145 = vrot.slane %v96, %v144
    %v146 = vlaneseq
    %v147 = vshrl.u32 %v146, 7
    %v148 = vsub.s32 2, %v147
    %v149 = vrot.slane %v96, %v148
    %v150 = vlaneseq
    %v151 = vshrl.u32 %v150, 7
    %v152 = vsub.s32 3, %v151
    %v153 = vrot.slane %v96, %v152
    %v154 = vlaneseq
    %v155 = vshrl.u32 %v154, 7
    %v156 = vsub.s32 4, %v155
    %v157 = vrot.slane %v96, %v156
    %v158 = vlaneseq
    %v159 = vshrl.u32 %v158, 7
    %v160 = vsub.s32 5, %v159
    %v161 = vrot.slane %v96, %v160
    %v162 = vlaneseq
    %v163 = vshrl.u32 %v162, 7
    %v164 = vsub.s32 6, %v163
    %v165 = vrot.slane %v96, %v164
    %v166 = vlaneseq
    %v167 = vshrl.u32 %v166, 7
    %v168 = vsub.s32 7, %v167
    %v169 = vrot.slane %v96, %v168
    %v178 = vmul.f32 %v100, %v141
    %v179 = vmul.f32 %v100, %v145
    %v180 = vmul.f32 %v100, %v149
    %v181 = vmul.f32 %v100, %v153
    %v182 = vmul.f32 %v100, %v157
    %v183 = vmul.f32 %v100, %v161
    %v184 = vmul.f32 %v100, %v165
    %v185 = vmul.f32 %v100, %v169
    %v186 = vmul.f32 %v105, %v141
    %v187 = vmul.f32 %v105, %v145
    %v188 = vmul.f32 %v105, %v149
    %v189 = vmul.f32 %v105, %v153
    %v190 = vmul.f32 %v105, %v157
    %v191 = vmul.f32 %v105, %v161
    %v192 = vmul.f32 %v105, %v165
    %v193 = vmul.f32 %v105, %v169
    %v194 = vmul.f32 %v110, %v141
    %v195 = vmul.f32 %v110, %v145
    %v196 = vmul.f32 %v110, %v149
    %v197 = vmul.f32 %v110, %v153
    %v198 = vmul.f32 %v110, %v157
    %v199 = vmul.f32 %v110, %v161
    %v200 = vmul.f32 %v110, %v165
    %v201 = vmul.f32 %v110, %v169
    %v202 = vmul.f32 %v115, %v141
    %v203 = vmul.f32 %v115, %v145
    %v204 = vmul.f32 %v115, %v149
    %v205 = vmul.f32 %v115, %v153
    %v206 = vmul.f32 %v115, %v157
    %v207 = vmul.f32 %v115, %v161
    %v208 = vmul.f32 %v115, %v165
    %v209 = vmul.f32 %v115, %v169
    %v210 = vmul.f32 %v120, %v141
    %v211 = vmul.f32 %v120, %v145
    %v212 = vmul.f32 %v120, %v149
    %v213 = vmul.f32 %v120, %v153
    %v214 = vmul.f32 %v120, %v157
    %v215 = vmul.f32 %v120, %v161
    %v216 = vmul.f32 %v120, %v165
    %v217 = vmul.f32 %v120, %v169
    %v218 = vmul.f32 %v125, %v141
    %v219 = vmul.f32 %v125, %v145
    %v220 = vmul.f32 %v125, %v149
    %v221 = vmul.f32 %v125, %v153
    %v222 = vmul.f32 %v125, %v157
    %v223 = vmul.f32 %v125, %v161
    %v224 = vmul.f32 %v125, %v165
    %v225 = vmul.f32 %v125, %v169
    %v226 = vmul.f32 %v130, %v141
    %v227 = vmul.f32 %v130, %v145
    %v228 = vmul.f32 %v130, %v149
    %v229 = vmul.f32 %v130, %v153
    %v230 = vmul.f32 %v130, %v157
    %v231 = vmul.f32 %v130, %v161
    %v232 = vmul.f32 %v130, %v165
    %v233 = vmul.f32 %v130, %v169
    %v234 = vmul.f32 %v135, %v141
    %v235 = vmul.f32 %v135, %v145
    %v236 = vmul.f32 %v135, %v149
    %v237 = vmul.f32 %v135, %v153
    %v238 = vmul.f32 %v135, %v157
    %v239 = vmul.f32 %v135, %v161
    %v240 = vmul.f32 %v135, %v165
    %v241 = vmul.f32 %v135, %v169
    %v242 = vld [vmem:[%s3] sm:$0xff]
    %v244 = vlaneseq
    %v245 = vshrl.u32 %v244, 7
    %v246 = vsub.s32 0, %v245
    %v247 = vrot.slane %v242, %v246
    %v248 = vlaneseq
    %v249 = vshrl.u32 %v248, 7
    %v250 = vsub.s32 1, %v249
    %v251 = vrot.slane %v242, %v250
    %v252 = vlaneseq
    %v253 = vshrl.u32 %v252, 7
    %v254 = vsub.s32 2, %v253
    %v255 = vrot.slane %v242, %v254
    %v256 = vlaneseq
    %v257 = vshrl.u32 %v256, 7
    %v258 = vsub.s32 3, %v257
    %v259 = vrot.slane %v242, %v258
    %v260 = vlaneseq
    %v261 = vshrl.u32 %v260, 7
    %v262 = vsub.s32 4, %v261
    %v263 = vrot.slane %v242, %v262
    %v264 = vlaneseq
    %v265 = vshrl.u32 %v264, 7
    %v266 = vsub.s32 5, %v265
    %v267 = vrot.slane %v242, %v266
    %v268 = vlaneseq
    %v269 = vshrl.u32 %v268, 7
    %v270 = vsub.s32 6, %v269
    %v271 = vrot.slane %v242, %v270
    %v272 = vlaneseq
    %v273 = vshrl.u32 %v272, 7
    %v274 = vsub.s32 7, %v273
    %v275 = vrot.slane %v242, %v274
    %v284 = vadd.f32 %v178, %v247
    %v285 = vadd.f32 %v179, %v251
    %v286 = vadd.f32 %v180, %v255
    %v287 = vadd.f32 %v181, %v259
    %v288 = vadd.f32 %v182, %v263
    %v289 = vadd.f32 %v183, %v267
    %v290 = vadd.f32 %v184, %v271
    %v291 = vadd.f32 %v185, %v275
    %v292 = vadd.f32 %v186, %v247
    %v293 = vadd.f32 %v187, %v251
    %v294 = vadd.f32 %v188, %v255
    %v295 = vadd.f32 %v189, %v259
    %v296 = vadd.f32 %v190, %v263
    %v297 = vadd.f32 %v191, %v267
    %v298 = vadd.f32 %v192, %v271
    %v299 = vadd.f32 %v193, %v275
    %v300 = vadd.f32 %v194, %v247
    %v301 = vadd.f32 %v195, %v251
    %v302 = vadd.f32 %v196, %v255
    %v303 = vadd.f32 %v197, %v259
    %v304 = vadd.f32 %v198, %v263
    %v305 = vadd.f32 %v199, %v267
    %v306 = vadd.f32 %v200, %v271
    %v307 = vadd.f32 %v201, %v275
    %v308 = vadd.f32 %v202, %v247
    %v309 = vadd.f32 %v203, %v251
    %v310 = vadd.f32 %v204, %v255
    %v311 = vadd.f32 %v205, %v259
    %v312 = vadd.f32 %v206, %v263
    %v313 = vadd.f32 %v207, %v267
    %v314 = vadd.f32 %v208, %v271
    %v315 = vadd.f32 %v209, %v275
    %v316 = vadd.f32 %v210, %v247
    %v317 = vadd.f32 %v211, %v251
    %v318 = vadd.f32 %v212, %v255
    %v319 = vadd.f32 %v213, %v259
    %v320 = vadd.f32 %v214, %v263
    %v321 = vadd.f32 %v215, %v267
    %v322 = vadd.f32 %v216, %v271
    %v323 = vadd.f32 %v217, %v275
    %v324 = vadd.f32 %v218, %v247
    %v325 = vadd.f32 %v219, %v251
    %v326 = vadd.f32 %v220, %v255
    %v327 = vadd.f32 %v221, %v259
    %v328 = vadd.f32 %v222, %v263
    %v329 = vadd.f32 %v223, %v267
    %v330 = vadd.f32 %v224, %v271
    %v331 = vadd.f32 %v225, %v275
    %v332 = vadd.f32 %v226, %v247
    %v333 = vadd.f32 %v227, %v251
    %v334 = vadd.f32 %v228, %v255
    %v335 = vadd.f32 %v229, %v259
    %v336 = vadd.f32 %v230, %v263
    %v337 = vadd.f32 %v231, %v267
    %v338 = vadd.f32 %v232, %v271
    %v339 = vadd.f32 %v233, %v275
    %v340 = vadd.f32 %v234, %v247
    %v341 = vadd.f32 %v235, %v251
    %v342 = vadd.f32 %v236, %v255
    %v343 = vadd.f32 %v237, %v259
    %v344 = vadd.f32 %v238, %v263
    %v345 = vadd.f32 %v239, %v267
    %v346 = vadd.f32 %v240, %v271
    %v347 = vadd.f32 %v241, %v275
    %348 = vst [vmem:[#allocation2] sm:$0xff] %v284
    %349 = vst [vmem:[#allocation2 + $0x8] sm:$0xff] %v285
    %350 = vst [vmem:[#allocation2 + $0x10] sm:$0xff] %v286
    %351 = vst [vmem:[#allocation2 + $0x18] sm:$0xff] %v287
    %352 = vst [vmem:[#allocation2 + $0x20] sm:$0xff] %v288
    %353 = vst [vmem:[#allocation2 + $0x28] sm:$0xff] %v289
    %354 = vst [vmem:[#allocation2 + $0x30] sm:$0xff] %v290
    %355 = vst [vmem:[#allocation2 + $0x38] sm:$0xff] %v291
    %356 = vst [vmem:[#allocation2 + $0x40] sm:$0xff] %v292
    %357 = vst [vmem:[#allocation2 + $0x48] sm:$0xff] %v293
    %358 = vst [vmem:[#allocation2 + $0x50] sm:$0xff] %v294
    %359 = vst [vmem:[#allocation2 + $0x58] sm:$0xff] %v295
    %360 = vst [vmem:[#allocation2 + $0x60] sm:$0xff] %v296
    %361 = vst [vmem:[#allocation2 + $0x68] sm:$0xff] %v297
    %362 = vst [vmem:[#allocation2 + $0x70] sm:$0xff] %v298
    %363 = vst [vmem:[#allocation2 + $0x78] sm:$0xff] %v299
    %364 = vst [vmem:[#allocation2 + $0x80] sm:$0xff] %v300
    %365 = vst [vmem:[#allocation2 + $0x88] sm:$0xff] %v301
    %366 = vst [vmem:[#allocation2 + $0x90] sm:$0xff] %v302
    %367 = vst [vmem:[#allocation2 + $0x98] sm:$0xff] %v303
    %368 = vst [vmem:[#allocation2 + $0xa0] sm:$0xff] %v304
    %369 = vst [vmem:[#allocation2 + $0xa8] sm:$0xff] %v305
    %370 = vst [vmem:[#allocation2 + $0xb0] sm:$0xff] %v306
    %371 = vst [vmem:[#allocation2 + $0xb8] sm:$0xff] %v307
    %372 = vst [vmem:[#allocation2 + $0xc0] sm:$0xff] %v308
    %373 = vst [vmem:[#allocation2 + $0xc8] sm:$0xff] %v309
    %374 = vst [vmem:[#allocation2 + $0xd0] sm:$0xff] %v310
    %375 = vst [vmem:[#allocation2 + $0xd8] sm:$0xff] %v311
    %376 = vst [vmem:[#allocation2 + $0xe0] sm:$0xff] %v312
    %377 = vst [vmem:[#allocation2 + $0xe8] sm:$0xff] %v313
    %378 = vst [vmem:[#allocation2 + $0xf0] sm:$0xff] %v314
    %379 = vst [vmem:[#allocation2 + $0xf8] sm:$0xff] %v315
    %380 = vst [vmem:[#allocation2 + $0x100] sm:$0xff] %v316
    %381 = vst [vmem:[#allocation2 + $0x108] sm:$0xff] %v317
    %382 = vst [vmem:[#allocation2 + $0x110] sm:$0xff] %v318
    %383 = vst [vmem:[#allocation2 + $0x118] sm:$0xff] %v319
    %384 = vst [vmem:[#allocation2 + $0x120] sm:$0xff] %v320
    %385 = vst [vmem:[#allocation2 + $0x128] sm:$0xff] %v321
    %386 = vst [vmem:[#allocation2 + $0x130] sm:$0xff] %v322
    %387 = vst [vmem:[#allocation2 + $0x138] sm:$0xff] %v323
    %388 = vst [vmem:[#allocation2 + $0x140] sm:$0xff] %v324
    %389 = vst [vmem:[#allocation2 + $0x148] sm:$0xff] %v325
    %390 = vst [vmem:[#allocation2 + $0x150] sm:$0xff] %v326
    %391 = vst [vmem:[#allocation2 + $0x158] sm:$0xff] %v327
    %392 = vst [vmem:[#allocation2 + $0x160] sm:$0xff] %v328
    %393 = vst [vmem:[#allocation2 + $0x168] sm:$0xff] %v329
    %394 = vst [vmem:[#allocation2 + $0x170] sm:$0xff] %v330
    %395 = vst [vmem:[#allocation2 + $0x178] sm:$0xff] %v331
    %396 = vst [vmem:[#allocation2 + $0x180] sm:$0xff] %v332
    %397 = vst [vmem:[#allocation2 + $0x188] sm:$0xff] %v333
    %398 = vst [vmem:[#allocation2 + $0x190] sm:$0xff] %v334
    %399 = vst [vmem:[#allocation2 + $0x198] sm:$0xff] %v335
    %400 = vst [vmem:[#allocation2 + $0x1a0] sm:$0xff] %v336
    %401 = vst [vmem:[#allocation2 + $0x1a8] sm:$0xff] %v337
    %402 = vst [vmem:[#allocation2 + $0x1b0] sm:$0xff] %v338
    %403 = vst [vmem:[#allocation2 + $0x1b8] sm:$0xff] %v339
    %404 = vst [vmem:[#allocation2 + $0x1c0] sm:$0xff] %v340
    %405 = vst [vmem:[#allocation2 + $0x1c8] sm:$0xff] %v341
    %406 = vst [vmem:[#allocation2 + $0x1d0] sm:$0xff] %v342
    %407 = vst [vmem:[#allocation2 + $0x1d8] sm:$0xff] %v343
    %408 = vst [vmem:[#allocation2 + $0x1e0] sm:$0xff] %v344
    %409 = vst [vmem:[#allocation2 + $0x1e8] sm:$0xff] %v345
    %410 = vst [vmem:[#allocation2 + $0x1f0] sm:$0xff] %v346
    %411 = vst [vmem:[#allocation2 + $0x1f8] sm:$0xff] %v347
    %v412 = vld [vmem:[%s6] sm:$0xff]
    %v414 = vlaneseq
    %v415 = vshrl.u32 %v414, 7
    %v416 = vsub.s32 0, %v415
    %v417 = vrot.slane %v412, %v416
    %v418 = vlaneseq
    %v419 = vshrl.u32 %v418, 7
    %v420 = vsub.s32 1, %v419
    %v421 = vrot.slane %v412, %v420
    %v422 = vlaneseq
    %v423 = vshrl.u32 %v422, 7
    %v424 = vsub.s32 2, %v423
    %v425 = vrot.slane %v412, %v424
    %v426 = vlaneseq
    %v427 = vshrl.u32 %v426, 7
    %v428 = vsub.s32 3, %v427
    %v429 = vrot.slane %v412, %v428
    %v430 = vlaneseq
    %v431 = vshrl.u32 %v430, 7
    %v432 = vsub.s32 4, %v431
    %v433 = vrot.slane %v412, %v432
    %v434 = vlaneseq
    %v435 = vshrl.u32 %v434, 7
    %v436 = vsub.s32 5, %v435
    %v437 = vrot.slane %v412, %v436
    %v438 = vlaneseq
    %v439 = vshrl.u32 %v438, 7
    %v440 = vsub.s32 6, %v439
    %v441 = vrot.slane %v412, %v440
    %v442 = vlaneseq
    %v443 = vshrl.u32 %v442, 7
    %v444 = vsub.s32 7, %v443
    %v445 = vrot.slane %v412, %v444
    %v454 = vld [vmem:[#allocation2] sm:$0xff]
    %v455 = vld [vmem:[#allocation2 + $0x8] sm:$0xff]
    %v456 = vld [vmem:[#allocation2 + $0x10] sm:$0xff]
    %v457 = vld [vmem:[#allocation2 + $0x18] sm:$0xff]
    %v458 = vld [vmem:[#allocation2 + $0x20] sm:$0xff]
    %v459 = vld [vmem:[#allocation2 + $0x28] sm:$0xff]
    %v460 = vld [vmem:[#allocation2 + $0x30] sm:$0xff]
    %v461 = vld [vmem:[#allocation2 + $0x38] sm:$0xff]
    %v462 = vmul.f32 %v454, 0.5
    %v463 = vmul.f32 %v455, 0.5
    %v464 = vtanh.pop %v462
    %v465 = vtanh.pop %v463
    %v466 = vmul.f32 %v464, 0.5
    %v467 = vmul.f32 %v465, 0.5
    %v468 = vadd.f32 %v466, 0.5
    %v469 = vadd.f32 %v467, 0.5
    %v470 = vmul.f32 %v456, 0.5
    %v471 = vmul.f32 %v457, 0.5
    %v472 = vtanh.pop %v470
    %v473 = vtanh.pop %v471
    %v474 = vmul.f32 %v472, 0.5
    %v475 = vmul.f32 %v473, 0.5
    %v476 = vadd.f32 %v474, 0.5
    %v477 = vadd.f32 %v475, 0.5
    %v478 = vtanh.pop %v458
    %v479 = vtanh.pop %v459
    %v480 = vmul.f32 %v460, 0.5
    %v481 = vmul.f32 %v461, 0.5
    %v482 = vtanh.pop %v480
    %v483 = vtanh.pop %v481
    %v484 = vmul.f32 %v482, 0.5
    %v485 = vmul.f32 %v483, 0.5
    %v486 = vadd.f32 %v484, 0.5
    %v487 = vadd.f32 %v485, 0.5
    %v488 = vmul.f32 %v476, 0.0
    %v489 = vmul.f32 %v477, 0.0
    %v490 = vmul.f32 %v468, %v478
    %v491 = vmul.f32 %v469, %v479
    %v492 = vadd.f32 %v488, %v490
    %v493 = vadd.f32 %v489, %v491
    %v494 = vtanh.pop %v492
    %v495 = vtanh.pop %v493
    %v496 = vmul.f32 %v486, %v494
    %v497 = vmul.f32 %v487, %v495
    %v498 = vpack.c.bf16 %v496, %v496
    %v499 = vpack.c.bf16 %v497, %v497
    %v500 = vld [vmem:[#allocation5] sm:$0xff]
    %v501 = vld [vmem:[#allocation5 + $0x8] sm:$0xff]
    %v502 = vld [vmem:[#allocation5 + $0x10] sm:$0xff]
    %v503 = vld [vmem:[#allocation5 + $0x18] sm:$0xff]
    %v504 = vld [vmem:[#allocation5 + $0x20] sm:$0xff]
    %v505 = vld [vmem:[#allocation5 + $0x28] sm:$0xff]
    %v506 = vld [vmem:[#allocation5 + $0x30] sm:$0xff]
    %v507 = vld [vmem:[#allocation5 + $0x38] sm:$0xff]
    %v508 = vld [vmem:[#allocation5 + $0x40] sm:$0xff]
    %v509 = vld [vmem:[#allocation5 + $0x48] sm:$0xff]
    %v510 = vld [vmem:[#allocation5 + $0x50] sm:$0xff]
    %v511 = vld [vmem:[#allocation5 + $0x58] sm:$0xff]
    %v512 = vld [vmem:[#allocation5 + $0x60] sm:$0xff]
    %v513 = vld [vmem:[#allocation5 + $0x68] sm:$0xff]
    %v514 = vld [vmem:[#allocation5 + $0x70] sm:$0xff]
    %v515 = vld [vmem:[#allocation5 + $0x78] sm:$0xff]
    %v516 = vld [vmem:[#allocation5 + $0x80] sm:$0xff]
    %v517 = vld [vmem:[#allocation5 + $0x88] sm:$0xff]
    %v518 = vld [vmem:[#allocation5 + $0x90] sm:$0xff]
    %v519 = vld [vmem:[#allocation5 + $0x98] sm:$0xff]
    %v520 = vld [vmem:[#allocation5 + $0xa0] sm:$0xff]
    %v521 = vld [vmem:[#allocation5 + $0xa8] sm:$0xff]
    %v522 = vld [vmem:[#allocation5 + $0xb0] sm:$0xff]
    %v523 = vld [vmem:[#allocation5 + $0xb8] sm:$0xff]
    %v524 = vld [vmem:[#allocation5 + $0xc0] sm:$0xff]
    %v525 = vld [vmem:[#allocation5 + $0xc8] sm:$0xff]
    %v526 = vld [vmem:[#allocation5 + $0xd0] sm:$0xff]
    %v527 = vld [vmem:[#allocation5 + $0xd8] sm:$0xff]
    %v528 = vld [vmem:[#allocation5 + $0xe0] sm:$0xff]
    %v529 = vld [vmem:[#allocation5 + $0xe8] sm:$0xff]
    %v530 = vld [vmem:[#allocation5 + $0xf0] sm:$0xff]
    %v531 = vld [vmem:[#allocation5 + $0xf8] sm:$0xff]
    %v532 = vld [vmem:[#allocation5 + $0x100] sm:$0xff]
    %v533 = vld [vmem:[#allocation5 + $0x108] sm:$0xff]
    %v534 = vld [vmem:[#allocation5 + $0x110] sm:$0xff]
    %v535 = vld [vmem:[#allocation5 + $0x118] sm:$0xff]
    %v536 = vld [vmem:[#allocation5 + $0x120] sm:$0xff]
    %v537 = vld [vmem:[#allocation5 + $0x128] sm:$0xff]
    %v538 = vld [vmem:[#allocation5 + $0x130] sm:$0xff]
    %v539 = vld [vmem:[#allocation5 + $0x138] sm:$0xff]
    %v540 = vld [vmem:[#allocation5 + $0x140] sm:$0xff]
    %v541 = vld [vmem:[#allocation5 + $0x148] sm:$0xff]
    %v542 = vld [vmem:[#allocation5 + $0x150] sm:$0xff]
    %v543 = vld [vmem:[#allocation5 + $0x158] sm:$0xff]
    %v544 = vld [vmem:[#allocation5 + $0x160] sm:$0xff]
    %v545 = vld [vmem:[#allocation5 + $0x168] sm:$0xff]
    %v546 = vld [vmem:[#allocation5 + $0x170] sm:$0xff]
    %v547 = vld [vmem:[#allocation5 + $0x178] sm:$0xff]
    %v548 = vld [vmem:[#allocation5 + $0x180] sm:$0xff]
    %v549 = vld [vmem:[#allocation5 + $0x188] sm:$0xff]
    %v550 = vld [vmem:[#allocation5 + $0x190] sm:$0xff]
    %v551 = vld [vmem:[#allocation5 + $0x198] sm:$0xff]
    %v552 = vld [vmem:[#allocation5 + $0x1a0] sm:$0xff]
    %v553 = vld [vmem:[#allocation5 + $0x1a8] sm:$0xff]
    %v554 = vld [vmem:[#allocation5 + $0x1b0] sm:$0xff]
    %v555 = vld [vmem:[#allocation5 + $0x1b8] sm:$0xff]
    %v556 = vld [vmem:[#allocation5 + $0x1c0] sm:$0xff]
    %v557 = vld [vmem:[#allocation5 + $0x1c8] sm:$0xff]
    %v558 = vld [vmem:[#allocation5 + $0x1d0] sm:$0xff]
    %v559 = vld [vmem:[#allocation5 + $0x1d8] sm:$0xff]
    %v560 = vld [vmem:[#allocation5 + $0x1e0] sm:$0xff]
    %v561 = vld [vmem:[#allocation5 + $0x1e8] sm:$0xff]
    %v562 = vld [vmem:[#allocation5 + $0x1f0] sm:$0xff]
    %v563 = vld [vmem:[#allocation5 + $0x1f8] sm:$0xff]
    %v564 = vld [vmem:[#allocation5 + $0x200] sm:$0xff]
    %v565 = vld [vmem:[#allocation5 + $0x208] sm:$0xff]
    %v566 = vld [vmem:[#allocation5 + $0x210] sm:$0xff]
    %v567 = vld [vmem:[#allocation5 + $0x218] sm:$0xff]
    %v568 = vld [vmem:[#allocation5 + $0x220] sm:$0xff]
    %v569 = vld [vmem:[#allocation5 + $0x228] sm:$0xff]
    %v570 = vld [vmem:[#allocation5 + $0x230] sm:$0xff]
    %v571 = vld [vmem:[#allocation5 + $0x238] sm:$0xff]
    %v572 = vld [vmem:[#allocation5 + $0x240] sm:$0xff]
    %v573 = vld [vmem:[#allocation5 + $0x248] sm:$0xff]
    %v574 = vld [vmem:[#allocation5 + $0x250] sm:$0xff]
    %v575 = vld [vmem:[#allocation5 + $0x258] sm:$0xff]
    %v576 = vld [vmem:[#allocation5 + $0x260] sm:$0xff]
    %v577 = vld [vmem:[#allocation5 + $0x268] sm:$0xff]
    %v578 = vld [vmem:[#allocation5 + $0x270] sm:$0xff]
    %v579 = vld [vmem:[#allocation5 + $0x278] sm:$0xff]
    %v580 = vld [vmem:[#allocation5 + $0x280] sm:$0xff]
    %v581 = vld [vmem:[#allocation5 + $0x288] sm:$0xff]
    %v582 = vld [vmem:[#allocation5 + $0x290] sm:$0xff]
    %v583 = vld [vmem:[#allocation5 + $0x298] sm:$0xff]
    %v584 = vld [vmem:[#allocation5 + $0x2a0] sm:$0xff]
    %v585 = vld [vmem:[#allocation5 + $0x2a8] sm:$0xff]
    %v586 = vld [vmem:[#allocation5 + $0x2b0] sm:$0xff]
    %v587 = vld [vmem:[#allocation5 + $0x2b8] sm:$0xff]
    %v588 = vld [vmem:[#allocation5 + $0x2c0] sm:$0xff]
    %v589 = vld [vmem:[#allocation5 + $0x2c8] sm:$0xff]
    %v590 = vld [vmem:[#allocation5 + $0x2d0] sm:$0xff]
    %v591 = vld [vmem:[#allocation5 + $0x2d8] sm:$0xff]
    %v592 = vld [vmem:[#allocation5 + $0x2e0] sm:$0xff]
    %v593 = vld [vmem:[#allocation5 + $0x2e8] sm:$0xff]
    %v594 = vld [vmem:[#allocation5 + $0x2f0] sm:$0xff]
    %v595 = vld [vmem:[#allocation5 + $0x2f8] sm:$0xff]
    %v596 = vld [vmem:[#allocation5 + $0x300] sm:$0xff]
    %v597 = vld [vmem:[#allocation5 + $0x308] sm:$0xff]
    %v598 = vld [vmem:[#allocation5 + $0x310] sm:$0xff]
    %v599 = vld [vmem:[#allocation5 + $0x318] sm:$0xff]
    %v600 = vld [vmem:[#allocation5 + $0x320] sm:$0xff]
    %v601 = vld [vmem:[#allocation5 + $0x328] sm:$0xff]
    %v602 = vld [vmem:[#allocation5 + $0x330] sm:$0xff]
    %v603 = vld [vmem:[#allocation5 + $0x338] sm:$0xff]
    %v604 = vld [vmem:[#allocation5 + $0x340] sm:$0xff]
    %v605 = vld [vmem:[#allocation5 + $0x348] sm:$0xff]
    %v606 = vld [vmem:[#allocation5 + $0x350] sm:$0xff]
    %v607 = vld [vmem:[#allocation5 + $0x358] sm:$0xff]
    %v608 = vld [vmem:[#allocation5 + $0x360] sm:$0xff]
    %v609 = vld [vmem:[#allocation5 + $0x368] sm:$0xff]
    %v610 = vld [vmem:[#allocation5 + $0x370] sm:$0xff]
    %v611 = vld [vmem:[#allocation5 + $0x378] sm:$0xff]
    %v612 = vld [vmem:[#allocation5 + $0x380] sm:$0xff]
    %v613 = vld [vmem:[#allocation5 + $0x388] sm:$0xff]
    %v614 = vld [vmem:[#allocation5 + $0x390] sm:$0xff]
    %v615 = vld [vmem:[#allocation5 + $0x398] sm:$0xff]
    %v616 = vld [vmem:[#allocation5 + $0x3a0] sm:$0xff]
    %v617 = vld [vmem:[#allocation5 + $0x3a8] sm:$0xff]
    %v618 = vld [vmem:[#allocation5 + $0x3b0] sm:$0xff]
    %v619 = vld [vmem:[#allocation5 + $0x3b8] sm:$0xff]
    %v620 = vld [vmem:[#allocation5 + $0x3c0] sm:$0xff]
    %v621 = vld [vmem:[#allocation5 + $0x3c8] sm:$0xff]
    %v622 = vld [vmem:[#allocation5 + $0x3d0] sm:$0xff]
    %v623 = vld [vmem:[#allocation5 + $0x3d8] sm:$0xff]
    %v624 = vld [vmem:[#allocation5 + $0x3e0] sm:$0xff]
    %v625 = vld [vmem:[#allocation5 + $0x3e8] sm:$0xff]
    %v626 = vld [vmem:[#allocation5 + $0x3f0] sm:$0xff]
    %v627 = vld [vmem:[#allocation5 + $0x3f8] sm:$0xff]
    %v756 = vunpack.c.l.b16 %v500
    %v757 = vunpack.c.h.b16 %v500
    %v758 = vunpack.c.l.b16 %v501
    %v759 = vunpack.c.h.b16 %v501
    %v760 = vunpack.c.l.b16 %v502
    %v761 = vunpack.c.h.b16 %v502
    %v762 = vunpack.c.l.b16 %v503
    %v763 = vunpack.c.h.b16 %v503
    %v764 = vunpack.c.l.b16 %v504
    %v765 = vunpack.c.h.b16 %v504
    %v766 = vunpack.c.l.b16 %v505
    %v767 = vunpack.c.h.b16 %v505
    %v768 = vunpack.c.l.b16 %v506
    %v769 = vunpack.c.h.b16 %v506
    %v770 = vunpack.c.l.b16 %v507
    %v771 = vunpack.c.h.b16 %v507
    %v772 = vunpack.c.l.b16 %v508
    %v773 = vunpack.c.h.b16 %v508
    %v774 = vunpack.c.l.b16 %v509
    %v775 = vunpack.c.h.b16 %v509
    %v776 = vunpack.c.l.b16 %v510
    %v777 = vunpack.c.h.b16 %v510
    %v778 = vunpack.c.l.b16 %v511
    %v779 = vunpack.c.h.b16 %v511
    %v780 = vunpack.c.l.b16 %v512
    %v781 = vunpack.c.h.b16 %v512
    %v782 = vunpack.c.l.b16 %v513
    %v783 = vunpack.c.h.b16 %v513
    %v784 = vunpack.c.l.b16 %v514
    %v785 = vunpack.c.h.b16 %v514
    %v786 = vunpack.c.l.b16 %v515
    %v787 = vunpack.c.h.b16 %v515
    %v788 = vunpack.c.l.b16 %v516
    %v789 = vunpack.c.h.b16 %v516
    %v790 = vunpack.c.l.b16 %v517
    %v791 = vunpack.c.h.b16 %v517
    %v792 = vunpack.c.l.b16 %v518
    %v793 = vunpack.c.h.b16 %v518
    %v794 = vunpack.c.l.b16 %v519
    %v795 = vunpack.c.h.b16 %v519
    %v796 = vunpack.c.l.b16 %v520
    %v797 = vunpack.c.h.b16 %v520
    %v798 = vunpack.c.l.b16 %v521
    %v799 = vunpack.c.h.b16 %v521
    %v800 = vunpack.c.l.b16 %v522
    %v801 = vunpack.c.h.b16 %v522
    %v802 = vunpack.c.l.b16 %v523
    %v803 = vunpack.c.h.b16 %v523
    %v804 = vunpack.c.l.b16 %v524
    %v805 = vunpack.c.h.b16 %v524
    %v806 = vunpack.c.l.b16 %v525
    %v807 = vunpack.c.h.b16 %v525
    %v808 = vunpack.c.l.b16 %v526
    %v809 = vunpack.c.h.b16 %v526
    %v810 = vunpack.c.l.b16 %v527
    %v811 = vunpack.c.h.b16 %v527
    %v812 = vunpack.c.l.b16 %v528
    %v813 = vunpack.c.h.b16 %v528
    %v814 = vunpack.c.l.b16 %v529
    %v815 = vunpack.c.h.b16 %v529
    %v816 = vunpack.c.l.b16 %v530
    %v817 = vunpack.c.h.b16 %v530
    %v818 = vunpack.c.l.b16 %v531
    %v819 = vunpack.c.h.b16 %v531
    %v820 = vunpack.c.l.b16 %v532
    %v821 = vunpack.c.h.b16 %v532
    %v822 = vunpack.c.l.b16 %v533
    %v823 = vunpack.c.h.b16 %v533
    %v824 = vunpack.c.l.b16 %v534
    %v825 = vunpack.c.h.b16 %v534
    %v826 = vunpack.c.l.b16 %v535
    %v827 = vunpack.c.h.b16 %v535
    %v828 = vunpack.c.l.b16 %v536
    %v829 = vunpack.c.h.b16 %v536
    %v830 = vunpack.c.l.b16 %v537
    %v831 = vunpack.c.h.b16 %v537
    %v832 = vunpack.c.l.b16 %v538
    %v833 = vunpack.c.h.b16 %v538
    %v834 = vunpack.c.l.b16 %v539
    %v835 = vunpack.c.h.b16 %v539
    %v836 = vunpack.c.l.b16 %v540
    %v837 = vunpack.c.h.b16 %v540
    %v838 = vunpack.c.l.b16 %v541
    %v839 = vunpack.c.h.b16 %v541
    %v840 = vunpack.c.l.b16 %v542
    %v841 = vunpack.c.h.b16 %v542
    %v842 = vunpack.c.l.b16 %v543
    %v843 = vunpack.c.h.b16 %v543
    %v844 = vunpack.c.l.b16 %v544
    %v845 = vunpack.c.h.b16 %v544
    %v846 = vunpack.c.l.b16 %v545
    %v847 = vunpack.c.h.b16 %v545
    %v848 = vunpack.c.l.b16 %v546
    %v849 = vunpack.c.h.b16 %v546
    %v850 = vunpack.c.l.b16 %v547
    %v851 = vunpack.c.h.b16 %v547
    %v852 = vunpack.c.l.b16 %v548
    %v853 = vunpack.c.h.b16 %v548
    %v854 = vunpack.c.l.b16 %v549
    %v855 = vunpack.c.h.b16 %v549
    %v856 = vunpack.c.l.b16 %v550
    %v857 = vunpack.c.h.b16 %v550
    %v858 = vunpack.c.l.b16 %v551
    %v859 = vunpack.c.h.b16 %v551
    %v860 = vunpack.c.l.b16 %v552
    %v861 = vunpack.c.h.b16 %v552
    %v862 = vunpack.c.l.b16 %v553
    %v863 = vunpack.c.h.b16 %v553
    %v864 = vunpack.c.l.b16 %v554
    %v865 = vunpack.c.h.b16 %v554
    %v866 = vunpack.c.l.b16 %v555
    %v867 = vunpack.c.h.b16 %v555
    %v868 = vunpack.c.l.b16 %v556
    %v869 = vunpack.c.h.b16 %v556
    %v870 = vunpack.c.l.b16 %v557
    %v871 = vunpack.c.h.b16 %v557
    %v872 = vunpack.c.l.b16 %v558
    %v873 = vunpack.c.h.b16 %v558
    %v874 = vunpack.c.l.b16 %v559
    %v875 = vunpack.c.h.b16 %v559
    %v876 = vunpack.c.l.b16 %v560
    %v877 = vunpack.c.h.b16 %v560
    %v878 = vunpack.c.l.b16 %v561
    %v879 = vunpack.c.h.b16 %v561
    %v880 = vunpack.c.l.b16 %v562
    %v881 = vunpack.c.h.b16 %v562
    %v882 = vunpack.c.l.b16 %v563
    %v883 = vunpack.c.h.b16 %v563
    %v884 = vunpack.c.l.b16 %v564
    %v885 = vunpack.c.h.b16 %v564
    %v886 = vunpack.c.l.b16 %v565
    %v887 = vunpack.c.h.b16 %v565
    %v888 = vunpack.c.l.b16 %v566
    %v889 = vunpack.c.h.b16 %v566
    %v890 = vunpack.c.l.b16 %v567
    %v891 = vunpack.c.h.b16 %v567
    %v892 = vunpack.c.l.b16 %v568
    %v893 = vunpack.c.h.b16 %v568
    %v894 = vunpack.c.l.b16 %v569
    %v895 = vunpack.c.h.b16 %v569
    %v896 = vunpack.c.l.b16 %v570
    %v897 = vunpack.c.h.b16 %v570
    %v898 = vunpack.c.l.b16 %v571
    %v899 = vunpack.c.h.b16 %v571
    %v900 = vunpack.c.l.b16 %v572
    %v901 = vunpack.c.h.b16 %v572
    %v902 = vunpack.c.l.b16 %v573
    %v903 = vunpack.c.h.b16 %v573
    %v904 = vunpack.c.l.b16 %v574
    %v905 = vunpack.c.h.b16 %v574
    %v906 = vunpack.c.l.b16 %v575
    %v907 = vunpack.c.h.b16 %v575
    %v908 = vunpack.c.l.b16 %v576
    %v909 = vunpack.c.h.b16 %v576
    %v910 = vunpack.c.l.b16 %v577
    %v911 = vunpack.c.h.b16 %v577
    %v912 = vunpack.c.l.b16 %v578
    %v913 = vunpack.c.h.b16 %v578
    %v914 = vunpack.c.l.b16 %v579
    %v915 = vunpack.c.h.b16 %v579
    %v916 = vunpack.c.l.b16 %v580
    %v917 = vunpack.c.h.b16 %v580
    %v918 = vunpack.c.l.b16 %v581
    %v919 = vunpack.c.h.b16 %v581
    %v920 = vunpack.c.l.b16 %v582
    %v921 = vunpack.c.h.b16 %v582
    %v922 = vunpack.c.l.b16 %v583
    %v923 = vunpack.c.h.b16 %v583
    %v924 = vunpack.c.l.b16 %v584
    %v925 = vunpack.c.h.b16 %v584
    %v926 = vunpack.c.l.b16 %v585
    %v927 = vunpack.c.h.b16 %v585
    %v928 = vunpack.c.l.b16 %v586
    %v929 = vunpack.c.h.b16 %v586
    %v930 = vunpack.c.l.b16 %v587
    %v931 = vunpack.c.h.b16 %v587
    %v932 = vunpack.c.l.b16 %v588
    %v933 = vunpack.c.h.b16 %v588
    %v934 = vunpack.c.l.b16 %v589
    %v935 = vunpack.c.h.b16 %v589
    %v936 = vunpack.c.l.b16 %v590
    %v937 = vunpack.c.h.b16 %v590
    %v938 = vunpack.c.l.b16 %v591
    %v939 = vunpack.c.h.b16 %v591
    %v940 = vunpack.c.l.b16 %v592
    %v941 = vunpack.c.h.b16 %v592
    %v942 = vunpack.c.l.b16 %v593
    %v943 = vunpack.c.h.b16 %v593
    %v944 = vunpack.c.l.b16 %v594
    %v945 = vunpack.c.h.b16 %v594
    %v946 = vunpack.c.l.b16 %v595
    %v947 = vunpack.c.h.b16 %v595
    %v948 = vunpack.c.l.b16 %v596
    %v949 = vunpack.c.h.b16 %v596
    %v950 = vunpack.c.l.b16 %v597
    %v951 = vunpack.c.h.b16 %v597
    %v952 = vunpack.c.l.b16 %v598
    %v953 = vunpack.c.h.b16 %v598
    %v954 = vunpack.c.l.b16 %v599
    %v955 = vunpack.c.h.b16 %v599
    %v956 = vunpack.c.l.b16 %v600
    %v957 = vunpack.c.h.b16 %v600
    %v958 = vunpack.c.l.b16 %v601
    %v959 = vunpack.c.h.b16 %v601
    %v960 = vunpack.c.l.b16 %v602
    %v961 = vunpack.c.h.b16 %v602
    %v962 = vunpack.c.l.b16 %v603
    %v963 = vunpack.c.h.b16 %v603
    %v964 = vunpack.c.l.b16 %v604
    %v965 = vunpack.c.h.b16 %v604
    %v966 = vunpack.c.l.b16 %v605
    %v967 = vunpack.c.h.b16 %v605
    %v968 = vunpack.c.l.b16 %v606
    %v969 = vunpack.c.h.b16 %v606
    %v970 = vunpack.c.l.b16 %v607
    %v971 = vunpack.c.h.b16 %v607
    %v972 = vunpack.c.l.b16 %v608
    %v973 = vunpack.c.h.b16 %v608
    %v974 = vunpack.c.l.b16 %v609
    %v975 = vunpack.c.h.b16 %v609
    %v976 = vunpack.c.l.b16 %v610
    %v977 = vunpack.c.h.b16 %v610
    %v978 = vunpack.c.l.b16 %v611
    %v979 = vunpack.c.h.b16 %v611
    %v980 = vunpack.c.l.b16 %v612
    %v981 = vunpack.c.h.b16 %v612
    %v982 = vunpack.c.l.b16 %v613
    %v983 = vunpack.c.h.b16 %v613
    %v984 = vunpack.c.l.b16 %v614
    %v985 = vunpack.c.h.b16 %v614
    %v986 = vunpack.c.l.b16 %v615
    %v987 = vunpack.c.h.b16 %v615
    %v988 = vunpack.c.l.b16 %v616
    %v989 = vunpack.c.h.b16 %v616
    %v990 = vunpack.c.l.b16 %v617
    %v991 = vunpack.c.h.b16 %v617
    %v992 = vunpack.c.l.b16 %v618
    %v993 = vunpack.c.h.b16 %v618
    %v994 = vunpack.c.l.b16 %v619
    %v995 = vunpack.c.h.b16 %v619
    %v996 = vunpack.c.l.b16 %v620
    %v997 = vunpack.c.h.b16 %v620
    %v998 = vunpack.c.l.b16 %v621
    %v999 = vunpack.c.h.b16 %v621
    %v1000 = vunpack.c.l.b16 %v622
    %v1001 = vunpack.c.h.b16 %v622
    %v1002 = vunpack.c.l.b16 %v623
    %v1003 = vunpack.c.h.b16 %v623
    %v1004 = vunpack.c.l.b16 %v624
    %v1005 = vunpack.c.h.b16 %v624
    %v1006 = vunpack.c.l.b16 %v625
    %v1007 = vunpack.c.h.b16 %v625
    %v1008 = vunpack.c.l.b16 %v626
    %v1009 = vunpack.c.h.b16 %v626
    %v1010 = vunpack.c.l.b16 %v627
    %v1011 = vunpack.c.h.b16 %v627
    %v1012 = vpack.c.b16 %v764, %v756
    %v1013 = vpack.c.b16 %v765, %v757
    %v1014 = vpack.c.b16 %v766, %v758
    %v1015 = vpack.c.b16 %v767, %v759
    %v1016 = vpack.c.b16 %v768, %v760
    %v1017 = vpack.c.b16 %v769, %v761
    %v1018 = vpack.c.b16 %v770, %v762
    %v1019 = vpack.c.b16 %v771, %v763
    %v1020 = vpack.c.b16 %v780, %v772
    %v1021 = vpack.c.b16 %v781, %v773
    %v1022 = vpack.c.b16 %v782, %v774
    %v1023 = vpack.c.b16 %v783, %v775
    %v1024 = vpack.c.b16 %v784, %v776
    %v1025 = vpack.c.b16 %v785, %v777
    %v1026 = vpack.c.b16 %v786, %v778
    %v1027 = vpack.c.b16 %v787, %v779
    %v1028 = vpack.c.b16 %v796, %v788
    %v1029 = vpack.c.b16 %v797, %v789
    %v1030 = vpack.c.b16 %v798, %v790
    %v1031 = vpack.c.b16 %v799, %v791
    %v1032 = vpack.c.b16 %v800, %v792
    %v1033 = vpack.c.b16 %v801, %v793
    %v1034 = vpack.c.b16 %v802, %v794
    %v1035 = vpack.c.b16 %v803, %v795
    %v1036 = vpack.c.b16 %v812, %v804
    %v1037 = vpack.c.b16 %v813, %v805
    %v1038 = vpack.c.b16 %v814, %v806
    %v1039 = vpack.c.b16 %v815, %v807
    %v1040 = vpack.c.b16 %v816, %v808
    %v1041 = vpack.c.b16 %v817, %v809
    %v1042 = vpack.c.b16 %v818, %v810
    %v1043 = vpack.c.b16 %v819, %v811
    %v1044 = vpack.c.b16 %v828, %v820
    %v1045 = vpack.c.b16 %v829, %v821
    %v1046 = vpack.c.b16 %v830, %v822
    %v1047 = vpack.c.b16 %v831, %v823
    %v1048 = vpack.c.b16 %v832, %v824
    %v1049 = vpack.c.b16 %v833, %v825
    %v1050 = vpack.c.b16 %v834, %v826
    %v1051 = vpack.c.b16 %v835, %v827
    %v1052 = vpack.c.b16 %v844, %v836
    %v1053 = vpack.c.b16 %v845, %v837
    %v1054 = vpack.c.b16 %v846, %v838
    %v1055 = vpack.c.b16 %v847, %v839
    %v1056 = vpack.c.b16 %v848, %v840
    %v1057 = vpack.c.b16 %v849, %v841
    %v1058 = vpack.c.b16 %v850, %v842
    %v1059 = vpack.c.b16 %v851, %v843
    %v1060 = vpack.c.b16 %v860, %v852
    %v1061 = vpack.c.b16 %v861, %v853
    %v1062 = vpack.c.b16 %v862, %v854
    %v1063 = vpack.c.b16 %v863, %v855
    %v1064 = vpack.c.b16 %v864, %v856
    %v1065 = vpack.c.b16 %v865, %v857
    %v1066 = vpack.c.b16 %v866, %v858
    %v1067 = vpack.c.b16 %v867, %v859
    %v1068 = vpack.c.b16 %v876, %v868
    %v1069 = vpack.c.b16 %v877, %v869
    %v1070 = vpack.c.b16 %v878, %v870
    %v1071 = vpack.c.b16 %v879, %v871
    %v1072 = vpack.c.b16 %v880, %v872
    %v1073 = vpack.c.b16 %v881, %v873
    %v1074 = vpack.c.b16 %v882, %v874
    %v1075 = vpack.c.b16 %v883, %v875
    %v1076 = vpack.c.b16 %v892, %v884
    %v1077 = vpack.c.b16 %v893, %v885
    %v1078 = vpack.c.b16 %v894, %v886
    %v1079 = vpack.c.b16 %v895, %v887
    %v1080 = vpack.c.b16 %v896, %v888
    %v1081 = vpack.c.b16 %v897, %v889
    %v1082 = vpack.c.b16 %v898, %v890
    %v1083 = vpack.c.b16 %v899, %v891
    %v1084 = vpack.c.b16 %v908, %v900
    %v1085 = vpack.c.b16 %v909, %v901
    %v1086 = vpack.c.b16 %v910, %v902
    %v1087 = vpack.c.b16 %v911, %v903
    %v1088 = vpack.c.b16 %v912, %v904
    %v1089 = vpack.c.b16 %v913, %v905
    %v1090 = vpack.c.b16 %v914, %v906
    %v1091 = vpack.c.b16 %v915, %v907
    %v1092 = vpack.c.b16 %v924, %v916
    %v1093 = vpack.c.b16 %v925, %v917
    %v1094 = vpack.c.b16 %v926, %v918
    %v1095 = vpack.c.b16 %v927, %v919
    %v1096 = vpack.c.b16 %v928, %v920
    %v1097 = vpack.c.b16 %v929, %v921
    %v1098 = vpack.c.b16 %v930, %v922
    %v1099 = vpack.c.b16 %v931, %v923
    %v1100 = vpack.c.b16 %v940, %v932
    %v1101 = vpack.c.b16 %v941, %v933
    %v1102 = vpack.c.b16 %v942, %v934
    %v1103 = vpack.c.b16 %v943, %v935
    %v1104 = vpack.c.b16 %v944, %v936
    %v1105 = vpack.c.b16 %v945, %v937
    %v1106 = vpack.c.b16 %v946, %v938
    %v1107 = vpack.c.b16 %v947, %v939
    %v1108 = vpack.c.b16 %v956, %v948
    %v1109 = vpack.c.b16 %v957, %v949
    %v1110 = vpack.c.b16 %v958, %v950
    %v1111 = vpack.c.b16 %v959, %v951
    %v1112 = vpack.c.b16 %v960, %v952
    %v1113 = vpack.c.b16 %v961, %v953
    %v1114 = vpack.c.b16 %v962, %v954
    %v1115 = vpack.c.b16 %v963, %v955
    %v1116 = vpack.c.b16 %v972, %v964
    %v1117 = vpack.c.b16 %v973, %v965
    %v1118 = vpack.c.b16 %v974, %v966
    %v1119 = vpack.c.b16 %v975, %v967
    %v1120 = vpack.c.b16 %v976, %v968
    %v1121 = vpack.c.b16 %v977, %v969
    %v1122 = vpack.c.b16 %v978, %v970
    %v1123 = vpack.c.b16 %v979, %v971
    %v1124 = vpack.c.b16 %v988, %v980
    %v1125 = vpack.c.b16 %v989, %v981
    %v1126 = vpack.c.b16 %v990, %v982
    %v1127 = vpack.c.b16 %v991, %v983
    %v1128 = vpack.c.b16 %v992, %v984
    %v1129 = vpack.c.b16 %v993, %v985
    %v1130 = vpack.c.b16 %v994, %v986
    %v1131 = vpack.c.b16 %v995, %v987
    %v1132 = vpack.c.b16 %v1004, %v996
    %v1133 = vpack.c.b16 %v1005, %v997
    %v1134 = vpack.c.b16 %v1006, %v998
    %v1135 = vpack.c.b16 %v1007, %v999
    %v1136 = vpack.c.b16 %v1008, %v1000
    %v1137 = vpack.c.b16 %v1009, %v1001
    %v1138 = vpack.c.b16 %v1010, %v1002
    %v1139 = vpack.c.b16 %v1011, %v1003
    %1268 = vmatprep.subr.bf16.mxu0 %v1013
    %1269 = vmatpush1.bf16.msra.mxu0 %v1012
    %1270 = vmatprep.subr.bf16.mxu0 %v1021
    %1271 = vmatpush1.bf16.msra.mxu0 %v1020
    %1272 = vmatprep.subr.bf16.mxu0 %v1029
    %1273 = vmatpush1.bf16.msra.mxu0 %v1028
    %1274 = vmatprep.subr.bf16.mxu0 %v1037
    %1275 = vmatpush1.bf16.msra.mxu0 %v1036
    %1276 = vmatprep.subr.bf16.mxu0 %v1045
    %1277 = vmatpush1.bf16.msra.mxu0 %v1044
    %1278 = vmatprep.subr.bf16.mxu0 %v1053
    %1279 = vmatpush1.bf16.msra.mxu0 %v1052
    %1280 = vmatprep.subr.bf16.mxu0 %v1061
    %1281 = vmatpush1.bf16.msra.mxu0 %v1060
    %1282 = vmatprep.subr.bf16.mxu0 %v1069
    %1283 = vmatpush1.bf16.msra.mxu0 %v1068
    %1284 = vmatprep.subr.bf16.mxu0 %v1077
    %1285 = vmatpush1.bf16.msra.mxu0 %v1076
    %1286 = vmatprep.subr.bf16.mxu0 %v1085
    %1287 = vmatpush1.bf16.msra.mxu0 %v1084
    %1288 = vmatprep.subr.bf16.mxu0 %v1093
    %1289 = vmatpush1.bf16.msra.mxu0 %v1092
    %1290 = vmatprep.subr.bf16.mxu0 %v1101
    %1291 = vmatpush1.bf16.msra.mxu0 %v1100
    %1292 = vmatprep.subr.bf16.mxu0 %v1109
    %1293 = vmatpush1.bf16.msra.mxu0 %v1108
    %1294 = vmatprep.subr.bf16.mxu0 %v1117
    %1295 = vmatpush1.bf16.msra.mxu0 %v1116
    %1296 = vmatprep.subr.bf16.mxu0 %v1125
    %1297 = vmatpush1.bf16.msra.mxu0 %v1124
    %1298 = vmatprep.subr.bf16.mxu0 %v1133
    %1299 = vmatpush1.bf16.msra.mxu0 %v1132
    %1300 = vmatprep.mubr.bf16.mxu0 %v499
    %1301 = vmatmul.mubr.bf16.gmra.mrb[0].mxu0 %v498
    %v1302 = vpop.f32.mrb[0].mxu0
    %v1303 = vadd.f32 %v417, %v1302
    %v1304 = vpop.f32.mrb[0].mxu0
    %v1305 = vadd.f32 %v421, %v1304
    %v1306 = vpop.f32.mrb[0].mxu0
    %v1307 = vpop.f32.mrb[0].mxu0
    %1308 = vdwg.mxu0
    %1309 = vmatprep.subr.bf16.mxu0 %v1015
    %1310 = vmatpush1.bf16.msra.mxu0 %v1014
    %1311 = vmatprep.subr.bf16.mxu0 %v1023
    %1312 = vmatpush1.bf16.msra.mxu0 %v1022
    %1313 = vmatprep.subr.bf16.mxu0 %v1031
    %1314 = vmatpush1.bf16.msra.mxu0 %v1030
    %1315 = vmatprep.subr.bf16.mxu0 %v1039
    %1316 = vmatpush1.bf16.msra.mxu0 %v1038
    %1317 = vmatprep.subr.bf16.mxu0 %v1047
    %1318 = vmatpush1.bf16.msra.mxu0 %v1046
    %1319 = vmatprep.subr.bf16.mxu0 %v1055
    %1320 = vmatpush1.bf16.msra.mxu0 %v1054
    %1321 = vmatprep.subr.bf16.mxu0 %v1063
    %1322 = vmatpush1.bf16.msra.mxu0 %v1062
    %1323 = vmatprep.subr.bf16.mxu0 %v1071
    %1324 = vmatpush1.bf16.msra.mxu0 %v1070
    %1325 = vmatprep.subr.bf16.mxu0 %v1079
    %1326 = vmatpush1.bf16.msra.mxu0 %v1078
    %1327 = vmatprep.subr.bf16.mxu0 %v1087
    %1328 = vmatpush1.bf16.msra.mxu0 %v1086
    %1329 = vmatprep.subr.bf16.mxu0 %v1095
    %1330 = vmatpush1.bf16.msra.mxu0 %v1094
    %1331 = vmatprep.subr.bf16.mxu0 %v1103
    %1332 = vmatpush1.bf16.msra.mxu0 %v1102
    %1333 = vmatprep.subr.bf16.mxu0 %v1111
    %1334 = vmatpush1.bf16.msra.mxu0 %v1110
    %1335 = vmatprep.subr.bf16.mxu0 %v1119
    %1336 = vmatpush1.bf16.msra.mxu0 %v1118
    %1337 = vmatprep.subr.bf16.mxu0 %v1127
    %1338 = vmatpush1.bf16.msra.mxu0 %v1126
    %1339 = vmatprep.subr.bf16.mxu0 %v1135
    %1340 = vmatpush1.bf16.msra.mxu0 %v1134
    %1341 = vmatprep.mubr.bf16.mxu0 %v499
    %1342 = vmatmul.mubr.bf16.gmra.mrb[0].mxu0 %v498
    %v1343 = vpop.f32.mrb[0].mxu0
    %v1344 = vadd.f32 %v425, %v1343
    %v1345 = vpop.f32.mrb[0].mxu0
    %v1346 = vadd.f32 %v429, %v1345
    %v1347 = vpop.f32.mrb[0].mxu0
    %v1348 = vpop.f32.mrb[0].mxu0
    %1349 = vdwg.mxu0
    %1350 = vmatprep.subr.bf16.mxu0 %v1017
    %1351 = vmatpush1.bf16.msra.mxu0 %v1016
    %1352 = vmatprep.subr.bf16.mxu0 %v1025
    %1353 = vmatpush1.bf16.msra.mxu0 %v1024
    %1354 = vmatprep.subr.bf16.mxu0 %v1033
    %1355 = vmatpush1.bf16.msra.mxu0 %v1032
    %1356 = vmatprep.subr.bf16.mxu0 %v1041
    %1357 = vmatpush1.bf16.msra.mxu0 %v1040
    %1358 = vmatprep.subr.bf16.mxu0 %v1049
    %1359 = vmatpush1.bf16.msra.mxu0 %v1048
    %1360 = vmatprep.subr.bf16.mxu0 %v1057
    %1361 = vmatpush1.bf16.msra.mxu0 %v1056
    %1362 = vmatprep.subr.bf16.mxu0 %v1065
    %1363 = vmatpush1.bf16.msra.mxu0 %v1064
    %1364 = vmatprep.subr.bf16.mxu0 %v1073
    %1365 = vmatpush1.bf16.msra.mxu0 %v1072
    %1366 = vmatprep.subr.bf16.mxu0 %v1081
    %1367 = vmatpush1.bf16.msra.mxu0 %v1080
    %1368 = vmatprep.subr.bf16.mxu0 %v1089
    %1369 = vmatpush1.bf16.msra.mxu0 %v1088
    %1370 = vmatprep.subr.bf16.mxu0 %v1097
    %1371 = vmatpush1.bf16.msra.mxu0 %v1096
    %1372 = vmatprep.subr.bf16.mxu0 %v1105
    %1373 = vmatpush1.bf16.msra.mxu0 %v1104
    %1374 = vmatprep.subr.bf16.mxu0 %v1113
    %1375 = vmatpush1.bf16.msra.mxu0 %v1112
    %1376 = vmatprep.subr.bf16.mxu0 %v1121
    %1377 = vmatpush1.bf16.msra.mxu0 %v1120
    %1378 = vmatprep.subr.bf16.mxu0 %v1129
    %1379 = vmatpush1.bf16.msra.mxu0 %v1128
    %1380 = vmatprep.subr.bf16.mxu0 %v1137
    %1381 = vmatpush1.bf16.msra.mxu0 %v1136
    %1382 = vmatprep.mubr.bf16.mxu0 %v499
    %1383 = vmatmul.mubr.bf16.gmra.mrb[0].mxu0 %v498
    %v1384 = vpop.f32.mrb[0].mxu0
    %v1385 = vadd.f32 %v433, %v1384
    %v1386 = vpop.f32.mrb[0].mxu0
    %v1387 = vadd.f32 %v437, %v1386
    %v1388 = vpop.f32.mrb[0].mxu0
    %v1389 = vpop.f32.mrb[0].mxu0
    %1390 = vdwg.mxu0
    %1391 = vmatprep.subr.bf16.mxu0 %v1019
    %1392 = vmatpush1.bf16.msra.mxu0 %v1018
    %1393 = vmatprep.subr.bf16.mxu0 %v1027
    %1394 = vmatpush1.bf16.msra.mxu0 %v1026
    %1395 = vmatprep.subr.bf16.mxu0 %v1035
    %1396 = vmatpush1.bf16.msra.mxu0 %v1034
    %1397 = vmatprep.subr.bf16.mxu0 %v1043
    %1398 = vmatpush1.bf16.msra.mxu0 %v1042
    %1399 = vmatprep.subr.bf16.mxu0 %v1051
    %1400 = vmatpush1.bf16.msra.mxu0 %v1050
    %1401 = vmatprep.subr.bf16.mxu0 %v1059
    %1402 = vmatpush1.bf16.msra.mxu0 %v1058
    %1403 = vmatprep.subr.bf16.mxu0 %v1067
    %1404 = vmatpush1.bf16.msra.mxu0 %v1066
    %1405 = vmatprep.subr.bf16.mxu0 %v1075
    %1406 = vmatpush1.bf16.msra.mxu0 %v1074
    %1407 = vmatprep.subr.bf16.mxu0 %v1083
    %1408 = vmatpush1.bf16.msra.mxu0 %v1082
    %1409 = vmatprep.subr.bf16.mxu0 %v1091
    %1410 = vmatpush1.bf16.msra.mxu0 %v1090
    %1411 = vmatprep.subr.bf16.mxu0 %v1099
    %1412 = vmatpush1.bf16.msra.mxu0 %v1098
    %1413 = vmatprep.subr.bf16.mxu0 %v1107
    %1414 = vmatpush1.bf16.msra.mxu0 %v1106
    %1415 = vmatprep.subr.bf16.mxu0 %v1115
    %1416 = vmatpush1.bf16.msra.mxu0 %v1114
    %1417 = vmatprep.subr.bf16.mxu0 %v1123
    %1418 = vmatpush1.bf16.msra.mxu0 %v1122
    %1419 = vmatprep.subr.bf16.mxu0 %v1131
    %1420 = vmatpush1.bf16.msra.mxu0 %v1130
    %1421 = vmatprep.subr.bf16.mxu0 %v1139
    %1422 = vmatpush1.bf16.msra.mxu0 %v1138
    %1423 = vmatprep.mubr.bf16.mxu0 %v499
    %1424 = vmatmul.mubr.bf16.gmra.mrb[0].mxu0 %v498
    %v1425 = vpop.f32.mrb[0].mxu0
    %v1426 = vadd.f32 %v441, %v1425
    %v1427 = vpop.f32.mrb[0].mxu0
    %v1428 = vadd.f32 %v445, %v1427
    %v1429 = vpop.f32.mrb[0].mxu0
    %v1430 = vpop.f32.mrb[0].mxu0
    %1431 = vdwg.mxu0
    %s1432 = smul.u32 1, 8
    %s1433 = smul.addr %s1432, 8
    %s1434 = scalar_lea.vmem [#allocation2], %s1433
    %v1435 = vld [vmem:[%s1434] sm:$0xff]
    %v1436 = vld [vmem:[%s1434 + $0x8] sm:$0xff]
    %v1437 = vld [vmem:[%s1434 + $0x10] sm:$0xff]
    %v1438 = vld [vmem:[%s1434 + $0x18] sm:$0xff]
    %v1439 = vld [vmem:[%s1434 + $0x20] sm:$0xff]
    %v1440 = vld [vmem:[%s1434 + $0x28] sm:$0xff]
    %v1441 = vld [vmem:[%s1434 + $0x30] sm:$0xff]
    %v1442 = vld [vmem:[%s1434 + $0x38] sm:$0xff]
    %v1443 = vld [vmem:[#allocation3] sm:$0xff]
    %v1444 = vld [vmem:[#allocation3 + $0x8] sm:$0xff]
    %v1445 = vld [vmem:[#allocation3 + $0x10] sm:$0xff]
    %v1446 = vld [vmem:[#allocation3 + $0x18] sm:$0xff]
    %v1447 = vld [vmem:[#allocation3 + $0x20] sm:$0xff]
    %v1448 = vld [vmem:[#allocation3 + $0x28] sm:$0xff]
    %v1449 = vld [vmem:[#allocation3 + $0x30] sm:$0xff]
    %v1450 = vld [vmem:[#allocation3 + $0x38] sm:$0xff]
    %v1451 = vld [vmem:[#allocation3 + $0x40] sm:$0xff]
    %v1452 = vld [vmem:[#allocation3 + $0x48] sm:$0xff]
    %v1453 = vld [vmem:[#allocation3 + $0x50] sm:$0xff]
    %v1454 = vld [vmem:[#allocation3 + $0x58] sm:$0xff]
    %v1455 = vld [vmem:[#allocation3 + $0x60] sm:$0xff]
    %v1456 = vld [vmem:[#allocation3 + $0x68] sm:$0xff]
    %v1457 = vld [vmem:[#allocation3 + $0x70] sm:$0xff]
    %v1458 = vld [vmem:[#allocation3 + $0x78] sm:$0xff]
    %v1459 = vld [vmem:[#allocation3 + $0x80] sm:$0xff]
    %v1460 = vld [vmem:[#allocation3 + $0x88] sm:$0xff]
    %v1461 = vld [vmem:[#allocation3 + $0x90] sm:$0xff]
    %v1462 = vld [vmem:[#allocation3 + $0x98] sm:$0xff]
    %v1463 = vld [vmem:[#allocation3 + $0xa0] sm:$0xff]
    %v1464 = vld [vmem:[#allocation3 + $0xa8] sm:$0xff]
    %v1465 = vld [vmem:[#allocation3 + $0xb0] sm:$0xff]
    %v1466 = vld [vmem:[#allocation3 + $0xb8] sm:$0xff]
    %v1467 = vld [vmem:[#allocation3 + $0xc0] sm:$0xff]
    %v1468 = vld [vmem:[#allocation3 + $0xc8] sm:$0xff]
    %v1469 = vld [vmem:[#allocation3 + $0xd0] sm:$0xff]
    %v1470 = vld [vmem:[#allocation3 + $0xd8] sm:$0xff]
    %v1471 = vld [vmem:[#allocation3 + $0xe0] sm:$0xff]
    %v1472 = vld [vmem:[#allocation3 + $0xe8] sm:$0xff]
    %v1473 = vld [vmem:[#allocation3 + $0xf0] sm:$0xff]
    %v1474 = vld [vmem:[#allocation3 + $0xf8] sm:$0xff]
    %v1475 = vld [vmem:[#allocation3 + $0x100] sm:$0xff]
    %v1476 = vld [vmem:[#allocation3 + $0x108] sm:$0xff]
    %v1477 = vld [vmem:[#allocation3 + $0x110] sm:$0xff]
    %v1478 = vld [vmem:[#allocation3 + $0x118] sm:$0xff]
    %v1479 = vld [vmem:[#allocation3 + $0x120] sm:$0xff]
    %v1480 = vld [vmem:[#allocation3 + $0x128] sm:$0xff]
    %v1481 = vld [vmem:[#allocation3 + $0x130] sm:$0xff]
    %v1482 = vld [vmem:[#allocation3 + $0x138] sm:$0xff]
    %v1483 = vld [vmem:[#allocation3 + $0x140] sm:$0xff]
    %v1484 = vld [vmem:[#allocation3 + $0x148] sm:$0xff]
    %v1485 = vld [vmem:[#allocation3 + $0x150] sm:$0xff]
    %v1486 = vld [vmem:[#allocation3 + $0x158] sm:$0xff]
    %v1487 = vld [vmem:[#allocation3 + $0x160] sm:$0xff]
    %v1488 = vld [vmem:[#allocation3 + $0x168] sm:$0xff]
    %v1489 = vld [vmem:[#allocation3 + $0x170] sm:$0xff]
    %v1490 = vld [vmem:[#allocation3 + $0x178] sm:$0xff]
    %v1491 = vld [vmem:[#allocation3 + $0x180] sm:$0xff]
    %v1492 = vld [vmem:[#allocation3 + $0x188] sm:$0xff]
    %v1493 = vld [vmem:[#allocation3 + $0x190] sm:$0xff]
    %v1494 = vld [vmem:[#allocation3 + $0x198] sm:$0xff]
    %v1495 = vld [vmem:[#allocation3 + $0x1a0] sm:$0xff]
    %v1496 = vld [vmem:[#allocation3 + $0x1a8] sm:$0xff]
    %v1497 = vld [vmem:[#allocation3 + $0x1b0] sm:$0xff]
    %v1498 = vld [vmem:[#allocation3 + $0x1b8] sm:$0xff]
    %v1499 = vld [vmem:[#allocation3 + $0x1c0] sm:$0xff]
    %v1500 = vld [vmem:[#allocation3 + $0x1c8] sm:$0xff]
    %v1501 = vld [vmem:[#allocation3 + $0x1d0] sm:$0xff]
    %v1502 = vld [vmem:[#allocation3 + $0x1d8] sm:$0xff]
    %v1503 = vld [vmem:[#allocation3 + $0x1e0] sm:$0xff]
    %v1504 = vld [vmem:[#allocation3 + $0x1e8] sm:$0xff]
    %v1505 = vld [vmem:[#allocation3 + $0x1f0] sm:$0xff]
    %v1506 = vld [vmem:[#allocation3 + $0x1f8] sm:$0xff]
    %v1507 = vld [vmem:[#allocation3 + $0x200] sm:$0xff]
    %v1508 = vld [vmem:[#allocation3 + $0x208] sm:$0xff]
    %v1509 = vld [vmem:[#allocation3 + $0x210] sm:$0xff]
    %v1510 = vld [vmem:[#allocation3 + $0x218] sm:$0xff]
    %v1511 = vld [vmem:[#allocation3 + $0x220] sm:$0xff]
    %v1512 = vld [vmem:[#allocation3 + $0x228] sm:$0xff]
    %v1513 = vld [vmem:[#allocation3 + $0x230] sm:$0xff]
    %v1514 = vld [vmem:[#allocation3 + $0x238] sm:$0xff]
    %v1515 = vld [vmem:[#allocation3 + $0x240] sm:$0xff]
    %v1516 = vld [vmem:[#allocation3 + $0x248] sm:$0xff]
    %v1517 = vld [vmem:[#allocation3 + $0x250] sm:$0xff]
    %v1518 = vld [vmem:[#allocation3 + $0x258] sm:$0xff]
    %v1519 = vld [vmem:[#allocation3 + $0x260] sm:$0xff]
    %v1520 = vld [vmem:[#allocation3 + $0x268] sm:$0xff]
    %v1521 = vld [vmem:[#allocation3 + $0x270] sm:$0xff]
    %v1522 = vld [vmem:[#allocation3 + $0x278] sm:$0xff]
    %v1523 = vld [vmem:[#allocation3 + $0x280] sm:$0xff]
    %v1524 = vld [vmem:[#allocation3 + $0x288] sm:$0xff]
    %v1525 = vld [vmem:[#allocation3 + $0x290] sm:$0xff]
    %v1526 = vld [vmem:[#allocation3 + $0x298] sm:$0xff]
    %v1527 = vld [vmem:[#allocation3 + $0x2a0] sm:$0xff]
    %v1528 = vld [vmem:[#allocation3 + $0x2a8] sm:$0xff]
    %v1529 = vld [vmem:[#allocation3 + $0x2b0] sm:$0xff]
    %v1530 = vld [vmem:[#allocation3 + $0x2b8] sm:$0xff]
    %v1531 = vld [vmem:[#allocation3 + $0x2c0] sm:$0xff]
    %v1532 = vld [vmem:[#allocation3 + $0x2c8] sm:$0xff]
    %v1533 = vld [vmem:[#allocation3 + $0x2d0] sm:$0xff]
    %v1534 = vld [vmem:[#allocation3 + $0x2d8] sm:$0xff]
    %v1535 = vld [vmem:[#allocation3 + $0x2e0] sm:$0xff]
    %v1536 = vld [vmem:[#allocation3 + $0x2e8] sm:$0xff]
    %v1537 = vld [vmem:[#allocation3 + $0x2f0] sm:$0xff]
    %v1538 = vld [vmem:[#allocation3 + $0x2f8] sm:$0xff]
    %v1539 = vld [vmem:[#allocation3 + $0x300] sm:$0xff]
    %v1540 = vld [vmem:[#allocation3 + $0x308] sm:$0xff]
    %v1541 = vld [vmem:[#allocation3 + $0x310] sm:$0xff]
    %v1542 = vld [vmem:[#allocation3 + $0x318] sm:$0xff]
    %v1543 = vld [vmem:[#allocation3 + $0x320] sm:$0xff]
    %v1544 = vld [vmem:[#allocation3 + $0x328] sm:$0xff]
    %v1545 = vld [vmem:[#allocation3 + $0x330] sm:$0xff]
    %v1546 = vld [vmem:[#allocation3 + $0x338] sm:$0xff]
    %v1547 = vld [vmem:[#allocation3 + $0x340] sm:$0xff]
    %v1548 = vld [vmem:[#allocation3 + $0x348] sm:$0xff]
    %v1549 = vld [vmem:[#allocation3 + $0x350] sm:$0xff]
    %v1550 = vld [vmem:[#allocation3 + $0x358] sm:$0xff]
    %v1551 = vld [vmem:[#allocation3 + $0x360] sm:$0xff]
    %v1552 = vld [vmem:[#allocation3 + $0x368] sm:$0xff]
    %v1553 = vld [vmem:[#allocation3 + $0x370] sm:$0xff]
    %v1554 = vld [vmem:[#allocation3 + $0x378] sm:$0xff]
    %v1555 = vld [vmem:[#allocation3 + $0x380] sm:$0xff]
    %v1556 = vld [vmem:[#allocation3 + $0x388] sm:$0xff]
    %v1557 = vld [vmem:[#allocation3 + $0x390] sm:$0xff]
    %v1558 = vld [vmem:[#allocation3 + $0x398] sm:$0xff]
    %v1559 = vld [vmem:[#allocation3 + $0x3a0] sm:$0xff]
    %v1560 = vld [vmem:[#allocation3 + $0x3a8] sm:$0xff]
    %v1561 = vld [vmem:[#allocation3 + $0x3b0] sm:$0xff]
    %v1562 = vld [vmem:[#allocation3 + $0x3b8] sm:$0xff]
    %v1563 = vld [vmem:[#allocation3 + $0x3c0] sm:$0xff]
    %v1564 = vld [vmem:[#allocation3 + $0x3c8] sm:$0xff]
    %v1565 = vld [vmem:[#allocation3 + $0x3d0] sm:$0xff]
    %v1566 = vld [vmem:[#allocation3 + $0x3d8] sm:$0xff]
    %v1567 = vld [vmem:[#allocation3 + $0x3e0] sm:$0xff]
    %v1568 = vld [vmem:[#allocation3 + $0x3e8] sm:$0xff]
    %v1569 = vld [vmem:[#allocation3 + $0x3f0] sm:$0xff]
    %v1570 = vld [vmem:[#allocation3 + $0x3f8] sm:$0xff]
    %v1699 = vunpack.c.l.b16 %v1443
    %v1700 = vunpack.c.h.b16 %v1443
    %v1701 = vunpack.c.l.b16 %v1444
    %v1702 = vunpack.c.h.b16 %v1444
    %v1703 = vunpack.c.l.b16 %v1445
    %v1704 = vunpack.c.h.b16 %v1445
    %v1705 = vunpack.c.l.b16 %v1446
    %v1706 = vunpack.c.h.b16 %v1446
    %v1707 = vunpack.c.l.b16 %v1447
    %v1708 = vunpack.c.h.b16 %v1447
    %v1709 = vunpack.c.l.b16 %v1448
    %v1710 = vunpack.c.h.b16 %v1448
    %v1711 = vunpack.c.l.b16 %v1449
    %v1712 = vunpack.c.h.b16 %v1449
    %v1713 = vunpack.c.l.b16 %v1450
    %v1714 = vunpack.c.h.b16 %v1450
    %v1715 = vunpack.c.l.b16 %v1451
    %v1716 = vunpack.c.h.b16 %v1451
    %v1717 = vunpack.c.l.b16 %v1452
    %v1718 = vunpack.c.h.b16 %v1452
    %v1719 = vunpack.c.l.b16 %v1453
    %v1720 = vunpack.c.h.b16 %v1453
    %v1721 = vunpack.c.l.b16 %v1454
    %v1722 = vunpack.c.h.b16 %v1454
    %v1723 = vunpack.c.l.b16 %v1455
    %v1724 = vunpack.c.h.b16 %v1455
    %v1725 = vunpack.c.l.b16 %v1456
    %v1726 = vunpack.c.h.b16 %v1456
    %v1727 = vunpack.c.l.b16 %v1457
    %v1728 = vunpack.c.h.b16 %v1457
    %v1729 = vunpack.c.l.b16 %v1458
    %v1730 = vunpack.c.h.b16 %v1458
    %v1731 = vunpack.c.l.b16 %v1459
    %v1732 = vunpack.c.h.b16 %v1459
    %v1733 = vunpack.c.l.b16 %v1460
    %v1734 = vunpack.c.h.b16 %v1460
    %v1735 = vunpack.c.l.b16 %v1461
    %v1736 = vunpack.c.h.b16 %v1461
    %v1737 = vunpack.c.l.b16 %v1462
    %v1738 = vunpack.c.h.b16 %v1462
    %v1739 = vunpack.c.l.b16 %v1463
    %v1740 = vunpack.c.h.b16 %v1463
    %v1741 = vunpack.c.l.b16 %v1464
    %v1742 = vunpack.c.h.b16 %v1464
    %v1743 = vunpack.c.l.b16 %v1465
    %v1744 = vunpack.c.h.b16 %v1465
    %v1745 = vunpack.c.l.b16 %v1466
    %v1746 = vunpack.c.h.b16 %v1466
    %v1747 = vunpack.c.l.b16 %v1467
    %v1748 = vunpack.c.h.b16 %v1467
    %v1749 = vunpack.c.l.b16 %v1468
    %v1750 = vunpack.c.h.b16 %v1468
    %v1751 = vunpack.c.l.b16 %v1469
    %v1752 = vunpack.c.h.b16 %v1469
    %v1753 = vunpack.c.l.b16 %v1470
    %v1754 = vunpack.c.h.b16 %v1470
    %v1755 = vunpack.c.l.b16 %v1471
    %v1756 = vunpack.c.h.b16 %v1471
    %v1757 = vunpack.c.l.b16 %v1472
    %v1758 = vunpack.c.h.b16 %v1472
    %v1759 = vunpack.c.l.b16 %v1473
    %v1760 = vunpack.c.h.b16 %v1473
    %v1761 = vunpack.c.l.b16 %v1474
    %v1762 = vunpack.c.h.b16 %v1474
    %v1763 = vunpack.c.l.b16 %v1475
    %v1764 = vunpack.c.h.b16 %v1475
    %v1765 = vunpack.c.l.b16 %v1476
    %v1766 = vunpack.c.h.b16 %v1476
    %v1767 = vunpack.c.l.b16 %v1477
    %v1768 = vunpack.c.h.b16 %v1477
    %v1769 = vunpack.c.l.b16 %v1478
    %v1770 = vunpack.c.h.b16 %v1478
    %v1771 = vunpack.c.l.b16 %v1479
    %v1772 = vunpack.c.h.b16 %v1479
    %v1773 = vunpack.c.l.b16 %v1480
    %v1774 = vunpack.c.h.b16 %v1480
    %v1775 = vunpack.c.l.b16 %v1481
    %v1776 = vunpack.c.h.b16 %v1481
    %v1777 = vunpack.c.l.b16 %v1482
    %v1778 = vunpack.c.h.b16 %v1482
    %v1779 = vunpack.c.l.b16 %v1483
    %v1780 = vunpack.c.h.b16 %v1483
    %v1781 = vunpack.c.l.b16 %v1484
    %v1782 = vunpack.c.h.b16 %v1484
    %v1783 = vunpack.c.l.b16 %v1485
    %v1784 = vunpack.c.h.b16 %v1485
    %v1785 = vunpack.c.l.b16 %v1486
    %v1786 = vunpack.c.h.b16 %v1486
    %v1787 = vunpack.c.l.b16 %v1487
    %v1788 = vunpack.c.h.b16 %v1487
    %v1789 = vunpack.c.l.b16 %v1488
    %v1790 = vunpack.c.h.b16 %v1488
    %v1791 = vunpack.c.l.b16 %v1489
    %v1792 = vunpack.c.h.b16 %v1489
    %v1793 = vunpack.c.l.b16 %v1490
    %v1794 = vunpack.c.h.b16 %v1490
    %v1795 = vunpack.c.l.b16 %v1491
    %v1796 = vunpack.c.h.b16 %v1491
    %v1797 = vunpack.c.l.b16 %v1492
    %v1798 = vunpack.c.h.b16 %v1492
    %v1799 = vunpack.c.l.b16 %v1493
    %v1800 = vunpack.c.h.b16 %v1493
    %v1801 = vunpack.c.l.b16 %v1494
    %v1802 = vunpack.c.h.b16 %v1494
    %v1803 = vunpack.c.l.b16 %v1495
    %v1804 = vunpack.c.h.b16 %v1495
    %v1805 = vunpack.c.l.b16 %v1496
    %v1806 = vunpack.c.h.b16 %v1496
    %v1807 = vunpack.c.l.b16 %v1497
    %v1808 = vunpack.c.h.b16 %v1497
    %v1809 = vunpack.c.l.b16 %v1498
    %v1810 = vunpack.c.h.b16 %v1498
    %v1811 = vunpack.c.l.b16 %v1499
    %v1812 = vunpack.c.h.b16 %v1499
    %v1813 = vunpack.c.l.b16 %v1500
    %v1814 = vunpack.c.h.b16 %v1500
    %v1815 = vunpack.c.l.b16 %v1501
    %v1816 = vunpack.c.h.b16 %v1501
    %v1817 = vunpack.c.l.b16 %v1502
    %v1818 = vunpack.c.h.b16 %v1502
    %v1819 = vunpack.c.l.b16 %v1503
    %v1820 = vunpack.c.h.b16 %v1503
    %v1821 = vunpack.c.l.b16 %v1504
    %v1822 = vunpack.c.h.b16 %v1504
    %v1823 = vunpack.c.l.b16 %v1505
    %v1824 = vunpack.c.h.b16 %v1505
    %v1825 = vunpack.c.l.b16 %v1506
    %v1826 = vunpack.c.h.b16 %v1506
    %v1827 = vunpack.c.l.b16 %v1507
    %v1828 = vunpack.c.h.b16 %v1507
    %v1829 = vunpack.c.l.b16 %v1508
    %v1830 = vunpack.c.h.b16 %v1508
    %v1831 = vunpack.c.l.b16 %v1509
    %v1832 = vunpack.c.h.b16 %v1509
    %v1833 = vunpack.c.l.b16 %v1510
    %v1834 = vunpack.c.h.b16 %v1510
    %v1835 = vunpack.c.l.b16 %v1511
    %v1836 = vunpack.c.h.b16 %v1511
    %v1837 = vunpack.c.l.b16 %v1512
    %v1838 = vunpack.c.h.b16 %v1512
    %v1839 = vunpack.c.l.b16 %v1513
    %v1840 = vunpack.c.h.b16 %v1513
    %v1841 = vunpack.c.l.b16 %v1514
    %v1842 = vunpack.c.h.b16 %v1514
    %v1843 = vunpack.c.l.b16 %v1515
    %v1844 = vunpack.c.h.b16 %v1515
    %v1845 = vunpack.c.l.b16 %v1516
    %v1846 = vunpack.c.h.b16 %v1516
    %v1847 = vunpack.c.l.b16 %v1517
    %v1848 = vunpack.c.h.b16 %v1517
    %v1849 = vunpack.c.l.b16 %v1518
    %v1850 = vunpack.c.h.b16 %v1518
    %v1851 = vunpack.c.l.b16 %v1519
    %v1852 = vunpack.c.h.b16 %v1519
    %v1853 = vunpack.c.l.b16 %v1520
    %v1854 = vunpack.c.h.b16 %v1520
    %v1855 = vunpack.c.l.b16 %v1521
    %v1856 = vunpack.c.h.b16 %v1521
    %v1857 = vunpack.c.l.b16 %v1522
    %v1858 = vunpack.c.h.b16 %v1522
    %v1859 = vunpack.c.l.b16 %v1523
    %v1860 = vunpack.c.h.b16 %v1523
    %v1861 = vunpack.c.l.b16 %v1524
    %v1862 = vunpack.c.h.b16 %v1524
    %v1863 = vunpack.c.l.b16 %v1525
    %v1864 = vunpack.c.h.b16 %v1525
    %v1865 = vunpack.c.l.b16 %v1526
    %v1866 = vunpack.c.h.b16 %v1526
    %v1867 = vunpack.c.l.b16 %v1527
    %v1868 = vunpack.c.h.b16 %v1527
    %v1869 = vunpack.c.l.b16 %v1528
    %v1870 = vunpack.c.h.b16 %v1528
    %v1871 = vunpack.c.l.b16 %v1529
    %v1872 = vunpack.c.h.b16 %v1529
    %v1873 = vunpack.c.l.b16 %v1530
    %v1874 = vunpack.c.h.b16 %v1530
    %v1875 = vunpack.c.l.b16 %v1531
    %v1876 = vunpack.c.h.b16 %v1531
    %v1877 = vunpack.c.l.b16 %v1532
    %v1878 = vunpack.c.h.b16 %v1532
    %v1879 = vunpack.c.l.b16 %v1533
    %v1880 = vunpack.c.h.b16 %v1533
    %v1881 = vunpack.c.l.b16 %v1534
    %v1882 = vunpack.c.h.b16 %v1534
    %v1883 = vunpack.c.l.b16 %v1535
    %v1884 = vunpack.c.h.b16 %v1535
    %v1885 = vunpack.c.l.b16 %v1536
    %v1886 = vunpack.c.h.b16 %v1536
    %v1887 = vunpack.c.l.b16 %v1537
    %v1888 = vunpack.c.h.b16 %v1537
    %v1889 = vunpack.c.l.b16 %v1538
    %v1890 = vunpack.c.h.b16 %v1538
    %v1891 = vunpack.c.l.b16 %v1539
    %v1892 = vunpack.c.h.b16 %v1539
    %v1893 = vunpack.c.l.b16 %v1540
    %v1894 = vunpack.c.h.b16 %v1540
    %v1895 = vunpack.c.l.b16 %v1541
    %v1896 = vunpack.c.h.b16 %v1541
    %v1897 = vunpack.c.l.b16 %v1542
    %v1898 = vunpack.c.h.b16 %v1542
    %v1899 = vunpack.c.l.b16 %v1543
    %v1900 = vunpack.c.h.b16 %v1543
    %v1901 = vunpack.c.l.b16 %v1544
    %v1902 = vunpack.c.h.b16 %v1544
    %v1903 = vunpack.c.l.b16 %v1545
    %v1904 = vunpack.c.h.b16 %v1545
    %v1905 = vunpack.c.l.b16 %v1546
    %v1906 = vunpack.c.h.b16 %v1546
    %v1907 = vunpack.c.l.b16 %v1547
    %v1908 = vunpack.c.h.b16 %v1547
    %v1909 = vunpack.c.l.b16 %v1548
    %v1910 = vunpack.c.h.b16 %v1548
    %v1911 = vunpack.c.l.b16 %v1549
    %v1912 = vunpack.c.h.b16 %v1549
    %v1913 = vunpack.c.l.b16 %v1550
    %v1914 = vunpack.c.h.b16 %v1550
    %v1915 = vunpack.c.l.b16 %v1551
    %v1916 = vunpack.c.h.b16 %v1551
    %v1917 = vunpack.c.l.b16 %v1552
    %v1918 = vunpack.c.h.b16 %v1552
    %v1919 = vunpack.c.l.b16 %v1553
    %v1920 = vunpack.c.h.b16 %v1553
    %v1921 = vunpack.c.l.b16 %v1554
    %v1922 = vunpack.c.h.b16 %v1554
    %v1923 = vunpack.c.l.b16 %v1555
    %v1924 = vunpack.c.h.b16 %v1555
    %v1925 = vunpack.c.l.b16 %v1556
    %v1926 = vunpack.c.h.b16 %v1556
    %v1927 = vunpack.c.l.b16 %v1557
    %v1928 = vunpack.c.h.b16 %v1557
    %v1929 = vunpack.c.l.b16 %v1558
    %v1930 = vunpack.c.h.b16 %v1558
    %v1931 = vunpack.c.l.b16 %v1559
    %v1932 = vunpack.c.h.b16 %v1559
    %v1933 = vunpack.c.l.b16 %v1560
    %v1934 = vunpack.c.h.b16 %v1560
    %v1935 = vunpack.c.l.b16 %v1561
    %v1936 = vunpack.c.h.b16 %v1561
    %v1937 = vunpack.c.l.b16 %v1562
    %v1938 = vunpack.c.h.b16 %v1562
    %v1939 = vunpack.c.l.b16 %v1563
    %v1940 = vunpack.c.h.b16 %v1563
    %v1941 = vunpack.c.l.b16 %v1564
    %v1942 = vunpack.c.h.b16 %v1564
    %v1943 = vunpack.c.l.b16 %v1565
    %v1944 = vunpack.c.h.b16 %v1565
    %v1945 = vunpack.c.l.b16 %v1566
    %v1946 = vunpack.c.h.b16 %v1566
    %v1947 = vunpack.c.l.b16 %v1567
    %v1948 = vunpack.c.h.b16 %v1567
    %v1949 = vunpack.c.l.b16 %v1568
    %v1950 = vunpack.c.h.b16 %v1568
    %v1951 = vunpack.c.l.b16 %v1569
    %v1952 = vunpack.c.h.b16 %v1569
    %v1953 = vunpack.c.l.b16 %v1570
    %v1954 = vunpack.c.h.b16 %v1570
    %v1955 = vpack.c.b16 %v1707, %v1699
    %v1956 = vpack.c.b16 %v1708, %v1700
    %v1957 = vpack.c.b16 %v1709, %v1701
    %v1958 = vpack.c.b16 %v1710, %v1702
    %v1959 = vpack.c.b16 %v1711, %v1703
    %v1960 = vpack.c.b16 %v1712, %v1704
    %v1961 = vpack.c.b16 %v1713, %v1705
    %v1962 = vpack.c.b16 %v1714, %v1706
    %v1963 = vpack.c.b16 %v1723, %v1715
    %v1964 = vpack.c.b16 %v1724, %v1716
    %v1965 = vpack.c.b16 %v1725, %v1717
    %v1966 = vpack.c.b16 %v1726, %v1718
    %v1967 = vpack.c.b16 %v1727, %v1719
    %v1968 = vpack.c.b16 %v1728, %v1720
    %v1969 = vpack.c.b16 %v1729, %v1721
    %v1970 = vpack.c.b16 %v1730, %v1722
    %v1971 = vpack.c.b16 %v1739, %v1731
    %v1972 = vpack.c.b16 %v1740, %v1732
    %v1973 = vpack.c.b16 %v1741, %v1733
    %v1974 = vpack.c.b16 %v1742, %v1734
    %v1975 = vpack.c.b16 %v1743, %v1735
    %v1976 = vpack.c.b16 %v1744, %v1736
    %v1977 = vpack.c.b16 %v1745, %v1737
    %v1978 = vpack.c.b16 %v1746, %v1738
    %v1979 = vpack.c.b16 %v1755, %v1747
    %v1980 = vpack.c.b16 %v1756, %v1748
    %v1981 = vpack.c.b16 %v1757, %v1749
    %v1982 = vpack.c.b16 %v1758, %v1750
    %v1983 = vpack.c.b16 %v1759, %v1751
    %v1984 = vpack.c.b16 %v1760, %v1752
    %v1985 = vpack.c.b16 %v1761, %v1753
    %v1986 = vpack.c.b16 %v1762, %v1754
    %v1987 = vpack.c.b16 %v1771, %v1763
    %v1988 = vpack.c.b16 %v1772, %v1764
    %v1989 = vpack.c.b16 %v1773, %v1765
    %v1990 = vpack.c.b16 %v1774, %v1766
    %v1991 = vpack.c.b16 %v1775, %v1767
    %v1992 = vpack.c.b16 %v1776, %v1768
    %v1993 = vpack.c.b16 %v1777, %v1769
    %v1994 = vpack.c.b16 %v1778, %v1770
    %v1995 = vpack.c.b16 %v1787, %v1779
    %v1996 = vpack.c.b16 %v1788, %v1780
    %v1997 = vpack.c.b16 %v1789, %v1781
    %v1998 = vpack.c.b16 %v1790, %v1782
    %v1999 = vpack.c.b16 %v1791, %v1783
    %v2000 = vpack.c.b16 %v1792, %v1784
    %v2001 = vpack.c.b16 %v1793, %v1785
    %v2002 = vpack.c.b16 %v1794, %v1786
    %v2003 = vpack.c.b16 %v1803, %v1795
    %v2004 = vpack.c.b16 %v1804, %v1796
    %v2005 = vpack.c.b16 %v1805, %v1797
    %v2006 = vpack.c.b16 %v1806, %v1798
    %v2007 = vpack.c.b16 %v1807, %v1799
    %v2008 = vpack.c.b16 %v1808, %v1800
    %v2009 = vpack.c.b16 %v1809, %v1801
    %v2010 = vpack.c.b16 %v1810, %v1802
    %v2011 = vpack.c.b16 %v1819, %v1811
    %v2012 = vpack.c.b16 %v1820, %v1812
    %v2013 = vpack.c.b16 %v1821, %v1813
    %v2014 = vpack.c.b16 %v1822, %v1814
    %v2015 = vpack.c.b16 %v1823, %v1815
    %v2016 = vpack.c.b16 %v1824, %v1816
    %v2017 = vpack.c.b16 %v1825, %v1817
    %v2018 = vpack.c.b16 %v1826, %v1818
    %v2019 = vpack.c.b16 %v1835, %v1827
    %v2020 = vpack.c.b16 %v1836, %v1828
    %v2021 = vpack.c.b16 %v1837, %v1829
    %v2022 = vpack.c.b16 %v1838, %v1830
    %v2023 = vpack.c.b16 %v1839, %v1831
    %v2024 = vpack.c.b16 %v1840, %v1832
    %v2025 = vpack.c.b16 %v1841, %v1833
    %v2026 = vpack.c.b16 %v1842, %v1834
    %v2027 = vpack.c.b16 %v1851, %v1843
    %v2028 = vpack.c.b16 %v1852, %v1844
    %v2029 = vpack.c.b16 %v1853, %v1845
    %v2030 = vpack.c.b16 %v1854, %v1846
    %v2031 = vpack.c.b16 %v1855, %v1847
    %v2032 = vpack.c.b16 %v1856, %v1848
    %v2033 = vpack.c.b16 %v1857, %v1849
    %v2034 = vpack.c.b16 %v1858, %v1850
    %v2035 = vpack.c.b16 %v1867, %v1859
    %v2036 = vpack.c.b16 %v1868, %v1860
    %v2037 = vpack.c.b16 %v1869, %v1861
    %v2038 = vpack.c.b16 %v1870, %v1862
    %v2039 = vpack.c.b16 %v1871, %v1863
    %v2040 = vpack.c.b16 %v1872, %v1864
    %v2041 = vpack.c.b16 %v1873, %v1865
    %v2042 = vpack.c.b16 %v1874, %v1866
    %v2043 = vpack.c.b16 %v1883, %v1875
    %v2044 = vpack.c.b16 %v1884, %v1876
    %v2045 = vpack.c.b16 %v1885, %v1877
    %v2046 = vpack.c.b16 %v1886, %v1878
    %v2047 = vpack.c.b16 %v1887, %v1879
    %v2048 = vpack.c.b16 %v1888, %v1880
    %v2049 = vpack.c.b16 %v1889, %v1881
    %v2050 = vpack.c.b16 %v1890, %v1882
    %v2051 = vpack.c.b16 %v1899, %v1891
    %v2052 = vpack.c.b16 %v1900, %v1892
    %v2053 = vpack.c.b16 %v1901, %v1893
    %v2054 = vpack.c.b16 %v1902, %v1894
    %v2055 = vpack.c.b16 %v1903, %v1895
    %v2056 = vpack.c.b16 %v1904, %v1896
    %v2057 = vpack.c.b16 %v1905, %v1897
    %v2058 = vpack.c.b16 %v1906, %v1898
    %v2059 = vpack.c.b16 %v1915, %v1907
    %v2060 = vpack.c.b16 %v1916, %v1908
    %v2061 = vpack.c.b16 %v1917, %v1909
    %v2062 = vpack.c.b16 %v1918, %v1910
    %v2063 = vpack.c.b16 %v1919, %v1911
    %v2064 = vpack.c.b16 %v1920, %v1912
    %v2065 = vpack.c.b16 %v1921, %v1913
    %v2066 = vpack.c.b16 %v1922, %v1914
    %v2067 = vpack.c.b16 %v1931, %v1923
    %v2068 = vpack.c.b16 %v1932, %v1924
    %v2069 = vpack.c.b16 %v1933, %v1925
    %v2070 = vpack.c.b16 %v1934, %v1926
    %v2071 = vpack.c.b16 %v1935, %v1927
    %v2072 = vpack.c.b16 %v1936, %v1928
    %v2073 = vpack.c.b16 %v1937, %v1929
    %v2074 = vpack.c.b16 %v1938, %v1930
    %v2075 = vpack.c.b16 %v1947, %v1939
    %v2076 = vpack.c.b16 %v1948, %v1940
    %v2077 = vpack.c.b16 %v1949, %v1941
    %v2078 = vpack.c.b16 %v1950, %v1942
    %v2079 = vpack.c.b16 %v1951, %v1943
    %v2080 = vpack.c.b16 %v1952, %v1944
    %v2081 = vpack.c.b16 %v1953, %v1945
    %v2082 = vpack.c.b16 %v1954, %v1946
    %2211 = vmatprep.subr.bf16.mxu0 %v1956
    %2212 = vmatpush1.bf16.msra.mxu0 %v1955
    %2213 = vmatprep.subr.bf16.mxu0 %v1964
    %2214 = vmatpush1.bf16.msra.mxu0 %v1963
    %2215 = vmatprep.subr.bf16.mxu0 %v1972
    %2216 = vmatpush1.bf16.msra.mxu0 %v1971
    %2217 = vmatprep.subr.bf16.mxu0 %v1980
    %2218 = vmatpush1.bf16.msra.mxu0 %v1979
    %2219 = vmatprep.subr.bf16.mxu0 %v1988
    %2220 = vmatpush1.bf16.msra.mxu0 %v1987
    %2221 = vmatprep.subr.bf16.mxu0 %v1996
    %2222 = vmatpush1.bf16.msra.mxu0 %v1995
    %2223 = vmatprep.subr.bf16.mxu0 %v2004
    %2224 = vmatpush1.bf16.msra.mxu0 %v2003
    %2225 = vmatprep.subr.bf16.mxu0 %v2012
    %2226 = vmatpush1.bf16.msra.mxu0 %v2011
    %2227 = vmatprep.subr.bf16.mxu0 %v2020
    %2228 = vmatpush1.bf16.msra.mxu0 %v2019
    %2229 = vmatprep.subr.bf16.mxu0 %v2028
    %2230 = vmatpush1.bf16.msra.mxu0 %v2027
    %2231 = vmatprep.subr.bf16.mxu0 %v2036
    %2232 = vmatpush1.bf16.msra.mxu0 %v2035
    %2233 = vmatprep.subr.bf16.mxu0 %v2044
    %2234 = vmatpush1.bf16.msra.mxu0 %v2043
    %2235 = vmatprep.subr.bf16.mxu0 %v2052
    %2236 = vmatpush1.bf16.msra.mxu0 %v2051
    %2237 = vmatprep.subr.bf16.mxu0 %v2060
    %2238 = vmatpush1.bf16.msra.mxu0 %v2059
    %2239 = vmatprep.subr.bf16.mxu0 %v2068
    %2240 = vmatpush1.bf16.msra.mxu0 %v2067
    %2241 = vmatprep.subr.bf16.mxu0 %v2076
    %2242 = vmatpush1.bf16.msra.mxu0 %v2075
    %2243 = vmatprep.mubr.bf16.mxu0 %v499
    %2244 = vmatmul.mubr.bf16.gmra.mrb[0].mxu0 %v498
    %v2245 = vpop.f32.mrb[0].mxu0
    %v2246 = vadd.f32 0.0, %v2245
    %v2247 = vpop.f32.mrb[0].mxu0
    %v2248 = vadd.f32 0.0, %v2247
    %v2249 = vpop.f32.mrb[0].mxu0
    %v2250 = vpop.f32.mrb[0].mxu0
    %2251 = vdwg.mxu0
    %2252 = vmatprep.subr.bf16.mxu0 %v1958
    %2253 = vmatpush1.bf16.msra.mxu0 %v1957
    %2254 = vmatprep.subr.bf16.mxu0 %v1966
    %2255 = vmatpush1.bf16.msra.mxu0 %v1965
    %2256 = vmatprep.subr.bf16.mxu0 %v1974
    %2257 = vmatpush1.bf16.msra.mxu0 %v1973
    %2258 = vmatprep.subr.bf16.mxu0 %v1982
    %2259 = vmatpush1.bf16.msra.mxu0 %v1981
    %2260 = vmatprep.subr.bf16.mxu0 %v1990
    %2261 = vmatpush1.bf16.msra.mxu0 %v1989
    %2262 = vmatprep.subr.bf16.mxu0 %v1998
    %2263 = vmatpush1.bf16.msra.mxu0 %v1997
    %2264 = vmatprep.subr.bf16.mxu0 %v2006
    %2265 = vmatpush1.bf16.msra.mxu0 %v2005
    %2266 = vmatprep.subr.bf16.mxu0 %v2014
    %2267 = vmatpush1.bf16.msra.mxu0 %v2013
    %2268 = vmatprep.subr.bf16.mxu0 %v2022
    %2269 = vmatpush1.bf16.msra.mxu0 %v2021
    %2270 = vmatprep.subr.bf16.mxu0 %v2030
    %2271 = vmatpush1.bf16.msra.mxu0 %v2029
    %2272 = vmatprep.subr.bf16.mxu0 %v2038
    %2273 = vmatpush1.bf16.msra.mxu0 %v2037
    %2274 = vmatprep.subr.bf16.mxu0 %v2046
    %2275 = vmatpush1.bf16.msra.mxu0 %v2045
    %2276 = vmatprep.subr.bf16.mxu0 %v2054
    %2277 = vmatpush1.bf16.msra.mxu0 %v2053
    %2278 = vmatprep.subr.bf16.mxu0 %v2062
    %2279 = vmatpush1.bf16.msra.mxu0 %v2061
    %2280 = vmatprep.subr.bf16.mxu0 %v2070
    %2281 = vmatpush1.bf16.msra.mxu0 %v2069
    %2282 = vmatprep.subr.bf16.mxu0 %v2078
    %2283 = vmatpush1.bf16.msra.mxu0 %v2077
    %2284 = vmatprep.mubr.bf16.mxu0 %v499
    %2285 = vmatmul.mubr.bf16.gmra.mrb[0].mxu0 %v498
    %v2286 = vpop.f32.mrb[0].mxu0
    %v2287 = vadd.f32 0.0, %v2286
    %v2288 = vpop.f32.mrb[0].mxu0
    %v2289 = vadd.f32 0.0, %v2288
    %v2290 = vpop.f32.mrb[0].mxu0
    %v2291 = vpop.f32.mrb[0].mxu0
    %2292 = vdwg.mxu0
    %2293 = vmatprep.subr.bf16.mxu0 %v1960
    %2294 = vmatpush1.bf16.msra.mxu0 %v1959
    %2295 = vmatprep.subr.bf16.mxu0 %v1968
    %2296 = vmatpush1.bf16.msra.mxu0 %v1967
    %2297 = vmatprep.subr.bf16.mxu0 %v1976
    %2298 = vmatpush1.bf16.msra.mxu0 %v1975
    %2299 = vmatprep.subr.bf16.mxu0 %v1984
    %2300 = vmatpush1.bf16.msra.mxu0 %v1983
    %2301 = vmatprep.subr.bf16.mxu0 %v1992
    %2302 = vmatpush1.bf16.msra.mxu0 %v1991
    %2303 = vmatprep.subr.bf16.mxu0 %v2000
    %2304 = vmatpush1.bf16.msra.mxu0 %v1999
    %2305 = vmatprep.subr.bf16.mxu0 %v2008
    %2306 = vmatpush1.bf16.msra.mxu0 %v2007
    %2307 = vmatprep.subr.bf16.mxu0 %v2016
    %2308 = vmatpush1.bf16.msra.mxu0 %v2015
    %2309 = vmatprep.subr.bf16.mxu0 %v2024
    %2310 = vmatpush1.bf16.msra.mxu0 %v2023
    %2311 = vmatprep.subr.bf16.mxu0 %v2032
    %2312 = vmatpush1.bf16.msra.mxu0 %v2031
    %2313 = vmatprep.subr.bf16.mxu0 %v2040
    %2314 = vmatpush1.bf16.msra.mxu0 %v2039
    %2315 = vmatprep.subr.bf16.mxu0 %v2048
    %2316 = vmatpush1.bf16.msra.mxu0 %v2047
    %2317 = vmatprep.subr.bf16.mxu0 %v2056
    %2318 = vmatpush1.bf16.msra.mxu0 %v2055
    %2319 = vmatprep.subr.bf16.mxu0 %v2064
    %2320 = vmatpush1.bf16.msra.mxu0 %v2063
    %2321 = vmatprep.subr.bf16.mxu0 %v2072
    %2322 = vmatpush1.bf16.msra.mxu0 %v2071
    %2323 = vmatprep.subr.bf16.mxu0 %v2080
    %2324 = vmatpush1.bf16.msra.mxu0 %v2079
    %2325 = vmatprep.mubr.bf16.mxu0 %v499
    %2326 = vmatmul.mubr.bf16.gmra.mrb[0].mxu0 %v498
    %v2327 = vpop.f32.mrb[0].mxu0
    %v2328 = vadd.f32 0.0, %v2327
    %v2329 = vpop.f32.mrb[0].mxu0
    %v2330 = vadd.f32 0.0, %v2329
    %v2331 = vpop.f32.mrb[0].mxu0
    %v2332 = vpop.f32.mrb[0].mxu0
    %2333 = vdwg.mxu0
    %2334 = vmatprep.subr.bf16.mxu0 %v1962
    %2335 = vmatpush1.bf16.msra.mxu0 %v1961
    %2336 = vmatprep.subr.bf16.mxu0 %v1970
    %2337 = vmatpush1.bf16.msra.mxu0 %v1969
    %2338 = vmatprep.subr.bf16.mxu0 %v1978
    %2339 = vmatpush1.bf16.msra.mxu0 %v1977
    %2340 = vmatprep.subr.bf16.mxu0 %v1986
    %2341 = vmatpush1.bf16.msra.mxu0 %v1985
    %2342 = vmatprep.subr.bf16.mxu0 %v1994
    %2343 = vmatpush1.bf16.msra.mxu0 %v1993
    %2344 = vmatprep.subr.bf16.mxu0 %v2002
    %2345 = vmatpush1.bf16.msra.mxu0 %v2001
    %2346 = vmatprep.subr.bf16.mxu0 %v2010
    %2347 = vmatpush1.bf16.msra.mxu0 %v2009
    %2348 = vmatprep.subr.bf16.mxu0 %v2018
    %2349 = vmatpush1.bf16.msra.mxu0 %v2017
    %2350 = vmatprep.subr.bf16.mxu0 %v2026
    %2351 = vmatpush1.bf16.msra.mxu0 %v2025
    %2352 = vmatprep.subr.bf16.mxu0 %v2034
    %2353 = vmatpush1.bf16.msra.mxu0 %v2033
    %2354 = vmatprep.subr.bf16.mxu0 %v2042
    %2355 = vmatpush1.bf16.msra.mxu0 %v2041
    %2356 = vmatprep.subr.bf16.mxu0 %v2050
    %2357 = vmatpush1.bf16.msra.mxu0 %v2049
    %2358 = vmatprep.subr.bf16.mxu0 %v2058
    %2359 = vmatpush1.bf16.msra.mxu0 %v2057
    %2360 = vmatprep.subr.bf16.mxu0 %v2066
    %2361 = vmatpush1.bf16.msra.mxu0 %v2065
    %2362 = vmatprep.subr.bf16.mxu0 %v2074
    %2363 = vmatpush1.bf16.msra.mxu0 %v2073
    %2364 = vmatprep.subr.bf16.mxu0 %v2082
    %2365 = vmatpush1.bf16.msra.mxu0 %v2081
    %2366 = vmatprep.mubr.bf16.mxu0 %v499
    %2367 = vmatmul.mubr.bf16.gmra.mrb[0].mxu0 %v498
    %v2368 = vpop.f32.mrb[0].mxu0
    %v2369 = vadd.f32 0.0, %v2368
    %v2370 = vpop.f32.mrb[0].mxu0
    %v2371 = vadd.f32 0.0, %v2370
    %v2372 = vpop.f32.mrb[0].mxu0
    %v2373 = vpop.f32.mrb[0].mxu0
    %2374 = vdwg.mxu0
    %v2375 = vadd.f32 %v1435, %v2246
    %v2376 = vadd.f32 %v1436, %v2248
    %v2377 = vadd.f32 %v1437, %v2287
    %v2378 = vadd.f32 %v1438, %v2289
    %v2379 = vadd.f32 %v1439, %v2328
    %v2380 = vadd.f32 %v1440, %v2330
    %v2381 = vadd.f32 %v1441, %v2369
    %v2382 = vadd.f32 %v1442, %v2371
    %v2383 = vld [vmem:[#allocation7] sm:$0xff]
    %v2384 = vld [vmem:[#allocation7 + $0x8] sm:$0xff]
    %v2385 = vld [vmem:[#allocation7 + $0x10] sm:$0xff]
    %v2386 = vld [vmem:[#allocation7 + $0x18] sm:$0xff]
    %v2387 = vld [vmem:[#allocation7 + $0x20] sm:$0xff]
    %v2388 = vld [vmem:[#allocation7 + $0x28] sm:$0xff]
    %v2389 = vld [vmem:[#allocation7 + $0x30] sm:$0xff]
    %v2390 = vld [vmem:[#allocation7 + $0x38] sm:$0xff]
    %v2391 = vld [vmem:[#allocation7 + $0x40] sm:$0xff]
    %v2392 = vld [vmem:[#allocation7 + $0x48] sm:$0xff]
    %v2393 = vld [vmem:[#allocation7 + $0x50] sm:$0xff]
    %v2394 = vld [vmem:[#allocation7 + $0x58] sm:$0xff]
    %v2395 = vld [vmem:[#allocation7 + $0x60] sm:$0xff]
    %v2396 = vld [vmem:[#allocation7 + $0x68] sm:$0xff]
    %v2397 = vld [vmem:[#allocation7 + $0x70] sm:$0xff]
    %v2398 = vld [vmem:[#allocation7 + $0x78] sm:$0xff]
    %v2399 = vld [vmem:[#allocation7 + $0x80] sm:$0xff]
    %v2400 = vld [vmem:[#allocation7 + $0x88] sm:$0xff]
    %v2401 = vld [vmem:[#allocation7 + $0x90] sm:$0xff]
    %v2402 = vld [vmem:[#allocation7 + $0x98] sm:$0xff]
    %v2403 = vld [vmem:[#allocation7 + $0xa0] sm:$0xff]
    %v2404 = vld [vmem:[#allocation7 + $0xa8] sm:$0xff]
    %v2405 = vld [vmem:[#allocation7 + $0xb0] sm:$0xff]
    %v2406 = vld [vmem:[#allocation7 + $0xb8] sm:$0xff]
    %v2407 = vld [vmem:[#allocation7 + $0xc0] sm:$0xff]
    %v2408 = vld [vmem:[#allocation7 + $0xc8] sm:$0xff]
    %v2409 = vld [vmem:[#allocation7 + $0xd0] sm:$0xff]
    %v2410 = vld [vmem:[#allocation7 + $0xd8] sm:$0xff]
    %v2411 = vld [vmem:[#allocation7 + $0xe0] sm:$0xff]
    %v2412 = vld [vmem:[#allocation7 + $0xe8] sm:$0xff]
    %v2413 = vld [vmem:[#allocation7 + $0xf0] sm:$0xff]
    %v2414 = vld [vmem:[#allocation7 + $0xf8] sm:$0xff]
    %v2415 = vld [vmem:[#allocation7 + $0x100] sm:$0xff]
    %v2416 = vld [vmem:[#allocation7 + $0x108] sm:$0xff]
    %v2417 = vld [vmem:[#allocation7 + $0x110] sm:$0xff]
    %v2418 = vld [vmem:[#allocation7 + $0x118] sm:$0xff]
    %v2419 = vld [vmem:[#allocation7 + $0x120] sm:$0xff]
    %v2420 = vld [vmem:[#allocation7 + $0x128] sm:$0xff]
    %v2421 = vld [vmem:[#allocation7 + $0x130] sm:$0xff]
    %v2422 = vld [vmem:[#allocation7 + $0x138] sm:$0xff]
    %v2423 = vld [vmem:[#allocation7 + $0x140] sm:$0xff]
    %v2424 = vld [vmem:[#allocation7 + $0x148] sm:$0xff]
    %v2425 = vld [vmem:[#allocation7 + $0x150] sm:$0xff]
    %v2426 = vld [vmem:[#allocation7 + $0x158] sm:$0xff]
    %v2427 = vld [vmem:[#allocation7 + $0x160] sm:$0xff]
    %v2428 = vld [vmem:[#allocation7 + $0x168] sm:$0xff]
    %v2429 = vld [vmem:[#allocation7 + $0x170] sm:$0xff]
    %v2430 = vld [vmem:[#allocation7 + $0x178] sm:$0xff]
    %v2431 = vld [vmem:[#allocation7 + $0x180] sm:$0xff]
    %v2432 = vld [vmem:[#allocation7 + $0x188] sm:$0xff]
    %v2433 = vld [vmem:[#allocation7 + $0x190] sm:$0xff]
    %v2434 = vld [vmem:[#allocation7 + $0x198] sm:$0xff]
    %v2435 = vld [vmem:[#allocation7 + $0x1a0] sm:$0xff]
    %v2436 = vld [vmem:[#allocation7 + $0x1a8] sm:$0xff]
    %v2437 = vld [vmem:[#allocation7 + $0x1b0] sm:$0xff]
    %v2438 = vld [vmem:[#allocation7 + $0x1b8] sm:$0xff]
    %v2439 = vld [vmem:[#allocation7 + $0x1c0] sm:$0xff]
    %v2440 = vld [vmem:[#allocation7 + $0x1c8] sm:$0xff]
    %v2441 = vld [vmem:[#allocation7 + $0x1d0] sm:$0xff]
    %v2442 = vld [vmem:[#allocation7 + $0x1d8] sm:$0xff]
    %v2443 = vld [vmem:[#allocation7 + $0x1e0] sm:$0xff]
    %v2444 = vld [vmem:[#allocation7 + $0x1e8] sm:$0xff]
    %v2445 = vld [vmem:[#allocation7 + $0x1f0] sm:$0xff]
    %v2446 = vld [vmem:[#allocation7 + $0x1f8] sm:$0xff]
    %v2447 = vld [vmem:[#allocation7 + $0x200] sm:$0xff]
    %v2448 = vld [vmem:[#allocation7 + $0x208] sm:$0xff]
    %v2449 = vld [vmem:[#allocation7 + $0x210] sm:$0xff]
    %v2450 = vld [vmem:[#allocation7 + $0x218] sm:$0xff]
    %v2451 = vld [vmem:[#allocation7 + $0x220] sm:$0xff]
    %v2452 = vld [vmem:[#allocation7 + $0x228] sm:$0xff]
    %v2453 = vld [vmem:[#allocation7 + $0x230] sm:$0xff]
    %v2454 = vld [vmem:[#allocation7 + $0x238] sm:$0xff]
    %v2455 = vld [vmem:[#allocation7 + $0x240] sm:$0xff]
    %v2456 = vld [vmem:[#allocation7 + $0x248] sm:$0xff]
    %v2457 = vld [vmem:[#allocation7 + $0x250] sm:$0xff]
    %v2458 = vld [vmem:[#allocation7 + $0x258] sm:$0xff]
    %v2459 = vld [vmem:[#allocation7 + $0x260] sm:$0xff]
    %v2460 = vld [vmem:[#allocation7 + $0x268] sm:$0xff]
    %v2461 = vld [vmem:[#allocation7 + $0x270] sm:$0xff]
    %v2462 = vld [vmem:[#allocation7 + $0x278] sm:$0xff]
    %v2463 = vld [vmem:[#allocation7 + $0x280] sm:$0xff]
    %v2464 = vld [vmem:[#allocation7 + $0x288] sm:$0xff]
    %v2465 = vld [vmem:[#allocation7 + $0x290] sm:$0xff]
    %v2466 = vld [vmem:[#allocation7 + $0x298] sm:$0xff]
    %v2467 = vld [vmem:[#allocation7 + $0x2a0] sm:$0xff]
    %v2468 = vld [vmem:[#allocation7 + $0x2a8] sm:$0xff]
    %v2469 = vld [vmem:[#allocation7 + $0x2b0] sm:$0xff]
    %v2470 = vld [vmem:[#allocation7 + $0x2b8] sm:$0xff]
    %v2471 = vld [vmem:[#allocation7 + $0x2c0] sm:$0xff]
    %v2472 = vld [vmem:[#allocation7 + $0x2c8] sm:$0xff]
    %v2473 = vld [vmem:[#allocation7 + $0x2d0] sm:$0xff]
    %v2474 = vld [vmem:[#allocation7 + $0x2d8] sm:$0xff]
    %v2475 = vld [vmem:[#allocation7 + $0x2e0] sm:$0xff]
    %v2476 = vld [vmem:[#allocation7 + $0x2e8] sm:$0xff]
    %v2477 = vld [vmem:[#allocation7 + $0x2f0] sm:$0xff]
    %v2478 = vld [vmem:[#allocation7 + $0x2f8] sm:$0xff]
    %v2479 = vld [vmem:[#allocation7 + $0x300] sm:$0xff]
    %v2480 = vld [vmem:[#allocation7 + $0x308] sm:$0xff]
    %v2481 = vld [vmem:[#allocation7 + $0x310] sm:$0xff]
    %v2482 = vld [vmem:[#allocation7 + $0x318] sm:$0xff]
    %v2483 = vld [vmem:[#allocation7 + $0x320] sm:$0xff]
    %v2484 = vld [vmem:[#allocation7 + $0x328] sm:$0xff]
    %v2485 = vld [vmem:[#allocation7 + $0x330] sm:$0xff]
    %v2486 = vld [vmem:[#allocation7 + $0x338] sm:$0xff]
    %v2487 = vld [vmem:[#allocation7 + $0x340] sm:$0xff]
    %v2488 = vld [vmem:[#allocation7 + $0x348] sm:$0xff]
    %v2489 = vld [vmem:[#allocation7 + $0x350] sm:$0xff]
    %v2490 = vld [vmem:[#allocation7 + $0x358] sm:$0xff]
    %v2491 = vld [vmem:[#allocation7 + $0x360] sm:$0xff]
    %v2492 = vld [vmem:[#allocation7 + $0x368] sm:$0xff]
    %v2493 = vld [vmem:[#allocation7 + $0x370] sm:$0xff]
    %v2494 = vld [vmem:[#allocation7 + $0x378] sm:$0xff]
    %v2495 = vld [vmem:[#allocation7 + $0x380] sm:$0xff]
    %v2496 = vld [vmem:[#allocation7 + $0x388] sm:$0xff]
    %v2497 = vld [vmem:[#allocation7 + $0x390] sm:$0xff]
    %v2498 = vld [vmem:[#allocation7 + $0x398] sm:$0xff]
    %v2499 = vld [vmem:[#allocation7 + $0x3a0] sm:$0xff]
    %v2500 = vld [vmem:[#allocation7 + $0x3a8] sm:$0xff]
    %v2501 = vld [vmem:[#allocation7 + $0x3b0] sm:$0xff]
    %v2502 = vld [vmem:[#allocation7 + $0x3b8] sm:$0xff]
    %v2503 = vld [vmem:[#allocation7 + $0x3c0] sm:$0xff]
    %v2504 = vld [vmem:[#allocation7 + $0x3c8] sm:$0xff]
    %v2505 = vld [vmem:[#allocation7 + $0x3d0] sm:$0xff]
    %v2506 = vld [vmem:[#allocation7 + $0x3d8] sm:$0xff]
    %v2507 = vld [vmem:[#allocation7 + $0x3e0] sm:$0xff]
    %v2508 = vld [vmem:[#allocation7 + $0x3e8] sm:$0xff]
    %v2509 = vld [vmem:[#allocation7 + $0x3f0] sm:$0xff]
    %v2510 = vld [vmem:[#allocation7 + $0x3f8] sm:$0xff]
    %v2639 = vunpack.c.l.b16 %v2383
    %v2640 = vunpack.c.h.b16 %v2383
    %v2641 = vunpack.c.l.b16 %v2384
    %v2642 = vunpack.c.h.b16 %v2384
    %v2643 = vunpack.c.l.b16 %v2385
    %v2644 = vunpack.c.h.b16 %v2385
    %v2645 = vunpack.c.l.b16 %v2386
    %v2646 = vunpack.c.h.b16 %v2386
    %v2647 = vunpack.c.l.b16 %v2387
    %v2648 = vunpack.c.h.b16 %v2387
    %v2649 = vunpack.c.l.b16 %v2388
    %v2650 = vunpack.c.h.b16 %v2388
    %v2651 = vunpack.c.l.b16 %v2389
    %v2652 = vunpack.c.h.b16 %v2389
    %v2653 = vunpack.c.l.b16 %v2390
    %v2654 = vunpack.c.h.b16 %v2390
    %v2655 = vunpack.c.l.b16 %v2391
    %v2656 = vunpack.c.h.b16 %v2391
    %v2657 = vunpack.c.l.b16 %v2392
    %v2658 = vunpack.c.h.b16 %v2392
    %v2659 = vunpack.c.l.b16 %v2393
    %v2660 = vunpack.c.h.b16 %v2393
    %v2661 = vunpack.c.l.b16 %v2394
    %v2662 = vunpack.c.h.b16 %v2394
    %v2663 = vunpack.c.l.b16 %v2395
    %v2664 = vunpack.c.h.b16 %v2395
    %v2665 = vunpack.c.l.b16 %v2396
    %v2666 = vunpack.c.h.b16 %v2396
    %v2667 = vunpack.c.l.b16 %v2397
    %v2668 = vunpack.c.h.b16 %v2397
    %v2669 = vunpack.c.l.b16 %v2398
    %v2670 = vunpack.c.h.b16 %v2398
    %v2671 = vunpack.c.l.b16 %v2399
    %v2672 = vunpack.c.h.b16 %v2399
    %v2673 = vunpack.c.l.b16 %v2400
    %v2674 = vunpack.c.h.b16 %v2400
    %v2675 = vunpack.c.l.b16 %v2401
    %v2676 = vunpack.c.h.b16 %v2401
    %v2677 = vunpack.c.l.b16 %v2402
    %v2678 = vunpack.c.h.b16 %v2402
    %v2679 = vunpack.c.l.b16 %v2403
    %v2680 = vunpack.c.h.b16 %v2403
    %v2681 = vunpack.c.l.b16 %v2404
    %v2682 = vunpack.c.h.b16 %v2404
    %v2683 = vunpack.c.l.b16 %v2405
    %v2684 = vunpack.c.h.b16 %v2405
    %v2685 = vunpack.c.l.b16 %v2406
    %v2686 = vunpack.c.h.b16 %v2406
    %v2687 = vunpack.c.l.b16 %v2407
    %v2688 = vunpack.c.h.b16 %v2407
    %v2689 = vunpack.c.l.b16 %v2408
    %v2690 = vunpack.c.h.b16 %v2408
    %v2691 = vunpack.c.l.b16 %v2409
    %v2692 = vunpack.c.h.b16 %v2409
    %v2693 = vunpack.c.l.b16 %v2410
    %v2694 = vunpack.c.h.b16 %v2410
    %v2695 = vunpack.c.l.b16 %v2411
    %v2696 = vunpack.c.h.b16 %v2411
    %v2697 = vunpack.c.l.b16 %v2412
    %v2698 = vunpack.c.h.b16 %v2412
    %v2699 = vunpack.c.l.b16 %v2413
    %v2700 = vunpack.c.h.b16 %v2413
    %v2701 = vunpack.c.l.b16 %v2414
    %v2702 = vunpack.c.h.b16 %v2414
    %v2703 = vunpack.c.l.b16 %v2415
    %v2704 = vunpack.c.h.b16 %v2415
    %v2705 = vunpack.c.l.b16 %v2416
    %v2706 = vunpack.c.h.b16 %v2416
    %v2707 = vunpack.c.l.b16 %v2417
    %v2708 = vunpack.c.h.b16 %v2417
    %v2709 = vunpack.c.l.b16 %v2418
    %v2710 = vunpack.c.h.b16 %v2418
    %v2711 = vunpack.c.l.b16 %v2419
    %v2712 = vunpack.c.h.b16 %v2419
    %v2713 = vunpack.c.l.b16 %v2420
    %v2714 = vunpack.c.h.b16 %v2420
    %v2715 = vunpack.c.l.b16 %v2421
    %v2716 = vunpack.c.h.b16 %v2421
    %v2717 = vunpack.c.l.b16 %v2422
    %v2718 = vunpack.c.h.b16 %v2422
    %v2719 = vunpack.c.l.b16 %v2423
    %v2720 = vunpack.c.h.b16 %v2423
    %v2721 = vunpack.c.l.b16 %v2424
    %v2722 = vunpack.c.h.b16 %v2424
    %v2723 = vunpack.c.l.b16 %v2425
    %v2724 = vunpack.c.h.b16 %v2425
    %v2725 = vunpack.c.l.b16 %v2426
    %v2726 = vunpack.c.h.b16 %v2426
    %v2727 = vunpack.c.l.b16 %v2427
    %v2728 = vunpack.c.h.b16 %v2427
    %v2729 = vunpack.c.l.b16 %v2428
    %v2730 = vunpack.c.h.b16 %v2428
    %v2731 = vunpack.c.l.b16 %v2429
    %v2732 = vunpack.c.h.b16 %v2429
    %v2733 = vunpack.c.l.b16 %v2430
    %v2734 = vunpack.c.h.b16 %v2430
    %v2735 = vunpack.c.l.b16 %v2431
    %v2736 = vunpack.c.h.b16 %v2431
    %v2737 = vunpack.c.l.b16 %v2432
    %v2738 = vunpack.c.h.b16 %v2432
    %v2739 = vunpack.c.l.b16 %v2433
    %v2740 = vunpack.c.h.b16 %v2433
    %v2741 = vunpack.c.l.b16 %v2434
    %v2742 = vunpack.c.h.b16 %v2434
    %v2743 = vunpack.c.l.b16 %v2435
    %v2744 = vunpack.c.h.b16 %v2435
    %v2745 = vunpack.c.l.b16 %v2436
    %v2746 = vunpack.c.h.b16 %v2436
    %v2747 = vunpack.c.l.b16 %v2437
    %v2748 = vunpack.c.h.b16 %v2437
    %v2749 = vunpack.c.l.b16 %v2438
    %v2750 = vunpack.c.h.b16 %v2438
    %v2751 = vunpack.c.l.b16 %v2439
    %v2752 = vunpack.c.h.b16 %v2439
    %v2753 = vunpack.c.l.b16 %v2440
    %v2754 = vunpack.c.h.b16 %v2440
    %v2755 = vunpack.c.l.b16 %v2441
    %v2756 = vunpack.c.h.b16 %v2441
    %v2757 = vunpack.c.l.b16 %v2442
    %v2758 = vunpack.c.h.b16 %v2442
    %v2759 = vunpack.c.l.b16 %v2443
    %v2760 = vunpack.c.h.b16 %v2443
    %v2761 = vunpack.c.l.b16 %v2444
    %v2762 = vunpack.c.h.b16 %v2444
    %v2763 = vunpack.c.l.b16 %v2445
    %v2764 = vunpack.c.h.b16 %v2445
    %v2765 = vunpack.c.l.b16 %v2446
    %v2766 = vunpack.c.h.b16 %v2446
    %v2767 = vunpack.c.l.b16 %v2447
    %v2768 = vunpack.c.h.b16 %v2447
    %v2769 = vunpack.c.l.b16 %v2448
    %v2770 = vunpack.c.h.b16 %v2448
    %v2771 = vunpack.c.l.b16 %v2449
    %v2772 = vunpack.c.h.b16 %v2449
    %v2773 = vunpack.c.l.b16 %v2450
    %v2774 = vunpack.c.h.b16 %v2450
    %v2775 = vunpack.c.l.b16 %v2451
    %v2776 = vunpack.c.h.b16 %v2451
    %v2777 = vunpack.c.l.b16 %v2452
    %v2778 = vunpack.c.h.b16 %v2452
    %v2779 = vunpack.c.l.b16 %v2453
    %v2780 = vunpack.c.h.b16 %v2453
    %v2781 = vunpack.c.l.b16 %v2454
    %v2782 = vunpack.c.h.b16 %v2454
    %v2783 = vunpack.c.l.b16 %v2455
    %v2784 = vunpack.c.h.b16 %v2455
    %v2785 = vunpack.c.l.b16 %v2456
    %v2786 = vunpack.c.h.b16 %v2456
    %v2787 = vunpack.c.l.b16 %v2457
    %v2788 = vunpack.c.h.b16 %v2457
    %v2789 = vunpack.c.l.b16 %v2458
    %v2790 = vunpack.c.h.b16 %v2458
    %v2791 = vunpack.c.l.b16 %v2459
    %v2792 = vunpack.c.h.b16 %v2459
    %v2793 = vunpack.c.l.b16 %v2460
    %v2794 = vunpack.c.h.b16 %v2460
    %v2795 = vunpack.c.l.b16 %v2461
    %v2796 = vunpack.c.h.b16 %v2461
    %v2797 = vunpack.c.l.b16 %v2462
    %v2798 = vunpack.c.h.b16 %v2462
    %v2799 = vunpack.c.l.b16 %v2463
    %v2800 = vunpack.c.h.b16 %v2463
    %v2801 = vunpack.c.l.b16 %v2464
    %v2802 = vunpack.c.h.b16 %v2464
    %v2803 = vunpack.c.l.b16 %v2465
    %v2804 = vunpack.c.h.b16 %v2465
    %v2805 = vunpack.c.l.b16 %v2466
    %v2806 = vunpack.c.h.b16 %v2466
    %v2807 = vunpack.c.l.b16 %v2467
    %v2808 = vunpack.c.h.b16 %v2467
    %v2809 = vunpack.c.l.b16 %v2468
    %v2810 = vunpack.c.h.b16 %v2468
    %v2811 = vunpack.c.l.b16 %v2469
    %v2812 = vunpack.c.h.b16 %v2469
    %v2813 = vunpack.c.l.b16 %v2470
    %v2814 = vunpack.c.h.b16 %v2470
    %v2815 = vunpack.c.l.b16 %v2471
    %v2816 = vunpack.c.h.b16 %v2471
    %v2817 = vunpack.c.l.b16 %v2472
    %v2818 = vunpack.c.h.b16 %v2472
    %v2819 = vunpack.c.l.b16 %v2473
    %v2820 = vunpack.c.h.b16 %v2473
    %v2821 = vunpack.c.l.b16 %v2474
    %v2822 = vunpack.c.h.b16 %v2474
    %v2823 = vunpack.c.l.b16 %v2475
    %v2824 = vunpack.c.h.b16 %v2475
    %v2825 = vunpack.c.l.b16 %v2476
    %v2826 = vunpack.c.h.b16 %v2476
    %v2827 = vunpack.c.l.b16 %v2477
    %v2828 = vunpack.c.h.b16 %v2477
    %v2829 = vunpack.c.l.b16 %v2478
    %v2830 = vunpack.c.h.b16 %v2478
    %v2831 = vunpack.c.l.b16 %v2479
    %v2832 = vunpack.c.h.b16 %v2479
    %v2833 = vunpack.c.l.b16 %v2480
    %v2834 = vunpack.c.h.b16 %v2480
    %v2835 = vunpack.c.l.b16 %v2481
    %v2836 = vunpack.c.h.b16 %v2481
    %v2837 = vunpack.c.l.b16 %v2482
    %v2838 = vunpack.c.h.b16 %v2482
    %v2839 = vunpack.c.l.b16 %v2483
    %v2840 = vunpack.c.h.b16 %v2483
    %v2841 = vunpack.c.l.b16 %v2484
    %v2842 = vunpack.c.h.b16 %v2484
    %v2843 = vunpack.c.l.b16 %v2485
    %v2844 = vunpack.c.h.b16 %v2485
    %v2845 = vunpack.c.l.b16 %v2486
    %v2846 = vunpack.c.h.b16 %v2486
    %v2847 = vunpack.c.l.b16 %v2487
    %v2848 = vunpack.c.h.b16 %v2487
    %v2849 = vunpack.c.l.b16 %v2488
    %v2850 = vunpack.c.h.b16 %v2488
    %v2851 = vunpack.c.l.b16 %v2489
    %v2852 = vunpack.c.h.b16 %v2489
    %v2853 = vunpack.c.l.b16 %v2490
    %v2854 = vunpack.c.h.b16 %v2490
    %v2855 = vunpack.c.l.b16 %v2491
    %v2856 = vunpack.c.h.b16 %v2491
    %v2857 = vunpack.c.l.b16 %v2492
    %v2858 = vunpack.c.h.b16 %v2492
    %v2859 = vunpack.c.l.b16 %v2493
    %v2860 = vunpack.c.h.b16 %v2493
    %v2861 = vunpack.c.l.b16 %v2494
    %v2862 = vunpack.c.h.b16 %v2494
    %v2863 = vunpack.c.l.b16 %v2495
    %v2864 = vunpack.c.h.b16 %v2495
    %v2865 = vunpack.c.l.b16 %v2496
    %v2866 = vunpack.c.h.b16 %v2496
    %v2867 = vunpack.c.l.b16 %v2497
    %v2868 = vunpack.c.h.b16 %v2497
    %v2869 = vunpack.c.l.b16 %v2498
    %v2870 = vunpack.c.h.b16 %v2498
    %v2871 = vunpack.c.l.b16 %v2499
    %v2872 = vunpack.c.h.b16 %v2499
    %v2873 = vunpack.c.l.b16 %v2500
    %v2874 = vunpack.c.h.b16 %v2500
    %v2875 = vunpack.c.l.b16 %v2501
    %v2876 = vunpack.c.h.b16 %v2501
    %v2877 = vunpack.c.l.b16 %v2502
    %v2878 = vunpack.c.h.b16 %v2502
    %v2879 = vunpack.c.l.b16 %v2503
    %v2880 = vunpack.c.h.b16 %v2503
    %v2881 = vunpack.c.l.b16 %v2504
    %v2882 = vunpack.c.h.b16 %v2504
    %v2883 = vunpack.c.l.b16 %v2505
    %v2884 = vunpack.c.h.b16 %v2505
    %v2885 = vunpack.c.l.b16 %v2506
    %v2886 = vunpack.c.h.b16 %v2506
    %v2887 = vunpack.c.l.b16 %v2507
    %v2888 = vunpack.c.h.b16 %v2507
    %v2889 = vunpack.c.l.b16 %v2508
    %v2890 = vunpack.c.h.b16 %v2508
    %v2891 = vunpack.c.l.b16 %v2509
    %v2892 = vunpack.c.h.b16 %v2509
    %v2893 = vunpack.c.l.b16 %v2510
    %v2894 = vunpack.c.h.b16 %v2510
    %v2895 = vpack.c.b16 %v2647, %v2639
    %v2896 = vpack.c.b16 %v2648, %v2640
    %v2897 = vpack.c.b16 %v2649, %v2641
    %v2898 = vpack.c.b16 %v2650, %v2642
    %v2899 = vpack.c.b16 %v2651, %v2643
    %v2900 = vpack.c.b16 %v2652, %v2644
    %v2901 = vpack.c.b16 %v2653, %v2645
    %v2902 = vpack.c.b16 %v2654, %v2646
    %v2903 = vpack.c.b16 %v2663, %v2655
    %v2904 = vpack.c.b16 %v2664, %v2656
    %v2905 = vpack.c.b16 %v2665, %v2657
    %v2906 = vpack.c.b16 %v2666, %v2658
    %v2907 = vpack.c.b16 %v2667, %v2659
    %v2908 = vpack.c.b16 %v2668, %v2660
    %v2909 = vpack.c.b16 %v2669, %v2661
    %v2910 = vpack.c.b16 %v2670, %v2662
    %v2911 = vpack.c.b16 %v2679, %v2671
    %v2912 = vpack.c.b16 %v2680, %v2672
    %v2913 = vpack.c.b16 %v2681, %v2673
    %v2914 = vpack.c.b16 %v2682, %v2674
    %v2915 = vpack.c.b16 %v2683, %v2675
    %v2916 = vpack.c.b16 %v2684, %v2676
    %v2917 = vpack.c.b16 %v2685, %v2677
    %v2918 = vpack.c.b16 %v2686, %v2678
    %v2919 = vpack.c.b16 %v2695, %v2687
    %v2920 = vpack.c.b16 %v2696, %v2688
    %v2921 = vpack.c.b16 %v2697, %v2689
    %v2922 = vpack.c.b16 %v2698, %v2690
    %v2923 = vpack.c.b16 %v2699, %v2691
    %v2924 = vpack.c.b16 %v2700, %v2692
    %v2925 = vpack.c.b16 %v2701, %v2693
    %v2926 = vpack.c.b16 %v2702, %v2694
    %v2927 = vpack.c.b16 %v2711, %v2703
    %v2928 = vpack.c.b16 %v2712, %v2704
    %v2929 = vpack.c.b16 %v2713, %v2705
    %v2930 = vpack.c.b16 %v2714, %v2706
    %v2931 = vpack.c.b16 %v2715, %v2707
    %v2932 = vpack.c.b16 %v2716, %v2708
    %v2933 = vpack.c.b16 %v2717, %v2709
    %v2934 = vpack.c.b16 %v2718, %v2710
    %v2935 = vpack.c.b16 %v2727, %v2719
    %v2936 = vpack.c.b16 %v2728, %v2720
    %v2937 = vpack.c.b16 %v2729, %v2721
    %v2938 = vpack.c.b16 %v2730, %v2722
    %v2939 = vpack.c.b16 %v2731, %v2723
    %v2940 = vpack.c.b16 %v2732, %v2724
    %v2941 = vpack.c.b16 %v2733, %v2725
    %v2942 = vpack.c.b16 %v2734, %v2726
    %v2943 = vpack.c.b16 %v2743, %v2735
    %v2944 = vpack.c.b16 %v2744, %v2736
    %v2945 = vpack.c.b16 %v2745, %v2737
    %v2946 = vpack.c.b16 %v2746, %v2738
    %v2947 = vpack.c.b16 %v2747, %v2739
    %v2948 = vpack.c.b16 %v2748, %v2740
    %v2949 = vpack.c.b16 %v2749, %v2741
    %v2950 = vpack.c.b16 %v2750, %v2742
    %v2951 = vpack.c.b16 %v2759, %v2751
    %v2952 = vpack.c.b16 %v2760, %v2752
    %v2953 = vpack.c.b16 %v2761, %v2753
    %v2954 = vpack.c.b16 %v2762, %v2754
    %v2955 = vpack.c.b16 %v2763, %v2755
    %v2956 = vpack.c.b16 %v2764, %v2756
    %v2957 = vpack.c.b16 %v2765, %v2757
    %v2958 = vpack.c.b16 %v2766, %v2758
    %v2959 = vpack.c.b16 %v2775, %v2767
    %v2960 = vpack.c.b16 %v2776, %v2768
    %v2961 = vpack.c.b16 %v2777, %v2769
    %v2962 = vpack.c.b16 %v2778, %v2770
    %v2963 = vpack.c.b16 %v2779, %v2771
    %v2964 = vpack.c.b16 %v2780, %v2772
    %v2965 = vpack.c.b16 %v2781, %v2773
    %v2966 = vpack.c.b16 %v2782, %v2774
    %v2967 = vpack.c.b16 %v2791, %v2783
    %v2968 = vpack.c.b16 %v2792, %v2784
    %v2969 = vpack.c.b16 %v2793, %v2785
    %v2970 = vpack.c.b16 %v2794, %v2786
    %v2971 = vpack.c.b16 %v2795, %v2787
    %v2972 = vpack.c.b16 %v2796, %v2788
    %v2973 = vpack.c.b16 %v2797, %v2789
    %v2974 = vpack.c.b16 %v2798, %v2790
    %v2975 = vpack.c.b16 %v2807, %v2799
    %v2976 = vpack.c.b16 %v2808, %v2800
    %v2977 = vpack.c.b16 %v2809, %v2801
    %v2978 = vpack.c.b16 %v2810, %v2802
    %v2979 = vpack.c.b16 %v2811, %v2803
    %v2980 = vpack.c.b16 %v2812, %v2804
    %v2981 = vpack.c.b16 %v2813, %v2805
    %v2982 = vpack.c.b16 %v2814, %v2806
    %v2983 = vpack.c.b16 %v2823, %v2815
    %v2984 = vpack.c.b16 %v2824, %v2816
    %v2985 = vpack.c.b16 %v2825, %v2817
    %v2986 = vpack.c.b16 %v2826, %v2818
    %v2987 = vpack.c.b16 %v2827, %v2819
    %v2988 = vpack.c.b16 %v2828, %v2820
    %v2989 = vpack.c.b16 %v2829, %v2821
    %v2990 = vpack.c.b16 %v2830, %v2822
    %v2991 = vpack.c.b16 %v2839, %v2831
    %v2992 = vpack.c.b16 %v2840, %v2832
    %v2993 = vpack.c.b16 %v2841, %v2833
    %v2994 = vpack.c.b16 %v2842, %v2834
    %v2995 = vpack.c.b16 %v2843, %v2835
    %v2996 = vpack.c.b16 %v2844, %v2836
    %v2997 = vpack.c.b16 %v2845, %v2837
    %v2998 = vpack.c.b16 %v2846, %v2838
    %v2999 = vpack.c.b16 %v2855, %v2847
    %v3000 = vpack.c.b16 %v2856, %v2848
    %v3001 = vpack.c.b16 %v2857, %v2849
    %v3002 = vpack.c.b16 %v2858, %v2850
    %v3003 = vpack.c.b16 %v2859, %v2851
    %v3004 = vpack.c.b16 %v2860, %v2852
    %v3005 = vpack.c.b16 %v2861, %v2853
    %v3006 = vpack.c.b16 %v2862, %v2854
    %v3007 = vpack.c.b16 %v2871, %v2863
    %v3008 = vpack.c.b16 %v2872, %v2864
    %v3009 = vpack.c.b16 %v2873, %v2865
    %v3010 = vpack.c.b16 %v2874, %v2866
    %v3011 = vpack.c.b16 %v2875, %v2867
    %v3012 = vpack.c.b16 %v2876, %v2868
    %v3013 = vpack.c.b16 %v2877, %v2869
    %v3014 = vpack.c.b16 %v2878, %v2870
    %v3015 = vpack.c.b16 %v2887, %v2879
    %v3016 = vpack.c.b16 %v2888, %v2880
    %v3017 = vpack.c.b16 %v2889, %v2881
    %v3018 = vpack.c.b16 %v2890, %v2882
    %v3019 = vpack.c.b16 %v2891, %v2883
    %v3020 = vpack.c.b16 %v2892, %v2884
    %v3021 = vpack.c.b16 %v2893, %v2885
    %v3022 = vpack.c.b16 %v2894, %v2886
    %3151 = vmatprep.subr.bf16.mxu0 %v2896
    %3152 = vmatpush1.bf16.msra.mxu0 %v2895
    %3153 = vmatprep.subr.bf16.mxu0 %v2904
    %3154 = vmatpush1.bf16.msra.mxu0 %v2903
    %3155 = vmatprep.subr.bf16.mxu0 %v2912
    %3156 = vmatpush1.bf16.msra.mxu0 %v2911
    %3157 = vmatprep.subr.bf16.mxu0 %v2920
    %3158 = vmatpush1.bf16.msra.mxu0 %v2919
    %3159 = vmatprep.subr.bf16.mxu0 %v2928
    %3160 = vmatpush1.bf16.msra.mxu0 %v2927
    %3161 = vmatprep.subr.bf16.mxu0 %v2936
    %3162 = vmatpush1.bf16.msra.mxu0 %v2935
    %3163 = vmatprep.subr.bf16.mxu0 %v2944
    %3164 = vmatpush1.bf16.msra.mxu0 %v2943
    %3165 = vmatprep.subr.bf16.mxu0 %v2952
    %3166 = vmatpush1.bf16.msra.mxu0 %v2951
    %3167 = vmatprep.subr.bf16.mxu0 %v2960
    %3168 = vmatpush1.bf16.msra.mxu0 %v2959
    %3169 = vmatprep.subr.bf16.mxu0 %v2968
    %3170 = vmatpush1.bf16.msra.mxu0 %v2967
    %3171 = vmatprep.subr.bf16.mxu0 %v2976
    %3172 = vmatpush1.bf16.msra.mxu0 %v2975
    %3173 = vmatprep.subr.bf16.mxu0 %v2984
    %3174 = vmatpush1.bf16.msra.mxu0 %v2983
    %3175 = vmatprep.subr.bf16.mxu0 %v2992
    %3176 = vmatpush1.bf16.msra.mxu0 %v2991
    %3177 = vmatprep.subr.bf16.mxu0 %v3000
    %3178 = vmatpush1.bf16.msra.mxu0 %v2999
    %3179 = vmatprep.subr.bf16.mxu0 %v3008
    %3180 = vmatpush1.bf16.msra.mxu0 %v3007
    %3181 = vmatprep.subr.bf16.mxu0 %v3016
    %3182 = vmatpush1.bf16.msra.mxu0 %v3015
    %3183 = vmatprep.mubr.bf16.mxu0 0
    %3184 = vmatmul.mubr.bf16.gmra.mrb[0].mxu0 0
    %v3185 = vpop.f32.mrb[0].mxu0
    %v3186 = vadd.f32 0.0, %v3185
    %v3187 = vpop.f32.mrb[0].mxu0
    %v3188 = vadd.f32 0.0, %v3187
    %v3189 = vpop.f32.mrb[0].mxu0
    %v3190 = vpop.f32.mrb[0].mxu0
    %3191 = vdwg.mxu0
    %3192 = vmatprep.subr.bf16.mxu0 %v2898
    %3193 = vmatpush1.bf16.msra.mxu0 %v2897
    %3194 = vmatprep.subr.bf16.mxu0 %v2906
    %3195 = vmatpush1.bf16.msra.mxu0 %v2905
    %3196 = vmatprep.subr.bf16.mxu0 %v2914
    %3197 = vmatpush1.bf16.msra.mxu0 %v2913
    %3198 = vmatprep.subr.bf16.mxu0 %v2922
    %3199 = vmatpush1.bf16.msra.mxu0 %v2921
    %3200 = vmatprep.subr.bf16.mxu0 %v2930
    %3201 = vmatpush1.bf16.msra.mxu0 %v2929
    %3202 = vmatprep.subr.bf16.mxu0 %v2938
    %3203 = vmatpush1.bf16.msra.mxu0 %v2937
    %3204 = vmatprep.subr.bf16.mxu0 %v2946
    %3205 = vmatpush1.bf16.msra.mxu0 %v2945
    %3206 = vmatprep.subr.bf16.mxu0 %v2954
    %3207 = vmatpush1.bf16.msra.mxu0 %v2953
    %3208 = vmatprep.subr.bf16.mxu0 %v2962
    %3209 = vmatpush1.bf16.msra.mxu0 %v2961
    %3210 = vmatprep.subr.bf16.mxu0 %v2970
    %3211 = vmatpush1.bf16.msra.mxu0 %v2969
    %3212 = vmatprep.subr.bf16.mxu0 %v2978
    %3213 = vmatpush1.bf16.msra.mxu0 %v2977
    %3214 = vmatprep.subr.bf16.mxu0 %v2986
    %3215 = vmatpush1.bf16.msra.mxu0 %v2985
    %3216 = vmatprep.subr.bf16.mxu0 %v2994
    %3217 = vmatpush1.bf16.msra.mxu0 %v2993
    %3218 = vmatprep.subr.bf16.mxu0 %v3002
    %3219 = vmatpush1.bf16.msra.mxu0 %v3001
    %3220 = vmatprep.subr.bf16.mxu0 %v3010
    %3221 = vmatpush1.bf16.msra.mxu0 %v3009
    %3222 = vmatprep.subr.bf16.mxu0 %v3018
    %3223 = vmatpush1.bf16.msra.mxu0 %v3017
    %3224 = vmatprep.mubr.bf16.mxu0 0
    %3225 = vmatmul.mubr.bf16.gmra.mrb[0].mxu0 0
    %v3226 = vpop.f32.mrb[0].mxu0
    %v3227 = vadd.f32 0.0, %v3226
    %v3228 = vpop.f32.mrb[0].mxu0
    %v3229 = vadd.f32 0.0, %v3228
    %v3230 = vpop.f32.mrb[0].mxu0
    %v3231 = vpop.f32.mrb[0].mxu0
    %3232 = vdwg.mxu0
    %3233 = vmatprep.subr.bf16.mxu0 %v2900
    %3234 = vmatpush1.bf16.msra.mxu0 %v2899
    %3235 = vmatprep.subr.bf16.mxu0 %v2908
    %3236 = vmatpush1.bf16.msra.mxu0 %v2907
    %3237 = vmatprep.subr.bf16.mxu0 %v2916
    %3238 = vmatpush1.bf16.msra.mxu0 %v2915
    %3239 = vmatprep.subr.bf16.mxu0 %v2924
    %3240 = vmatpush1.bf16.msra.mxu0 %v2923
    %3241 = vmatprep.subr.bf16.mxu0 %v2932
    %3242 = vmatpush1.bf16.msra.mxu0 %v2931
    %3243 = vmatprep.subr.bf16.mxu0 %v2940
    %3244 = vmatpush1.bf16.msra.mxu0 %v2939
    %3245 = vmatprep.subr.bf16.mxu0 %v2948
    %3246 = vmatpush1.bf16.msra.mxu0 %v2947
    %3247 = vmatprep.subr.bf16.mxu0 %v2956
    %3248 = vmatpush1.bf16.msra.mxu0 %v2955
    %3249 = vmatprep.subr.bf16.mxu0 %v2964
    %3250 = vmatpush1.bf16.msra.mxu0 %v2963
    %3251 = vmatprep.subr.bf16.mxu0 %v2972
    %3252 = vmatpush1.bf16.msra.mxu0 %v2971
    %3253 = vmatprep.subr.bf16.mxu0 %v2980
    %3254 = vmatpush1.bf16.msra.mxu0 %v2979
    %3255 = vmatprep.subr.bf16.mxu0 %v2988
    %3256 = vmatpush1.bf16.msra.mxu0 %v2987
    %3257 = vmatprep.subr.bf16.mxu0 %v2996
    %3258 = vmatpush1.bf16.msra.mxu0 %v2995
    %3259 = vmatprep.subr.bf16.mxu0 %v3004
    %3260 = vmatpush1.bf16.msra.mxu0 %v3003
    %3261 = vmatprep.subr.bf16.mxu0 %v3012
    %3262 = vmatpush1.bf16.msra.mxu0 %v3011
    %3263 = vmatprep.subr.bf16.mxu0 %v3020
    %3264 = vmatpush1.bf16.msra.mxu0 %v3019
    %3265 = vmatprep.mubr.bf16.mxu0 0
    %3266 = vmatmul.mubr.bf16.gmra.mrb[0].mxu0 0
    %v3267 = vpop.f32.mrb[0].mxu0
    %v3268 = vadd.f32 0.0, %v3267
    %v3269 = vpop.f32.mrb[0].mxu0
    %v3270 = vadd.f32 0.0, %v3269
    %v3271 = vpop.f32.mrb[0].mxu0
    %v3272 = vpop.f32.mrb[0].mxu0
    %3273 = vdwg.mxu0
    %3274 = vmatprep.subr.bf16.mxu0 %v2902
    %3275 = vmatpush1.bf16.msra.mxu0 %v2901
    %3276 = vmatprep.subr.bf16.mxu0 %v2910
    %3277 = vmatpush1.bf16.msra.mxu0 %v2909
    %3278 = vmatprep.subr.bf16.mxu0 %v2918
    %3279 = vmatpush1.bf16.msra.mxu0 %v2917
    %3280 = vmatprep.subr.bf16.mxu0 %v2926
    %3281 = vmatpush1.bf16.msra.mxu0 %v2925
    %3282 = vmatprep.subr.bf16.mxu0 %v2934
    %3283 = vmatpush1.bf16.msra.mxu0 %v2933
    %3284 = vmatprep.subr.bf16.mxu0 %v2942
    %3285 = vmatpush1.bf16.msra.mxu0 %v2941
    %3286 = vmatprep.subr.bf16.mxu0 %v2950
    %3287 = vmatpush1.bf16.msra.mxu0 %v2949
    %3288 = vmatprep.subr.bf16.mxu0 %v2958
    %3289 = vmatpush1.bf16.msra.mxu0 %v2957
    %3290 = vmatprep.subr.bf16.mxu0 %v2966
    %3291 = vmatpush1.bf16.msra.mxu0 %v2965
    %3292 = vmatprep.subr.bf16.mxu0 %v2974
    %3293 = vmatpush1.bf16.msra.mxu0 %v2973
    %3294 = vmatprep.subr.bf16.mxu0 %v2982
    %3295 = vmatpush1.bf16.msra.mxu0 %v2981
    %3296 = vmatprep.subr.bf16.mxu0 %v2990
    %3297 = vmatpush1.bf16.msra.mxu0 %v2989
    %3298 = vmatprep.subr.bf16.mxu0 %v2998
    %3299 = vmatpush1.bf16.msra.mxu0 %v2997
    %3300 = vmatprep.subr.bf16.mxu0 %v3006
    %3301 = vmatpush1.bf16.msra.mxu0 %v3005
    %3302 = vmatprep.subr.bf16.mxu0 %v3014
    %3303 = vmatpush1.bf16.msra.mxu0 %v3013
    %3304 = vmatprep.subr.bf16.mxu0 %v3022
    %3305 = vmatpush1.bf16.msra.mxu0 %v3021
    %3306 = vmatprep.mubr.bf16.mxu0 0
    %3307 = vmatmul.mubr.bf16.gmra.mrb[0].mxu0 0
    %v3308 = vpop.f32.mrb[0].mxu0
    %v3309 = vadd.f32 0.0, %v3308
    %v3310 = vpop.f32.mrb[0].mxu0
    %v3311 = vadd.f32 0.0, %v3310
    %v3312 = vpop.f32.mrb[0].mxu0
    %v3313 = vpop.f32.mrb[0].mxu0
    %3314 = vdwg.mxu0
    %v3315 = vadd.f32 %v1303, %v3186
    %v3316 = vadd.f32 %v1305, %v3188
    %v3317 = vadd.f32 %v1344, %v3227
    %v3318 = vadd.f32 %v1346, %v3229
    %v3319 = vadd.f32 %v1385, %v3268
    %v3320 = vadd.f32 %v1387, %v3270
    %v3321 = vadd.f32 %v1426, %v3309
    %v3322 = vadd.f32 %v1428, %v3311
    %v3323 = vmul.f32 %v2375, 0.5
    %v3324 = vmul.f32 %v2376, 0.5
    %v3325 = vtanh.pop %v3323
    %v3326 = vtanh.pop %v3324
    %v3327 = vmul.f32 %v3325, 0.5
    %v3328 = vmul.f32 %v3326, 0.5
    %v3329 = vadd.f32 %v3327, 0.5
    %v3330 = vadd.f32 %v3328, 0.5
    %v3331 = vmul.f32 %v2377, 0.5
    %v3332 = vmul.f32 %v2378, 0.5
    %v3333 = vtanh.pop %v3331
    %v3334 = vtanh.pop %v3332
    %v3335 = vmul.f32 %v3333, 0.5
    %v3336 = vmul.f32 %v3334, 0.5
    %v3337 = vadd.f32 %v3335, 0.5
    %v3338 = vadd.f32 %v3336, 0.5
    %v3339 = vtanh.pop %v2379
    %v3340 = vtanh.pop %v2380
    %v3341 = vmul.f32 %v2381, 0.5
    %v3342 = vmul.f32 %v2382, 0.5
    %v3343 = vtanh.pop %v3341
    %v3344 = vtanh.pop %v3342
    %v3345 = vmul.f32 %v3343, 0.5
    %v3346 = vmul.f32 %v3344, 0.5
    %v3347 = vadd.f32 %v3345, 0.5
    %v3348 = vadd.f32 %v3346, 0.5
    %v3349 = vmul.f32 %v3337, %v492
    %v3350 = vmul.f32 %v3338, %v493
    %v3351 = vmul.f32 %v3329, %v3339
    %v3352 = vmul.f32 %v3330, %v3340
    %v3353 = vadd.f32 %v3349, %v3351
    %v3354 = vadd.f32 %v3350, %v3352
    %v3355 = vtanh.pop %v3353
    %v3356 = vtanh.pop %v3354
    %v3357 = vmul.f32 %v3347, %v3355
    %v3358 = vmul.f32 %v3348, %v3356
    %v3359 = vmul.f32 %v3315, 0.5
    %v3360 = vmul.f32 %v3316, 0.5
    %v3361 = vtanh.pop %v3359
    %v3362 = vtanh.pop %v3360
    %v3363 = vmul.f32 %v3361, 0.5
    %v3364 = vmul.f32 %v3362, 0.5
    %v3365 = vadd.f32 %v3363, 0.5
    %v3366 = vadd.f32 %v3364, 0.5
    %v3367 = vmul.f32 %v3317, 0.5
    %v3368 = vmul.f32 %v3318, 0.5
    %v3369 = vtanh.pop %v3367
    %v3370 = vtanh.pop %v3368
    %v3371 = vmul.f32 %v3369, 0.5
    %v3372 = vmul.f32 %v3370, 0.5
    %v3373 = vadd.f32 %v3371, 0.5
    %v3374 = vadd.f32 %v3372, 0.5
    %v3375 = vtanh.pop %v3319
    %v3376 = vtanh.pop %v3320
    %v3377 = vmul.f32 %v3321, 0.5
    %v3378 = vmul.f32 %v3322, 0.5
    %v3379 = vtanh.pop %v3377
    %v3380 = vtanh.pop %v3378
    %v3381 = vmul.f32 %v3379, 0.5
    %v3382 = vmul.f32 %v3380, 0.5
    %v3383 = vadd.f32 %v3381, 0.5
    %v3384 = vadd.f32 %v3382, 0.5
    %v3385 = vmul.f32 %v3373, 0.0
    %v3386 = vmul.f32 %v3374, 0.0
    %v3387 = vmul.f32 %v3365, %v3375
    %v3388 = vmul.f32 %v3366, %v3376
    %v3389 = vadd.f32 %v3385, %v3387
    %v3390 = vadd.f32 %v3386, %v3388
    %v3391 = vtanh.pop %v3389
    %v3392 = vtanh.pop %v3390
    %v3393 = vmul.f32 %v3383, %v3391
    %v3394 = vmul.f32 %v3384, %v3392
    %v3395 = vpack.c.bf16 %v3357, %v3357
    %v3396 = vpack.c.bf16 %v3358, %v3358
    %3397 = vmatprep.subr.bf16.mxu0 %v1013
    %3398 = vmatpush1.bf16.msra.mxu0 %v1012
    %3399 = vmatprep.subr.bf16.mxu0 %v1021
    %3400 = vmatpush1.bf16.msra.mxu0 %v1020
    %3401 = vmatprep.subr.bf16.mxu0 %v1029
    %3402 = vmatpush1.bf16.msra.mxu0 %v1028
    %3403 = vmatprep.subr.bf16.mxu0 %v1037
    %3404 = vmatpush1.bf16.msra.mxu0 %v1036
    %3405 = vmatprep.subr.bf16.mxu0 %v1045
    %3406 = vmatpush1.bf16.msra.mxu0 %v1044
    %3407 = vmatprep.subr.bf16.mxu0 %v1053
    %3408 = vmatpush1.bf16.msra.mxu0 %v1052
    %3409 = vmatprep.subr.bf16.mxu0 %v1061
    %3410 = vmatpush1.bf16.msra.mxu0 %v1060
    %3411 = vmatprep.subr.bf16.mxu0 %v1069
    %3412 = vmatpush1.bf16.msra.mxu0 %v1068
    %3413 = vmatprep.subr.bf16.mxu0 %v1077
    %3414 = vmatpush1.bf16.msra.mxu0 %v1076
    %3415 = vmatprep.subr.bf16.mxu0 %v1085
    %3416 = vmatpush1.bf16.msra.mxu0 %v1084
    %3417 = vmatprep.subr.bf16.mxu0 %v1093
    %3418 = vmatpush1.bf16.msra.mxu0 %v1092
    %3419 = vmatprep.subr.bf16.mxu0 %v1101
    %3420 = vmatpush1.bf16.msra.mxu0 %v1100
    %3421 = vmatprep.subr.bf16.mxu0 %v1109
    %3422 = vmatpush1.bf16.msra.mxu0 %v1108
    %3423 = vmatprep.subr.bf16.mxu0 %v1117
    %3424 = vmatpush1.bf16.msra.mxu0 %v1116
    %3425 = vmatprep.subr.bf16.mxu0 %v1125
    %3426 = vmatpush1.bf16.msra.mxu0 %v1124
    %3427 = vmatprep.subr.bf16.mxu0 %v1133
    %3428 = vmatpush1.bf16.msra.mxu0 %v1132
    %3429 = vmatprep.mubr.bf16.mxu0 %v3396
    %3430 = vmatmul.mubr.bf16.gmra.mrb[0].mxu0 %v3395
    %v3431 = vpop.f32.mrb[0].mxu0
    %v3432 = vadd.f32 %v417, %v3431
    %v3433 = vpop.f32.mrb[0].mxu0
    %v3434 = vadd.f32 %v421, %v3433
    %v3435 = vpop.f32.mrb[0].mxu0
    %v3436 = vpop.f32.mrb[0].mxu0
    %3437 = vdwg.mxu0
    %3438 = vmatprep.subr.bf16.mxu0 %v1015
    %3439 = vmatpush1.bf16.msra.mxu0 %v1014
    %3440 = vmatprep.subr.bf16.mxu0 %v1023
    %3441 = vmatpush1.bf16.msra.mxu0 %v1022
    %3442 = vmatprep.subr.bf16.mxu0 %v1031
    %3443 = vmatpush1.bf16.msra.mxu0 %v1030
    %3444 = vmatprep.subr.bf16.mxu0 %v1039
    %3445 = vmatpush1.bf16.msra.mxu0 %v1038
    %3446 = vmatprep.subr.bf16.mxu0 %v1047
    %3447 = vmatpush1.bf16.msra.mxu0 %v1046
    %3448 = vmatprep.subr.bf16.mxu0 %v1055
    %3449 = vmatpush1.bf16.msra.mxu0 %v1054
    %3450 = vmatprep.subr.bf16.mxu0 %v1063
    %3451 = vmatpush1.bf16.msra.mxu0 %v1062
    %3452 = vmatprep.subr.bf16.mxu0 %v1071
    %3453 = vmatpush1.bf16.msra.mxu0 %v1070
    %3454 = vmatprep.subr.bf16.mxu0 %v1079
    %3455 = vmatpush1.bf16.msra.mxu0 %v1078
    %3456 = vmatprep.subr.bf16.mxu0 %v1087
    %3457 = vmatpush1.bf16.msra.mxu0 %v1086
    %3458 = vmatprep.subr.bf16.mxu0 %v1095
    %3459 = vmatpush1.bf16.msra.mxu0 %v1094
    %3460 = vmatprep.subr.bf16.mxu0 %v1103
    %3461 = vmatpush1.bf16.msra.mxu0 %v1102
    %3462 = vmatprep.subr.bf16.mxu0 %v1111
    %3463 = vmatpush1.bf16.msra.mxu0 %v1110
    %3464 = vmatprep.subr.bf16.mxu0 %v1119
    %3465 = vmatpush1.bf16.msra.mxu0 %v1118
    %3466 = vmatprep.subr.bf16.mxu0 %v1127
    %3467 = vmatpush1.bf16.msra.mxu0 %v1126
    %3468 = vmatprep.subr.bf16.mxu0 %v1135
    %3469 = vmatpush1.bf16.msra.mxu0 %v1134
    %3470 = vmatprep.mubr.bf16.mxu0 %v3396
    %3471 = vmatmul.mubr.bf16.gmra.mrb[0].mxu0 %v3395
    %v3472 = vpop.f32.mrb[0].mxu0
    %v3473 = vadd.f32 %v425, %v3472
    %v3474 = vpop.f32.mrb[0].mxu0
    %v3475 = vadd.f32 %v429, %v3474
    %v3476 = vpop.f32.mrb[0].mxu0
    %v3477 = vpop.f32.mrb[0].mxu0
    %3478 = vdwg.mxu0
    %3479 = vmatprep.subr.bf16.mxu0 %v1017
    %3480 = vmatpush1.bf16.msra.mxu0 %v1016
    %3481 = vmatprep.subr.bf16.mxu0 %v1025
    %3482 = vmatpush1.bf16.msra.mxu0 %v1024
    %3483 = vmatprep.subr.bf16.mxu0 %v1033
    %3484 = vmatpush1.bf16.msra.mxu0 %v1032
    %3485 = vmatprep.subr.bf16.mxu0 %v1041
    %3486 = vmatpush1.bf16.msra.mxu0 %v1040
    %3487 = vmatprep.subr.bf16.mxu0 %v1049
    %3488 = vmatpush1.bf16.msra.mxu0 %v1048
    %3489 = vmatprep.subr.bf16.mxu0 %v1057
    %3490 = vmatpush1.bf16.msra.mxu0 %v1056
    %3491 = vmatprep.subr.bf16.mxu0 %v1065
    %3492 = vmatpush1.bf16.msra.mxu0 %v1064
    %3493 = vmatprep.subr.bf16.mxu0 %v1073
    %3494 = vmatpush1.bf16.msra.mxu0 %v1072
    %3495 = vmatprep.subr.bf16.mxu0 %v1081
    %3496 = vmatpush1.bf16.msra.mxu0 %v1080
    %3497 = vmatprep.subr.bf16.mxu0 %v1089
    %3498 = vmatpush1.bf16.msra.mxu0 %v1088
    %3499 = vmatprep.subr.bf16.mxu0 %v1097
    %3500 = vmatpush1.bf16.msra.mxu0 %v1096
    %3501 = vmatprep.subr.bf16.mxu0 %v1105
    %3502 = vmatpush1.bf16.msra.mxu0 %v1104
    %3503 = vmatprep.subr.bf16.mxu0 %v1113
    %3504 = vmatpush1.bf16.msra.mxu0 %v1112
    %3505 = vmatprep.subr.bf16.mxu0 %v1121
    %3506 = vmatpush1.bf16.msra.mxu0 %v1120
    %3507 = vmatprep.subr.bf16.mxu0 %v1129
    %3508 = vmatpush1.bf16.msra.mxu0 %v1128
    %3509 = vmatprep.subr.bf16.mxu0 %v1137
    %3510 = vmatpush1.bf16.msra.mxu0 %v1136
    %3511 = vmatprep.mubr.bf16.mxu0 %v3396
    %3512 = vmatmul.mubr.bf16.gmra.mrb[0].mxu0 %v3395
    %v3513 = vpop.f32.mrb[0].mxu0
    %v3514 = vadd.f32 %v433, %v3513
    %v3515 = vpop.f32.mrb[0].mxu0
    %v3516 = vadd.f32 %v437, %v3515
    %v3517 = vpop.f32.mrb[0].mxu0
    %v3518 = vpop.f32.mrb[0].mxu0
    %3519 = vdwg.mxu0
    %3520 = vmatprep.subr.bf16.mxu0 %v1019
    %3521 = vmatpush1.bf16.msra.mxu0 %v1018
    %3522 = vmatprep.subr.bf16.mxu0 %v1027
    %3523 = vmatpush1.bf16.msra.mxu0 %v1026
    %3524 = vmatprep.subr.bf16.mxu0 %v1035
    %3525 = vmatpush1.bf16.msra.mxu0 %v1034
    %3526 = vmatprep.subr.bf16.mxu0 %v1043
    %3527 = vmatpush1.bf16.msra.mxu0 %v1042
    %3528 = vmatprep.subr.bf16.mxu0 %v1051
    %3529 = vmatpush1.bf16.msra.mxu0 %v1050
    %3530 = vmatprep.subr.bf16.mxu0 %v1059
    %3531 = vmatpush1.bf16.msra.mxu0 %v1058
    %3532 = vmatprep.subr.bf16.mxu0 %v1067
    %3533 = vmatpush1.bf16.msra.mxu0 %v1066
    %3534 = vmatprep.subr.bf16.mxu0 %v1075
    %3535 = vmatpush1.bf16.msra.mxu0 %v1074
    %3536 = vmatprep.subr.bf16.mxu0 %v1083
    %3537 = vmatpush1.bf16.msra.mxu0 %v1082
    %3538 = vmatprep.subr.bf16.mxu0 %v1091
    %3539 = vmatpush1.bf16.msra.mxu0 %v1090
    %3540 = vmatprep.subr.bf16.mxu0 %v1099
    %3541 = vmatpush1.bf16.msra.mxu0 %v1098
    %3542 = vmatprep.subr.bf16.mxu0 %v1107
    %3543 = vmatpush1.bf16.msra.mxu0 %v1106
    %3544 = vmatprep.subr.bf16.mxu0 %v1115
    %3545 = vmatpush1.bf16.msra.mxu0 %v1114
    %3546 = vmatprep.subr.bf16.mxu0 %v1123
    %3547 = vmatpush1.bf16.msra.mxu0 %v1122
    %3548 = vmatprep.subr.bf16.mxu0 %v1131
    %3549 = vmatpush1.bf16.msra.mxu0 %v1130
    %3550 = vmatprep.subr.bf16.mxu0 %v1139
    %3551 = vmatpush1.bf16.msra.mxu0 %v1138
    %3552 = vmatprep.mubr.bf16.mxu0 %v3396
    %3553 = vmatmul.mubr.bf16.gmra.mrb[0].mxu0 %v3395
    %v3554 = vpop.f32.mrb[0].mxu0
    %v3555 = vadd.f32 %v441, %v3554
    %v3556 = vpop.f32.mrb[0].mxu0
    %v3557 = vadd.f32 %v445, %v3556
    %v3558 = vpop.f32.mrb[0].mxu0
    %v3559 = vpop.f32.mrb[0].mxu0
    %3560 = vdwg.mxu0
    %s3561 = smul.u32 2, 8
    %s3562 = smul.addr %s3561, 8
    %s3563 = scalar_lea.vmem [#allocation2], %s3562
    %v3564 = vld [vmem:[%s3563] sm:$0xff]
    %v3565 = vld [vmem:[%s3563 + $0x8] sm:$0xff]
    %v3566 = vld [vmem:[%s3563 + $0x10] sm:$0xff]
    %v3567 = vld [vmem:[%s3563 + $0x18] sm:$0xff]
    %v3568 = vld [vmem:[%s3563 + $0x20] sm:$0xff]
    %v3569 = vld [vmem:[%s3563 + $0x28] sm:$0xff]
    %v3570 = vld [vmem:[%s3563 + $0x30] sm:$0xff]
    %v3571 = vld [vmem:[%s3563 + $0x38] sm:$0xff]
    %3572 = vmatprep.subr.bf16.mxu0 %v1956
    %3573 = vmatpush1.bf16.msra.mxu0 %v1955
    %3574 = vmatprep.subr.bf16.mxu0 %v1964
    %3575 = vmatpush1.bf16.msra.mxu0 %v1963
    %3576 = vmatprep.subr.bf16.mxu0 %v1972
    %3577 = vmatpush1.bf16.msra.mxu0 %v1971
    %3578 = vmatprep.subr.bf16.mxu0 %v1980
    %3579 = vmatpush1.bf16.msra.mxu0 %v1979
    %3580 = vmatprep.subr.bf16.mxu0 %v1988
    %3581 = vmatpush1.bf16.msra.mxu0 %v1987
    %3582 = vmatprep.subr.bf16.mxu0 %v1996
    %3583 = vmatpush1.bf16.msra.mxu0 %v1995
    %3584 = vmatprep.subr.bf16.mxu0 %v2004
    %3585 = vmatpush1.bf16.msra.mxu0 %v2003
    %3586 = vmatprep.subr.bf16.mxu0 %v2012
    %3587 = vmatpush1.bf16.msra.mxu0 %v2011
    %3588 = vmatprep.subr.bf16.mxu0 %v2020
    %3589 = vmatpush1.bf16.msra.mxu0 %v2019
    %3590 = vmatprep.subr.bf16.mxu0 %v2028
    %3591 = vmatpush1.bf16.msra.mxu0 %v2027
    %3592 = vmatprep.subr.bf16.mxu0 %v2036
    %3593 = vmatpush1.bf16.msra.mxu0 %v2035
    %3594 = vmatprep.subr.bf16.mxu0 %v2044
    %3595 = vmatpush1.bf16.msra.mxu0 %v2043
    %3596 = vmatprep.subr.bf16.mxu0 %v2052
    %3597 = vmatpush1.bf16.msra.mxu0 %v2051
    %3598 = vmatprep.subr.bf16.mxu0 %v2060
    %3599 = vmatpush1.bf16.msra.mxu0 %v2059
    %3600 = vmatprep.subr.bf16.mxu0 %v2068
    %3601 = vmatpush1.bf16.msra.mxu0 %v2067
    %3602 = vmatprep.subr.bf16.mxu0 %v2076
    %3603 = vmatpush1.bf16.msra.mxu0 %v2075
    %3604 = vmatprep.mubr.bf16.mxu0 %v3396
    %3605 = vmatmul.mubr.bf16.gmra.mrb[0].mxu0 %v3395
    %v3606 = vpop.f32.mrb[0].mxu0
    %v3607 = vadd.f32 0.0, %v3606
    %v3608 = vpop.f32.mrb[0].mxu0
    %v3609 = vadd.f32 0.0, %v3608
    %v3610 = vpop.f32.mrb[0].mxu0
    %v3611 = vpop.f32.mrb[0].mxu0
    %3612 = vdwg.mxu0
    %3613 = vmatprep.subr.bf16.mxu0 %v1958
    %3614 = vmatpush1.bf16.msra.mxu0 %v1957
    %3615 = vmatprep.subr.bf16.mxu0 %v1966
    %3616 = vmatpush1.bf16.msra.mxu0 %v1965
    %3617 = vmatprep.subr.bf16.mxu0 %v1974
    %3618 = vmatpush1.bf16.msra.mxu0 %v1973
    %3619 = vmatprep.subr.bf16.mxu0 %v1982
    %3620 = vmatpush1.bf16.msra.mxu0 %v1981
    %3621 = vmatprep.subr.bf16.mxu0 %v1990
    %3622 = vmatpush1.bf16.msra.mxu0 %v1989
    %3623 = vmatprep.subr.bf16.mxu0 %v1998
    %3624 = vmatpush1.bf16.msra.mxu0 %v1997
    %3625 = vmatprep.subr.bf16.mxu0 %v2006
    %3626 = vmatpush1.bf16.msra.mxu0 %v2005
    %3627 = vmatprep.subr.bf16.mxu0 %v2014
    %3628 = vmatpush1.bf16.msra.mxu0 %v2013
    %3629 = vmatprep.subr.bf16.mxu0 %v2022
    %3630 = vmatpush1.bf16.msra.mxu0 %v2021
    %3631 = vmatprep.subr.bf16.mxu0 %v2030
    %3632 = vmatpush1.bf16.msra.mxu0 %v2029
    %3633 = vmatprep.subr.bf16.mxu0 %v2038
    %3634 = vmatpush1.bf16.msra.mxu0 %v2037
    %3635 = vmatprep.subr.bf16.mxu0 %v2046
    %3636 = vmatpush1.bf16.msra.mxu0 %v2045
    %3637 = vmatprep.subr.bf16.mxu0 %v2054
    %3638 = vmatpush1.bf16.msra.mxu0 %v2053
    %3639 = vmatprep.subr.bf16.mxu0 %v2062
    %3640 = vmatpush1.bf16.msra.mxu0 %v2061
    %3641 = vmatprep.subr.bf16.mxu0 %v2070
    %3642 = vmatpush1.bf16.msra.mxu0 %v2069
    %3643 = vmatprep.subr.bf16.mxu0 %v2078
    %3644 = vmatpush1.bf16.msra.mxu0 %v2077
    %3645 = vmatprep.mubr.bf16.mxu0 %v3396
    %3646 = vmatmul.mubr.bf16.gmra.mrb[0].mxu0 %v3395
    %v3647 = vpop.f32.mrb[0].mxu0
    %v3648 = vadd.f32 0.0, %v3647
    %v3649 = vpop.f32.mrb[0].mxu0
    %v3650 = vadd.f32 0.0, %v3649
    %v3651 = vpop.f32.mrb[0].mxu0
    %v3652 = vpop.f32.mrb[0].mxu0
    %3653 = vdwg.mxu0
    %3654 = vmatprep.subr.bf16.mxu0 %v1960
    %3655 = vmatpush1.bf16.msra.mxu0 %v1959
    %3656 = vmatprep.subr.bf16.mxu0 %v1968
    %3657 = vmatpush1.bf16.msra.mxu0 %v1967
    %3658 = vmatprep.subr.bf16.mxu0 %v1976
    %3659 = vmatpush1.bf16.msra.mxu0 %v1975
    %3660 = vmatprep.subr.bf16.mxu0 %v1984
    %3661 = vmatpush1.bf16.msra.mxu0 %v1983
    %3662 = vmatprep.subr.bf16.mxu0 %v1992
    %3663 = vmatpush1.bf16.msra.mxu0 %v1991
    %3664 = vmatprep.subr.bf16.mxu0 %v2000
    %3665 = vmatpush1.bf16.msra.mxu0 %v1999
    %3666 = vmatprep.subr.bf16.mxu0 %v2008
    %3667 = vmatpush1.bf16.msra.mxu0 %v2007
    %3668 = vmatprep.subr.bf16.mxu0 %v2016
    %3669 = vmatpush1.bf16.msra.mxu0 %v2015
    %3670 = vmatprep.subr.bf16.mxu0 %v2024
    %3671 = vmatpush1.bf16.msra.mxu0 %v2023
    %3672 = vmatprep.subr.bf16.mxu0 %v2032
    %3673 = vmatpush1.bf16.msra.mxu0 %v2031
    %3674 = vmatprep.subr.bf16.mxu0 %v2040
    %3675 = vmatpush1.bf16.msra.mxu0 %v2039
    %3676 = vmatprep.subr.bf16.mxu0 %v2048
    %3677 = vmatpush1.bf16.msra.mxu0 %v2047
    %3678 = vmatprep.subr.bf16.mxu0 %v2056
    %3679 = vmatpush1.bf16.msra.mxu0 %v2055
    %3680 = vmatprep.subr.bf16.mxu0 %v2064
    %3681 = vmatpush1.bf16.msra.mxu0 %v2063
    %3682 = vmatprep.subr.bf16.mxu0 %v2072
    %3683 = vmatpush1.bf16.msra.mxu0 %v2071
    %3684 = vmatprep.subr.bf16.mxu0 %v2080
    %3685 = vmatpush1.bf16.msra.mxu0 %v2079
    %3686 = vmatprep.mubr.bf16.mxu0 %v3396
    %3687 = vmatmul.mubr.bf16.gmra.mrb[0].mxu0 %v3395
    %v3688 = vpop.f32.mrb[0].mxu0
    %v3689 = vadd.f32 0.0, %v3688
    %v3690 = vpop.f32.mrb[0].mxu0
    %v3691 = vadd.f32 0.0, %v3690
    %v3692 = vpop.f32.mrb[0].mxu0
    %v3693 = vpop.f32.mrb[0].mxu0
    %3694 = vdwg.mxu0
    %3695 = vmatprep.subr.bf16.mxu0 %v1962
    %3696 = vmatpush1.bf16.msra.mxu0 %v1961
    %3697 = vmatprep.subr.bf16.mxu0 %v1970
    %3698 = vmatpush1.bf16.msra.mxu0 %v1969
    %3699 = vmatprep.subr.bf16.mxu0 %v1978
    %3700 = vmatpush1.bf16.msra.mxu0 %v1977
    %3701 = vmatprep.subr.bf16.mxu0 %v1986
    %3702 = vmatpush1.bf16.msra.mxu0 %v1985
    %3703 = vmatprep.subr.bf16.mxu0 %v1994
    %3704 = vmatpush1.bf16.msra.mxu0 %v1993
    %3705 = vmatprep.subr.bf16.mxu0 %v2002
    %3706 = vmatpush1.bf16.msra.mxu0 %v2001
    %3707 = vmatprep.subr.bf16.mxu0 %v2010
    %3708 = vmatpush1.bf16.msra.mxu0 %v2009
    %3709 = vmatprep.subr.bf16.mxu0 %v2018
    %3710 = vmatpush1.bf16.msra.mxu0 %v2017
    %3711 = vmatprep.subr.bf16.mxu0 %v2026
    %3712 = vmatpush1.bf16.msra.mxu0 %v2025
    %3713 = vmatprep.subr.bf16.mxu0 %v2034
    %3714 = vmatpush1.bf16.msra.mxu0 %v2033
    %3715 = vmatprep.subr.bf16.mxu0 %v2042
    %3716 = vmatpush1.bf16.msra.mxu0 %v2041
    %3717 = vmatprep.subr.bf16.mxu0 %v2050
    %3718 = vmatpush1.bf16.msra.mxu0 %v2049
    %3719 = vmatprep.subr.bf16.mxu0 %v2058
    %3720 = vmatpush1.bf16.msra.mxu0 %v2057
    %3721 = vmatprep.subr.bf16.mxu0 %v2066
    %3722 = vmatpush1.bf16.msra.mxu0 %v2065
    %3723 = vmatprep.subr.bf16.mxu0 %v2074
    %3724 = vmatpush1.bf16.msra.mxu0 %v2073
    %3725 = vmatprep.subr.bf16.mxu0 %v2082
    %3726 = vmatpush1.bf16.msra.mxu0 %v2081
    %3727 = vmatprep.mubr.bf16.mxu0 %v3396
    %3728 = vmatmul.mubr.bf16.gmra.mrb[0].mxu0 %v3395
    %v3729 = vpop.f32.mrb[0].mxu0
    %v3730 = vadd.f32 0.0, %v3729
    %v3731 = vpop.f32.mrb[0].mxu0
    %v3732 = vadd.f32 0.0, %v3731
    %v3733 = vpop.f32.mrb[0].mxu0
    %v3734 = vpop.f32.mrb[0].mxu0
    %3735 = vdwg.mxu0
    %v3736 = vadd.f32 %v3564, %v3607
    %v3737 = vadd.f32 %v3565, %v3609
    %v3738 = vadd.f32 %v3566, %v3648
    %v3739 = vadd.f32 %v3567, %v3650
    %v3740 = vadd.f32 %v3568, %v3689
    %v3741 = vadd.f32 %v3569, %v3691
    %v3742 = vadd.f32 %v3570, %v3730
    %v3743 = vadd.f32 %v3571, %v3732
    %v3744 = vpack.c.bf16 %v3393, %v3393
    %v3745 = vpack.c.bf16 %v3394, %v3394
    %3746 = vmatprep.subr.bf16.mxu0 %v2896
    %3747 = vmatpush1.bf16.msra.mxu0 %v2895
    %3748 = vmatprep.subr.bf16.mxu0 %v2904
    %3749 = vmatpush1.bf16.msra.mxu0 %v2903
    %3750 = vmatprep.subr.bf16.mxu0 %v2912
    %3751 = vmatpush1.bf16.msra.mxu0 %v2911
    %3752 = vmatprep.subr.bf16.mxu0 %v2920
    %3753 = vmatpush1.bf16.msra.mxu0 %v2919
    %3754 = vmatprep.subr.bf16.mxu0 %v2928
    %3755 = vmatpush1.bf16.msra.mxu0 %v2927
    %3756 = vmatprep.subr.bf16.mxu0 %v2936
    %3757 = vmatpush1.bf16.msra.mxu0 %v2935
    %3758 = vmatprep.subr.bf16.mxu0 %v2944
    %3759 = vmatpush1.bf16.msra.mxu0 %v2943
    %3760 = vmatprep.subr.bf16.mxu0 %v2952
    %3761 = vmatpush1.bf16.msra.mxu0 %v2951
    %3762 = vmatprep.subr.bf16.mxu0 %v2960
    %3763 = vmatpush1.bf16.msra.mxu0 %v2959
    %3764 = vmatprep.subr.bf16.mxu0 %v2968
    %3765 = vmatpush1.bf16.msra.mxu0 %v2967
    %3766 = vmatprep.subr.bf16.mxu0 %v2976
    %3767 = vmatpush1.bf16.msra.mxu0 %v2975
    %3768 = vmatprep.subr.bf16.mxu0 %v2984
    %3769 = vmatpush1.bf16.msra.mxu0 %v2983
    %3770 = vmatprep.subr.bf16.mxu0 %v2992
    %3771 = vmatpush1.bf16.msra.mxu0 %v2991
    %3772 = vmatprep.subr.bf16.mxu0 %v3000
    %3773 = vmatpush1.bf16.msra.mxu0 %v2999
    %3774 = vmatprep.subr.bf16.mxu0 %v3008
    %3775 = vmatpush1.bf16.msra.mxu0 %v3007
    %3776 = vmatprep.subr.bf16.mxu0 %v3016
    %3777 = vmatpush1.bf16.msra.mxu0 %v3015
    %3778 = vmatprep.mubr.bf16.mxu0 %v3745
    %3779 = vmatmul.mubr.bf16.gmra.mrb[0].mxu0 %v3744
    %v3780 = vpop.f32.mrb[0].mxu0
    %v3781 = vadd.f32 0.0, %v3780
    %v3782 = vpop.f32.mrb[0].mxu0
    %v3783 = vadd.f32 0.0, %v3782
    %v3784 = vpop.f32.mrb[0].mxu0
    %v3785 = vpop.f32.mrb[0].mxu0
    %3786 = vdwg.mxu0
    %3787 = vmatprep.subr.bf16.mxu0 %v2898
    %3788 = vmatpush1.bf16.msra.mxu0 %v2897
    %3789 = vmatprep.subr.bf16.mxu0 %v2906
    %3790 = vmatpush1.bf16.msra.mxu0 %v2905
    %3791 = vmatprep.subr.bf16.mxu0 %v2914
    %3792 = vmatpush1.bf16.msra.mxu0 %v2913
    %3793 = vmatprep.subr.bf16.mxu0 %v2922
    %3794 = vmatpush1.bf16.msra.mxu0 %v2921
    %3795 = vmatprep.subr.bf16.mxu0 %v2930
    %3796 = vmatpush1.bf16.msra.mxu0 %v2929
    %3797 = vmatprep.subr.bf16.mxu0 %v2938
    %3798 = vmatpush1.bf16.msra.mxu0 %v2937
    %3799 = vmatprep.subr.bf16.mxu0 %v2946
    %3800 = vmatpush1.bf16.msra.mxu0 %v2945
    %3801 = vmatprep.subr.bf16.mxu0 %v2954
    %3802 = vmatpush1.bf16.msra.mxu0 %v2953
    %3803 = vmatprep.subr.bf16.mxu0 %v2962
    %3804 = vmatpush1.bf16.msra.mxu0 %v2961
    %3805 = vmatprep.subr.bf16.mxu0 %v2970
    %3806 = vmatpush1.bf16.msra.mxu0 %v2969
    %3807 = vmatprep.subr.bf16.mxu0 %v2978
    %3808 = vmatpush1.bf16.msra.mxu0 %v2977
    %3809 = vmatprep.subr.bf16.mxu0 %v2986
    %3810 = vmatpush1.bf16.msra.mxu0 %v2985
    %3811 = vmatprep.subr.bf16.mxu0 %v2994
    %3812 = vmatpush1.bf16.msra.mxu0 %v2993
    %3813 = vmatprep.subr.bf16.mxu0 %v3002
    %3814 = vmatpush1.bf16.msra.mxu0 %v3001
    %3815 = vmatprep.subr.bf16.mxu0 %v3010
    %3816 = vmatpush1.bf16.msra.mxu0 %v3009
    %3817 = vmatprep.subr.bf16.mxu0 %v3018
    %3818 = vmatpush1.bf16.msra.mxu0 %v3017
    %3819 = vmatprep.mubr.bf16.mxu0 %v3745
    %3820 = vmatmul.mubr.bf16.gmra.mrb[0].mxu0 %v3744
    %v3821 = vpop.f32.mrb[0].mxu0
    %v3822 = vadd.f32 0.0, %v3821
    %v3823 = vpop.f32.mrb[0].mxu0
    %v3824 = vadd.f32 0.0, %v3823
    %v3825 = vpop.f32.mrb[0].mxu0
    %v3826 = vpop.f32.mrb[0].mxu0
    %3827 = vdwg.mxu0
    %3828 = vmatprep.subr.bf16.mxu0 %v2900
    %3829 = vmatpush1.bf16.msra.mxu0 %v2899
    %3830 = vmatprep.subr.bf16.mxu0 %v2908
    %3831 = vmatpush1.bf16.msra.mxu0 %v2907
    %3832 = vmatprep.subr.bf16.mxu0 %v2916
    %3833 = vmatpush1.bf16.msra.mxu0 %v2915
    %3834 = vmatprep.subr.bf16.mxu0 %v2924
    %3835 = vmatpush1.bf16.msra.mxu0 %v2923
    %3836 = vmatprep.subr.bf16.mxu0 %v2932
    %3837 = vmatpush1.bf16.msra.mxu0 %v2931
    %3838 = vmatprep.subr.bf16.mxu0 %v2940
    %3839 = vmatpush1.bf16.msra.mxu0 %v2939
    %3840 = vmatprep.subr.bf16.mxu0 %v2948
    %3841 = vmatpush1.bf16.msra.mxu0 %v2947
    %3842 = vmatprep.subr.bf16.mxu0 %v2956
    %3843 = vmatpush1.bf16.msra.mxu0 %v2955
    %3844 = vmatprep.subr.bf16.mxu0 %v2964
    %3845 = vmatpush1.bf16.msra.mxu0 %v2963
    %3846 = vmatprep.subr.bf16.mxu0 %v2972
    %3847 = vmatpush1.bf16.msra.mxu0 %v2971
    %3848 = vmatprep.subr.bf16.mxu0 %v2980
    %3849 = vmatpush1.bf16.msra.mxu0 %v2979
    %3850 = vmatprep.subr.bf16.mxu0 %v2988
    %3851 = vmatpush1.bf16.msra.mxu0 %v2987
    %3852 = vmatprep.subr.bf16.mxu0 %v2996
    %3853 = vmatpush1.bf16.msra.mxu0 %v2995
    %3854 = vmatprep.subr.bf16.mxu0 %v3004
    %3855 = vmatpush1.bf16.msra.mxu0 %v3003
    %3856 = vmatprep.subr.bf16.mxu0 %v3012
    %3857 = vmatpush1.bf16.msra.mxu0 %v3011
    %3858 = vmatprep.subr.bf16.mxu0 %v3020
    %3859 = vmatpush1.bf16.msra.mxu0 %v3019
    %3860 = vmatprep.mubr.bf16.mxu0 %v3745
    %3861 = vmatmul.mubr.bf16.gmra.mrb[0].mxu0 %v3744
    %v3862 = vpop.f32.mrb[0].mxu0
    %v3863 = vadd.f32 0.0, %v3862
    %v3864 = vpop.f32.mrb[0].mxu0
    %v3865 = vadd.f32 0.0, %v3864
    %v3866 = vpop.f32.mrb[0].mxu0
    %v3867 = vpop.f32.mrb[0].mxu0
    %3868 = vdwg.mxu0
    %3869 = vmatprep.subr.bf16.mxu0 %v2902
    %3870 = vmatpush1.bf16.msra.mxu0 %v2901
    %3871 = vmatprep.subr.bf16.mxu0 %v2910
    %3872 = vmatpush1.bf16.msra.mxu0 %v2909
    %3873 = vmatprep.subr.bf16.mxu0 %v2918
    %3874 = vmatpush1.bf16.msra.mxu0 %v2917
    %3875 = vmatprep.subr.bf16.mxu0 %v2926
    %3876 = vmatpush1.bf16.msra.mxu0 %v2925
    %3877 = vmatprep.subr.bf16.mxu0 %v2934
    %3878 = vmatpush1.bf16.msra.mxu0 %v2933
    %3879 = vmatprep.subr.bf16.mxu0 %v2942
    %3880 = vmatpush1.bf16.msra.mxu0 %v2941
    %3881 = vmatprep.subr.bf16.mxu0 %v2950
    %3882 = vmatpush1.bf16.msra.mxu0 %v2949
    %3883 = vmatprep.subr.bf16.mxu0 %v2958
    %3884 = vmatpush1.bf16.msra.mxu0 %v2957
    %3885 = vmatprep.subr.bf16.mxu0 %v2966
    %3886 = vmatpush1.bf16.msra.mxu0 %v2965
    %3887 = vmatprep.subr.bf16.mxu0 %v2974
    %3888 = vmatpush1.bf16.msra.mxu0 %v2973
    %3889 = vmatprep.subr.bf16.mxu0 %v2982
    %3890 = vmatpush1.bf16.msra.mxu0 %v2981
    %3891 = vmatprep.subr.bf16.mxu0 %v2990
    %3892 = vmatpush1.bf16.msra.mxu0 %v2989
    %3893 = vmatprep.subr.bf16.mxu0 %v2998
    %3894 = vmatpush1.bf16.msra.mxu0 %v2997
    %3895 = vmatprep.subr.bf16.mxu0 %v3006
    %3896 = vmatpush1.bf16.msra.mxu0 %v3005
    %3897 = vmatprep.subr.bf16.mxu0 %v3014
    %3898 = vmatpush1.bf16.msra.mxu0 %v3013
    %3899 = vmatprep.subr.bf16.mxu0 %v3022
    %3900 = vmatpush1.bf16.msra.mxu0 %v3021
    %3901 = vmatprep.mubr.bf16.mxu0 %v3745
    %3902 = vmatmul.mubr.bf16.gmra.mrb[0].mxu0 %v3744
    %v3903 = vpop.f32.mrb[0].mxu0
    %v3904 = vadd.f32 0.0, %v3903
    %v3905 = vpop.f32.mrb[0].mxu0
    %v3906 = vadd.f32 0.0, %v3905
    %v3907 = vpop.f32.mrb[0].mxu0
    %v3908 = vpop.f32.mrb[0].mxu0
    %3909 = vdwg.mxu0
    %v3910 = vadd.f32 %v3432, %v3781
    %v3911 = vadd.f32 %v3434, %v3783
    %v3912 = vadd.f32 %v3473, %v3822
    %v3913 = vadd.f32 %v3475, %v3824
    %v3914 = vadd.f32 %v3514, %v3863
    %v3915 = vadd.f32 %v3516, %v3865
    %v3916 = vadd.f32 %v3555, %v3904
    %v3917 = vadd.f32 %v3557, %v3906
    %v3918 = vmul.f32 %v3736, 0.5
    %v3919 = vmul.f32 %v3737, 0.5
    %v3920 = vtanh.pop %v3918
    %v3921 = vtanh.pop %v3919
    %v3922 = vmul.f32 %v3920, 0.5
    %v3923 = vmul.f32 %v3921, 0.5
    %v3924 = vadd.f32 %v3922, 0.5
    %v3925 = vadd.f32 %v3923, 0.5
    %v3926 = vmul.f32 %v3738, 0.5
    %v3927 = vmul.f32 %v3739, 0.5
    %v3928 = vtanh.pop %v3926
    %v3929 = vtanh.pop %v3927
    %v3930 = vmul.f32 %v3928, 0.5
    %v3931 = vmul.f32 %v3929, 0.5
    %v3932 = vadd.f32 %v3930, 0.5
    %v3933 = vadd.f32 %v3931, 0.5
    %v3934 = vtanh.pop %v3740
    %v3935 = vtanh.pop %v3741
    %v3936 = vmul.f32 %v3742, 0.5
    %v3937 = vmul.f32 %v3743, 0.5
    %v3938 = vtanh.pop %v3936
    %v3939 = vtanh.pop %v3937
    %v3940 = vmul.f32 %v3938, 0.5
    %v3941 = vmul.f32 %v3939, 0.5
    %v3942 = vadd.f32 %v3940, 0.5
    %v3943 = vadd.f32 %v3941, 0.5
    %v3944 = vmul.f32 %v3932, %v3353
    %v3945 = vmul.f32 %v3933, %v3354
    %v3946 = vmul.f32 %v3924, %v3934
    %v3947 = vmul.f32 %v3925, %v3935
    %v3948 = vadd.f32 %v3944, %v3946
    %v3949 = vadd.f32 %v3945, %v3947
    %v3950 = vtanh.pop %v3948
    %v3951 = vtanh.pop %v3949
    %v3952 = vmul.f32 %v3942, %v3950
    %v3953 = vmul.f32 %v3943, %v3951
    %v3954 = vmul.f32 %v3910, 0.5
    %v3955 = vmul.f32 %v3911, 0.5
    %v3956 = vtanh.pop %v3954
    %v3957 = vtanh.pop %v3955
    %v3958 = vmul.f32 %v3956, 0.5
    %v3959 = vmul.f32 %v3957, 0.5
    %v3960 = vadd.f32 %v3958, 0.5
    %v3961 = vadd.f32 %v3959, 0.5
    %v3962 = vmul.f32 %v3912, 0.5
    %v3963 = vmul.f32 %v3913, 0.5
    %v3964 = vtanh.pop %v3962
    %v3965 = vtanh.pop %v3963
    %v3966 = vmul.f32 %v3964, 0.5
    %v3967 = vmul.f32 %v3965, 0.5
    %v3968 = vadd.f32 %v3966, 0.5
    %v3969 = vadd.f32 %v3967, 0.5
    %v3970 = vtanh.pop %v3914
    %v3971 = vtanh.pop %v3915
    %v3972 = vmul.f32 %v3916, 0.5
    %v3973 = vmul.f32 %v3917, 0.5
    %v3974 = vtanh.pop %v3972
    %v3975 = vtanh.pop %v3973
    %v3976 = vmul.f32 %v3974, 0.5
    %v3977 = vmul.f32 %v3975, 0.5
    %v3978 = vadd.f32 %v3976, 0.5
    %v3979 = vadd.f32 %v3977, 0.5
    %v3980 = vmul.f32 %v3968, %v3389
    %v3981 = vmul.f32 %v3969, %v3390
    %v3982 = vmul.f32 %v3960, %v3970
    %v3983 = vmul.f32 %v3961, %v3971
    %v3984 = vadd.f32 %v3980, %v3982
    %v3985 = vadd.f32 %v3981, %v3983
    %v3986 = vtanh.pop %v3984
    %v3987 = vtanh.pop %v3985
    %v3988 = vmul.f32 %v3978, %v3986
    %v3989 = vmul.f32 %v3979, %v3987
    %v3990 = vpack.c.bf16 %v3952, %v3952
    %v3991 = vpack.c.bf16 %v3953, %v3953
    %3992 = vmatprep.subr.bf16.mxu0 %v1013
    %3993 = vmatpush1.bf16.msra.mxu0 %v1012
    %3994 = vmatprep.subr.bf16.mxu0 %v1021
    %3995 = vmatpush1.bf16.msra.mxu0 %v1020
    %3996 = vmatprep.subr.bf16.mxu0 %v1029
    %3997 = vmatpush1.bf16.msra.mxu0 %v1028
    %3998 = vmatprep.subr.bf16.mxu0 %v1037
    %3999 = vmatpush1.bf16.msra.mxu0 %v1036
    %4000 = vmatprep.subr.bf16.mxu0 %v1045
    %4001 = vmatpush1.bf16.msra.mxu0 %v1044
    %4002 = vmatprep.subr.bf16.mxu0 %v1053
    %4003 = vmatpush1.bf16.msra.mxu0 %v1052
    %4004 = vmatprep.subr.bf16.mxu0 %v1061
    %4005 = vmatpush1.bf16.msra.mxu0 %v1060
    %4006 = vmatprep.subr.bf16.mxu0 %v1069
    %4007 = vmatpush1.bf16.msra.mxu0 %v1068
    %4008 = vmatprep.subr.bf16.mxu0 %v1077
    %4009 = vmatpush1.bf16.msra.mxu0 %v1076
    %4010 = vmatprep.subr.bf16.mxu0 %v1085
    %4011 = vmatpush1.bf16.msra.mxu0 %v1084
    %4012 = vmatprep.subr.bf16.mxu0 %v1093
    %4013 = vmatpush1.bf16.msra.mxu0 %v1092
    %4014 = vmatprep.subr.bf16.mxu0 %v1101
    %4015 = vmatpush1.bf16.msra.mxu0 %v1100
    %4016 = vmatprep.subr.bf16.mxu0 %v1109
    %4017 = vmatpush1.bf16.msra.mxu0 %v1108
    %4018 = vmatprep.subr.bf16.mxu0 %v1117
    %4019 = vmatpush1.bf16.msra.mxu0 %v1116
    %4020 = vmatprep.subr.bf16.mxu0 %v1125
    %4021 = vmatpush1.bf16.msra.mxu0 %v1124
    %4022 = vmatprep.subr.bf16.mxu0 %v1133
    %4023 = vmatpush1.bf16.msra.mxu0 %v1132
    %4024 = vmatprep.mubr.bf16.mxu0 %v3991
    %4025 = vmatmul.mubr.bf16.gmra.mrb[0].mxu0 %v3990
    %v4026 = vpop.f32.mrb[0].mxu0
    %v4027 = vadd.f32 %v417, %v4026
    %v4028 = vpop.f32.mrb[0].mxu0
    %v4029 = vadd.f32 %v421, %v4028
    %v4030 = vpop.f32.mrb[0].mxu0
    %v4031 = vpop.f32.mrb[0].mxu0
    %4032 = vdwg.mxu0
    %4033 = vmatprep.subr.bf16.mxu0 %v1015
    %4034 = vmatpush1.bf16.msra.mxu0 %v1014
    %4035 = vmatprep.subr.bf16.mxu0 %v1023
    %4036 = vmatpush1.bf16.msra.mxu0 %v1022
    %4037 = vmatprep.subr.bf16.mxu0 %v1031
    %4038 = vmatpush1.bf16.msra.mxu0 %v1030
    %4039 = vmatprep.subr.bf16.mxu0 %v1039
    %4040 = vmatpush1.bf16.msra.mxu0 %v1038
    %4041 = vmatprep.subr.bf16.mxu0 %v1047
    %4042 = vmatpush1.bf16.msra.mxu0 %v1046
    %4043 = vmatprep.subr.bf16.mxu0 %v1055
    %4044 = vmatpush1.bf16.msra.mxu0 %v1054
    %4045 = vmatprep.subr.bf16.mxu0 %v1063
    %4046 = vmatpush1.bf16.msra.mxu0 %v1062
    %4047 = vmatprep.subr.bf16.mxu0 %v1071
    %4048 = vmatpush1.bf16.msra.mxu0 %v1070
    %4049 = vmatprep.subr.bf16.mxu0 %v1079
    %4050 = vmatpush1.bf16.msra.mxu0 %v1078
    %4051 = vmatprep.subr.bf16.mxu0 %v1087
    %4052 = vmatpush1.bf16.msra.mxu0 %v1086
    %4053 = vmatprep.subr.bf16.mxu0 %v1095
    %4054 = vmatpush1.bf16.msra.mxu0 %v1094
    %4055 = vmatprep.subr.bf16.mxu0 %v1103
    %4056 = vmatpush1.bf16.msra.mxu0 %v1102
    %4057 = vmatprep.subr.bf16.mxu0 %v1111
    %4058 = vmatpush1.bf16.msra.mxu0 %v1110
    %4059 = vmatprep.subr.bf16.mxu0 %v1119
    %4060 = vmatpush1.bf16.msra.mxu0 %v1118
    %4061 = vmatprep.subr.bf16.mxu0 %v1127
    %4062 = vmatpush1.bf16.msra.mxu0 %v1126
    %4063 = vmatprep.subr.bf16.mxu0 %v1135
    %4064 = vmatpush1.bf16.msra.mxu0 %v1134
    %4065 = vmatprep.mubr.bf16.mxu0 %v3991
    %4066 = vmatmul.mubr.bf16.gmra.mrb[0].mxu0 %v3990
    %v4067 = vpop.f32.mrb[0].mxu0
    %v4068 = vadd.f32 %v425, %v4067
    %v4069 = vpop.f32.mrb[0].mxu0
    %v4070 = vadd.f32 %v429, %v4069
    %v4071 = vpop.f32.mrb[0].mxu0
    %v4072 = vpop.f32.mrb[0].mxu0
    %4073 = vdwg.mxu0
    %4074 = vmatprep.subr.bf16.mxu0 %v1017
    %4075 = vmatpush1.bf16.msra.mxu0 %v1016
    %4076 = vmatprep.subr.bf16.mxu0 %v1025
    %4077 = vmatpush1.bf16.msra.mxu0 %v1024
    %4078 = vmatprep.subr.bf16.mxu0 %v1033
    %4079 = vmatpush1.bf16.msra.mxu0 %v1032
    %4080 = vmatprep.subr.bf16.mxu0 %v1041
    %4081 = vmatpush1.bf16.msra.mxu0 %v1040
    %4082 = vmatprep.subr.bf16.mxu0 %v1049
    %4083 = vmatpush1.bf16.msra.mxu0 %v1048
    %4084 = vmatprep.subr.bf16.mxu0 %v1057
    %4085 = vmatpush1.bf16.msra.mxu0 %v1056
    %4086 = vmatprep.subr.bf16.mxu0 %v1065
    %4087 = vmatpush1.bf16.msra.mxu0 %v1064
    %4088 = vmatprep.subr.bf16.mxu0 %v1073
    %4089 = vmatpush1.bf16.msra.mxu0 %v1072
    %4090 = vmatprep.subr.bf16.mxu0 %v1081
    %4091 = vmatpush1.bf16.msra.mxu0 %v1080
    %4092 = vmatprep.subr.bf16.mxu0 %v1089
    %4093 = vmatpush1.bf16.msra.mxu0 %v1088
    %4094 = vmatprep.subr.bf16.mxu0 %v1097
    %4095 = vmatpush1.bf16.msra.mxu0 %v1096
    %4096 = vmatprep.subr.bf16.mxu0 %v1105
    %4097 = vmatpush1.bf16.msra.mxu0 %v1104
    %4098 = vmatprep.subr.bf16.mxu0 %v1113
    %4099 = vmatpush1.bf16.msra.mxu0 %v1112
    %4100 = vmatprep.subr.bf16.mxu0 %v1121
    %4101 = vmatpush1.bf16.msra.mxu0 %v1120
    %4102 = vmatprep.subr.bf16.mxu0 %v1129
    %4103 = vmatpush1.bf16.msra.mxu0 %v1128
    %4104 = vmatprep.subr.bf16.mxu0 %v1137
    %4105 = vmatpush1.bf16.msra.mxu0 %v1136
    %4106 = vmatprep.mubr.bf16.mxu0 %v3991
    %4107 = vmatmul.mubr.bf16.gmra.mrb[0].mxu0 %v3990
    %v4108 = vpop.f32.mrb[0].mxu0
    %v4109 = vadd.f32 %v433, %v4108
    %v4110 = vpop.f32.mrb[0].mxu0
    %v4111 = vadd.f32 %v437, %v4110
    %v4112 = vpop.f32.mrb[0].mxu0
    %v4113 = vpop.f32.mrb[0].mxu0
    %4114 = vdwg.mxu0
    %4115 = vmatprep.subr.bf16.mxu0 %v1019
    %4116 = vmatpush1.bf16.msra.mxu0 %v1018
    %4117 = vmatprep.subr.bf16.mxu0 %v1027
    %4118 = vmatpush1.bf16.msra.mxu0 %v1026
    %4119 = vmatprep.subr.bf16.mxu0 %v1035
    %4120 = vmatpush1.bf16.msra.mxu0 %v1034
    %4121 = vmatprep.subr.bf16.mxu0 %v1043
    %4122 = vmatpush1.bf16.msra.mxu0 %v1042
    %4123 = vmatprep.subr.bf16.mxu0 %v1051
    %4124 = vmatpush1.bf16.msra.mxu0 %v1050
    %4125 = vmatprep.subr.bf16.mxu0 %v1059
    %4126 = vmatpush1.bf16.msra.mxu0 %v1058
    %4127 = vmatprep.subr.bf16.mxu0 %v1067
    %4128 = vmatpush1.bf16.msra.mxu0 %v1066
    %4129 = vmatprep.subr.bf16.mxu0 %v1075
    %4130 = vmatpush1.bf16.msra.mxu0 %v1074
    %4131 = vmatprep.subr.bf16.mxu0 %v1083
    %4132 = vmatpush1.bf16.msra.mxu0 %v1082
    %4133 = vmatprep.subr.bf16.mxu0 %v1091
    %4134 = vmatpush1.bf16.msra.mxu0 %v1090
    %4135 = vmatprep.subr.bf16.mxu0 %v1099
    %4136 = vmatpush1.bf16.msra.mxu0 %v1098
    %4137 = vmatprep.subr.bf16.mxu0 %v1107
    %4138 = vmatpush1.bf16.msra.mxu0 %v1106
    %4139 = vmatprep.subr.bf16.mxu0 %v1115
    %4140 = vmatpush1.bf16.msra.mxu0 %v1114
    %4141 = vmatprep.subr.bf16.mxu0 %v1123
    %4142 = vmatpush1.bf16.msra.mxu0 %v1122
    %4143 = vmatprep.subr.bf16.mxu0 %v1131
    %4144 = vmatpush1.bf16.msra.mxu0 %v1130
    %4145 = vmatprep.subr.bf16.mxu0 %v1139
    %4146 = vmatpush1.bf16.msra.mxu0 %v1138
    %4147 = vmatprep.mubr.bf16.mxu0 %v3991
    %4148 = vmatmul.mubr.bf16.gmra.mrb[0].mxu0 %v3990
    %v4149 = vpop.f32.mrb[0].mxu0
    %v4150 = vadd.f32 %v441, %v4149
    %v4151 = vpop.f32.mrb[0].mxu0
    %v4152 = vadd.f32 %v445, %v4151
    %v4153 = vpop.f32.mrb[0].mxu0
    %v4154 = vpop.f32.mrb[0].mxu0
    %4155 = vdwg.mxu0
    %s4156 = smul.u32 3, 8
    %s4157 = smul.addr %s4156, 8
    %s4158 = scalar_lea.vmem [#allocation2], %s4157
    %v4159 = vld [vmem:[%s4158] sm:$0xff]
    %v4160 = vld [vmem:[%s4158 + $0x8] sm:$0xff]
    %v4161 = vld [vmem:[%s4158 + $0x10] sm:$0xff]
    %v4162 = vld [vmem:[%s4158 + $0x18] sm:$0xff]
    %v4163 = vld [vmem:[%s4158 + $0x20] sm:$0xff]
    %v4164 = vld [vmem:[%s4158 + $0x28] sm:$0xff]
    %v4165 = vld [vmem:[%s4158 + $0x30] sm:$0xff]
    %v4166 = vld [vmem:[%s4158 + $0x38] sm:$0xff]
    %4167 = vmatprep.subr.bf16.mxu0 %v1956
    %4168 = vmatpush1.bf16.msra.mxu0 %v1955
    %4169 = vmatprep.subr.bf16.mxu0 %v1964
    %4170 = vmatpush1.bf16.msra.mxu0 %v1963
    %4171 = vmatprep.subr.bf16.mxu0 %v1972
    %4172 = vmatpush1.bf16.msra.mxu0 %v1971
    %4173 = vmatprep.subr.bf16.mxu0 %v1980
    %4174 = vmatpush1.bf16.msra.mxu0 %v1979
    %4175 = vmatprep.subr.bf16.mxu0 %v1988
    %4176 = vmatpush1.bf16.msra.mxu0 %v1987
    %4177 = vmatprep.subr.bf16.mxu0 %v1996
    %4178 = vmatpush1.bf16.msra.mxu0 %v1995
    %4179 = vmatprep.subr.bf16.mxu0 %v2004
    %4180 = vmatpush1.bf16.msra.mxu0 %v2003
    %4181 = vmatprep.subr.bf16.mxu0 %v2012
    %4182 = vmatpush1.bf16.msra.mxu0 %v2011
    %4183 = vmatprep.subr.bf16.mxu0 %v2020
    %4184 = vmatpush1.bf16.msra.mxu0 %v2019
    %4185 = vmatprep.subr.bf16.mxu0 %v2028
    %4186 = vmatpush1.bf16.msra.mxu0 %v2027
    %4187 = vmatprep.subr.bf16.mxu0 %v2036
    %4188 = vmatpush1.bf16.msra.mxu0 %v2035
    %4189 = vmatprep.subr.bf16.mxu0 %v2044
    %4190 = vmatpush1.bf16.msra.mxu0 %v2043
    %4191 = vmatprep.subr.bf16.mxu0 %v2052
    %4192 = vmatpush1.bf16.msra.mxu0 %v2051
    %4193 = vmatprep.subr.bf16.mxu0 %v2060
    %4194 = vmatpush1.bf16.msra.mxu0 %v2059
    %4195 = vmatprep.subr.bf16.mxu0 %v2068
    %4196 = vmatpush1.bf16.msra.mxu0 %v2067
    %4197 = vmatprep.subr.bf16.mxu0 %v2076
    %4198 = vmatpush1.bf16.msra.mxu0 %v2075
    %4199 = vmatprep.mubr.bf16.mxu0 %v3991
    %4200 = vmatmul.mubr.bf16.gmra.mrb[0].mxu0 %v3990
    %v4201 = vpop.f32.mrb[0].mxu0
    %v4202 = vadd.f32 0.0, %v4201
    %v4203 = vpop.f32.mrb[0].mxu0
    %v4204 = vadd.f32 0.0, %v4203
    %v4205 = vpop.f32.mrb[0].mxu0
    %v4206 = vpop.f32.mrb[0].mxu0
    %4207 = vdwg.mxu0
    %4208 = vmatprep.subr.bf16.mxu0 %v1958
    %4209 = vmatpush1.bf16.msra.mxu0 %v1957
    %4210 = vmatprep.subr.bf16.mxu0 %v1966
    %4211 = vmatpush1.bf16.msra.mxu0 %v1965
    %4212 = vmatprep.subr.bf16.mxu0 %v1974
    %4213 = vmatpush1.bf16.msra.mxu0 %v1973
    %4214 = vmatprep.subr.bf16.mxu0 %v1982
    %4215 = vmatpush1.bf16.msra.mxu0 %v1981
    %4216 = vmatprep.subr.bf16.mxu0 %v1990
    %4217 = vmatpush1.bf16.msra.mxu0 %v1989
    %4218 = vmatprep.subr.bf16.mxu0 %v1998
    %4219 = vmatpush1.bf16.msra.mxu0 %v1997
    %4220 = vmatprep.subr.bf16.mxu0 %v2006
    %4221 = vmatpush1.bf16.msra.mxu0 %v2005
    %4222 = vmatprep.subr.bf16.mxu0 %v2014
    %4223 = vmatpush1.bf16.msra.mxu0 %v2013
    %4224 = vmatprep.subr.bf16.mxu0 %v2022
    %4225 = vmatpush1.bf16.msra.mxu0 %v2021
    %4226 = vmatprep.subr.bf16.mxu0 %v2030
    %4227 = vmatpush1.bf16.msra.mxu0 %v2029
    %4228 = vmatprep.subr.bf16.mxu0 %v2038
    %4229 = vmatpush1.bf16.msra.mxu0 %v2037
    %4230 = vmatprep.subr.bf16.mxu0 %v2046
    %4231 = vmatpush1.bf16.msra.mxu0 %v2045
    %4232 = vmatprep.subr.bf16.mxu0 %v2054
    %4233 = vmatpush1.bf16.msra.mxu0 %v2053
    %4234 = vmatprep.subr.bf16.mxu0 %v2062
    %4235 = vmatpush1.bf16.msra.mxu0 %v2061
    %4236 = vmatprep.subr.bf16.mxu0 %v2070
    %4237 = vmatpush1.bf16.msra.mxu0 %v2069
    %4238 = vmatprep.subr.bf16.mxu0 %v2078
    %4239 = vmatpush1.bf16.msra.mxu0 %v2077
    %4240 = vmatprep.mubr.bf16.mxu0 %v3991
    %4241 = vmatmul.mubr.bf16.gmra.mrb[0].mxu0 %v3990
    %v4242 = vpop.f32.mrb[0].mxu0
    %v4243 = vadd.f32 0.0, %v4242
    %v4244 = vpop.f32.mrb[0].mxu0
    %v4245 = vadd.f32 0.0, %v4244
    %v4246 = vpop.f32.mrb[0].mxu0
    %v4247 = vpop.f32.mrb[0].mxu0
    %4248 = vdwg.mxu0
    %4249 = vmatprep.subr.bf16.mxu0 %v1960
    %4250 = vmatpush1.bf16.msra.mxu0 %v1959
    %4251 = vmatprep.subr.bf16.mxu0 %v1968
    %4252 = vmatpush1.bf16.msra.mxu0 %v1967
    %4253 = vmatprep.subr.bf16.mxu0 %v1976
    %4254 = vmatpush1.bf16.msra.mxu0 %v1975
    %4255 = vmatprep.subr.bf16.mxu0 %v1984
    %4256 = vmatpush1.bf16.msra.mxu0 %v1983
    %4257 = vmatprep.subr.bf16.mxu0 %v1992
    %4258 = vmatpush1.bf16.msra.mxu0 %v1991
    %4259 = vmatprep.subr.bf16.mxu0 %v2000
    %4260 = vmatpush1.bf16.msra.mxu0 %v1999
    %4261 = vmatprep.subr.bf16.mxu0 %v2008
    %4262 = vmatpush1.bf16.msra.mxu0 %v2007
    %4263 = vmatprep.subr.bf16.mxu0 %v2016
    %4264 = vmatpush1.bf16.msra.mxu0 %v2015
    %4265 = vmatprep.subr.bf16.mxu0 %v2024
    %4266 = vmatpush1.bf16.msra.mxu0 %v2023
    %4267 = vmatprep.subr.bf16.mxu0 %v2032
    %4268 = vmatpush1.bf16.msra.mxu0 %v2031
    %4269 = vmatprep.subr.bf16.mxu0 %v2040
    %4270 = vmatpush1.bf16.msra.mxu0 %v2039
    %4271 = vmatprep.subr.bf16.mxu0 %v2048
    %4272 = vmatpush1.bf16.msra.mxu0 %v2047
    %4273 = vmatprep.subr.bf16.mxu0 %v2056
    %4274 = vmatpush1.bf16.msra.mxu0 %v2055
    %4275 = vmatprep.subr.bf16.mxu0 %v2064
    %4276 = vmatpush1.bf16.msra.mxu0 %v2063
    %4277 = vmatprep.subr.bf16.mxu0 %v2072
    %4278 = vmatpush1.bf16.msra.mxu0 %v2071
    %4279 = vmatprep.subr.bf16.mxu0 %v2080
    %4280 = vmatpush1.bf16.msra.mxu0 %v2079
    %4281 = vmatprep.mubr.bf16.mxu0 %v3991
    %4282 = vmatmul.mubr.bf16.gmra.mrb[0].mxu0 %v3990
    %v4283 = vpop.f32.mrb[0].mxu0
    %v4284 = vadd.f32 0.0, %v4283
    %v4285 = vpop.f32.mrb[0].mxu0
    %v4286 = vadd.f32 0.0, %v4285
    %v4287 = vpop.f32.mrb[0].mxu0
    %v4288 = vpop.f32.mrb[0].mxu0
    %4289 = vdwg.mxu0
    %4290 = vmatprep.subr.bf16.mxu0 %v1962
    %4291 = vmatpush1.bf16.msra.mxu0 %v1961
    %4292 = vmatprep.subr.bf16.mxu0 %v1970
    %4293 = vmatpush1.bf16.msra.mxu0 %v1969
    %4294 = vmatprep.subr.bf16.mxu0 %v1978
    %4295 = vmatpush1.bf16.msra.mxu0 %v1977
    %4296 = vmatprep.subr.bf16.mxu0 %v1986
    %4297 = vmatpush1.bf16.msra.mxu0 %v1985
    %4298 = vmatprep.subr.bf16.mxu0 %v1994
    %4299 = vmatpush1.bf16.msra.mxu0 %v1993
    %4300 = vmatprep.subr.bf16.mxu0 %v2002
    %4301 = vmatpush1.bf16.msra.mxu0 %v2001
    %4302 = vmatprep.subr.bf16.mxu0 %v2010
    %4303 = vmatpush1.bf16.msra.mxu0 %v2009
    %4304 = vmatprep.subr.bf16.mxu0 %v2018
    %4305 = vmatpush1.bf16.msra.mxu0 %v2017
    %4306 = vmatprep.subr.bf16.mxu0 %v2026
    %4307 = vmatpush1.bf16.msra.mxu0 %v2025
    %4308 = vmatprep.subr.bf16.mxu0 %v2034
    %4309 = vmatpush1.bf16.msra.mxu0 %v2033
    %4310 = vmatprep.subr.bf16.mxu0 %v2042
    %4311 = vmatpush1.bf16.msra.mxu0 %v2041
    %4312 = vmatprep.subr.bf16.mxu0 %v2050
    %4313 = vmatpush1.bf16.msra.mxu0 %v2049
    %4314 = vmatprep.subr.bf16.mxu0 %v2058
    %4315 = vmatpush1.bf16.msra.mxu0 %v2057
    %4316 = vmatprep.subr.bf16.mxu0 %v2066
    %4317 = vmatpush1.bf16.msra.mxu0 %v2065
    %4318 = vmatprep.subr.bf16.mxu0 %v2074
    %4319 = vmatpush1.bf16.msra.mxu0 %v2073
    %4320 = vmatprep.subr.bf16.mxu0 %v2082
    %4321 = vmatpush1.bf16.msra.mxu0 %v2081
    %4322 = vmatprep.mubr.bf16.mxu0 %v3991
    %4323 = vmatmul.mubr.bf16.gmra.mrb[0].mxu0 %v3990
    %v4324 = vpop.f32.mrb[0].mxu0
    %v4325 = vadd.f32 0.0, %v4324
    %v4326 = vpop.f32.mrb[0].mxu0
    %v4327 = vadd.f32 0.0, %v4326
    %v4328 = vpop.f32.mrb[0].mxu0
    %v4329 = vpop.f32.mrb[0].mxu0
    %4330 = vdwg.mxu0
    %v4331 = vadd.f32 %v4159, %v4202
    %v4332 = vadd.f32 %v4160, %v4204
    %v4333 = vadd.f32 %v4161, %v4243
    %v4334 = vadd.f32 %v4162, %v4245
    %v4335 = vadd.f32 %v4163, %v4284
    %v4336 = vadd.f32 %v4164, %v4286
    %v4337 = vadd.f32 %v4165, %v4325
    %v4338 = vadd.f32 %v4166, %v4327
    %v4339 = vpack.c.bf16 %v3988, %v3988
    %v4340 = vpack.c.bf16 %v3989, %v3989
    %4341 = vmatprep.subr.bf16.mxu0 %v2896
    %4342 = vmatpush1.bf16.msra.mxu0 %v2895
    %4343 = vmatprep.subr.bf16.mxu0 %v2904
    %4344 = vmatpush1.bf16.msra.mxu0 %v2903
    %4345 = vmatprep.subr.bf16.mxu0 %v2912
    %4346 = vmatpush1.bf16.msra.mxu0 %v2911
    %4347 = vmatprep.subr.bf16.mxu0 %v2920
    %4348 = vmatpush1.bf16.msra.mxu0 %v2919
    %4349 = vmatprep.subr.bf16.mxu0 %v2928
    %4350 = vmatpush1.bf16.msra.mxu0 %v2927
    %4351 = vmatprep.subr.bf16.mxu0 %v2936
    %4352 = vmatpush1.bf16.msra.mxu0 %v2935
    %4353 = vmatprep.subr.bf16.mxu0 %v2944
    %4354 = vmatpush1.bf16.msra.mxu0 %v2943
    %4355 = vmatprep.subr.bf16.mxu0 %v2952
    %4356 = vmatpush1.bf16.msra.mxu0 %v2951
    %4357 = vmatprep.subr.bf16.mxu0 %v2960
    %4358 = vmatpush1.bf16.msra.mxu0 %v2959
    %4359 = vmatprep.subr.bf16.mxu0 %v2968
    %4360 = vmatpush1.bf16.msra.mxu0 %v2967
    %4361 = vmatprep.subr.bf16.mxu0 %v2976
    %4362 = vmatpush1.bf16.msra.mxu0 %v2975
    %4363 = vmatprep.subr.bf16.mxu0 %v2984
    %4364 = vmatpush1.bf16.msra.mxu0 %v2983
    %4365 = vmatprep.subr.bf16.mxu0 %v2992
    %4366 = vmatpush1.bf16.msra.mxu0 %v2991
    %4367 = vmatprep.subr.bf16.mxu0 %v3000
    %4368 = vmatpush1.bf16.msra.mxu0 %v2999
    %4369 = vmatprep.subr.bf16.mxu0 %v3008
    %4370 = vmatpush1.bf16.msra.mxu0 %v3007
    %4371 = vmatprep.subr.bf16.mxu0 %v3016
    %4372 = vmatpush1.bf16.msra.mxu0 %v3015
    %4373 = vmatprep.mubr.bf16.mxu0 %v4340
    %4374 = vmatmul.mubr.bf16.gmra.mrb[0].mxu0 %v4339
    %v4375 = vpop.f32.mrb[0].mxu0
    %v4376 = vadd.f32 0.0, %v4375
    %v4377 = vpop.f32.mrb[0].mxu0
    %v4378 = vadd.f32 0.0, %v4377
    %v4379 = vpop.f32.mrb[0].mxu0
    %v4380 = vpop.f32.mrb[0].mxu0
    %4381 = vdwg.mxu0
    %4382 = vmatprep.subr.bf16.mxu0 %v2898
    %4383 = vmatpush1.bf16.msra.mxu0 %v2897
    %4384 = vmatprep.subr.bf16.mxu0 %v2906
    %4385 = vmatpush1.bf16.msra.mxu0 %v2905
    %4386 = vmatprep.subr.bf16.mxu0 %v2914
    %4387 = vmatpush1.bf16.msra.mxu0 %v2913
    %4388 = vmatprep.subr.bf16.mxu0 %v2922
    %4389 = vmatpush1.bf16.msra.mxu0 %v2921
    %4390 = vmatprep.subr.bf16.mxu0 %v2930
    %4391 = vmatpush1.bf16.msra.mxu0 %v2929
    %4392 = vmatprep.subr.bf16.mxu0 %v2938
    %4393 = vmatpush1.bf16.msra.mxu0 %v2937
    %4394 = vmatprep.subr.bf16.mxu0 %v2946
    %4395 = vmatpush1.bf16.msra.mxu0 %v2945
    %4396 = vmatprep.subr.bf16.mxu0 %v2954
    %4397 = vmatpush1.bf16.msra.mxu0 %v2953
    %4398 = vmatprep.subr.bf16.mxu0 %v2962
    %4399 = vmatpush1.bf16.msra.mxu0 %v2961
    %4400 = vmatprep.subr.bf16.mxu0 %v2970
    %4401 = vmatpush1.bf16.msra.mxu0 %v2969
    %4402 = vmatprep.subr.bf16.mxu0 %v2978
    %4403 = vmatpush1.bf16.msra.mxu0 %v2977
    %4404 = vmatprep.subr.bf16.mxu0 %v2986
    %4405 = vmatpush1.bf16.msra.mxu0 %v2985
    %4406 = vmatprep.subr.bf16.mxu0 %v2994
    %4407 = vmatpush1.bf16.msra.mxu0 %v2993
    %4408 = vmatprep.subr.bf16.mxu0 %v3002
    %4409 = vmatpush1.bf16.msra.mxu0 %v3001
    %4410 = vmatprep.subr.bf16.mxu0 %v3010
    %4411 = vmatpush1.bf16.msra.mxu0 %v3009
    %4412 = vmatprep.subr.bf16.mxu0 %v3018
    %4413 = vmatpush1.bf16.msra.mxu0 %v3017
    %4414 = vmatprep.mubr.bf16.mxu0 %v4340
    %4415 = vmatmul.mubr.bf16.gmra.mrb[0].mxu0 %v4339
    %v4416 = vpop.f32.mrb[0].mxu0
    %v4417 = vadd.f32 0.0, %v4416
    %v4418 = vpop.f32.mrb[0].mxu0
    %v4419 = vadd.f32 0.0, %v4418
    %v4420 = vpop.f32.mrb[0].mxu0
    %v4421 = vpop.f32.mrb[0].mxu0
    %4422 = vdwg.mxu0
    %4423 = vmatprep.subr.bf16.mxu0 %v2900
    %4424 = vmatpush1.bf16.msra.mxu0 %v2899
    %4425 = vmatprep.subr.bf16.mxu0 %v2908
    %4426 = vmatpush1.bf16.msra.mxu0 %v2907
    %4427 = vmatprep.subr.bf16.mxu0 %v2916
    %4428 = vmatpush1.bf16.msra.mxu0 %v2915
    %4429 = vmatprep.subr.bf16.mxu0 %v2924
    %4430 = vmatpush1.bf16.msra.mxu0 %v2923
    %4431 = vmatprep.subr.bf16.mxu0 %v2932
    %4432 = vmatpush1.bf16.msra.mxu0 %v2931
    %4433 = vmatprep.subr.bf16.mxu0 %v2940
    %4434 = vmatpush1.bf16.msra.mxu0 %v2939
    %4435 = vmatprep.subr.bf16.mxu0 %v2948
    %4436 = vmatpush1.bf16.msra.mxu0 %v2947
    %4437 = vmatprep.subr.bf16.mxu0 %v2956
    %4438 = vmatpush1.bf16.msra.mxu0 %v2955
    %4439 = vmatprep.subr.bf16.mxu0 %v2964
    %4440 = vmatpush1.bf16.msra.mxu0 %v2963
    %4441 = vmatprep.subr.bf16.mxu0 %v2972
    %4442 = vmatpush1.bf16.msra.mxu0 %v2971
    %4443 = vmatprep.subr.bf16.mxu0 %v2980
    %4444 = vmatpush1.bf16.msra.mxu0 %v2979
    %4445 = vmatprep.subr.bf16.mxu0 %v2988
    %4446 = vmatpush1.bf16.msra.mxu0 %v2987
    %4447 = vmatprep.subr.bf16.mxu0 %v2996
    %4448 = vmatpush1.bf16.msra.mxu0 %v2995
    %4449 = vmatprep.subr.bf16.mxu0 %v3004
    %4450 = vmatpush1.bf16.msra.mxu0 %v3003
    %4451 = vmatprep.subr.bf16.mxu0 %v3012
    %4452 = vmatpush1.bf16.msra.mxu0 %v3011
    %4453 = vmatprep.subr.bf16.mxu0 %v3020
    %4454 = vmatpush1.bf16.msra.mxu0 %v3019
    %4455 = vmatprep.mubr.bf16.mxu0 %v4340
    %4456 = vmatmul.mubr.bf16.gmra.mrb[0].mxu0 %v4339
    %v4457 = vpop.f32.mrb[0].mxu0
    %v4458 = vadd.f32 0.0, %v4457
    %v4459 = vpop.f32.mrb[0].mxu0
    %v4460 = vadd.f32 0.0, %v4459
    %v4461 = vpop.f32.mrb[0].mxu0
    %v4462 = vpop.f32.mrb[0].mxu0
    %4463 = vdwg.mxu0
    %4464 = vmatprep.subr.bf16.mxu0 %v2902
    %4465 = vmatpush1.bf16.msra.mxu0 %v2901
    %4466 = vmatprep.subr.bf16.mxu0 %v2910
    %4467 = vmatpush1.bf16.msra.mxu0 %v2909
    %4468 = vmatprep.subr.bf16.mxu0 %v2918
    %4469 = vmatpush1.bf16.msra.mxu0 %v2917
    %4470 = vmatprep.subr.bf16.mxu0 %v2926
    %4471 = vmatpush1.bf16.msra.mxu0 %v2925
    %4472 = vmatprep.subr.bf16.mxu0 %v2934
    %4473 = vmatpush1.bf16.msra.mxu0 %v2933
    %4474 = vmatprep.subr.bf16.mxu0 %v2942
    %4475 = vmatpush1.bf16.msra.mxu0 %v2941
    %4476 = vmatprep.subr.bf16.mxu0 %v2950
    %4477 = vmatpush1.bf16.msra.mxu0 %v2949
    %4478 = vmatprep.subr.bf16.mxu0 %v2958
    %4479 = vmatpush1.bf16.msra.mxu0 %v2957
    %4480 = vmatprep.subr.bf16.mxu0 %v2966
    %4481 = vmatpush1.bf16.msra.mxu0 %v2965
    %4482 = vmatprep.subr.bf16.mxu0 %v2974
    %4483 = vmatpush1.bf16.msra.mxu0 %v2973
    %4484 = vmatprep.subr.bf16.mxu0 %v2982
    %4485 = vmatpush1.bf16.msra.mxu0 %v2981
    %4486 = vmatprep.subr.bf16.mxu0 %v2990
    %4487 = vmatpush1.bf16.msra.mxu0 %v2989
    %4488 = vmatprep.subr.bf16.mxu0 %v2998
    %4489 = vmatpush1.bf16.msra.mxu0 %v2997
    %4490 = vmatprep.subr.bf16.mxu0 %v3006
    %4491 = vmatpush1.bf16.msra.mxu0 %v3005
    %4492 = vmatprep.subr.bf16.mxu0 %v3014
    %4493 = vmatpush1.bf16.msra.mxu0 %v3013
    %4494 = vmatprep.subr.bf16.mxu0 %v3022
    %4495 = vmatpush1.bf16.msra.mxu0 %v3021
    %4496 = vmatprep.mubr.bf16.mxu0 %v4340
    %4497 = vmatmul.mubr.bf16.gmra.mrb[0].mxu0 %v4339
    %v4498 = vpop.f32.mrb[0].mxu0
    %v4499 = vadd.f32 0.0, %v4498
    %v4500 = vpop.f32.mrb[0].mxu0
    %v4501 = vadd.f32 0.0, %v4500
    %v4502 = vpop.f32.mrb[0].mxu0
    %v4503 = vpop.f32.mrb[0].mxu0
    %4504 = vdwg.mxu0
    %v4505 = vadd.f32 %v4027, %v4376
    %v4506 = vadd.f32 %v4029, %v4378
    %v4507 = vadd.f32 %v4068, %v4417
    %v4508 = vadd.f32 %v4070, %v4419
    %v4509 = vadd.f32 %v4109, %v4458
    %v4510 = vadd.f32 %v4111, %v4460
    %v4511 = vadd.f32 %v4150, %v4499
    %v4512 = vadd.f32 %v4152, %v4501
    %v4513 = vmul.f32 %v4331, 0.5
    %v4514 = vmul.f32 %v4332, 0.5
    %v4515 = vtanh.pop %v4513
    %v4516 = vtanh.pop %v4514
    %v4517 = vmul.f32 %v4515, 0.5
    %v4518 = vmul.f32 %v4516, 0.5
    %v4519 = vadd.f32 %v4517, 0.5
    %v4520 = vadd.f32 %v4518, 0.5
    %v4521 = vmul.f32 %v4333, 0.5
    %v4522 = vmul.f32 %v4334, 0.5
    %v4523 = vtanh.pop %v4521
    %v4524 = vtanh.pop %v4522
    %v4525 = vmul.f32 %v4523, 0.5
    %v4526 = vmul.f32 %v4524, 0.5
    %v4527 = vadd.f32 %v4525, 0.5
    %v4528 = vadd.f32 %v4526, 0.5
    %v4529 = vtanh.pop %v4335
    %v4530 = vtanh.pop %v4336
    %v4531 = vmul.f32 %v4337, 0.5
    %v4532 = vmul.f32 %v4338, 0.5
    %v4533 = vtanh.pop %v4531
    %v4534 = vtanh.pop %v4532
    %v4535 = vmul.f32 %v4533, 0.5
    %v4536 = vmul.f32 %v4534, 0.5
    %v4537 = vadd.f32 %v4535, 0.5
    %v4538 = vadd.f32 %v4536, 0.5
    %v4539 = vmul.f32 %v4527, %v3948
    %v4540 = vmul.f32 %v4528, %v3949
    %v4541 = vmul.f32 %v4519, %v4529
    %v4542 = vmul.f32 %v4520, %v4530
    %v4543 = vadd.f32 %v4539, %v4541
    %v4544 = vadd.f32 %v4540, %v4542
    %v4545 = vtanh.pop %v4543
    %v4546 = vtanh.pop %v4544
    %v4547 = vmul.f32 %v4537, %v4545
    %v4548 = vmul.f32 %v4538, %v4546
    %v4549 = vmul.f32 %v4505, 0.5
    %v4550 = vmul.f32 %v4506, 0.5
    %v4551 = vtanh.pop %v4549
    %v4552 = vtanh.pop %v4550
    %v4553 = vmul.f32 %v4551, 0.5
    %v4554 = vmul.f32 %v4552, 0.5
    %v4555 = vadd.f32 %v4553, 0.5
    %v4556 = vadd.f32 %v4554, 0.5
    %v4557 = vmul.f32 %v4507, 0.5
    %v4558 = vmul.f32 %v4508, 0.5
    %v4559 = vtanh.pop %v4557
    %v4560 = vtanh.pop %v4558
    %v4561 = vmul.f32 %v4559, 0.5
    %v4562 = vmul.f32 %v4560, 0.5
    %v4563 = vadd.f32 %v4561, 0.5
    %v4564 = vadd.f32 %v4562, 0.5
    %v4565 = vtanh.pop %v4509
    %v4566 = vtanh.pop %v4510
    %v4567 = vmul.f32 %v4511, 0.5
    %v4568 = vmul.f32 %v4512, 0.5
    %v4569 = vtanh.pop %v4567
    %v4570 = vtanh.pop %v4568
    %v4571 = vmul.f32 %v4569, 0.5
    %v4572 = vmul.f32 %v4570, 0.5
    %v4573 = vadd.f32 %v4571, 0.5
    %v4574 = vadd.f32 %v4572, 0.5
    %v4575 = vmul.f32 %v4563, %v3984
    %v4576 = vmul.f32 %v4564, %v3985
    %v4577 = vmul.f32 %v4555, %v4565
    %v4578 = vmul.f32 %v4556, %v4566
    %v4579 = vadd.f32 %v4575, %v4577
    %v4580 = vadd.f32 %v4576, %v4578
    %v4581 = vtanh.pop %v4579
    %v4582 = vtanh.pop %v4580
    %v4583 = vmul.f32 %v4573, %v4581
    %v4584 = vmul.f32 %v4574, %v4582
    %v4585 = vpack.c.bf16 %v4547, %v4547
    %v4586 = vpack.c.bf16 %v4548, %v4548
    %4587 = vmatprep.subr.bf16.mxu0 %v1013
    %4588 = vmatpush1.bf16.msra.mxu0 %v1012
    %4589 = vmatprep.subr.bf16.mxu0 %v1021
    %4590 = vmatpush1.bf16.msra.mxu0 %v1020
    %4591 = vmatprep.subr.bf16.mxu0 %v1029
    %4592 = vmatpush1.bf16.msra.mxu0 %v1028
    %4593 = vmatprep.subr.bf16.mxu0 %v1037
    %4594 = vmatpush1.bf16.msra.mxu0 %v1036
    %4595 = vmatprep.subr.bf16.mxu0 %v1045
    %4596 = vmatpush1.bf16.msra.mxu0 %v1044
    %4597 = vmatprep.subr.bf16.mxu0 %v1053
    %4598 = vmatpush1.bf16.msra.mxu0 %v1052
    %4599 = vmatprep.subr.bf16.mxu0 %v1061
    %4600 = vmatpush1.bf16.msra.mxu0 %v1060
    %4601 = vmatprep.subr.bf16.mxu0 %v1069
    %4602 = vmatpush1.bf16.msra.mxu0 %v1068
    %4603 = vmatprep.subr.bf16.mxu0 %v1077
    %4604 = vmatpush1.bf16.msra.mxu0 %v1076
    %4605 = vmatprep.subr.bf16.mxu0 %v1085
    %4606 = vmatpush1.bf16.msra.mxu0 %v1084
    %4607 = vmatprep.subr.bf16.mxu0 %v1093
    %4608 = vmatpush1.bf16.msra.mxu0 %v1092
    %4609 = vmatprep.subr.bf16.mxu0 %v1101
    %4610 = vmatpush1.bf16.msra.mxu0 %v1100
    %4611 = vmatprep.subr.bf16.mxu0 %v1109
    %4612 = vmatpush1.bf16.msra.mxu0 %v1108
    %4613 = vmatprep.subr.bf16.mxu0 %v1117
    %4614 = vmatpush1.bf16.msra.mxu0 %v1116
    %4615 = vmatprep.subr.bf16.mxu0 %v1125
    %4616 = vmatpush1.bf16.msra.mxu0 %v1124
    %4617 = vmatprep.subr.bf16.mxu0 %v1133
    %4618 = vmatpush1.bf16.msra.mxu0 %v1132
    %4619 = vmatprep.mubr.bf16.mxu0 %v4586
    %4620 = vmatmul.mubr.bf16.gmra.mrb[0].mxu0 %v4585
    %v4621 = vpop.f32.mrb[0].mxu0
    %v4622 = vadd.f32 %v417, %v4621
    %v4623 = vpop.f32.mrb[0].mxu0
    %v4624 = vadd.f32 %v421, %v4623
    %v4625 = vpop.f32.mrb[0].mxu0
    %v4626 = vpop.f32.mrb[0].mxu0
    %4627 = vdwg.mxu0
    %4628 = vmatprep.subr.bf16.mxu0 %v1015
    %4629 = vmatpush1.bf16.msra.mxu0 %v1014
    %4630 = vmatprep.subr.bf16.mxu0 %v1023
    %4631 = vmatpush1.bf16.msra.mxu0 %v1022
    %4632 = vmatprep.subr.bf16.mxu0 %v1031
    %4633 = vmatpush1.bf16.msra.mxu0 %v1030
    %4634 = vmatprep.subr.bf16.mxu0 %v1039
    %4635 = vmatpush1.bf16.msra.mxu0 %v1038
    %4636 = vmatprep.subr.bf16.mxu0 %v1047
    %4637 = vmatpush1.bf16.msra.mxu0 %v1046
    %4638 = vmatprep.subr.bf16.mxu0 %v1055
    %4639 = vmatpush1.bf16.msra.mxu0 %v1054
    %4640 = vmatprep.subr.bf16.mxu0 %v1063
    %4641 = vmatpush1.bf16.msra.mxu0 %v1062
    %4642 = vmatprep.subr.bf16.mxu0 %v1071
    %4643 = vmatpush1.bf16.msra.mxu0 %v1070
    %4644 = vmatprep.subr.bf16.mxu0 %v1079
    %4645 = vmatpush1.bf16.msra.mxu0 %v1078
    %4646 = vmatprep.subr.bf16.mxu0 %v1087
    %4647 = vmatpush1.bf16.msra.mxu0 %v1086
    %4648 = vmatprep.subr.bf16.mxu0 %v1095
    %4649 = vmatpush1.bf16.msra.mxu0 %v1094
    %4650 = vmatprep.subr.bf16.mxu0 %v1103
    %4651 = vmatpush1.bf16.msra.mxu0 %v1102
    %4652 = vmatprep.subr.bf16.mxu0 %v1111
    %4653 = vmatpush1.bf16.msra.mxu0 %v1110
    %4654 = vmatprep.subr.bf16.mxu0 %v1119
    %4655 = vmatpush1.bf16.msra.mxu0 %v1118
    %4656 = vmatprep.subr.bf16.mxu0 %v1127
    %4657 = vmatpush1.bf16.msra.mxu0 %v1126
    %4658 = vmatprep.subr.bf16.mxu0 %v1135
    %4659 = vmatpush1.bf16.msra.mxu0 %v1134
    %4660 = vmatprep.mubr.bf16.mxu0 %v4586
    %4661 = vmatmul.mubr.bf16.gmra.mrb[0].mxu0 %v4585
    %v4662 = vpop.f32.mrb[0].mxu0
    %v4663 = vadd.f32 %v425, %v4662
    %v4664 = vpop.f32.mrb[0].mxu0
    %v4665 = vadd.f32 %v429, %v4664
    %v4666 = vpop.f32.mrb[0].mxu0
    %v4667 = vpop.f32.mrb[0].mxu0
    %4668 = vdwg.mxu0
    %4669 = vmatprep.subr.bf16.mxu0 %v1017
    %4670 = vmatpush1.bf16.msra.mxu0 %v1016
    %4671 = vmatprep.subr.bf16.mxu0 %v1025
    %4672 = vmatpush1.bf16.msra.mxu0 %v1024
    %4673 = vmatprep.subr.bf16.mxu0 %v1033
    %4674 = vmatpush1.bf16.msra.mxu0 %v1032
    %4675 = vmatprep.subr.bf16.mxu0 %v1041
    %4676 = vmatpush1.bf16.msra.mxu0 %v1040
    %4677 = vmatprep.subr.bf16.mxu0 %v1049
    %4678 = vmatpush1.bf16.msra.mxu0 %v1048
    %4679 = vmatprep.subr.bf16.mxu0 %v1057
    %4680 = vmatpush1.bf16.msra.mxu0 %v1056
    %4681 = vmatprep.subr.bf16.mxu0 %v1065
    %4682 = vmatpush1.bf16.msra.mxu0 %v1064
    %4683 = vmatprep.subr.bf16.mxu0 %v1073
    %4684 = vmatpush1.bf16.msra.mxu0 %v1072
    %4685 = vmatprep.subr.bf16.mxu0 %v1081
    %4686 = vmatpush1.bf16.msra.mxu0 %v1080
    %4687 = vmatprep.subr.bf16.mxu0 %v1089
    %4688 = vmatpush1.bf16.msra.mxu0 %v1088
    %4689 = vmatprep.subr.bf16.mxu0 %v1097
    %4690 = vmatpush1.bf16.msra.mxu0 %v1096
    %4691 = vmatprep.subr.bf16.mxu0 %v1105
    %4692 = vmatpush1.bf16.msra.mxu0 %v1104
    %4693 = vmatprep.subr.bf16.mxu0 %v1113
    %4694 = vmatpush1.bf16.msra.mxu0 %v1112
    %4695 = vmatprep.subr.bf16.mxu0 %v1121
    %4696 = vmatpush1.bf16.msra.mxu0 %v1120
    %4697 = vmatprep.subr.bf16.mxu0 %v1129
    %4698 = vmatpush1.bf16.msra.mxu0 %v1128
    %4699 = vmatprep.subr.bf16.mxu0 %v1137
    %4700 = vmatpush1.bf16.msra.mxu0 %v1136
    %4701 = vmatprep.mubr.bf16.mxu0 %v4586
    %4702 = vmatmul.mubr.bf16.gmra.mrb[0].mxu0 %v4585
    %v4703 = vpop.f32.mrb[0].mxu0
    %v4704 = vadd.f32 %v433, %v4703
    %v4705 = vpop.f32.mrb[0].mxu0
    %v4706 = vadd.f32 %v437, %v4705
    %v4707 = vpop.f32.mrb[0].mxu0
    %v4708 = vpop.f32.mrb[0].mxu0
    %4709 = vdwg.mxu0
    %4710 = vmatprep.subr.bf16.mxu0 %v1019
    %4711 = vmatpush1.bf16.msra.mxu0 %v1018
    %4712 = vmatprep.subr.bf16.mxu0 %v1027
    %4713 = vmatpush1.bf16.msra.mxu0 %v1026
    %4714 = vmatprep.subr.bf16.mxu0 %v1035
    %4715 = vmatpush1.bf16.msra.mxu0 %v1034
    %4716 = vmatprep.subr.bf16.mxu0 %v1043
    %4717 = vmatpush1.bf16.msra.mxu0 %v1042
    %4718 = vmatprep.subr.bf16.mxu0 %v1051
    %4719 = vmatpush1.bf16.msra.mxu0 %v1050
    %4720 = vmatprep.subr.bf16.mxu0 %v1059
    %4721 = vmatpush1.bf16.msra.mxu0 %v1058
    %4722 = vmatprep.subr.bf16.mxu0 %v1067
    %4723 = vmatpush1.bf16.msra.mxu0 %v1066
    %4724 = vmatprep.subr.bf16.mxu0 %v1075
    %4725 = vmatpush1.bf16.msra.mxu0 %v1074
    %4726 = vmatprep.subr.bf16.mxu0 %v1083
    %4727 = vmatpush1.bf16.msra.mxu0 %v1082
    %4728 = vmatprep.subr.bf16.mxu0 %v1091
    %4729 = vmatpush1.bf16.msra.mxu0 %v1090
    %4730 = vmatprep.subr.bf16.mxu0 %v1099
    %4731 = vmatpush1.bf16.msra.mxu0 %v1098
    %4732 = vmatprep.subr.bf16.mxu0 %v1107
    %4733 = vmatpush1.bf16.msra.mxu0 %v1106
    %4734 = vmatprep.subr.bf16.mxu0 %v1115
    %4735 = vmatpush1.bf16.msra.mxu0 %v1114
    %4736 = vmatprep.subr.bf16.mxu0 %v1123
    %4737 = vmatpush1.bf16.msra.mxu0 %v1122
    %4738 = vmatprep.subr.bf16.mxu0 %v1131
    %4739 = vmatpush1.bf16.msra.mxu0 %v1130
    %4740 = vmatprep.subr.bf16.mxu0 %v1139
    %4741 = vmatpush1.bf16.msra.mxu0 %v1138
    %4742 = vmatprep.mubr.bf16.mxu0 %v4586
    %4743 = vmatmul.mubr.bf16.gmra.mrb[0].mxu0 %v4585
    %v4744 = vpop.f32.mrb[0].mxu0
    %v4745 = vadd.f32 %v441, %v4744
    %v4746 = vpop.f32.mrb[0].mxu0
    %v4747 = vadd.f32 %v445, %v4746
    %v4748 = vpop.f32.mrb[0].mxu0
    %v4749 = vpop.f32.mrb[0].mxu0
    %4750 = vdwg.mxu0
    %s4751 = smul.u32 4, 8
    %s4752 = smul.addr %s4751, 8
    %s4753 = scalar_lea.vmem [#allocation2], %s4752
    %v4754 = vld [vmem:[%s4753] sm:$0xff]
    %v4755 = vld [vmem:[%s4753 + $0x8] sm:$0xff]
    %v4756 = vld [vmem:[%s4753 + $0x10] sm:$0xff]
    %v4757 = vld [vmem:[%s4753 + $0x18] sm:$0xff]
    %v4758 = vld [vmem:[%s4753 + $0x20] sm:$0xff]
    %v4759 = vld [vmem:[%s4753 + $0x28] sm:$0xff]
    %v4760 = vld [vmem:[%s4753 + $0x30] sm:$0xff]
    %v4761 = vld [vmem:[%s4753 + $0x38] sm:$0xff]
    %4762 = vmatprep.subr.bf16.mxu0 %v1956
    %4763 = vmatpush1.bf16.msra.mxu0 %v1955
    %4764 = vmatprep.subr.bf16.mxu0 %v1964
    %4765 = vmatpush1.bf16.msra.mxu0 %v1963
    %4766 = vmatprep.subr.bf16.mxu0 %v1972
    %4767 = vmatpush1.bf16.msra.mxu0 %v1971
    %4768 = vmatprep.subr.bf16.mxu0 %v1980
    %4769 = vmatpush1.bf16.msra.mxu0 %v1979
    %4770 = vmatprep.subr.bf16.mxu0 %v1988
    %4771 = vmatpush1.bf16.msra.mxu0 %v1987
    %4772 = vmatprep.subr.bf16.mxu0 %v1996
    %4773 = vmatpush1.bf16.msra.mxu0 %v1995
    %4774 = vmatprep.subr.bf16.mxu0 %v2004
    %4775 = vmatpush1.bf16.msra.mxu0 %v2003
    %4776 = vmatprep.subr.bf16.mxu0 %v2012
    %4777 = vmatpush1.bf16.msra.mxu0 %v2011
    %4778 = vmatprep.subr.bf16.mxu0 %v2020
    %4779 = vmatpush1.bf16.msra.mxu0 %v2019
    %4780 = vmatprep.subr.bf16.mxu0 %v2028
    %4781 = vmatpush1.bf16.msra.mxu0 %v2027
    %4782 = vmatprep.subr.bf16.mxu0 %v2036
    %4783 = vmatpush1.bf16.msra.mxu0 %v2035
    %4784 = vmatprep.subr.bf16.mxu0 %v2044
    %4785 = vmatpush1.bf16.msra.mxu0 %v2043
    %4786 = vmatprep.subr.bf16.mxu0 %v2052
    %4787 = vmatpush1.bf16.msra.mxu0 %v2051
    %4788 = vmatprep.subr.bf16.mxu0 %v2060
    %4789 = vmatpush1.bf16.msra.mxu0 %v2059
    %4790 = vmatprep.subr.bf16.mxu0 %v2068
    %4791 = vmatpush1.bf16.msra.mxu0 %v2067
    %4792 = vmatprep.subr.bf16.mxu0 %v2076
    %4793 = vmatpush1.bf16.msra.mxu0 %v2075
    %4794 = vmatprep.mubr.bf16.mxu0 %v4586
    %4795 = vmatmul.mubr.bf16.gmra.mrb[0].mxu0 %v4585
    %v4796 = vpop.f32.mrb[0].mxu0
    %v4797 = vadd.f32 0.0, %v4796
    %v4798 = vpop.f32.mrb[0].mxu0
    %v4799 = vadd.f32 0.0, %v4798
    %v4800 = vpop.f32.mrb[0].mxu0
    %v4801 = vpop.f32.mrb[0].mxu0
    %4802 = vdwg.mxu0
    %4803 = vmatprep.subr.bf16.mxu0 %v1958
    %4804 = vmatpush1.bf16.msra.mxu0 %v1957
    %4805 = vmatprep.subr.bf16.mxu0 %v1966
    %4806 = vmatpush1.bf16.msra.mxu0 %v1965
    %4807 = vmatprep.subr.bf16.mxu0 %v1974
    %4808 = vmatpush1.bf16.msra.mxu0 %v1973
    %4809 = vmatprep.subr.bf16.mxu0 %v1982
    %4810 = vmatpush1.bf16.msra.mxu0 %v1981
    %4811 = vmatprep.subr.bf16.mxu0 %v1990
    %4812 = vmatpush1.bf16.msra.mxu0 %v1989
    %4813 = vmatprep.subr.bf16.mxu0 %v1998
    %4814 = vmatpush1.bf16.msra.mxu0 %v1997
    %4815 = vmatprep.subr.bf16.mxu0 %v2006
    %4816 = vmatpush1.bf16.msra.mxu0 %v2005
    %4817 = vmatprep.subr.bf16.mxu0 %v2014
    %4818 = vmatpush1.bf16.msra.mxu0 %v2013
    %4819 = vmatprep.subr.bf16.mxu0 %v2022
    %4820 = vmatpush1.bf16.msra.mxu0 %v2021
    %4821 = vmatprep.subr.bf16.mxu0 %v2030
    %4822 = vmatpush1.bf16.msra.mxu0 %v2029
    %4823 = vmatprep.subr.bf16.mxu0 %v2038
    %4824 = vmatpush1.bf16.msra.mxu0 %v2037
    %4825 = vmatprep.subr.bf16.mxu0 %v2046
    %4826 = vmatpush1.bf16.msra.mxu0 %v2045
    %4827 = vmatprep.subr.bf16.mxu0 %v2054
    %4828 = vmatpush1.bf16.msra.mxu0 %v2053
    %4829 = vmatprep.subr.bf16.mxu0 %v2062
    %4830 = vmatpush1.bf16.msra.mxu0 %v2061
    %4831 = vmatprep.subr.bf16.mxu0 %v2070
    %4832 = vmatpush1.bf16.msra.mxu0 %v2069
    %4833 = vmatprep.subr.bf16.mxu0 %v2078
    %4834 = vmatpush1.bf16.msra.mxu0 %v2077
    %4835 = vmatprep.mubr.bf16.mxu0 %v4586
    %4836 = vmatmul.mubr.bf16.gmra.mrb[0].mxu0 %v4585
    %v4837 = vpop.f32.mrb[0].mxu0
    %v4838 = vadd.f32 0.0, %v4837
    %v4839 = vpop.f32.mrb[0].mxu0
    %v4840 = vadd.f32 0.0, %v4839
    %v4841 = vpop.f32.mrb[0].mxu0
    %v4842 = vpop.f32.mrb[0].mxu0
    %4843 = vdwg.mxu0
    %4844 = vmatprep.subr.bf16.mxu0 %v1960
    %4845 = vmatpush1.bf16.msra.mxu0 %v1959
    %4846 = vmatprep.subr.bf16.mxu0 %v1968
    %4847 = vmatpush1.bf16.msra.mxu0 %v1967
    %4848 = vmatprep.subr.bf16.mxu0 %v1976
    %4849 = vmatpush1.bf16.msra.mxu0 %v1975
    %4850 = vmatprep.subr.bf16.mxu0 %v1984
    %4851 = vmatpush1.bf16.msra.mxu0 %v1983
    %4852 = vmatprep.subr.bf16.mxu0 %v1992
    %4853 = vmatpush1.bf16.msra.mxu0 %v1991
    %4854 = vmatprep.subr.bf16.mxu0 %v2000
    %4855 = vmatpush1.bf16.msra.mxu0 %v1999
    %4856 = vmatprep.subr.bf16.mxu0 %v2008
    %4857 = vmatpush1.bf16.msra.mxu0 %v2007
    %4858 = vmatprep.subr.bf16.mxu0 %v2016
    %4859 = vmatpush1.bf16.msra.mxu0 %v2015
    %4860 = vmatprep.subr.bf16.mxu0 %v2024
    %4861 = vmatpush1.bf16.msra.mxu0 %v2023
    %4862 = vmatprep.subr.bf16.mxu0 %v2032
    %4863 = vmatpush1.bf16.msra.mxu0 %v2031
    %4864 = vmatprep.subr.bf16.mxu0 %v2040
    %4865 = vmatpush1.bf16.msra.mxu0 %v2039
    %4866 = vmatprep.subr.bf16.mxu0 %v2048
    %4867 = vmatpush1.bf16.msra.mxu0 %v2047
    %4868 = vmatprep.subr.bf16.mxu0 %v2056
    %4869 = vmatpush1.bf16.msra.mxu0 %v2055
    %4870 = vmatprep.subr.bf16.mxu0 %v2064
    %4871 = vmatpush1.bf16.msra.mxu0 %v2063
    %4872 = vmatprep.subr.bf16.mxu0 %v2072
    %4873 = vmatpush1.bf16.msra.mxu0 %v2071
    %4874 = vmatprep.subr.bf16.mxu0 %v2080
    %4875 = vmatpush1.bf16.msra.mxu0 %v2079
    %4876 = vmatprep.mubr.bf16.mxu0 %v4586
    %4877 = vmatmul.mubr.bf16.gmra.mrb[0].mxu0 %v4585
    %v4878 = vpop.f32.mrb[0].mxu0
    %v4879 = vadd.f32 0.0, %v4878
    %v4880 = vpop.f32.mrb[0].mxu0
    %v4881 = vadd.f32 0.0, %v4880
    %v4882 = vpop.f32.mrb[0].mxu0
    %v4883 = vpop.f32.mrb[0].mxu0
    %4884 = vdwg.mxu0
    %4885 = vmatprep.subr.bf16.mxu0 %v1962
    %4886 = vmatpush1.bf16.msra.mxu0 %v1961
    %4887 = vmatprep.subr.bf16.mxu0 %v1970
    %4888 = vmatpush1.bf16.msra.mxu0 %v1969
    %4889 = vmatprep.subr.bf16.mxu0 %v1978
    %4890 = vmatpush1.bf16.msra.mxu0 %v1977
    %4891 = vmatprep.subr.bf16.mxu0 %v1986
    %4892 = vmatpush1.bf16.msra.mxu0 %v1985
    %4893 = vmatprep.subr.bf16.mxu0 %v1994
    %4894 = vmatpush1.bf16.msra.mxu0 %v1993
    %4895 = vmatprep.subr.bf16.mxu0 %v2002
    %4896 = vmatpush1.bf16.msra.mxu0 %v2001
    %4897 = vmatprep.subr.bf16.mxu0 %v2010
    %4898 = vmatpush1.bf16.msra.mxu0 %v2009
    %4899 = vmatprep.subr.bf16.mxu0 %v2018
    %4900 = vmatpush1.bf16.msra.mxu0 %v2017
    %4901 = vmatprep.subr.bf16.mxu0 %v2026
    %4902 = vmatpush1.bf16.msra.mxu0 %v2025
    %4903 = vmatprep.subr.bf16.mxu0 %v2034
    %4904 = vmatpush1.bf16.msra.mxu0 %v2033
    %4905 = vmatprep.subr.bf16.mxu0 %v2042
    %4906 = vmatpush1.bf16.msra.mxu0 %v2041
    %4907 = vmatprep.subr.bf16.mxu0 %v2050
    %4908 = vmatpush1.bf16.msra.mxu0 %v2049
    %4909 = vmatprep.subr.bf16.mxu0 %v2058
    %4910 = vmatpush1.bf16.msra.mxu0 %v2057
    %4911 = vmatprep.subr.bf16.mxu0 %v2066
    %4912 = vmatpush1.bf16.msra.mxu0 %v2065
    %4913 = vmatprep.subr.bf16.mxu0 %v2074
    %4914 = vmatpush1.bf16.msra.mxu0 %v2073
    %4915 = vmatprep.subr.bf16.mxu0 %v2082
    %4916 = vmatpush1.bf16.msra.mxu0 %v2081
    %4917 = vmatprep.mubr.bf16.mxu0 %v4586
    %4918 = vmatmul.mubr.bf16.gmra.mrb[0].mxu0 %v4585
    %v4919 = vpop.f32.mrb[0].mxu0
    %v4920 = vadd.f32 0.0, %v4919
    %v4921 = vpop.f32.mrb[0].mxu0
    %v4922 = vadd.f32 0.0, %v4921
    %v4923 = vpop.f32.mrb[0].mxu0
    %v4924 = vpop.f32.mrb[0].mxu0
    %4925 = vdwg.mxu0
    %v4926 = vadd.f32 %v4754, %v4797
    %v4927 = vadd.f32 %v4755, %v4799
    %v4928 = vadd.f32 %v4756, %v4838
    %v4929 = vadd.f32 %v4757, %v4840
    %v4930 = vadd.f32 %v4758, %v4879
    %v4931 = vadd.f32 %v4759, %v4881
    %v4932 = vadd.f32 %v4760, %v4920
    %v4933 = vadd.f32 %v4761, %v4922
    %v4934 = vpack.c.bf16 %v4583, %v4583
    %v4935 = vpack.c.bf16 %v4584, %v4584
    %4936 = vmatprep.subr.bf16.mxu0 %v2896
    %4937 = vmatpush1.bf16.msra.mxu0 %v2895
    %4938 = vmatprep.subr.bf16.mxu0 %v2904
    %4939 = vmatpush1.bf16.msra.mxu0 %v2903
    %4940 = vmatprep.subr.bf16.mxu0 %v2912
    %4941 = vmatpush1.bf16.msra.mxu0 %v2911
    %4942 = vmatprep.subr.bf16.mxu0 %v2920
    %4943 = vmatpush1.bf16.msra.mxu0 %v2919
    %4944 = vmatprep.subr.bf16.mxu0 %v2928
    %4945 = vmatpush1.bf16.msra.mxu0 %v2927
    %4946 = vmatprep.subr.bf16.mxu0 %v2936
    %4947 = vmatpush1.bf16.msra.mxu0 %v2935
    %4948 = vmatprep.subr.bf16.mxu0 %v2944
    %4949 = vmatpush1.bf16.msra.mxu0 %v2943
    %4950 = vmatprep.subr.bf16.mxu0 %v2952
    %4951 = vmatpush1.bf16.msra.mxu0 %v2951
    %4952 = vmatprep.subr.bf16.mxu0 %v2960
    %4953 = vmatpush1.bf16.msra.mxu0 %v2959
    %4954 = vmatprep.subr.bf16.mxu0 %v2968
    %4955 = vmatpush1.bf16.msra.mxu0 %v2967
    %4956 = vmatprep.subr.bf16.mxu0 %v2976
    %4957 = vmatpush1.bf16.msra.mxu0 %v2975
    %4958 = vmatprep.subr.bf16.mxu0 %v2984
    %4959 = vmatpush1.bf16.msra.mxu0 %v2983
    %4960 = vmatprep.subr.bf16.mxu0 %v2992
    %4961 = vmatpush1.bf16.msra.mxu0 %v2991
    %4962 = vmatprep.subr.bf16.mxu0 %v3000
    %4963 = vmatpush1.bf16.msra.mxu0 %v2999
    %4964 = vmatprep.subr.bf16.mxu0 %v3008
    %4965 = vmatpush1.bf16.msra.mxu0 %v3007
    %4966 = vmatprep.subr.bf16.mxu0 %v3016
    %4967 = vmatpush1.bf16.msra.mxu0 %v3015
    %4968 = vmatprep.mubr.bf16.mxu0 %v4935
    %4969 = vmatmul.mubr.bf16.gmra.mrb[0].mxu0 %v4934
    %v4970 = vpop.f32.mrb[0].mxu0
    %v4971 = vadd.f32 0.0, %v4970
    %v4972 = vpop.f32.mrb[0].mxu0
    %v4973 = vadd.f32 0.0, %v4972
    %v4974 = vpop.f32.mrb[0].mxu0
    %v4975 = vpop.f32.mrb[0].mxu0
    %4976 = vdwg.mxu0
    %4977 = vmatprep.subr.bf16.mxu0 %v2898
    %4978 = vmatpush1.bf16.msra.mxu0 %v2897
    %4979 = vmatprep.subr.bf16.mxu0 %v2906
    %4980 = vmatpush1.bf16.msra.mxu0 %v2905
    %4981 = vmatprep.subr.bf16.mxu0 %v2914
    %4982 = vmatpush1.bf16.msra.mxu0 %v2913
    %4983 = vmatprep.subr.bf16.mxu0 %v2922
    %4984 = vmatpush1.bf16.msra.mxu0 %v2921
    %4985 = vmatprep.subr.bf16.mxu0 %v2930
    %4986 = vmatpush1.bf16.msra.mxu0 %v2929
    %4987 = vmatprep.subr.bf16.mxu0 %v2938
    %4988 = vmatpush1.bf16.msra.mxu0 %v2937
    %4989 = vmatprep.subr.bf16.mxu0 %v2946
    %4990 = vmatpush1.bf16.msra.mxu0 %v2945
    %4991 = vmatprep.subr.bf16.mxu0 %v2954
    %4992 = vmatpush1.bf16.msra.mxu0 %v2953
    %4993 = vmatprep.subr.bf16.mxu0 %v2962
    %4994 = vmatpush1.bf16.msra.mxu0 %v2961
    %4995 = vmatprep.subr.bf16.mxu0 %v2970
    %4996 = vmatpush1.bf16.msra.mxu0 %v2969
    %4997 = vmatprep.subr.bf16.mxu0 %v2978
    %4998 = vmatpush1.bf16.msra.mxu0 %v2977
    %4999 = vmatprep.subr.bf16.mxu0 %v2986
    %5000 = vmatpush1.bf16.msra.mxu0 %v2985
    %5001 = vmatprep.subr.bf16.mxu0 %v2994
    %5002 = vmatpush1.bf16.msra.mxu0 %v2993
    %5003 = vmatprep.subr.bf16.mxu0 %v3002
    %5004 = vmatpush1.bf16.msra.mxu0 %v3001
    %5005 = vmatprep.subr.bf16.mxu0 %v3010
    %5006 = vmatpush1.bf16.msra.mxu0 %v3009
    %5007 = vmatprep.subr.bf16.mxu0 %v3018
    %5008 = vmatpush1.bf16.msra.mxu0 %v3017
    %5009 = vmatprep.mubr.bf16.mxu0 %v4935
    %5010 = vmatmul.mubr.bf16.gmra.mrb[0].mxu0 %v4934
    %v5011 = vpop.f32.mrb[0].mxu0
    %v5012 = vadd.f32 0.0, %v5011
    %v5013 = vpop.f32.mrb[0].mxu0
    %v5014 = vadd.f32 0.0, %v5013
    %v5015 = vpop.f32.mrb[0].mxu0
    %v5016 = vpop.f32.mrb[0].mxu0
    %5017 = vdwg.mxu0
    %5018 = vmatprep.subr.bf16.mxu0 %v2900
    %5019 = vmatpush1.bf16.msra.mxu0 %v2899
    %5020 = vmatprep.subr.bf16.mxu0 %v2908
    %5021 = vmatpush1.bf16.msra.mxu0 %v2907
    %5022 = vmatprep.subr.bf16.mxu0 %v2916
    %5023 = vmatpush1.bf16.msra.mxu0 %v2915
    %5024 = vmatprep.subr.bf16.mxu0 %v2924
    %5025 = vmatpush1.bf16.msra.mxu0 %v2923
    %5026 = vmatprep.subr.bf16.mxu0 %v2932
    %5027 = vmatpush1.bf16.msra.mxu0 %v2931
    %5028 = vmatprep.subr.bf16.mxu0 %v2940
    %5029 = vmatpush1.bf16.msra.mxu0 %v2939
    %5030 = vmatprep.subr.bf16.mxu0 %v2948
    %5031 = vmatpush1.bf16.msra.mxu0 %v2947
    %5032 = vmatprep.subr.bf16.mxu0 %v2956
    %5033 = vmatpush1.bf16.msra.mxu0 %v2955
    %5034 = vmatprep.subr.bf16.mxu0 %v2964
    %5035 = vmatpush1.bf16.msra.mxu0 %v2963
    %5036 = vmatprep.subr.bf16.mxu0 %v2972
    %5037 = vmatpush1.bf16.msra.mxu0 %v2971
    %5038 = vmatprep.subr.bf16.mxu0 %v2980
    %5039 = vmatpush1.bf16.msra.mxu0 %v2979
    %5040 = vmatprep.subr.bf16.mxu0 %v2988
    %5041 = vmatpush1.bf16.msra.mxu0 %v2987
    %5042 = vmatprep.subr.bf16.mxu0 %v2996
    %5043 = vmatpush1.bf16.msra.mxu0 %v2995
    %5044 = vmatprep.subr.bf16.mxu0 %v3004
    %5045 = vmatpush1.bf16.msra.mxu0 %v3003
    %5046 = vmatprep.subr.bf16.mxu0 %v3012
    %5047 = vmatpush1.bf16.msra.mxu0 %v3011
    %5048 = vmatprep.subr.bf16.mxu0 %v3020
    %5049 = vmatpush1.bf16.msra.mxu0 %v3019
    %5050 = vmatprep.mubr.bf16.mxu0 %v4935
    %5051 = vmatmul.mubr.bf16.gmra.mrb[0].mxu0 %v4934
    %v5052 = vpop.f32.mrb[0].mxu0
    %v5053 = vadd.f32 0.0, %v5052
    %v5054 = vpop.f32.mrb[0].mxu0
    %v5055 = vadd.f32 0.0, %v5054
    %v5056 = vpop.f32.mrb[0].mxu0
    %v5057 = vpop.f32.mrb[0].mxu0
    %5058 = vdwg.mxu0
    %5059 = vmatprep.subr.bf16.mxu0 %v2902
    %5060 = vmatpush1.bf16.msra.mxu0 %v2901
    %5061 = vmatprep.subr.bf16.mxu0 %v2910
    %5062 = vmatpush1.bf16.msra.mxu0 %v2909
    %5063 = vmatprep.subr.bf16.mxu0 %v2918
    %5064 = vmatpush1.bf16.msra.mxu0 %v2917
    %5065 = vmatprep.subr.bf16.mxu0 %v2926
    %5066 = vmatpush1.bf16.msra.mxu0 %v2925
    %5067 = vmatprep.subr.bf16.mxu0 %v2934
    %5068 = vmatpush1.bf16.msra.mxu0 %v2933
    %5069 = vmatprep.subr.bf16.mxu0 %v2942
    %5070 = vmatpush1.bf16.msra.mxu0 %v2941
    %5071 = vmatprep.subr.bf16.mxu0 %v2950
    %5072 = vmatpush1.bf16.msra.mxu0 %v2949
    %5073 = vmatprep.subr.bf16.mxu0 %v2958
    %5074 = vmatpush1.bf16.msra.mxu0 %v2957
    %5075 = vmatprep.subr.bf16.mxu0 %v2966
    %5076 = vmatpush1.bf16.msra.mxu0 %v2965
    %5077 = vmatprep.subr.bf16.mxu0 %v2974
    %5078 = vmatpush1.bf16.msra.mxu0 %v2973
    %5079 = vmatprep.subr.bf16.mxu0 %v2982
    %5080 = vmatpush1.bf16.msra.mxu0 %v2981
    %5081 = vmatprep.subr.bf16.mxu0 %v2990
    %5082 = vmatpush1.bf16.msra.mxu0 %v2989
    %5083 = vmatprep.subr.bf16.mxu0 %v2998
    %5084 = vmatpush1.bf16.msra.mxu0 %v2997
    %5085 = vmatprep.subr.bf16.mxu0 %v3006
    %5086 = vmatpush1.bf16.msra.mxu0 %v3005
    %5087 = vmatprep.subr.bf16.mxu0 %v3014
    %5088 = vmatpush1.bf16.msra.mxu0 %v3013
    %5089 = vmatprep.subr.bf16.mxu0 %v3022
    %5090 = vmatpush1.bf16.msra.mxu0 %v3021
    %5091 = vmatprep.mubr.bf16.mxu0 %v4935
    %5092 = vmatmul.mubr.bf16.gmra.mrb[0].mxu0 %v4934
    %v5093 = vpop.f32.mrb[0].mxu0
    %v5094 = vadd.f32 0.0, %v5093
    %v5095 = vpop.f32.mrb[0].mxu0
    %v5096 = vadd.f32 0.0, %v5095
    %v5097 = vpop.f32.mrb[0].mxu0
    %v5098 = vpop.f32.mrb[0].mxu0
    %5099 = vdwg.mxu0
    %v5100 = vadd.f32 %v4622, %v4971
    %v5101 = vadd.f32 %v4624, %v4973
    %v5102 = vadd.f32 %v4663, %v5012
    %v5103 = vadd.f32 %v4665, %v5014
    %v5104 = vadd.f32 %v4704, %v5053
    %v5105 = vadd.f32 %v4706, %v5055
    %v5106 = vadd.f32 %v4745, %v5094
    %v5107 = vadd.f32 %v4747, %v5096
    %v5108 = vmul.f32 %v4926, 0.5
    %v5109 = vmul.f32 %v4927, 0.5
    %v5110 = vtanh.pop %v5108
    %v5111 = vtanh.pop %v5109
    %v5112 = vmul.f32 %v5110, 0.5
    %v5113 = vmul.f32 %v5111, 0.5
    %v5114 = vadd.f32 %v5112, 0.5
    %v5115 = vadd.f32 %v5113, 0.5
    %v5116 = vmul.f32 %v4928, 0.5
    %v5117 = vmul.f32 %v4929, 0.5
    %v5118 = vtanh.pop %v5116
    %v5119 = vtanh.pop %v5117
    %v5120 = vmul.f32 %v5118, 0.5
    %v5121 = vmul.f32 %v5119, 0.5
    %v5122 = vadd.f32 %v5120, 0.5
    %v5123 = vadd.f32 %v5121, 0.5
    %v5124 = vtanh.pop %v4930
    %v5125 = vtanh.pop %v4931
    %v5126 = vmul.f32 %v4932, 0.5
    %v5127 = vmul.f32 %v4933, 0.5
    %v5128 = vtanh.pop %v5126
    %v5129 = vtanh.pop %v5127
    %v5130 = vmul.f32 %v5128, 0.5
    %v5131 = vmul.f32 %v5129, 0.5
    %v5132 = vadd.f32 %v5130, 0.5
    %v5133 = vadd.f32 %v5131, 0.5
    %v5134 = vmul.f32 %v5122, %v4543
    %v5135 = vmul.f32 %v5123, %v4544
    %v5136 = vmul.f32 %v5114, %v5124
    %v5137 = vmul.f32 %v5115, %v5125
    %v5138 = vadd.f32 %v5134, %v5136
    %v5139 = vadd.f32 %v5135, %v5137
    %v5140 = vtanh.pop %v5138
    %v5141 = vtanh.pop %v5139
    %v5142 = vmul.f32 %v5132, %v5140
    %v5143 = vmul.f32 %v5133, %v5141
    %v5144 = vmul.f32 %v5100, 0.5
    %v5145 = vmul.f32 %v5101, 0.5
    %v5146 = vtanh.pop %v5144
    %v5147 = vtanh.pop %v5145
    %v5148 = vmul.f32 %v5146, 0.5
    %v5149 = vmul.f32 %v5147, 0.5
    %v5150 = vadd.f32 %v5148, 0.5
    %v5151 = vadd.f32 %v5149, 0.5
    %v5152 = vmul.f32 %v5102, 0.5
    %v5153 = vmul.f32 %v5103, 0.5
    %v5154 = vtanh.pop %v5152
    %v5155 = vtanh.pop %v5153
    %v5156 = vmul.f32 %v5154, 0.5
    %v5157 = vmul.f32 %v5155, 0.5
    %v5158 = vadd.f32 %v5156, 0.5
    %v5159 = vadd.f32 %v5157, 0.5
    %v5160 = vtanh.pop %v5104
    %v5161 = vtanh.pop %v5105
    %v5162 = vmul.f32 %v5106, 0.5
    %v5163 = vmul.f32 %v5107, 0.5
    %v5164 = vtanh.pop %v5162
    %v5165 = vtanh.pop %v5163
    %v5166 = vmul.f32 %v5164, 0.5
    %v5167 = vmul.f32 %v5165, 0.5
    %v5168 = vadd.f32 %v5166, 0.5
    %v5169 = vadd.f32 %v5167, 0.5
    %v5170 = vmul.f32 %v5158, %v4579
    %v5171 = vmul.f32 %v5159, %v4580
    %v5172 = vmul.f32 %v5150, %v5160
    %v5173 = vmul.f32 %v5151, %v5161
    %v5174 = vadd.f32 %v5170, %v5172
    %v5175 = vadd.f32 %v5171, %v5173
    %v5176 = vtanh.pop %v5174
    %v5177 = vtanh.pop %v5175
    %v5178 = vmul.f32 %v5168, %v5176
    %v5179 = vmul.f32 %v5169, %v5177
    %v5180 = vpack.c.bf16 %v5142, %v5142
    %v5181 = vpack.c.bf16 %v5143, %v5143
    %5182 = vmatprep.subr.bf16.mxu0 %v1013
    %5183 = vmatpush1.bf16.msra.mxu0 %v1012
    %5184 = vmatprep.subr.bf16.mxu0 %v1021
    %5185 = vmatpush1.bf16.msra.mxu0 %v1020
    %5186 = vmatprep.subr.bf16.mxu0 %v1029
    %5187 = vmatpush1.bf16.msra.mxu0 %v1028
    %5188 = vmatprep.subr.bf16.mxu0 %v1037
    %5189 = vmatpush1.bf16.msra.mxu0 %v1036
    %5190 = vmatprep.subr.bf16.mxu0 %v1045
    %5191 = vmatpush1.bf16.msra.mxu0 %v1044
    %5192 = vmatprep.subr.bf16.mxu0 %v1053
    %5193 = vmatpush1.bf16.msra.mxu0 %v1052
    %5194 = vmatprep.subr.bf16.mxu0 %v1061
    %5195 = vmatpush1.bf16.msra.mxu0 %v1060
    %5196 = vmatprep.subr.bf16.mxu0 %v1069
    %5197 = vmatpush1.bf16.msra.mxu0 %v1068
    %5198 = vmatprep.subr.bf16.mxu0 %v1077
    %5199 = vmatpush1.bf16.msra.mxu0 %v1076
    %5200 = vmatprep.subr.bf16.mxu0 %v1085
    %5201 = vmatpush1.bf16.msra.mxu0 %v1084
    %5202 = vmatprep.subr.bf16.mxu0 %v1093
    %5203 = vmatpush1.bf16.msra.mxu0 %v1092
    %5204 = vmatprep.subr.bf16.mxu0 %v1101
    %5205 = vmatpush1.bf16.msra.mxu0 %v1100
    %5206 = vmatprep.subr.bf16.mxu0 %v1109
    %5207 = vmatpush1.bf16.msra.mxu0 %v1108
    %5208 = vmatprep.subr.bf16.mxu0 %v1117
    %5209 = vmatpush1.bf16.msra.mxu0 %v1116
    %5210 = vmatprep.subr.bf16.mxu0 %v1125
    %5211 = vmatpush1.bf16.msra.mxu0 %v1124
    %5212 = vmatprep.subr.bf16.mxu0 %v1133
    %5213 = vmatpush1.bf16.msra.mxu0 %v1132
    %5214 = vmatprep.mubr.bf16.mxu0 %v5181
    %5215 = vmatmul.mubr.bf16.gmra.mrb[0].mxu0 %v5180
    %v5216 = vpop.f32.mrb[0].mxu0
    %v5217 = vadd.f32 %v417, %v5216
    %v5218 = vpop.f32.mrb[0].mxu0
    %v5219 = vadd.f32 %v421, %v5218
    %v5220 = vpop.f32.mrb[0].mxu0
    %v5221 = vpop.f32.mrb[0].mxu0
    %5222 = vdwg.mxu0
    %5223 = vmatprep.subr.bf16.mxu0 %v1015
    %5224 = vmatpush1.bf16.msra.mxu0 %v1014
    %5225 = vmatprep.subr.bf16.mxu0 %v1023
    %5226 = vmatpush1.bf16.msra.mxu0 %v1022
    %5227 = vmatprep.subr.bf16.mxu0 %v1031
    %5228 = vmatpush1.bf16.msra.mxu0 %v1030
    %5229 = vmatprep.subr.bf16.mxu0 %v1039
    %5230 = vmatpush1.bf16.msra.mxu0 %v1038
    %5231 = vmatprep.subr.bf16.mxu0 %v1047
    %5232 = vmatpush1.bf16.msra.mxu0 %v1046
    %5233 = vmatprep.subr.bf16.mxu0 %v1055
    %5234 = vmatpush1.bf16.msra.mxu0 %v1054
    %5235 = vmatprep.subr.bf16.mxu0 %v1063
    %5236 = vmatpush1.bf16.msra.mxu0 %v1062
    %5237 = vmatprep.subr.bf16.mxu0 %v1071
    %5238 = vmatpush1.bf16.msra.mxu0 %v1070
    %5239 = vmatprep.subr.bf16.mxu0 %v1079
    %5240 = vmatpush1.bf16.msra.mxu0 %v1078
    %5241 = vmatprep.subr.bf16.mxu0 %v1087
    %5242 = vmatpush1.bf16.msra.mxu0 %v1086
    %5243 = vmatprep.subr.bf16.mxu0 %v1095
    %5244 = vmatpush1.bf16.msra.mxu0 %v1094
    %5245 = vmatprep.subr.bf16.mxu0 %v1103
    %5246 = vmatpush1.bf16.msra.mxu0 %v1102
    %5247 = vmatprep.subr.bf16.mxu0 %v1111
    %5248 = vmatpush1.bf16.msra.mxu0 %v1110
    %5249 = vmatprep.subr.bf16.mxu0 %v1119
    %5250 = vmatpush1.bf16.msra.mxu0 %v1118
    %5251 = vmatprep.subr.bf16.mxu0 %v1127
    %5252 = vmatpush1.bf16.msra.mxu0 %v1126
    %5253 = vmatprep.subr.bf16.mxu0 %v1135
    %5254 = vmatpush1.bf16.msra.mxu0 %v1134
    %5255 = vmatprep.mubr.bf16.mxu0 %v5181
    %5256 = vmatmul.mubr.bf16.gmra.mrb[0].mxu0 %v5180
    %v5257 = vpop.f32.mrb[0].mxu0
    %v5258 = vadd.f32 %v425, %v5257
    %v5259 = vpop.f32.mrb[0].mxu0
    %v5260 = vadd.f32 %v429, %v5259
    %v5261 = vpop.f32.mrb[0].mxu0
    %v5262 = vpop.f32.mrb[0].mxu0
    %5263 = vdwg.mxu0
    %5264 = vmatprep.subr.bf16.mxu0 %v1017
    %5265 = vmatpush1.bf16.msra.mxu0 %v1016
    %5266 = vmatprep.subr.bf16.mxu0 %v1025
    %5267 = vmatpush1.bf16.msra.mxu0 %v1024
    %5268 = vmatprep.subr.bf16.mxu0 %v1033
    %5269 = vmatpush1.bf16.msra.mxu0 %v1032
    %5270 = vmatprep.subr.bf16.mxu0 %v1041
    %5271 = vmatpush1.bf16.msra.mxu0 %v1040
    %5272 = vmatprep.subr.bf16.mxu0 %v1049
    %5273 = vmatpush1.bf16.msra.mxu0 %v1048
    %5274 = vmatprep.subr.bf16.mxu0 %v1057
    %5275 = vmatpush1.bf16.msra.mxu0 %v1056
    %5276 = vmatprep.subr.bf16.mxu0 %v1065
    %5277 = vmatpush1.bf16.msra.mxu0 %v1064
    %5278 = vmatprep.subr.bf16.mxu0 %v1073
    %5279 = vmatpush1.bf16.msra.mxu0 %v1072
    %5280 = vmatprep.subr.bf16.mxu0 %v1081
    %5281 = vmatpush1.bf16.msra.mxu0 %v1080
    %5282 = vmatprep.subr.bf16.mxu0 %v1089
    %5283 = vmatpush1.bf16.msra.mxu0 %v1088
    %5284 = vmatprep.subr.bf16.mxu0 %v1097
    %5285 = vmatpush1.bf16.msra.mxu0 %v1096
    %5286 = vmatprep.subr.bf16.mxu0 %v1105
    %5287 = vmatpush1.bf16.msra.mxu0 %v1104
    %5288 = vmatprep.subr.bf16.mxu0 %v1113
    %5289 = vmatpush1.bf16.msra.mxu0 %v1112
    %5290 = vmatprep.subr.bf16.mxu0 %v1121
    %5291 = vmatpush1.bf16.msra.mxu0 %v1120
    %5292 = vmatprep.subr.bf16.mxu0 %v1129
    %5293 = vmatpush1.bf16.msra.mxu0 %v1128
    %5294 = vmatprep.subr.bf16.mxu0 %v1137
    %5295 = vmatpush1.bf16.msra.mxu0 %v1136
    %5296 = vmatprep.mubr.bf16.mxu0 %v5181
    %5297 = vmatmul.mubr.bf16.gmra.mrb[0].mxu0 %v5180
    %v5298 = vpop.f32.mrb[0].mxu0
    %v5299 = vadd.f32 %v433, %v5298
    %v5300 = vpop.f32.mrb[0].mxu0
    %v5301 = vadd.f32 %v437, %v5300
    %v5302 = vpop.f32.mrb[0].mxu0
    %v5303 = vpop.f32.mrb[0].mxu0
    %5304 = vdwg.mxu0
    %5305 = vmatprep.subr.bf16.mxu0 %v1019
    %5306 = vmatpush1.bf16.msra.mxu0 %v1018
    %5307 = vmatprep.subr.bf16.mxu0 %v1027
    %5308 = vmatpush1.bf16.msra.mxu0 %v1026
    %5309 = vmatprep.subr.bf16.mxu0 %v1035
    %5310 = vmatpush1.bf16.msra.mxu0 %v1034
    %5311 = vmatprep.subr.bf16.mxu0 %v1043
    %5312 = vmatpush1.bf16.msra.mxu0 %v1042
    %5313 = vmatprep.subr.bf16.mxu0 %v1051
    %5314 = vmatpush1.bf16.msra.mxu0 %v1050
    %5315 = vmatprep.subr.bf16.mxu0 %v1059
    %5316 = vmatpush1.bf16.msra.mxu0 %v1058
    %5317 = vmatprep.subr.bf16.mxu0 %v1067
    %5318 = vmatpush1.bf16.msra.mxu0 %v1066
    %5319 = vmatprep.subr.bf16.mxu0 %v1075
    %5320 = vmatpush1.bf16.msra.mxu0 %v1074
    %5321 = vmatprep.subr.bf16.mxu0 %v1083
    %5322 = vmatpush1.bf16.msra.mxu0 %v1082
    %5323 = vmatprep.subr.bf16.mxu0 %v1091
    %5324 = vmatpush1.bf16.msra.mxu0 %v1090
    %5325 = vmatprep.subr.bf16.mxu0 %v1099
    %5326 = vmatpush1.bf16.msra.mxu0 %v1098
    %5327 = vmatprep.subr.bf16.mxu0 %v1107
    %5328 = vmatpush1.bf16.msra.mxu0 %v1106
    %5329 = vmatprep.subr.bf16.mxu0 %v1115
    %5330 = vmatpush1.bf16.msra.mxu0 %v1114
    %5331 = vmatprep.subr.bf16.mxu0 %v1123
    %5332 = vmatpush1.bf16.msra.mxu0 %v1122
    %5333 = vmatprep.subr.bf16.mxu0 %v1131
    %5334 = vmatpush1.bf16.msra.mxu0 %v1130
    %5335 = vmatprep.subr.bf16.mxu0 %v1139
    %5336 = vmatpush1.bf16.msra.mxu0 %v1138
    %5337 = vmatprep.mubr.bf16.mxu0 %v5181
    %5338 = vmatmul.mubr.bf16.gmra.mrb[0].mxu0 %v5180
    %v5339 = vpop.f32.mrb[0].mxu0
    %v5340 = vadd.f32 %v441, %v5339
    %v5341 = vpop.f32.mrb[0].mxu0
    %v5342 = vadd.f32 %v445, %v5341
    %v5343 = vpop.f32.mrb[0].mxu0
    %v5344 = vpop.f32.mrb[0].mxu0
    %5345 = vdwg.mxu0
    %s5346 = smul.u32 5, 8
    %s5347 = smul.addr %s5346, 8
    %s5348 = scalar_lea.vmem [#allocation2], %s5347
    %v5349 = vld [vmem:[%s5348] sm:$0xff]
    %v5350 = vld [vmem:[%s5348 + $0x8] sm:$0xff]
    %v5351 = vld [vmem:[%s5348 + $0x10] sm:$0xff]
    %v5352 = vld [vmem:[%s5348 + $0x18] sm:$0xff]
    %v5353 = vld [vmem:[%s5348 + $0x20] sm:$0xff]
    %v5354 = vld [vmem:[%s5348 + $0x28] sm:$0xff]
    %v5355 = vld [vmem:[%s5348 + $0x30] sm:$0xff]
    %v5356 = vld [vmem:[%s5348 + $0x38] sm:$0xff]
    %5357 = vmatprep.subr.bf16.mxu0 %v1956
    %5358 = vmatpush1.bf16.msra.mxu0 %v1955
    %5359 = vmatprep.subr.bf16.mxu0 %v1964
    %5360 = vmatpush1.bf16.msra.mxu0 %v1963
    %5361 = vmatprep.subr.bf16.mxu0 %v1972
    %5362 = vmatpush1.bf16.msra.mxu0 %v1971
    %5363 = vmatprep.subr.bf16.mxu0 %v1980
    %5364 = vmatpush1.bf16.msra.mxu0 %v1979
    %5365 = vmatprep.subr.bf16.mxu0 %v1988
    %5366 = vmatpush1.bf16.msra.mxu0 %v1987
    %5367 = vmatprep.subr.bf16.mxu0 %v1996
    %5368 = vmatpush1.bf16.msra.mxu0 %v1995
    %5369 = vmatprep.subr.bf16.mxu0 %v2004
    %5370 = vmatpush1.bf16.msra.mxu0 %v2003
    %5371 = vmatprep.subr.bf16.mxu0 %v2012
    %5372 = vmatpush1.bf16.msra.mxu0 %v2011
    %5373 = vmatprep.subr.bf16.mxu0 %v2020
    %5374 = vmatpush1.bf16.msra.mxu0 %v2019
    %5375 = vmatprep.subr.bf16.mxu0 %v2028
    %5376 = vmatpush1.bf16.msra.mxu0 %v2027
    %5377 = vmatprep.subr.bf16.mxu0 %v2036
    %5378 = vmatpush1.bf16.msra.mxu0 %v2035
    %5379 = vmatprep.subr.bf16.mxu0 %v2044
    %5380 = vmatpush1.bf16.msra.mxu0 %v2043
    %5381 = vmatprep.subr.bf16.mxu0 %v2052
    %5382 = vmatpush1.bf16.msra.mxu0 %v2051
    %5383 = vmatprep.subr.bf16.mxu0 %v2060
    %5384 = vmatpush1.bf16.msra.mxu0 %v2059
    %5385 = vmatprep.subr.bf16.mxu0 %v2068
    %5386 = vmatpush1.bf16.msra.mxu0 %v2067
    %5387 = vmatprep.subr.bf16.mxu0 %v2076
    %5388 = vmatpush1.bf16.msra.mxu0 %v2075
    %5389 = vmatprep.mubr.bf16.mxu0 %v5181
    %5390 = vmatmul.mubr.bf16.gmra.mrb[0].mxu0 %v5180
    %v5391 = vpop.f32.mrb[0].mxu0
    %v5392 = vadd.f32 0.0, %v5391
    %v5393 = vpop.f32.mrb[0].mxu0
    %v5394 = vadd.f32 0.0, %v5393
    %v5395 = vpop.f32.mrb[0].mxu0
    %v5396 = vpop.f32.mrb[0].mxu0
    %5397 = vdwg.mxu0
    %5398 = vmatprep.subr.bf16.mxu0 %v1958
    %5399 = vmatpush1.bf16.msra.mxu0 %v1957
    %5400 = vmatprep.subr.bf16.mxu0 %v1966
    %5401 = vmatpush1.bf16.msra.mxu0 %v1965
    %5402 = vmatprep.subr.bf16.mxu0 %v1974
    %5403 = vmatpush1.bf16.msra.mxu0 %v1973
    %5404 = vmatprep.subr.bf16.mxu0 %v1982
    %5405 = vmatpush1.bf16.msra.mxu0 %v1981
    %5406 = vmatprep.subr.bf16.mxu0 %v1990
    %5407 = vmatpush1.bf16.msra.mxu0 %v1989
    %5408 = vmatprep.subr.bf16.mxu0 %v1998
    %5409 = vmatpush1.bf16.msra.mxu0 %v1997
    %5410 = vmatprep.subr.bf16.mxu0 %v2006
    %5411 = vmatpush1.bf16.msra.mxu0 %v2005
    %5412 = vmatprep.subr.bf16.mxu0 %v2014
    %5413 = vmatpush1.bf16.msra.mxu0 %v2013
    %5414 = vmatprep.subr.bf16.mxu0 %v2022
    %5415 = vmatpush1.bf16.msra.mxu0 %v2021
    %5416 = vmatprep.subr.bf16.mxu0 %v2030
    %5417 = vmatpush1.bf16.msra.mxu0 %v2029
    %5418 = vmatprep.subr.bf16.mxu0 %v2038
    %5419 = vmatpush1.bf16.msra.mxu0 %v2037
    %5420 = vmatprep.subr.bf16.mxu0 %v2046
    %5421 = vmatpush1.bf16.msra.mxu0 %v2045
    %5422 = vmatprep.subr.bf16.mxu0 %v2054
    %5423 = vmatpush1.bf16.msra.mxu0 %v2053
    %5424 = vmatprep.subr.bf16.mxu0 %v2062
    %5425 = vmatpush1.bf16.msra.mxu0 %v2061
    %5426 = vmatprep.subr.bf16.mxu0 %v2070
    %5427 = vmatpush1.bf16.msra.mxu0 %v2069
    %5428 = vmatprep.subr.bf16.mxu0 %v2078
    %5429 = vmatpush1.bf16.msra.mxu0 %v2077
    %5430 = vmatprep.mubr.bf16.mxu0 %v5181
    %5431 = vmatmul.mubr.bf16.gmra.mrb[0].mxu0 %v5180
    %v5432 = vpop.f32.mrb[0].mxu0
    %v5433 = vadd.f32 0.0, %v5432
    %v5434 = vpop.f32.mrb[0].mxu0
    %v5435 = vadd.f32 0.0, %v5434
    %v5436 = vpop.f32.mrb[0].mxu0
    %v5437 = vpop.f32.mrb[0].mxu0
    %5438 = vdwg.mxu0
    %5439 = vmatprep.subr.bf16.mxu0 %v1960
    %5440 = vmatpush1.bf16.msra.mxu0 %v1959
    %5441 = vmatprep.subr.bf16.mxu0 %v1968
    %5442 = vmatpush1.bf16.msra.mxu0 %v1967
    %5443 = vmatprep.subr.bf16.mxu0 %v1976
    %5444 = vmatpush1.bf16.msra.mxu0 %v1975
    %5445 = vmatprep.subr.bf16.mxu0 %v1984
    %5446 = vmatpush1.bf16.msra.mxu0 %v1983
    %5447 = vmatprep.subr.bf16.mxu0 %v1992
    %5448 = vmatpush1.bf16.msra.mxu0 %v1991
    %5449 = vmatprep.subr.bf16.mxu0 %v2000
    %5450 = vmatpush1.bf16.msra.mxu0 %v1999
    %5451 = vmatprep.subr.bf16.mxu0 %v2008
    %5452 = vmatpush1.bf16.msra.mxu0 %v2007
    %5453 = vmatprep.subr.bf16.mxu0 %v2016
    %5454 = vmatpush1.bf16.msra.mxu0 %v2015
    %5455 = vmatprep.subr.bf16.mxu0 %v2024
    %5456 = vmatpush1.bf16.msra.mxu0 %v2023
    %5457 = vmatprep.subr.bf16.mxu0 %v2032
    %5458 = vmatpush1.bf16.msra.mxu0 %v2031
    %5459 = vmatprep.subr.bf16.mxu0 %v2040
    %5460 = vmatpush1.bf16.msra.mxu0 %v2039
    %5461 = vmatprep.subr.bf16.mxu0 %v2048
    %5462 = vmatpush1.bf16.msra.mxu0 %v2047
    %5463 = vmatprep.subr.bf16.mxu0 %v2056
    %5464 = vmatpush1.bf16.msra.mxu0 %v2055
    %5465 = vmatprep.subr.bf16.mxu0 %v2064
    %5466 = vmatpush1.bf16.msra.mxu0 %v2063
    %5467 = vmatprep.subr.bf16.mxu0 %v2072
    %5468 = vmatpush1.bf16.msra.mxu0 %v2071
    %5469 = vmatprep.subr.bf16.mxu0 %v2080
    %5470 = vmatpush1.bf16.msra.mxu0 %v2079
    %5471 = vmatprep.mubr.bf16.mxu0 %v5181
    %5472 = vmatmul.mubr.bf16.gmra.mrb[0].mxu0 %v5180
    %v5473 = vpop.f32.mrb[0].mxu0
    %v5474 = vadd.f32 0.0, %v5473
    %v5475 = vpop.f32.mrb[0].mxu0
    %v5476 = vadd.f32 0.0, %v5475
    %v5477 = vpop.f32.mrb[0].mxu0
    %v5478 = vpop.f32.mrb[0].mxu0
    %5479 = vdwg.mxu0
    %5480 = vmatprep.subr.bf16.mxu0 %v1962
    %5481 = vmatpush1.bf16.msra.mxu0 %v1961
    %5482 = vmatprep.subr.bf16.mxu0 %v1970
    %5483 = vmatpush1.bf16.msra.mxu0 %v1969
    %5484 = vmatprep.subr.bf16.mxu0 %v1978
    %5485 = vmatpush1.bf16.msra.mxu0 %v1977
    %5486 = vmatprep.subr.bf16.mxu0 %v1986
    %5487 = vmatpush1.bf16.msra.mxu0 %v1985
    %5488 = vmatprep.subr.bf16.mxu0 %v1994
    %5489 = vmatpush1.bf16.msra.mxu0 %v1993
    %5490 = vmatprep.subr.bf16.mxu0 %v2002
    %5491 = vmatpush1.bf16.msra.mxu0 %v2001
    %5492 = vmatprep.subr.bf16.mxu0 %v2010
    %5493 = vmatpush1.bf16.msra.mxu0 %v2009
    %5494 = vmatprep.subr.bf16.mxu0 %v2018
    %5495 = vmatpush1.bf16.msra.mxu0 %v2017
    %5496 = vmatprep.subr.bf16.mxu0 %v2026
    %5497 = vmatpush1.bf16.msra.mxu0 %v2025
    %5498 = vmatprep.subr.bf16.mxu0 %v2034
    %5499 = vmatpush1.bf16.msra.mxu0 %v2033
    %5500 = vmatprep.subr.bf16.mxu0 %v2042
    %5501 = vmatpush1.bf16.msra.mxu0 %v2041
    %5502 = vmatprep.subr.bf16.mxu0 %v2050
    %5503 = vmatpush1.bf16.msra.mxu0 %v2049
    %5504 = vmatprep.subr.bf16.mxu0 %v2058
    %5505 = vmatpush1.bf16.msra.mxu0 %v2057
    %5506 = vmatprep.subr.bf16.mxu0 %v2066
    %5507 = vmatpush1.bf16.msra.mxu0 %v2065
    %5508 = vmatprep.subr.bf16.mxu0 %v2074
    %5509 = vmatpush1.bf16.msra.mxu0 %v2073
    %5510 = vmatprep.subr.bf16.mxu0 %v2082
    %5511 = vmatpush1.bf16.msra.mxu0 %v2081
    %5512 = vmatprep.mubr.bf16.mxu0 %v5181
    %5513 = vmatmul.mubr.bf16.gmra.mrb[0].mxu0 %v5180
    %v5514 = vpop.f32.mrb[0].mxu0
    %v5515 = vadd.f32 0.0, %v5514
    %v5516 = vpop.f32.mrb[0].mxu0
    %v5517 = vadd.f32 0.0, %v5516
    %v5518 = vpop.f32.mrb[0].mxu0
    %v5519 = vpop.f32.mrb[0].mxu0
    %5520 = vdwg.mxu0
    %v5521 = vadd.f32 %v5349, %v5392
    %v5522 = vadd.f32 %v5350, %v5394
    %v5523 = vadd.f32 %v5351, %v5433
    %v5524 = vadd.f32 %v5352, %v5435
    %v5525 = vadd.f32 %v5353, %v5474
    %v5526 = vadd.f32 %v5354, %v5476
    %v5527 = vadd.f32 %v5355, %v5515
    %v5528 = vadd.f32 %v5356, %v5517
    %v5529 = vpack.c.bf16 %v5178, %v5178
    %v5530 = vpack.c.bf16 %v5179, %v5179
    %5531 = vmatprep.subr.bf16.mxu0 %v2896
    %5532 = vmatpush1.bf16.msra.mxu0 %v2895
    %5533 = vmatprep.subr.bf16.mxu0 %v2904
    %5534 = vmatpush1.bf16.msra.mxu0 %v2903
    %5535 = vmatprep.subr.bf16.mxu0 %v2912
    %5536 = vmatpush1.bf16.msra.mxu0 %v2911
    %5537 = vmatprep.subr.bf16.mxu0 %v2920
    %5538 = vmatpush1.bf16.msra.mxu0 %v2919
    %5539 = vmatprep.subr.bf16.mxu0 %v2928
    %5540 = vmatpush1.bf16.msra.mxu0 %v2927
    %5541 = vmatprep.subr.bf16.mxu0 %v2936
    %5542 = vmatpush1.bf16.msra.mxu0 %v2935
    %5543 = vmatprep.subr.bf16.mxu0 %v2944
    %5544 = vmatpush1.bf16.msra.mxu0 %v2943
    %5545 = vmatprep.subr.bf16.mxu0 %v2952
    %5546 = vmatpush1.bf16.msra.mxu0 %v2951
    %5547 = vmatprep.subr.bf16.mxu0 %v2960
    %5548 = vmatpush1.bf16.msra.mxu0 %v2959
    %5549 = vmatprep.subr.bf16.mxu0 %v2968
    %5550 = vmatpush1.bf16.msra.mxu0 %v2967
    %5551 = vmatprep.subr.bf16.mxu0 %v2976
    %5552 = vmatpush1.bf16.msra.mxu0 %v2975
    %5553 = vmatprep.subr.bf16.mxu0 %v2984
    %5554 = vmatpush1.bf16.msra.mxu0 %v2983
    %5555 = vmatprep.subr.bf16.mxu0 %v2992
    %5556 = vmatpush1.bf16.msra.mxu0 %v2991
    %5557 = vmatprep.subr.bf16.mxu0 %v3000
    %5558 = vmatpush1.bf16.msra.mxu0 %v2999
    %5559 = vmatprep.subr.bf16.mxu0 %v3008
    %5560 = vmatpush1.bf16.msra.mxu0 %v3007
    %5561 = vmatprep.subr.bf16.mxu0 %v3016
    %5562 = vmatpush1.bf16.msra.mxu0 %v3015
    %5563 = vmatprep.mubr.bf16.mxu0 %v5530
    %5564 = vmatmul.mubr.bf16.gmra.mrb[0].mxu0 %v5529
    %v5565 = vpop.f32.mrb[0].mxu0
    %v5566 = vadd.f32 0.0, %v5565
    %v5567 = vpop.f32.mrb[0].mxu0
    %v5568 = vadd.f32 0.0, %v5567
    %v5569 = vpop.f32.mrb[0].mxu0
    %v5570 = vpop.f32.mrb[0].mxu0
    %5571 = vdwg.mxu0
    %5572 = vmatprep.subr.bf16.mxu0 %v2898
    %5573 = vmatpush1.bf16.msra.mxu0 %v2897
    %5574 = vmatprep.subr.bf16.mxu0 %v2906
    %5575 = vmatpush1.bf16.msra.mxu0 %v2905
    %5576 = vmatprep.subr.bf16.mxu0 %v2914
    %5577 = vmatpush1.bf16.msra.mxu0 %v2913
    %5578 = vmatprep.subr.bf16.mxu0 %v2922
    %5579 = vmatpush1.bf16.msra.mxu0 %v2921
    %5580 = vmatprep.subr.bf16.mxu0 %v2930
    %5581 = vmatpush1.bf16.msra.mxu0 %v2929
    %5582 = vmatprep.subr.bf16.mxu0 %v2938
    %5583 = vmatpush1.bf16.msra.mxu0 %v2937
    %5584 = vmatprep.subr.bf16.mxu0 %v2946
    %5585 = vmatpush1.bf16.msra.mxu0 %v2945
    %5586 = vmatprep.subr.bf16.mxu0 %v2954
    %5587 = vmatpush1.bf16.msra.mxu0 %v2953
    %5588 = vmatprep.subr.bf16.mxu0 %v2962
    %5589 = vmatpush1.bf16.msra.mxu0 %v2961
    %5590 = vmatprep.subr.bf16.mxu0 %v2970
    %5591 = vmatpush1.bf16.msra.mxu0 %v2969
    %5592 = vmatprep.subr.bf16.mxu0 %v2978
    %5593 = vmatpush1.bf16.msra.mxu0 %v2977
    %5594 = vmatprep.subr.bf16.mxu0 %v2986
    %5595 = vmatpush1.bf16.msra.mxu0 %v2985
    %5596 = vmatprep.subr.bf16.mxu0 %v2994
    %5597 = vmatpush1.bf16.msra.mxu0 %v2993
    %5598 = vmatprep.subr.bf16.mxu0 %v3002
    %5599 = vmatpush1.bf16.msra.mxu0 %v3001
    %5600 = vmatprep.subr.bf16.mxu0 %v3010
    %5601 = vmatpush1.bf16.msra.mxu0 %v3009
    %5602 = vmatprep.subr.bf16.mxu0 %v3018
    %5603 = vmatpush1.bf16.msra.mxu0 %v3017
    %5604 = vmatprep.mubr.bf16.mxu0 %v5530
    %5605 = vmatmul.mubr.bf16.gmra.mrb[0].mxu0 %v5529
    %v5606 = vpop.f32.mrb[0].mxu0
    %v5607 = vadd.f32 0.0, %v5606
    %v5608 = vpop.f32.mrb[0].mxu0
    %v5609 = vadd.f32 0.0, %v5608
    %v5610 = vpop.f32.mrb[0].mxu0
    %v5611 = vpop.f32.mrb[0].mxu0
    %5612 = vdwg.mxu0
    %5613 = vmatprep.subr.bf16.mxu0 %v2900
    %5614 = vmatpush1.bf16.msra.mxu0 %v2899
    %5615 = vmatprep.subr.bf16.mxu0 %v2908
    %5616 = vmatpush1.bf16.msra.mxu0 %v2907
    %5617 = vmatprep.subr.bf16.mxu0 %v2916
    %5618 = vmatpush1.bf16.msra.mxu0 %v2915
    %5619 = vmatprep.subr.bf16.mxu0 %v2924
    %5620 = vmatpush1.bf16.msra.mxu0 %v2923
    %5621 = vmatprep.subr.bf16.mxu0 %v2932
    %5622 = vmatpush1.bf16.msra.mxu0 %v2931
    %5623 = vmatprep.subr.bf16.mxu0 %v2940
    %5624 = vmatpush1.bf16.msra.mxu0 %v2939
    %5625 = vmatprep.subr.bf16.mxu0 %v2948
    %5626 = vmatpush1.bf16.msra.mxu0 %v2947
    %5627 = vmatprep.subr.bf16.mxu0 %v2956
    %5628 = vmatpush1.bf16.msra.mxu0 %v2955
    %5629 = vmatprep.subr.bf16.mxu0 %v2964
    %5630 = vmatpush1.bf16.msra.mxu0 %v2963
    %5631 = vmatprep.subr.bf16.mxu0 %v2972
    %5632 = vmatpush1.bf16.msra.mxu0 %v2971
    %5633 = vmatprep.subr.bf16.mxu0 %v2980
    %5634 = vmatpush1.bf16.msra.mxu0 %v2979
    %5635 = vmatprep.subr.bf16.mxu0 %v2988
    %5636 = vmatpush1.bf16.msra.mxu0 %v2987
    %5637 = vmatprep.subr.bf16.mxu0 %v2996
    %5638 = vmatpush1.bf16.msra.mxu0 %v2995
    %5639 = vmatprep.subr.bf16.mxu0 %v3004
    %5640 = vmatpush1.bf16.msra.mxu0 %v3003
    %5641 = vmatprep.subr.bf16.mxu0 %v3012
    %5642 = vmatpush1.bf16.msra.mxu0 %v3011
    %5643 = vmatprep.subr.bf16.mxu0 %v3020
    %5644 = vmatpush1.bf16.msra.mxu0 %v3019
    %5645 = vmatprep.mubr.bf16.mxu0 %v5530
    %5646 = vmatmul.mubr.bf16.gmra.mrb[0].mxu0 %v5529
    %v5647 = vpop.f32.mrb[0].mxu0
    %v5648 = vadd.f32 0.0, %v5647
    %v5649 = vpop.f32.mrb[0].mxu0
    %v5650 = vadd.f32 0.0, %v5649
    %v5651 = vpop.f32.mrb[0].mxu0
    %v5652 = vpop.f32.mrb[0].mxu0
    %5653 = vdwg.mxu0
    %5654 = vmatprep.subr.bf16.mxu0 %v2902
    %5655 = vmatpush1.bf16.msra.mxu0 %v2901
    %5656 = vmatprep.subr.bf16.mxu0 %v2910
    %5657 = vmatpush1.bf16.msra.mxu0 %v2909
    %5658 = vmatprep.subr.bf16.mxu0 %v2918
    %5659 = vmatpush1.bf16.msra.mxu0 %v2917
    %5660 = vmatprep.subr.bf16.mxu0 %v2926
    %5661 = vmatpush1.bf16.msra.mxu0 %v2925
    %5662 = vmatprep.subr.bf16.mxu0 %v2934
    %5663 = vmatpush1.bf16.msra.mxu0 %v2933
    %5664 = vmatprep.subr.bf16.mxu0 %v2942
    %5665 = vmatpush1.bf16.msra.mxu0 %v2941
    %5666 = vmatprep.subr.bf16.mxu0 %v2950
    %5667 = vmatpush1.bf16.msra.mxu0 %v2949
    %5668 = vmatprep.subr.bf16.mxu0 %v2958
    %5669 = vmatpush1.bf16.msra.mxu0 %v2957
    %5670 = vmatprep.subr.bf16.mxu0 %v2966
    %5671 = vmatpush1.bf16.msra.mxu0 %v2965
    %5672 = vmatprep.subr.bf16.mxu0 %v2974
    %5673 = vmatpush1.bf16.msra.mxu0 %v2973
    %5674 = vmatprep.subr.bf16.mxu0 %v2982
    %5675 = vmatpush1.bf16.msra.mxu0 %v2981
    %5676 = vmatprep.subr.bf16.mxu0 %v2990
    %5677 = vmatpush1.bf16.msra.mxu0 %v2989
    %5678 = vmatprep.subr.bf16.mxu0 %v2998
    %5679 = vmatpush1.bf16.msra.mxu0 %v2997
    %5680 = vmatprep.subr.bf16.mxu0 %v3006
    %5681 = vmatpush1.bf16.msra.mxu0 %v3005
    %5682 = vmatprep.subr.bf16.mxu0 %v3014
    %5683 = vmatpush1.bf16.msra.mxu0 %v3013
    %5684 = vmatprep.subr.bf16.mxu0 %v3022
    %5685 = vmatpush1.bf16.msra.mxu0 %v3021
    %5686 = vmatprep.mubr.bf16.mxu0 %v5530
    %5687 = vmatmul.mubr.bf16.gmra.mrb[0].mxu0 %v5529
    %v5688 = vpop.f32.mrb[0].mxu0
    %v5689 = vadd.f32 0.0, %v5688
    %v5690 = vpop.f32.mrb[0].mxu0
    %v5691 = vadd.f32 0.0, %v5690
    %v5692 = vpop.f32.mrb[0].mxu0
    %v5693 = vpop.f32.mrb[0].mxu0
    %5694 = vdwg.mxu0
    %v5695 = vadd.f32 %v5217, %v5566
    %v5696 = vadd.f32 %v5219, %v5568
    %v5697 = vadd.f32 %v5258, %v5607
    %v5698 = vadd.f32 %v5260, %v5609
    %v5699 = vadd.f32 %v5299, %v5648
    %v5700 = vadd.f32 %v5301, %v5650
    %v5701 = vadd.f32 %v5340, %v5689
    %v5702 = vadd.f32 %v5342, %v5691
    %v5703 = vmul.f32 %v5521, 0.5
    %v5704 = vmul.f32 %v5522, 0.5
    %v5705 = vtanh.pop %v5703
    %v5706 = vtanh.pop %v5704
    %v5707 = vmul.f32 %v5705, 0.5
    %v5708 = vmul.f32 %v5706, 0.5
    %v5709 = vadd.f32 %v5707, 0.5
    %v5710 = vadd.f32 %v5708, 0.5
    %v5711 = vmul.f32 %v5523, 0.5
    %v5712 = vmul.f32 %v5524, 0.5
    %v5713 = vtanh.pop %v5711
    %v5714 = vtanh.pop %v5712
    %v5715 = vmul.f32 %v5713, 0.5
    %v5716 = vmul.f32 %v5714, 0.5
    %v5717 = vadd.f32 %v5715, 0.5
    %v5718 = vadd.f32 %v5716, 0.5
    %v5719 = vtanh.pop %v5525
    %v5720 = vtanh.pop %v5526
    %v5721 = vmul.f32 %v5527, 0.5
    %v5722 = vmul.f32 %v5528, 0.5
    %v5723 = vtanh.pop %v5721
    %v5724 = vtanh.pop %v5722
    %v5725 = vmul.f32 %v5723, 0.5
    %v5726 = vmul.f32 %v5724, 0.5
    %v5727 = vadd.f32 %v5725, 0.5
    %v5728 = vadd.f32 %v5726, 0.5
    %v5729 = vmul.f32 %v5717, %v5138
    %v5730 = vmul.f32 %v5718, %v5139
    %v5731 = vmul.f32 %v5709, %v5719
    %v5732 = vmul.f32 %v5710, %v5720
    %v5733 = vadd.f32 %v5729, %v5731
    %v5734 = vadd.f32 %v5730, %v5732
    %v5735 = vtanh.pop %v5733
    %v5736 = vtanh.pop %v5734
    %v5737 = vmul.f32 %v5727, %v5735
    %v5738 = vmul.f32 %v5728, %v5736
    %v5739 = vmul.f32 %v5695, 0.5
    %v5740 = vmul.f32 %v5696, 0.5
    %v5741 = vtanh.pop %v5739
    %v5742 = vtanh.pop %v5740
    %v5743 = vmul.f32 %v5741, 0.5
    %v5744 = vmul.f32 %v5742, 0.5
    %v5745 = vadd.f32 %v5743, 0.5
    %v5746 = vadd.f32 %v5744, 0.5
    %v5747 = vmul.f32 %v5697, 0.5
    %v5748 = vmul.f32 %v5698, 0.5
    %v5749 = vtanh.pop %v5747
    %v5750 = vtanh.pop %v5748
    %v5751 = vmul.f32 %v5749, 0.5
    %v5752 = vmul.f32 %v5750, 0.5
    %v5753 = vadd.f32 %v5751, 0.5
    %v5754 = vadd.f32 %v5752, 0.5
    %v5755 = vtanh.pop %v5699
    %v5756 = vtanh.pop %v5700
    %v5757 = vmul.f32 %v5701, 0.5
    %v5758 = vmul.f32 %v5702, 0.5
    %v5759 = vtanh.pop %v5757
    %v5760 = vtanh.pop %v5758
    %v5761 = vmul.f32 %v5759, 0.5
    %v5762 = vmul.f32 %v5760, 0.5
    %v5763 = vadd.f32 %v5761, 0.5
    %v5764 = vadd.f32 %v5762, 0.5
    %v5765 = vmul.f32 %v5753, %v5174
    %v5766 = vmul.f32 %v5754, %v5175
    %v5767 = vmul.f32 %v5745, %v5755
    %v5768 = vmul.f32 %v5746, %v5756
    %v5769 = vadd.f32 %v5765, %v5767
    %v5770 = vadd.f32 %v5766, %v5768
    %v5771 = vtanh.pop %v5769
    %v5772 = vtanh.pop %v5770
    %v5773 = vmul.f32 %v5763, %v5771
    %v5774 = vmul.f32 %v5764, %v5772
    %v5775 = vpack.c.bf16 %v5737, %v5737
    %v5776 = vpack.c.bf16 %v5738, %v5738
    %5777 = vmatprep.subr.bf16.mxu0 %v1013
    %5778 = vmatpush1.bf16.msra.mxu0 %v1012
    %5779 = vmatprep.subr.bf16.mxu0 %v1021
    %5780 = vmatpush1.bf16.msra.mxu0 %v1020
    %5781 = vmatprep.subr.bf16.mxu0 %v1029
    %5782 = vmatpush1.bf16.msra.mxu0 %v1028
    %5783 = vmatprep.subr.bf16.mxu0 %v1037
    %5784 = vmatpush1.bf16.msra.mxu0 %v1036
    %5785 = vmatprep.subr.bf16.mxu0 %v1045
    %5786 = vmatpush1.bf16.msra.mxu0 %v1044
    %5787 = vmatprep.subr.bf16.mxu0 %v1053
    %5788 = vmatpush1.bf16.msra.mxu0 %v1052
    %5789 = vmatprep.subr.bf16.mxu0 %v1061
    %5790 = vmatpush1.bf16.msra.mxu0 %v1060
    %5791 = vmatprep.subr.bf16.mxu0 %v1069
    %5792 = vmatpush1.bf16.msra.mxu0 %v1068
    %5793 = vmatprep.subr.bf16.mxu0 %v1077
    %5794 = vmatpush1.bf16.msra.mxu0 %v1076
    %5795 = vmatprep.subr.bf16.mxu0 %v1085
    %5796 = vmatpush1.bf16.msra.mxu0 %v1084
    %5797 = vmatprep.subr.bf16.mxu0 %v1093
    %5798 = vmatpush1.bf16.msra.mxu0 %v1092
    %5799 = vmatprep.subr.bf16.mxu0 %v1101
    %5800 = vmatpush1.bf16.msra.mxu0 %v1100
    %5801 = vmatprep.subr.bf16.mxu0 %v1109
    %5802 = vmatpush1.bf16.msra.mxu0 %v1108
    %5803 = vmatprep.subr.bf16.mxu0 %v1117
    %5804 = vmatpush1.bf16.msra.mxu0 %v1116
    %5805 = vmatprep.subr.bf16.mxu0 %v1125
    %5806 = vmatpush1.bf16.msra.mxu0 %v1124
    %5807 = vmatprep.subr.bf16.mxu0 %v1133
    %5808 = vmatpush1.bf16.msra.mxu0 %v1132
    %5809 = vmatprep.mubr.bf16.mxu0 %v5776
    %5810 = vmatmul.mubr.bf16.gmra.mrb[0].mxu0 %v5775
    %v5811 = vpop.f32.mrb[0].mxu0
    %v5812 = vadd.f32 %v417, %v5811
    %v5813 = vpop.f32.mrb[0].mxu0
    %v5814 = vadd.f32 %v421, %v5813
    %v5815 = vpop.f32.mrb[0].mxu0
    %v5816 = vpop.f32.mrb[0].mxu0
    %5817 = vdwg.mxu0
    %5818 = vmatprep.subr.bf16.mxu0 %v1015
    %5819 = vmatpush1.bf16.msra.mxu0 %v1014
    %5820 = vmatprep.subr.bf16.mxu0 %v1023
    %5821 = vmatpush1.bf16.msra.mxu0 %v1022
    %5822 = vmatprep.subr.bf16.mxu0 %v1031
    %5823 = vmatpush1.bf16.msra.mxu0 %v1030
    %5824 = vmatprep.subr.bf16.mxu0 %v1039
    %5825 = vmatpush1.bf16.msra.mxu0 %v1038
    %5826 = vmatprep.subr.bf16.mxu0 %v1047
    %5827 = vmatpush1.bf16.msra.mxu0 %v1046
    %5828 = vmatprep.subr.bf16.mxu0 %v1055
    %5829 = vmatpush1.bf16.msra.mxu0 %v1054
    %5830 = vmatprep.subr.bf16.mxu0 %v1063
    %5831 = vmatpush1.bf16.msra.mxu0 %v1062
    %5832 = vmatprep.subr.bf16.mxu0 %v1071
    %5833 = vmatpush1.bf16.msra.mxu0 %v1070
    %5834 = vmatprep.subr.bf16.mxu0 %v1079
    %5835 = vmatpush1.bf16.msra.mxu0 %v1078
    %5836 = vmatprep.subr.bf16.mxu0 %v1087
    %5837 = vmatpush1.bf16.msra.mxu0 %v1086
    %5838 = vmatprep.subr.bf16.mxu0 %v1095
    %5839 = vmatpush1.bf16.msra.mxu0 %v1094
    %5840 = vmatprep.subr.bf16.mxu0 %v1103
    %5841 = vmatpush1.bf16.msra.mxu0 %v1102
    %5842 = vmatprep.subr.bf16.mxu0 %v1111
    %5843 = vmatpush1.bf16.msra.mxu0 %v1110
    %5844 = vmatprep.subr.bf16.mxu0 %v1119
    %5845 = vmatpush1.bf16.msra.mxu0 %v1118
    %5846 = vmatprep.subr.bf16.mxu0 %v1127
    %5847 = vmatpush1.bf16.msra.mxu0 %v1126
    %5848 = vmatprep.subr.bf16.mxu0 %v1135
    %5849 = vmatpush1.bf16.msra.mxu0 %v1134
    %5850 = vmatprep.mubr.bf16.mxu0 %v5776
    %5851 = vmatmul.mubr.bf16.gmra.mrb[0].mxu0 %v5775
    %v5852 = vpop.f32.mrb[0].mxu0
    %v5853 = vadd.f32 %v425, %v5852
    %v5854 = vpop.f32.mrb[0].mxu0
    %v5855 = vadd.f32 %v429, %v5854
    %v5856 = vpop.f32.mrb[0].mxu0
    %v5857 = vpop.f32.mrb[0].mxu0
    %5858 = vdwg.mxu0
    %5859 = vmatprep.subr.bf16.mxu0 %v1017
    %5860 = vmatpush1.bf16.msra.mxu0 %v1016
    %5861 = vmatprep.subr.bf16.mxu0 %v1025
    %5862 = vmatpush1.bf16.msra.mxu0 %v1024
    %5863 = vmatprep.subr.bf16.mxu0 %v1033
    %5864 = vmatpush1.bf16.msra.mxu0 %v1032
    %5865 = vmatprep.subr.bf16.mxu0 %v1041
    %5866 = vmatpush1.bf16.msra.mxu0 %v1040
    %5867 = vmatprep.subr.bf16.mxu0 %v1049
    %5868 = vmatpush1.bf16.msra.mxu0 %v1048
    %5869 = vmatprep.subr.bf16.mxu0 %v1057
    %5870 = vmatpush1.bf16.msra.mxu0 %v1056
    %5871 = vmatprep.subr.bf16.mxu0 %v1065
    %5872 = vmatpush1.bf16.msra.mxu0 %v1064
    %5873 = vmatprep.subr.bf16.mxu0 %v1073
    %5874 = vmatpush1.bf16.msra.mxu0 %v1072
    %5875 = vmatprep.subr.bf16.mxu0 %v1081
    %5876 = vmatpush1.bf16.msra.mxu0 %v1080
    %5877 = vmatprep.subr.bf16.mxu0 %v1089
    %5878 = vmatpush1.bf16.msra.mxu0 %v1088
    %5879 = vmatprep.subr.bf16.mxu0 %v1097
    %5880 = vmatpush1.bf16.msra.mxu0 %v1096
    %5881 = vmatprep.subr.bf16.mxu0 %v1105
    %5882 = vmatpush1.bf16.msra.mxu0 %v1104
    %5883 = vmatprep.subr.bf16.mxu0 %v1113
    %5884 = vmatpush1.bf16.msra.mxu0 %v1112
    %5885 = vmatprep.subr.bf16.mxu0 %v1121
    %5886 = vmatpush1.bf16.msra.mxu0 %v1120
    %5887 = vmatprep.subr.bf16.mxu0 %v1129
    %5888 = vmatpush1.bf16.msra.mxu0 %v1128
    %5889 = vmatprep.subr.bf16.mxu0 %v1137
    %5890 = vmatpush1.bf16.msra.mxu0 %v1136
    %5891 = vmatprep.mubr.bf16.mxu0 %v5776
    %5892 = vmatmul.mubr.bf16.gmra.mrb[0].mxu0 %v5775
    %v5893 = vpop.f32.mrb[0].mxu0
    %v5894 = vadd.f32 %v433, %v5893
    %v5895 = vpop.f32.mrb[0].mxu0
    %v5896 = vadd.f32 %v437, %v5895
    %v5897 = vpop.f32.mrb[0].mxu0
    %v5898 = vpop.f32.mrb[0].mxu0
    %5899 = vdwg.mxu0
    %5900 = vmatprep.subr.bf16.mxu0 %v1019
    %5901 = vmatpush1.bf16.msra.mxu0 %v1018
    %5902 = vmatprep.subr.bf16.mxu0 %v1027
    %5903 = vmatpush1.bf16.msra.mxu0 %v1026
    %5904 = vmatprep.subr.bf16.mxu0 %v1035
    %5905 = vmatpush1.bf16.msra.mxu0 %v1034
    %5906 = vmatprep.subr.bf16.mxu0 %v1043
    %5907 = vmatpush1.bf16.msra.mxu0 %v1042
    %5908 = vmatprep.subr.bf16.mxu0 %v1051
    %5909 = vmatpush1.bf16.msra.mxu0 %v1050
    %5910 = vmatprep.subr.bf16.mxu0 %v1059
    %5911 = vmatpush1.bf16.msra.mxu0 %v1058
    %5912 = vmatprep.subr.bf16.mxu0 %v1067
    %5913 = vmatpush1.bf16.msra.mxu0 %v1066
    %5914 = vmatprep.subr.bf16.mxu0 %v1075
    %5915 = vmatpush1.bf16.msra.mxu0 %v1074
    %5916 = vmatprep.subr.bf16.mxu0 %v1083
    %5917 = vmatpush1.bf16.msra.mxu0 %v1082
    %5918 = vmatprep.subr.bf16.mxu0 %v1091
    %5919 = vmatpush1.bf16.msra.mxu0 %v1090
    %5920 = vmatprep.subr.bf16.mxu0 %v1099
    %5921 = vmatpush1.bf16.msra.mxu0 %v1098
    %5922 = vmatprep.subr.bf16.mxu0 %v1107
    %5923 = vmatpush1.bf16.msra.mxu0 %v1106
    %5924 = vmatprep.subr.bf16.mxu0 %v1115
    %5925 = vmatpush1.bf16.msra.mxu0 %v1114
    %5926 = vmatprep.subr.bf16.mxu0 %v1123
    %5927 = vmatpush1.bf16.msra.mxu0 %v1122
    %5928 = vmatprep.subr.bf16.mxu0 %v1131
    %5929 = vmatpush1.bf16.msra.mxu0 %v1130
    %5930 = vmatprep.subr.bf16.mxu0 %v1139
    %5931 = vmatpush1.bf16.msra.mxu0 %v1138
    %5932 = vmatprep.mubr.bf16.mxu0 %v5776
    %5933 = vmatmul.mubr.bf16.gmra.mrb[0].mxu0 %v5775
    %v5934 = vpop.f32.mrb[0].mxu0
    %v5935 = vadd.f32 %v441, %v5934
    %v5936 = vpop.f32.mrb[0].mxu0
    %v5937 = vadd.f32 %v445, %v5936
    %v5938 = vpop.f32.mrb[0].mxu0
    %v5939 = vpop.f32.mrb[0].mxu0
    %5940 = vdwg.mxu0
    %s5941 = smul.u32 6, 8
    %s5942 = smul.addr %s5941, 8
    %s5943 = scalar_lea.vmem [#allocation2], %s5942
    %v5944 = vld [vmem:[%s5943] sm:$0xff]
    %v5945 = vld [vmem:[%s5943 + $0x8] sm:$0xff]
    %v5946 = vld [vmem:[%s5943 + $0x10] sm:$0xff]
    %v5947 = vld [vmem:[%s5943 + $0x18] sm:$0xff]
    %v5948 = vld [vmem:[%s5943 + $0x20] sm:$0xff]
    %v5949 = vld [vmem:[%s5943 + $0x28] sm:$0xff]
    %v5950 = vld [vmem:[%s5943 + $0x30] sm:$0xff]
    %v5951 = vld [vmem:[%s5943 + $0x38] sm:$0xff]
    %5952 = vmatprep.subr.bf16.mxu0 %v1956
    %5953 = vmatpush1.bf16.msra.mxu0 %v1955
    %5954 = vmatprep.subr.bf16.mxu0 %v1964
    %5955 = vmatpush1.bf16.msra.mxu0 %v1963
    %5956 = vmatprep.subr.bf16.mxu0 %v1972
    %5957 = vmatpush1.bf16.msra.mxu0 %v1971
    %5958 = vmatprep.subr.bf16.mxu0 %v1980
    %5959 = vmatpush1.bf16.msra.mxu0 %v1979
    %5960 = vmatprep.subr.bf16.mxu0 %v1988
    %5961 = vmatpush1.bf16.msra.mxu0 %v1987
    %5962 = vmatprep.subr.bf16.mxu0 %v1996
    %5963 = vmatpush1.bf16.msra.mxu0 %v1995
    %5964 = vmatprep.subr.bf16.mxu0 %v2004
    %5965 = vmatpush1.bf16.msra.mxu0 %v2003
    %5966 = vmatprep.subr.bf16.mxu0 %v2012
    %5967 = vmatpush1.bf16.msra.mxu0 %v2011
    %5968 = vmatprep.subr.bf16.mxu0 %v2020
    %5969 = vmatpush1.bf16.msra.mxu0 %v2019
    %5970 = vmatprep.subr.bf16.mxu0 %v2028
    %5971 = vmatpush1.bf16.msra.mxu0 %v2027
    %5972 = vmatprep.subr.bf16.mxu0 %v2036
    %5973 = vmatpush1.bf16.msra.mxu0 %v2035
    %5974 = vmatprep.subr.bf16.mxu0 %v2044
    %5975 = vmatpush1.bf16.msra.mxu0 %v2043
    %5976 = vmatprep.subr.bf16.mxu0 %v2052
    %5977 = vmatpush1.bf16.msra.mxu0 %v2051
    %5978 = vmatprep.subr.bf16.mxu0 %v2060
    %5979 = vmatpush1.bf16.msra.mxu0 %v2059
    %5980 = vmatprep.subr.bf16.mxu0 %v2068
    %5981 = vmatpush1.bf16.msra.mxu0 %v2067
    %5982 = vmatprep.subr.bf16.mxu0 %v2076
    %5983 = vmatpush1.bf16.msra.mxu0 %v2075
    %5984 = vmatprep.mubr.bf16.mxu0 %v5776
    %5985 = vmatmul.mubr.bf16.gmra.mrb[0].mxu0 %v5775
    %v5986 = vpop.f32.mrb[0].mxu0
    %v5987 = vadd.f32 0.0, %v5986
    %v5988 = vpop.f32.mrb[0].mxu0
    %v5989 = vadd.f32 0.0, %v5988
    %v5990 = vpop.f32.mrb[0].mxu0
    %v5991 = vpop.f32.mrb[0].mxu0
    %5992 = vdwg.mxu0
    %5993 = vmatprep.subr.bf16.mxu0 %v1958
    %5994 = vmatpush1.bf16.msra.mxu0 %v1957
    %5995 = vmatprep.subr.bf16.mxu0 %v1966
    %5996 = vmatpush1.bf16.msra.mxu0 %v1965
    %5997 = vmatprep.subr.bf16.mxu0 %v1974
    %5998 = vmatpush1.bf16.msra.mxu0 %v1973
    %5999 = vmatprep.subr.bf16.mxu0 %v1982
    %6000 = vmatpush1.bf16.msra.mxu0 %v1981
    %6001 = vmatprep.subr.bf16.mxu0 %v1990
    %6002 = vmatpush1.bf16.msra.mxu0 %v1989
    %6003 = vmatprep.subr.bf16.mxu0 %v1998
    %6004 = vmatpush1.bf16.msra.mxu0 %v1997
    %6005 = vmatprep.subr.bf16.mxu0 %v2006
    %6006 = vmatpush1.bf16.msra.mxu0 %v2005
    %6007 = vmatprep.subr.bf16.mxu0 %v2014
    %6008 = vmatpush1.bf16.msra.mxu0 %v2013
    %6009 = vmatprep.subr.bf16.mxu0 %v2022
    %6010 = vmatpush1.bf16.msra.mxu0 %v2021
    %6011 = vmatprep.subr.bf16.mxu0 %v2030
    %6012 = vmatpush1.bf16.msra.mxu0 %v2029
    %6013 = vmatprep.subr.bf16.mxu0 %v2038
    %6014 = vmatpush1.bf16.msra.mxu0 %v2037
    %6015 = vmatprep.subr.bf16.mxu0 %v2046
    %6016 = vmatpush1.bf16.msra.mxu0 %v2045
    %6017 = vmatprep.subr.bf16.mxu0 %v2054
    %6018 = vmatpush1.bf16.msra.mxu0 %v2053
    %6019 = vmatprep.subr.bf16.mxu0 %v2062
    %6020 = vmatpush1.bf16.msra.mxu0 %v2061
    %6021 = vmatprep.subr.bf16.mxu0 %v2070
    %6022 = vmatpush1.bf16.msra.mxu0 %v2069
    %6023 = vmatprep.subr.bf16.mxu0 %v2078
    %6024 = vmatpush1.bf16.msra.mxu0 %v2077
    %6025 = vmatprep.mubr.bf16.mxu0 %v5776
    %6026 = vmatmul.mubr.bf16.gmra.mrb[0].mxu0 %v5775
    %v6027 = vpop.f32.mrb[0].mxu0
    %v6028 = vadd.f32 0.0, %v6027
    %v6029 = vpop.f32.mrb[0].mxu0
    %v6030 = vadd.f32 0.0, %v6029
    %v6031 = vpop.f32.mrb[0].mxu0
    %v6032 = vpop.f32.mrb[0].mxu0
    %6033 = vdwg.mxu0
    %6034 = vmatprep.subr.bf16.mxu0 %v1960
    %6035 = vmatpush1.bf16.msra.mxu0 %v1959
    %6036 = vmatprep.subr.bf16.mxu0 %v1968
    %6037 = vmatpush1.bf16.msra.mxu0 %v1967
    %6038 = vmatprep.subr.bf16.mxu0 %v1976
    %6039 = vmatpush1.bf16.msra.mxu0 %v1975
    %6040 = vmatprep.subr.bf16.mxu0 %v1984
    %6041 = vmatpush1.bf16.msra.mxu0 %v1983
    %6042 = vmatprep.subr.bf16.mxu0 %v1992
    %6043 = vmatpush1.bf16.msra.mxu0 %v1991
    %6044 = vmatprep.subr.bf16.mxu0 %v2000
    %6045 = vmatpush1.bf16.msra.mxu0 %v1999
    %6046 = vmatprep.subr.bf16.mxu0 %v2008
    %6047 = vmatpush1.bf16.msra.mxu0 %v2007
    %6048 = vmatprep.subr.bf16.mxu0 %v2016
    %6049 = vmatpush1.bf16.msra.mxu0 %v2015
    %6050 = vmatprep.subr.bf16.mxu0 %v2024
    %6051 = vmatpush1.bf16.msra.mxu0 %v2023
    %6052 = vmatprep.subr.bf16.mxu0 %v2032
    %6053 = vmatpush1.bf16.msra.mxu0 %v2031
    %6054 = vmatprep.subr.bf16.mxu0 %v2040
    %6055 = vmatpush1.bf16.msra.mxu0 %v2039
    %6056 = vmatprep.subr.bf16.mxu0 %v2048
    %6057 = vmatpush1.bf16.msra.mxu0 %v2047
    %6058 = vmatprep.subr.bf16.mxu0 %v2056
    %6059 = vmatpush1.bf16.msra.mxu0 %v2055
    %6060 = vmatprep.subr.bf16.mxu0 %v2064
    %6061 = vmatpush1.bf16.msra.mxu0 %v2063
    %6062 = vmatprep.subr.bf16.mxu0 %v2072
    %6063 = vmatpush1.bf16.msra.mxu0 %v2071
    %6064 = vmatprep.subr.bf16.mxu0 %v2080
    %6065 = vmatpush1.bf16.msra.mxu0 %v2079
    %6066 = vmatprep.mubr.bf16.mxu0 %v5776
    %6067 = vmatmul.mubr.bf16.gmra.mrb[0].mxu0 %v5775
    %v6068 = vpop.f32.mrb[0].mxu0
    %v6069 = vadd.f32 0.0, %v6068
    %v6070 = vpop.f32.mrb[0].mxu0
    %v6071 = vadd.f32 0.0, %v6070
    %v6072 = vpop.f32.mrb[0].mxu0
    %v6073 = vpop.f32.mrb[0].mxu0
    %6074 = vdwg.mxu0
    %6075 = vmatprep.subr.bf16.mxu0 %v1962
    %6076 = vmatpush1.bf16.msra.mxu0 %v1961
    %6077 = vmatprep.subr.bf16.mxu0 %v1970
    %6078 = vmatpush1.bf16.msra.mxu0 %v1969
    %6079 = vmatprep.subr.bf16.mxu0 %v1978
    %6080 = vmatpush1.bf16.msra.mxu0 %v1977
    %6081 = vmatprep.subr.bf16.mxu0 %v1986
    %6082 = vmatpush1.bf16.msra.mxu0 %v1985
    %6083 = vmatprep.subr.bf16.mxu0 %v1994
    %6084 = vmatpush1.bf16.msra.mxu0 %v1993
    %6085 = vmatprep.subr.bf16.mxu0 %v2002
    %6086 = vmatpush1.bf16.msra.mxu0 %v2001
    %6087 = vmatprep.subr.bf16.mxu0 %v2010
    %6088 = vmatpush1.bf16.msra.mxu0 %v2009
    %6089 = vmatprep.subr.bf16.mxu0 %v2018
    %6090 = vmatpush1.bf16.msra.mxu0 %v2017
    %6091 = vmatprep.subr.bf16.mxu0 %v2026
    %6092 = vmatpush1.bf16.msra.mxu0 %v2025
    %6093 = vmatprep.subr.bf16.mxu0 %v2034
    %6094 = vmatpush1.bf16.msra.mxu0 %v2033
    %6095 = vmatprep.subr.bf16.mxu0 %v2042
    %6096 = vmatpush1.bf16.msra.mxu0 %v2041
    %6097 = vmatprep.subr.bf16.mxu0 %v2050
    %6098 = vmatpush1.bf16.msra.mxu0 %v2049
    %6099 = vmatprep.subr.bf16.mxu0 %v2058
    %6100 = vmatpush1.bf16.msra.mxu0 %v2057
    %6101 = vmatprep.subr.bf16.mxu0 %v2066
    %6102 = vmatpush1.bf16.msra.mxu0 %v2065
    %6103 = vmatprep.subr.bf16.mxu0 %v2074
    %6104 = vmatpush1.bf16.msra.mxu0 %v2073
    %6105 = vmatprep.subr.bf16.mxu0 %v2082
    %6106 = vmatpush1.bf16.msra.mxu0 %v2081
    %6107 = vmatprep.mubr.bf16.mxu0 %v5776
    %6108 = vmatmul.mubr.bf16.gmra.mrb[0].mxu0 %v5775
    %v6109 = vpop.f32.mrb[0].mxu0
    %v6110 = vadd.f32 0.0, %v6109
    %v6111 = vpop.f32.mrb[0].mxu0
    %v6112 = vadd.f32 0.0, %v6111
    %v6113 = vpop.f32.mrb[0].mxu0
    %v6114 = vpop.f32.mrb[0].mxu0
    %6115 = vdwg.mxu0
    %v6116 = vadd.f32 %v5944, %v5987
    %v6117 = vadd.f32 %v5945, %v5989
    %v6118 = vadd.f32 %v5946, %v6028
    %v6119 = vadd.f32 %v5947, %v6030
    %v6120 = vadd.f32 %v5948, %v6069
    %v6121 = vadd.f32 %v5949, %v6071
    %v6122 = vadd.f32 %v5950, %v6110
    %v6123 = vadd.f32 %v5951, %v6112
    %v6124 = vpack.c.bf16 %v5773, %v5773
    %v6125 = vpack.c.bf16 %v5774, %v5774
    %6126 = vmatprep.subr.bf16.mxu0 %v2896
    %6127 = vmatpush1.bf16.msra.mxu0 %v2895
    %6128 = vmatprep.subr.bf16.mxu0 %v2904
    %6129 = vmatpush1.bf16.msra.mxu0 %v2903
    %6130 = vmatprep.subr.bf16.mxu0 %v2912
    %6131 = vmatpush1.bf16.msra.mxu0 %v2911
    %6132 = vmatprep.subr.bf16.mxu0 %v2920
    %6133 = vmatpush1.bf16.msra.mxu0 %v2919
    %6134 = vmatprep.subr.bf16.mxu0 %v2928
    %6135 = vmatpush1.bf16.msra.mxu0 %v2927
    %6136 = vmatprep.subr.bf16.mxu0 %v2936
    %6137 = vmatpush1.bf16.msra.mxu0 %v2935
    %6138 = vmatprep.subr.bf16.mxu0 %v2944
    %6139 = vmatpush1.bf16.msra.mxu0 %v2943
    %6140 = vmatprep.subr.bf16.mxu0 %v2952
    %6141 = vmatpush1.bf16.msra.mxu0 %v2951
    %6142 = vmatprep.subr.bf16.mxu0 %v2960
    %6143 = vmatpush1.bf16.msra.mxu0 %v2959
    %6144 = vmatprep.subr.bf16.mxu0 %v2968
    %6145 = vmatpush1.bf16.msra.mxu0 %v2967
    %6146 = vmatprep.subr.bf16.mxu0 %v2976
    %6147 = vmatpush1.bf16.msra.mxu0 %v2975
    %6148 = vmatprep.subr.bf16.mxu0 %v2984
    %6149 = vmatpush1.bf16.msra.mxu0 %v2983
    %6150 = vmatprep.subr.bf16.mxu0 %v2992
    %6151 = vmatpush1.bf16.msra.mxu0 %v2991
    %6152 = vmatprep.subr.bf16.mxu0 %v3000
    %6153 = vmatpush1.bf16.msra.mxu0 %v2999
    %6154 = vmatprep.subr.bf16.mxu0 %v3008
    %6155 = vmatpush1.bf16.msra.mxu0 %v3007
    %6156 = vmatprep.subr.bf16.mxu0 %v3016
    %6157 = vmatpush1.bf16.msra.mxu0 %v3015
    %6158 = vmatprep.mubr.bf16.mxu0 %v6125
    %6159 = vmatmul.mubr.bf16.gmra.mrb[0].mxu0 %v6124
    %v6160 = vpop.f32.mrb[0].mxu0
    %v6161 = vadd.f32 0.0, %v6160
    %v6162 = vpop.f32.mrb[0].mxu0
    %v6163 = vadd.f32 0.0, %v6162
    %v6164 = vpop.f32.mrb[0].mxu0
    %v6165 = vpop.f32.mrb[0].mxu0
    %6166 = vdwg.mxu0
    %6167 = vmatprep.subr.bf16.mxu0 %v2898
    %6168 = vmatpush1.bf16.msra.mxu0 %v2897
    %6169 = vmatprep.subr.bf16.mxu0 %v2906
    %6170 = vmatpush1.bf16.msra.mxu0 %v2905
    %6171 = vmatprep.subr.bf16.mxu0 %v2914
    %6172 = vmatpush1.bf16.msra.mxu0 %v2913
    %6173 = vmatprep.subr.bf16.mxu0 %v2922
    %6174 = vmatpush1.bf16.msra.mxu0 %v2921
    %6175 = vmatprep.subr.bf16.mxu0 %v2930
    %6176 = vmatpush1.bf16.msra.mxu0 %v2929
    %6177 = vmatprep.subr.bf16.mxu0 %v2938
    %6178 = vmatpush1.bf16.msra.mxu0 %v2937
    %6179 = vmatprep.subr.bf16.mxu0 %v2946
    %6180 = vmatpush1.bf16.msra.mxu0 %v2945
    %6181 = vmatprep.subr.bf16.mxu0 %v2954
    %6182 = vmatpush1.bf16.msra.mxu0 %v2953
    %6183 = vmatprep.subr.bf16.mxu0 %v2962
    %6184 = vmatpush1.bf16.msra.mxu0 %v2961
    %6185 = vmatprep.subr.bf16.mxu0 %v2970
    %6186 = vmatpush1.bf16.msra.mxu0 %v2969
    %6187 = vmatprep.subr.bf16.mxu0 %v2978
    %6188 = vmatpush1.bf16.msra.mxu0 %v2977
    %6189 = vmatprep.subr.bf16.mxu0 %v2986
    %6190 = vmatpush1.bf16.msra.mxu0 %v2985
    %6191 = vmatprep.subr.bf16.mxu0 %v2994
    %6192 = vmatpush1.bf16.msra.mxu0 %v2993
    %6193 = vmatprep.subr.bf16.mxu0 %v3002
    %6194 = vmatpush1.bf16.msra.mxu0 %v3001
    %6195 = vmatprep.subr.bf16.mxu0 %v3010
    %6196 = vmatpush1.bf16.msra.mxu0 %v3009
    %6197 = vmatprep.subr.bf16.mxu0 %v3018
    %6198 = vmatpush1.bf16.msra.mxu0 %v3017
    %6199 = vmatprep.mubr.bf16.mxu0 %v6125
    %6200 = vmatmul.mubr.bf16.gmra.mrb[0].mxu0 %v6124
    %v6201 = vpop.f32.mrb[0].mxu0
    %v6202 = vadd.f32 0.0, %v6201
    %v6203 = vpop.f32.mrb[0].mxu0
    %v6204 = vadd.f32 0.0, %v6203
    %v6205 = vpop.f32.mrb[0].mxu0
    %v6206 = vpop.f32.mrb[0].mxu0
    %6207 = vdwg.mxu0
    %6208 = vmatprep.subr.bf16.mxu0 %v2900
    %6209 = vmatpush1.bf16.msra.mxu0 %v2899
    %6210 = vmatprep.subr.bf16.mxu0 %v2908
    %6211 = vmatpush1.bf16.msra.mxu0 %v2907
    %6212 = vmatprep.subr.bf16.mxu0 %v2916
    %6213 = vmatpush1.bf16.msra.mxu0 %v2915
    %6214 = vmatprep.subr.bf16.mxu0 %v2924
    %6215 = vmatpush1.bf16.msra.mxu0 %v2923
    %6216 = vmatprep.subr.bf16.mxu0 %v2932
    %6217 = vmatpush1.bf16.msra.mxu0 %v2931
    %6218 = vmatprep.subr.bf16.mxu0 %v2940
    %6219 = vmatpush1.bf16.msra.mxu0 %v2939
    %6220 = vmatprep.subr.bf16.mxu0 %v2948
    %6221 = vmatpush1.bf16.msra.mxu0 %v2947
    %6222 = vmatprep.subr.bf16.mxu0 %v2956
    %6223 = vmatpush1.bf16.msra.mxu0 %v2955
    %6224 = vmatprep.subr.bf16.mxu0 %v2964
    %6225 = vmatpush1.bf16.msra.mxu0 %v2963
    %6226 = vmatprep.subr.bf16.mxu0 %v2972
    %6227 = vmatpush1.bf16.msra.mxu0 %v2971
    %6228 = vmatprep.subr.bf16.mxu0 %v2980
    %6229 = vmatpush1.bf16.msra.mxu0 %v2979
    %6230 = vmatprep.subr.bf16.mxu0 %v2988
    %6231 = vmatpush1.bf16.msra.mxu0 %v2987
    %6232 = vmatprep.subr.bf16.mxu0 %v2996
    %6233 = vmatpush1.bf16.msra.mxu0 %v2995
    %6234 = vmatprep.subr.bf16.mxu0 %v3004
    %6235 = vmatpush1.bf16.msra.mxu0 %v3003
    %6236 = vmatprep.subr.bf16.mxu0 %v3012
    %6237 = vmatpush1.bf16.msra.mxu0 %v3011
    %6238 = vmatprep.subr.bf16.mxu0 %v3020
    %6239 = vmatpush1.bf16.msra.mxu0 %v3019
    %6240 = vmatprep.mubr.bf16.mxu0 %v6125
    %6241 = vmatmul.mubr.bf16.gmra.mrb[0].mxu0 %v6124
    %v6242 = vpop.f32.mrb[0].mxu0
    %v6243 = vadd.f32 0.0, %v6242
    %v6244 = vpop.f32.mrb[0].mxu0
    %v6245 = vadd.f32 0.0, %v6244
    %v6246 = vpop.f32.mrb[0].mxu0
    %v6247 = vpop.f32.mrb[0].mxu0
    %6248 = vdwg.mxu0
    %6249 = vmatprep.subr.bf16.mxu0 %v2902
    %6250 = vmatpush1.bf16.msra.mxu0 %v2901
    %6251 = vmatprep.subr.bf16.mxu0 %v2910
    %6252 = vmatpush1.bf16.msra.mxu0 %v2909
    %6253 = vmatprep.subr.bf16.mxu0 %v2918
    %6254 = vmatpush1.bf16.msra.mxu0 %v2917
    %6255 = vmatprep.subr.bf16.mxu0 %v2926
    %6256 = vmatpush1.bf16.msra.mxu0 %v2925
    %6257 = vmatprep.subr.bf16.mxu0 %v2934
    %6258 = vmatpush1.bf16.msra.mxu0 %v2933
    %6259 = vmatprep.subr.bf16.mxu0 %v2942
    %6260 = vmatpush1.bf16.msra.mxu0 %v2941
    %6261 = vmatprep.subr.bf16.mxu0 %v2950
    %6262 = vmatpush1.bf16.msra.mxu0 %v2949
    %6263 = vmatprep.subr.bf16.mxu0 %v2958
    %6264 = vmatpush1.bf16.msra.mxu0 %v2957
    %6265 = vmatprep.subr.bf16.mxu0 %v2966
    %6266 = vmatpush1.bf16.msra.mxu0 %v2965
    %6267 = vmatprep.subr.bf16.mxu0 %v2974
    %6268 = vmatpush1.bf16.msra.mxu0 %v2973
    %6269 = vmatprep.subr.bf16.mxu0 %v2982
    %6270 = vmatpush1.bf16.msra.mxu0 %v2981
    %6271 = vmatprep.subr.bf16.mxu0 %v2990
    %6272 = vmatpush1.bf16.msra.mxu0 %v2989
    %6273 = vmatprep.subr.bf16.mxu0 %v2998
    %6274 = vmatpush1.bf16.msra.mxu0 %v2997
    %6275 = vmatprep.subr.bf16.mxu0 %v3006
    %6276 = vmatpush1.bf16.msra.mxu0 %v3005
    %6277 = vmatprep.subr.bf16.mxu0 %v3014
    %6278 = vmatpush1.bf16.msra.mxu0 %v3013
    %6279 = vmatprep.subr.bf16.mxu0 %v3022
    %6280 = vmatpush1.bf16.msra.mxu0 %v3021
    %6281 = vmatprep.mubr.bf16.mxu0 %v6125
    %6282 = vmatmul.mubr.bf16.gmra.mrb[0].mxu0 %v6124
    %v6283 = vpop.f32.mrb[0].mxu0
    %v6284 = vadd.f32 0.0, %v6283
    %v6285 = vpop.f32.mrb[0].mxu0
    %v6286 = vadd.f32 0.0, %v6285
    %v6287 = vpop.f32.mrb[0].mxu0
    %v6288 = vpop.f32.mrb[0].mxu0
    %6289 = vdwg.mxu0
    %v6290 = vadd.f32 %v5812, %v6161
    %v6291 = vadd.f32 %v5814, %v6163
    %v6292 = vadd.f32 %v5853, %v6202
    %v6293 = vadd.f32 %v5855, %v6204
    %v6294 = vadd.f32 %v5894, %v6243
    %v6295 = vadd.f32 %v5896, %v6245
    %v6296 = vadd.f32 %v5935, %v6284
    %v6297 = vadd.f32 %v5937, %v6286
    %v6298 = vmul.f32 %v6116, 0.5
    %v6299 = vmul.f32 %v6117, 0.5
    %v6300 = vtanh.pop %v6298
    %v6301 = vtanh.pop %v6299
    %v6302 = vmul.f32 %v6300, 0.5
    %v6303 = vmul.f32 %v6301, 0.5
    %v6304 = vadd.f32 %v6302, 0.5
    %v6305 = vadd.f32 %v6303, 0.5
    %v6306 = vmul.f32 %v6118, 0.5
    %v6307 = vmul.f32 %v6119, 0.5
    %v6308 = vtanh.pop %v6306
    %v6309 = vtanh.pop %v6307
    %v6310 = vmul.f32 %v6308, 0.5
    %v6311 = vmul.f32 %v6309, 0.5
    %v6312 = vadd.f32 %v6310, 0.5
    %v6313 = vadd.f32 %v6311, 0.5
    %v6314 = vtanh.pop %v6120
    %v6315 = vtanh.pop %v6121
    %v6316 = vmul.f32 %v6122, 0.5
    %v6317 = vmul.f32 %v6123, 0.5
    %v6318 = vtanh.pop %v6316
    %v6319 = vtanh.pop %v6317
    %v6320 = vmul.f32 %v6318, 0.5
    %v6321 = vmul.f32 %v6319, 0.5
    %v6322 = vadd.f32 %v6320, 0.5
    %v6323 = vadd.f32 %v6321, 0.5
    %v6324 = vmul.f32 %v6312, %v5733
    %v6325 = vmul.f32 %v6313, %v5734
    %v6326 = vmul.f32 %v6304, %v6314
    %v6327 = vmul.f32 %v6305, %v6315
    %v6328 = vadd.f32 %v6324, %v6326
    %v6329 = vadd.f32 %v6325, %v6327
    %v6330 = vtanh.pop %v6328
    %v6331 = vtanh.pop %v6329
    %v6332 = vmul.f32 %v6322, %v6330
    %v6333 = vmul.f32 %v6323, %v6331
    %v6334 = vmul.f32 %v6290, 0.5
    %v6335 = vmul.f32 %v6291, 0.5
    %v6336 = vtanh.pop %v6334
    %v6337 = vtanh.pop %v6335
    %v6338 = vmul.f32 %v6336, 0.5
    %v6339 = vmul.f32 %v6337, 0.5
    %v6340 = vadd.f32 %v6338, 0.5
    %v6341 = vadd.f32 %v6339, 0.5
    %v6342 = vmul.f32 %v6292, 0.5
    %v6343 = vmul.f32 %v6293, 0.5
    %v6344 = vtanh.pop %v6342
    %v6345 = vtanh.pop %v6343
    %v6346 = vmul.f32 %v6344, 0.5
    %v6347 = vmul.f32 %v6345, 0.5
    %v6348 = vadd.f32 %v6346, 0.5
    %v6349 = vadd.f32 %v6347, 0.5
    %v6350 = vtanh.pop %v6294
    %v6351 = vtanh.pop %v6295
    %v6352 = vmul.f32 %v6296, 0.5
    %v6353 = vmul.f32 %v6297, 0.5
    %v6354 = vtanh.pop %v6352
    %v6355 = vtanh.pop %v6353
    %v6356 = vmul.f32 %v6354, 0.5
    %v6357 = vmul.f32 %v6355, 0.5
    %v6358 = vadd.f32 %v6356, 0.5
    %v6359 = vadd.f32 %v6357, 0.5
    %v6360 = vmul.f32 %v6348, %v5769
    %v6361 = vmul.f32 %v6349, %v5770
    %v6362 = vmul.f32 %v6340, %v6350
    %v6363 = vmul.f32 %v6341, %v6351
    %v6364 = vadd.f32 %v6360, %v6362
    %v6365 = vadd.f32 %v6361, %v6363
    %v6366 = vtanh.pop %v6364
    %v6367 = vtanh.pop %v6365
    %v6368 = vmul.f32 %v6358, %v6366
    %v6369 = vmul.f32 %v6359, %v6367
    %v6370 = vpack.c.bf16 %v6332, %v6332
    %v6371 = vpack.c.bf16 %v6333, %v6333
    %6372 = vmatprep.subr.bf16.mxu0 %v1013
    %6373 = vmatpush1.bf16.msra.mxu0 %v1012
    %6374 = vmatprep.subr.bf16.mxu0 %v1021
    %6375 = vmatpush1.bf16.msra.mxu0 %v1020
    %6376 = vmatprep.subr.bf16.mxu0 %v1029
    %6377 = vmatpush1.bf16.msra.mxu0 %v1028
    %6378 = vmatprep.subr.bf16.mxu0 %v1037
    %6379 = vmatpush1.bf16.msra.mxu0 %v1036
    %6380 = vmatprep.subr.bf16.mxu0 %v1045
    %6381 = vmatpush1.bf16.msra.mxu0 %v1044
    %6382 = vmatprep.subr.bf16.mxu0 %v1053
    %6383 = vmatpush1.bf16.msra.mxu0 %v1052
    %6384 = vmatprep.subr.bf16.mxu0 %v1061
    %6385 = vmatpush1.bf16.msra.mxu0 %v1060
    %6386 = vmatprep.subr.bf16.mxu0 %v1069
    %6387 = vmatpush1.bf16.msra.mxu0 %v1068
    %6388 = vmatprep.subr.bf16.mxu0 %v1077
    %6389 = vmatpush1.bf16.msra.mxu0 %v1076
    %6390 = vmatprep.subr.bf16.mxu0 %v1085
    %6391 = vmatpush1.bf16.msra.mxu0 %v1084
    %6392 = vmatprep.subr.bf16.mxu0 %v1093
    %6393 = vmatpush1.bf16.msra.mxu0 %v1092
    %6394 = vmatprep.subr.bf16.mxu0 %v1101
    %6395 = vmatpush1.bf16.msra.mxu0 %v1100
    %6396 = vmatprep.subr.bf16.mxu0 %v1109
    %6397 = vmatpush1.bf16.msra.mxu0 %v1108
    %6398 = vmatprep.subr.bf16.mxu0 %v1117
    %6399 = vmatpush1.bf16.msra.mxu0 %v1116
    %6400 = vmatprep.subr.bf16.mxu0 %v1125
    %6401 = vmatpush1.bf16.msra.mxu0 %v1124
    %6402 = vmatprep.subr.bf16.mxu0 %v1133
    %6403 = vmatpush1.bf16.msra.mxu0 %v1132
    %6404 = vmatprep.mubr.bf16.mxu0 %v6371
    %6405 = vmatmul.mubr.bf16.gmra.mrb[0].mxu0 %v6370
    %v6406 = vpop.f32.mrb[0].mxu0
    %v6407 = vadd.f32 %v417, %v6406
    %v6408 = vpop.f32.mrb[0].mxu0
    %v6409 = vadd.f32 %v421, %v6408
    %v6410 = vpop.f32.mrb[0].mxu0
    %v6411 = vpop.f32.mrb[0].mxu0
    %6412 = vdwg.mxu0
    %6413 = vmatprep.subr.bf16.mxu0 %v1015
    %6414 = vmatpush1.bf16.msra.mxu0 %v1014
    %6415 = vmatprep.subr.bf16.mxu0 %v1023
    %6416 = vmatpush1.bf16.msra.mxu0 %v1022
    %6417 = vmatprep.subr.bf16.mxu0 %v1031
    %6418 = vmatpush1.bf16.msra.mxu0 %v1030
    %6419 = vmatprep.subr.bf16.mxu0 %v1039
    %6420 = vmatpush1.bf16.msra.mxu0 %v1038
    %6421 = vmatprep.subr.bf16.mxu0 %v1047
    %6422 = vmatpush1.bf16.msra.mxu0 %v1046
    %6423 = vmatprep.subr.bf16.mxu0 %v1055
    %6424 = vmatpush1.bf16.msra.mxu0 %v1054
    %6425 = vmatprep.subr.bf16.mxu0 %v1063
    %6426 = vmatpush1.bf16.msra.mxu0 %v1062
    %6427 = vmatprep.subr.bf16.mxu0 %v1071
    %6428 = vmatpush1.bf16.msra.mxu0 %v1070
    %6429 = vmatprep.subr.bf16.mxu0 %v1079
    %6430 = vmatpush1.bf16.msra.mxu0 %v1078
    %6431 = vmatprep.subr.bf16.mxu0 %v1087
    %6432 = vmatpush1.bf16.msra.mxu0 %v1086
    %6433 = vmatprep.subr.bf16.mxu0 %v1095
    %6434 = vmatpush1.bf16.msra.mxu0 %v1094
    %6435 = vmatprep.subr.bf16.mxu0 %v1103
    %6436 = vmatpush1.bf16.msra.mxu0 %v1102
    %6437 = vmatprep.subr.bf16.mxu0 %v1111
    %6438 = vmatpush1.bf16.msra.mxu0 %v1110
    %6439 = vmatprep.subr.bf16.mxu0 %v1119
    %6440 = vmatpush1.bf16.msra.mxu0 %v1118
    %6441 = vmatprep.subr.bf16.mxu0 %v1127
    %6442 = vmatpush1.bf16.msra.mxu0 %v1126
    %6443 = vmatprep.subr.bf16.mxu0 %v1135
    %6444 = vmatpush1.bf16.msra.mxu0 %v1134
    %6445 = vmatprep.mubr.bf16.mxu0 %v6371
    %6446 = vmatmul.mubr.bf16.gmra.mrb[0].mxu0 %v6370
    %v6447 = vpop.f32.mrb[0].mxu0
    %v6448 = vadd.f32 %v425, %v6447
    %v6449 = vpop.f32.mrb[0].mxu0
    %v6450 = vadd.f32 %v429, %v6449
    %v6451 = vpop.f32.mrb[0].mxu0
    %v6452 = vpop.f32.mrb[0].mxu0
    %6453 = vdwg.mxu0
    %6454 = vmatprep.subr.bf16.mxu0 %v1017
    %6455 = vmatpush1.bf16.msra.mxu0 %v1016
    %6456 = vmatprep.subr.bf16.mxu0 %v1025
    %6457 = vmatpush1.bf16.msra.mxu0 %v1024
    %6458 = vmatprep.subr.bf16.mxu0 %v1033
    %6459 = vmatpush1.bf16.msra.mxu0 %v1032
    %6460 = vmatprep.subr.bf16.mxu0 %v1041
    %6461 = vmatpush1.bf16.msra.mxu0 %v1040
    %6462 = vmatprep.subr.bf16.mxu0 %v1049
    %6463 = vmatpush1.bf16.msra.mxu0 %v1048
    %6464 = vmatprep.subr.bf16.mxu0 %v1057
    %6465 = vmatpush1.bf16.msra.mxu0 %v1056
    %6466 = vmatprep.subr.bf16.mxu0 %v1065
    %6467 = vmatpush1.bf16.msra.mxu0 %v1064
    %6468 = vmatprep.subr.bf16.mxu0 %v1073
    %6469 = vmatpush1.bf16.msra.mxu0 %v1072
    %6470 = vmatprep.subr.bf16.mxu0 %v1081
    %6471 = vmatpush1.bf16.msra.mxu0 %v1080
    %6472 = vmatprep.subr.bf16.mxu0 %v1089
    %6473 = vmatpush1.bf16.msra.mxu0 %v1088
    %6474 = vmatprep.subr.bf16.mxu0 %v1097
    %6475 = vmatpush1.bf16.msra.mxu0 %v1096
    %6476 = vmatprep.subr.bf16.mxu0 %v1105
    %6477 = vmatpush1.bf16.msra.mxu0 %v1104
    %6478 = vmatprep.subr.bf16.mxu0 %v1113
    %6479 = vmatpush1.bf16.msra.mxu0 %v1112
    %6480 = vmatprep.subr.bf16.mxu0 %v1121
    %6481 = vmatpush1.bf16.msra.mxu0 %v1120
    %6482 = vmatprep.subr.bf16.mxu0 %v1129
    %6483 = vmatpush1.bf16.msra.mxu0 %v1128
    %6484 = vmatprep.subr.bf16.mxu0 %v1137
    %6485 = vmatpush1.bf16.msra.mxu0 %v1136
    %6486 = vmatprep.mubr.bf16.mxu0 %v6371
    %6487 = vmatmul.mubr.bf16.gmra.mrb[0].mxu0 %v6370
    %v6488 = vpop.f32.mrb[0].mxu0
    %v6489 = vadd.f32 %v433, %v6488
    %v6490 = vpop.f32.mrb[0].mxu0
    %v6491 = vadd.f32 %v437, %v6490
    %v6492 = vpop.f32.mrb[0].mxu0
    %v6493 = vpop.f32.mrb[0].mxu0
    %6494 = vdwg.mxu0
    %6495 = vmatprep.subr.bf16.mxu0 %v1019
    %6496 = vmatpush1.bf16.msra.mxu0 %v1018
    %6497 = vmatprep.subr.bf16.mxu0 %v1027
    %6498 = vmatpush1.bf16.msra.mxu0 %v1026
    %6499 = vmatprep.subr.bf16.mxu0 %v1035
    %6500 = vmatpush1.bf16.msra.mxu0 %v1034
    %6501 = vmatprep.subr.bf16.mxu0 %v1043
    %6502 = vmatpush1.bf16.msra.mxu0 %v1042
    %6503 = vmatprep.subr.bf16.mxu0 %v1051
    %6504 = vmatpush1.bf16.msra.mxu0 %v1050
    %6505 = vmatprep.subr.bf16.mxu0 %v1059
    %6506 = vmatpush1.bf16.msra.mxu0 %v1058
    %6507 = vmatprep.subr.bf16.mxu0 %v1067
    %6508 = vmatpush1.bf16.msra.mxu0 %v1066
    %6509 = vmatprep.subr.bf16.mxu0 %v1075
    %6510 = vmatpush1.bf16.msra.mxu0 %v1074
    %6511 = vmatprep.subr.bf16.mxu0 %v1083
    %6512 = vmatpush1.bf16.msra.mxu0 %v1082
    %6513 = vmatprep.subr.bf16.mxu0 %v1091
    %6514 = vmatpush1.bf16.msra.mxu0 %v1090
    %6515 = vmatprep.subr.bf16.mxu0 %v1099
    %6516 = vmatpush1.bf16.msra.mxu0 %v1098
    %6517 = vmatprep.subr.bf16.mxu0 %v1107
    %6518 = vmatpush1.bf16.msra.mxu0 %v1106
    %6519 = vmatprep.subr.bf16.mxu0 %v1115
    %6520 = vmatpush1.bf16.msra.mxu0 %v1114
    %6521 = vmatprep.subr.bf16.mxu0 %v1123
    %6522 = vmatpush1.bf16.msra.mxu0 %v1122
    %6523 = vmatprep.subr.bf16.mxu0 %v1131
    %6524 = vmatpush1.bf16.msra.mxu0 %v1130
    %6525 = vmatprep.subr.bf16.mxu0 %v1139
    %6526 = vmatpush1.bf16.msra.mxu0 %v1138
    %6527 = vmatprep.mubr.bf16.mxu0 %v6371
    %6528 = vmatmul.mubr.bf16.gmra.mrb[0].mxu0 %v6370
    %v6529 = vpop.f32.mrb[0].mxu0
    %v6530 = vadd.f32 %v441, %v6529
    %v6531 = vpop.f32.mrb[0].mxu0
    %v6532 = vadd.f32 %v445, %v6531
    %v6533 = vpop.f32.mrb[0].mxu0
    %v6534 = vpop.f32.mrb[0].mxu0
    %6535 = vdwg.mxu0
    %s6536 = smul.u32 7, 8
    %s6537 = smul.addr %s6536, 8
    %s6538 = scalar_lea.vmem [#allocation2], %s6537
    %v6539 = vld [vmem:[%s6538] sm:$0xff]
    %v6540 = vld [vmem:[%s6538 + $0x8] sm:$0xff]
    %v6541 = vld [vmem:[%s6538 + $0x10] sm:$0xff]
    %v6542 = vld [vmem:[%s6538 + $0x18] sm:$0xff]
    %v6543 = vld [vmem:[%s6538 + $0x20] sm:$0xff]
    %v6544 = vld [vmem:[%s6538 + $0x28] sm:$0xff]
    %v6545 = vld [vmem:[%s6538 + $0x30] sm:$0xff]
    %v6546 = vld [vmem:[%s6538 + $0x38] sm:$0xff]
    %6547 = vmatprep.subr.bf16.mxu0 %v1956
    %6548 = vmatpush1.bf16.msra.mxu0 %v1955
    %6549 = vmatprep.subr.bf16.mxu0 %v1964
    %6550 = vmatpush1.bf16.msra.mxu0 %v1963
    %6551 = vmatprep.subr.bf16.mxu0 %v1972
    %6552 = vmatpush1.bf16.msra.mxu0 %v1971
    %6553 = vmatprep.subr.bf16.mxu0 %v1980
    %6554 = vmatpush1.bf16.msra.mxu0 %v1979
    %6555 = vmatprep.subr.bf16.mxu0 %v1988
    %6556 = vmatpush1.bf16.msra.mxu0 %v1987
    %6557 = vmatprep.subr.bf16.mxu0 %v1996
    %6558 = vmatpush1.bf16.msra.mxu0 %v1995
    %6559 = vmatprep.subr.bf16.mxu0 %v2004
    %6560 = vmatpush1.bf16.msra.mxu0 %v2003
    %6561 = vmatprep.subr.bf16.mxu0 %v2012
    %6562 = vmatpush1.bf16.msra.mxu0 %v2011
    %6563 = vmatprep.subr.bf16.mxu0 %v2020
    %6564 = vmatpush1.bf16.msra.mxu0 %v2019
    %6565 = vmatprep.subr.bf16.mxu0 %v2028
    %6566 = vmatpush1.bf16.msra.mxu0 %v2027
    %6567 = vmatprep.subr.bf16.mxu0 %v2036
    %6568 = vmatpush1.bf16.msra.mxu0 %v2035
    %6569 = vmatprep.subr.bf16.mxu0 %v2044
    %6570 = vmatpush1.bf16.msra.mxu0 %v2043
    %6571 = vmatprep.subr.bf16.mxu0 %v2052
    %6572 = vmatpush1.bf16.msra.mxu0 %v2051
    %6573 = vmatprep.subr.bf16.mxu0 %v2060
    %6574 = vmatpush1.bf16.msra.mxu0 %v2059
    %6575 = vmatprep.subr.bf16.mxu0 %v2068
    %6576 = vmatpush1.bf16.msra.mxu0 %v2067
    %6577 = vmatprep.subr.bf16.mxu0 %v2076
    %6578 = vmatpush1.bf16.msra.mxu0 %v2075
    %6579 = vmatprep.mubr.bf16.mxu0 %v6371
    %6580 = vmatmul.mubr.bf16.gmra.mrb[0].mxu0 %v6370
    %v6581 = vpop.f32.mrb[0].mxu0
    %v6582 = vadd.f32 0.0, %v6581
    %v6583 = vpop.f32.mrb[0].mxu0
    %v6584 = vadd.f32 0.0, %v6583
    %v6585 = vpop.f32.mrb[0].mxu0
    %v6586 = vpop.f32.mrb[0].mxu0
    %6587 = vdwg.mxu0
    %6588 = vmatprep.subr.bf16.mxu0 %v1958
    %6589 = vmatpush1.bf16.msra.mxu0 %v1957
    %6590 = vmatprep.subr.bf16.mxu0 %v1966
    %6591 = vmatpush1.bf16.msra.mxu0 %v1965
    %6592 = vmatprep.subr.bf16.mxu0 %v1974
    %6593 = vmatpush1.bf16.msra.mxu0 %v1973
    %6594 = vmatprep.subr.bf16.mxu0 %v1982
    %6595 = vmatpush1.bf16.msra.mxu0 %v1981
    %6596 = vmatprep.subr.bf16.mxu0 %v1990
    %6597 = vmatpush1.bf16.msra.mxu0 %v1989
    %6598 = vmatprep.subr.bf16.mxu0 %v1998
    %6599 = vmatpush1.bf16.msra.mxu0 %v1997
    %6600 = vmatprep.subr.bf16.mxu0 %v2006
    %6601 = vmatpush1.bf16.msra.mxu0 %v2005
    %6602 = vmatprep.subr.bf16.mxu0 %v2014
    %6603 = vmatpush1.bf16.msra.mxu0 %v2013
    %6604 = vmatprep.subr.bf16.mxu0 %v2022
    %6605 = vmatpush1.bf16.msra.mxu0 %v2021
    %6606 = vmatprep.subr.bf16.mxu0 %v2030
    %6607 = vmatpush1.bf16.msra.mxu0 %v2029
    %6608 = vmatprep.subr.bf16.mxu0 %v2038
    %6609 = vmatpush1.bf16.msra.mxu0 %v2037
    %6610 = vmatprep.subr.bf16.mxu0 %v2046
    %6611 = vmatpush1.bf16.msra.mxu0 %v2045
    %6612 = vmatprep.subr.bf16.mxu0 %v2054
    %6613 = vmatpush1.bf16.msra.mxu0 %v2053
    %6614 = vmatprep.subr.bf16.mxu0 %v2062
    %6615 = vmatpush1.bf16.msra.mxu0 %v2061
    %6616 = vmatprep.subr.bf16.mxu0 %v2070
    %6617 = vmatpush1.bf16.msra.mxu0 %v2069
    %6618 = vmatprep.subr.bf16.mxu0 %v2078
    %6619 = vmatpush1.bf16.msra.mxu0 %v2077
    %6620 = vmatprep.mubr.bf16.mxu0 %v6371
    %6621 = vmatmul.mubr.bf16.gmra.mrb[0].mxu0 %v6370
    %v6622 = vpop.f32.mrb[0].mxu0
    %v6623 = vadd.f32 0.0, %v6622
    %v6624 = vpop.f32.mrb[0].mxu0
    %v6625 = vadd.f32 0.0, %v6624
    %v6626 = vpop.f32.mrb[0].mxu0
    %v6627 = vpop.f32.mrb[0].mxu0
    %6628 = vdwg.mxu0
    %6629 = vmatprep.subr.bf16.mxu0 %v1960
    %6630 = vmatpush1.bf16.msra.mxu0 %v1959
    %6631 = vmatprep.subr.bf16.mxu0 %v1968
    %6632 = vmatpush1.bf16.msra.mxu0 %v1967
    %6633 = vmatprep.subr.bf16.mxu0 %v1976
    %6634 = vmatpush1.bf16.msra.mxu0 %v1975
    %6635 = vmatprep.subr.bf16.mxu0 %v1984
    %6636 = vmatpush1.bf16.msra.mxu0 %v1983
    %6637 = vmatprep.subr.bf16.mxu0 %v1992
    %6638 = vmatpush1.bf16.msra.mxu0 %v1991
    %6639 = vmatprep.subr.bf16.mxu0 %v2000
    %6640 = vmatpush1.bf16.msra.mxu0 %v1999
    %6641 = vmatprep.subr.bf16.mxu0 %v2008
    %6642 = vmatpush1.bf16.msra.mxu0 %v2007
    %6643 = vmatprep.subr.bf16.mxu0 %v2016
    %6644 = vmatpush1.bf16.msra.mxu0 %v2015
    %6645 = vmatprep.subr.bf16.mxu0 %v2024
    %6646 = vmatpush1.bf16.msra.mxu0 %v2023
    %6647 = vmatprep.subr.bf16.mxu0 %v2032
    %6648 = vmatpush1.bf16.msra.mxu0 %v2031
    %6649 = vmatprep.subr.bf16.mxu0 %v2040
    %6650 = vmatpush1.bf16.msra.mxu0 %v2039
    %6651 = vmatprep.subr.bf16.mxu0 %v2048
    %6652 = vmatpush1.bf16.msra.mxu0 %v2047
    %6653 = vmatprep.subr.bf16.mxu0 %v2056
    %6654 = vmatpush1.bf16.msra.mxu0 %v2055
    %6655 = vmatprep.subr.bf16.mxu0 %v2064
    %6656 = vmatpush1.bf16.msra.mxu0 %v2063
    %6657 = vmatprep.subr.bf16.mxu0 %v2072
    %6658 = vmatpush1.bf16.msra.mxu0 %v2071
    %6659 = vmatprep.subr.bf16.mxu0 %v2080
    %6660 = vmatpush1.bf16.msra.mxu0 %v2079
    %6661 = vmatprep.mubr.bf16.mxu0 %v6371
    %6662 = vmatmul.mubr.bf16.gmra.mrb[0].mxu0 %v6370
    %v6663 = vpop.f32.mrb[0].mxu0
    %v6664 = vadd.f32 0.0, %v6663
    %v6665 = vpop.f32.mrb[0].mxu0
    %v6666 = vadd.f32 0.0, %v6665
    %v6667 = vpop.f32.mrb[0].mxu0
    %v6668 = vpop.f32.mrb[0].mxu0
    %6669 = vdwg.mxu0
    %6670 = vmatprep.subr.bf16.mxu0 %v1962
    %6671 = vmatpush1.bf16.msra.mxu0 %v1961
    %6672 = vmatprep.subr.bf16.mxu0 %v1970
    %6673 = vmatpush1.bf16.msra.mxu0 %v1969
    %6674 = vmatprep.subr.bf16.mxu0 %v1978
    %6675 = vmatpush1.bf16.msra.mxu0 %v1977
    %6676 = vmatprep.subr.bf16.mxu0 %v1986
    %6677 = vmatpush1.bf16.msra.mxu0 %v1985
    %6678 = vmatprep.subr.bf16.mxu0 %v1994
    %6679 = vmatpush1.bf16.msra.mxu0 %v1993
    %6680 = vmatprep.subr.bf16.mxu0 %v2002
    %6681 = vmatpush1.bf16.msra.mxu0 %v2001
    %6682 = vmatprep.subr.bf16.mxu0 %v2010
    %6683 = vmatpush1.bf16.msra.mxu0 %v2009
    %6684 = vmatprep.subr.bf16.mxu0 %v2018
    %6685 = vmatpush1.bf16.msra.mxu0 %v2017
    %6686 = vmatprep.subr.bf16.mxu0 %v2026
    %6687 = vmatpush1.bf16.msra.mxu0 %v2025
    %6688 = vmatprep.subr.bf16.mxu0 %v2034
    %6689 = vmatpush1.bf16.msra.mxu0 %v2033
    %6690 = vmatprep.subr.bf16.mxu0 %v2042
    %6691 = vmatpush1.bf16.msra.mxu0 %v2041
    %6692 = vmatprep.subr.bf16.mxu0 %v2050
    %6693 = vmatpush1.bf16.msra.mxu0 %v2049
    %6694 = vmatprep.subr.bf16.mxu0 %v2058
    %6695 = vmatpush1.bf16.msra.mxu0 %v2057
    %6696 = vmatprep.subr.bf16.mxu0 %v2066
    %6697 = vmatpush1.bf16.msra.mxu0 %v2065
    %6698 = vmatprep.subr.bf16.mxu0 %v2074
    %6699 = vmatpush1.bf16.msra.mxu0 %v2073
    %6700 = vmatprep.subr.bf16.mxu0 %v2082
    %6701 = vmatpush1.bf16.msra.mxu0 %v2081
    %6702 = vmatprep.mubr.bf16.mxu0 %v6371
    %6703 = vmatmul.mubr.bf16.gmra.mrb[0].mxu0 %v6370
    %v6704 = vpop.f32.mrb[0].mxu0
    %v6705 = vadd.f32 0.0, %v6704
    %v6706 = vpop.f32.mrb[0].mxu0
    %v6707 = vadd.f32 0.0, %v6706
    %v6708 = vpop.f32.mrb[0].mxu0
    %v6709 = vpop.f32.mrb[0].mxu0
    %6710 = vdwg.mxu0
    %v6711 = vadd.f32 %v6539, %v6582
    %v6712 = vadd.f32 %v6540, %v6584
    %v6713 = vadd.f32 %v6541, %v6623
    %v6714 = vadd.f32 %v6542, %v6625
    %v6715 = vadd.f32 %v6543, %v6664
    %v6716 = vadd.f32 %v6544, %v6666
    %v6717 = vadd.f32 %v6545, %v6705
    %v6718 = vadd.f32 %v6546, %v6707
    %v6719 = vpack.c.bf16 %v6368, %v6368
    %v6720 = vpack.c.bf16 %v6369, %v6369
    %6721 = vmatprep.subr.bf16.mxu0 %v2896
    %6722 = vmatpush1.bf16.msra.mxu0 %v2895
    %6723 = vmatprep.subr.bf16.mxu0 %v2904
    %6724 = vmatpush1.bf16.msra.mxu0 %v2903
    %6725 = vmatprep.subr.bf16.mxu0 %v2912
    %6726 = vmatpush1.bf16.msra.mxu0 %v2911
    %6727 = vmatprep.subr.bf16.mxu0 %v2920
    %6728 = vmatpush1.bf16.msra.mxu0 %v2919
    %6729 = vmatprep.subr.bf16.mxu0 %v2928
    %6730 = vmatpush1.bf16.msra.mxu0 %v2927
    %6731 = vmatprep.subr.bf16.mxu0 %v2936
    %6732 = vmatpush1.bf16.msra.mxu0 %v2935
    %6733 = vmatprep.subr.bf16.mxu0 %v2944
    %6734 = vmatpush1.bf16.msra.mxu0 %v2943
    %6735 = vmatprep.subr.bf16.mxu0 %v2952
    %6736 = vmatpush1.bf16.msra.mxu0 %v2951
    %6737 = vmatprep.subr.bf16.mxu0 %v2960
    %6738 = vmatpush1.bf16.msra.mxu0 %v2959
    %6739 = vmatprep.subr.bf16.mxu0 %v2968
    %6740 = vmatpush1.bf16.msra.mxu0 %v2967
    %6741 = vmatprep.subr.bf16.mxu0 %v2976
    %6742 = vmatpush1.bf16.msra.mxu0 %v2975
    %6743 = vmatprep.subr.bf16.mxu0 %v2984
    %6744 = vmatpush1.bf16.msra.mxu0 %v2983
    %6745 = vmatprep.subr.bf16.mxu0 %v2992
    %6746 = vmatpush1.bf16.msra.mxu0 %v2991
    %6747 = vmatprep.subr.bf16.mxu0 %v3000
    %6748 = vmatpush1.bf16.msra.mxu0 %v2999
    %6749 = vmatprep.subr.bf16.mxu0 %v3008
    %6750 = vmatpush1.bf16.msra.mxu0 %v3007
    %6751 = vmatprep.subr.bf16.mxu0 %v3016
    %6752 = vmatpush1.bf16.msra.mxu0 %v3015
    %6753 = vmatprep.mubr.bf16.mxu0 %v6720
    %6754 = vmatmul.mubr.bf16.gmra.mrb[0].mxu0 %v6719
    %v6755 = vpop.f32.mrb[0].mxu0
    %v6756 = vadd.f32 0.0, %v6755
    %v6757 = vpop.f32.mrb[0].mxu0
    %v6758 = vadd.f32 0.0, %v6757
    %v6759 = vpop.f32.mrb[0].mxu0
    %v6760 = vpop.f32.mrb[0].mxu0
    %6761 = vdwg.mxu0
    %6762 = vmatprep.subr.bf16.mxu0 %v2898
    %6763 = vmatpush1.bf16.msra.mxu0 %v2897
    %6764 = vmatprep.subr.bf16.mxu0 %v2906
    %6765 = vmatpush1.bf16.msra.mxu0 %v2905
    %6766 = vmatprep.subr.bf16.mxu0 %v2914
    %6767 = vmatpush1.bf16.msra.mxu0 %v2913
    %6768 = vmatprep.subr.bf16.mxu0 %v2922
    %6769 = vmatpush1.bf16.msra.mxu0 %v2921
    %6770 = vmatprep.subr.bf16.mxu0 %v2930
    %6771 = vmatpush1.bf16.msra.mxu0 %v2929
    %6772 = vmatprep.subr.bf16.mxu0 %v2938
    %6773 = vmatpush1.bf16.msra.mxu0 %v2937
    %6774 = vmatprep.subr.bf16.mxu0 %v2946
    %6775 = vmatpush1.bf16.msra.mxu0 %v2945
    %6776 = vmatprep.subr.bf16.mxu0 %v2954
    %6777 = vmatpush1.bf16.msra.mxu0 %v2953
    %6778 = vmatprep.subr.bf16.mxu0 %v2962
    %6779 = vmatpush1.bf16.msra.mxu0 %v2961
    %6780 = vmatprep.subr.bf16.mxu0 %v2970
    %6781 = vmatpush1.bf16.msra.mxu0 %v2969
    %6782 = vmatprep.subr.bf16.mxu0 %v2978
    %6783 = vmatpush1.bf16.msra.mxu0 %v2977
    %6784 = vmatprep.subr.bf16.mxu0 %v2986
    %6785 = vmatpush1.bf16.msra.mxu0 %v2985
    %6786 = vmatprep.subr.bf16.mxu0 %v2994
    %6787 = vmatpush1.bf16.msra.mxu0 %v2993
    %6788 = vmatprep.subr.bf16.mxu0 %v3002
    %6789 = vmatpush1.bf16.msra.mxu0 %v3001
    %6790 = vmatprep.subr.bf16.mxu0 %v3010
    %6791 = vmatpush1.bf16.msra.mxu0 %v3009
    %6792 = vmatprep.subr.bf16.mxu0 %v3018
    %6793 = vmatpush1.bf16.msra.mxu0 %v3017
    %6794 = vmatprep.mubr.bf16.mxu0 %v6720
    %6795 = vmatmul.mubr.bf16.gmra.mrb[0].mxu0 %v6719
    %v6796 = vpop.f32.mrb[0].mxu0
    %v6797 = vadd.f32 0.0, %v6796
    %v6798 = vpop.f32.mrb[0].mxu0
    %v6799 = vadd.f32 0.0, %v6798
    %v6800 = vpop.f32.mrb[0].mxu0
    %v6801 = vpop.f32.mrb[0].mxu0
    %6802 = vdwg.mxu0
    %6803 = vmatprep.subr.bf16.mxu0 %v2900
    %6804 = vmatpush1.bf16.msra.mxu0 %v2899
    %6805 = vmatprep.subr.bf16.mxu0 %v2908
    %6806 = vmatpush1.bf16.msra.mxu0 %v2907
    %6807 = vmatprep.subr.bf16.mxu0 %v2916
    %6808 = vmatpush1.bf16.msra.mxu0 %v2915
    %6809 = vmatprep.subr.bf16.mxu0 %v2924
    %6810 = vmatpush1.bf16.msra.mxu0 %v2923
    %6811 = vmatprep.subr.bf16.mxu0 %v2932
    %6812 = vmatpush1.bf16.msra.mxu0 %v2931
    %6813 = vmatprep.subr.bf16.mxu0 %v2940
    %6814 = vmatpush1.bf16.msra.mxu0 %v2939
    %6815 = vmatprep.subr.bf16.mxu0 %v2948
    %6816 = vmatpush1.bf16.msra.mxu0 %v2947
    %6817 = vmatprep.subr.bf16.mxu0 %v2956
    %6818 = vmatpush1.bf16.msra.mxu0 %v2955
    %6819 = vmatprep.subr.bf16.mxu0 %v2964
    %6820 = vmatpush1.bf16.msra.mxu0 %v2963
    %6821 = vmatprep.subr.bf16.mxu0 %v2972
    %6822 = vmatpush1.bf16.msra.mxu0 %v2971
    %6823 = vmatprep.subr.bf16.mxu0 %v2980
    %6824 = vmatpush1.bf16.msra.mxu0 %v2979
    %6825 = vmatprep.subr.bf16.mxu0 %v2988
    %6826 = vmatpush1.bf16.msra.mxu0 %v2987
    %6827 = vmatprep.subr.bf16.mxu0 %v2996
    %6828 = vmatpush1.bf16.msra.mxu0 %v2995
    %6829 = vmatprep.subr.bf16.mxu0 %v3004
    %6830 = vmatpush1.bf16.msra.mxu0 %v3003
    %6831 = vmatprep.subr.bf16.mxu0 %v3012
    %6832 = vmatpush1.bf16.msra.mxu0 %v3011
    %6833 = vmatprep.subr.bf16.mxu0 %v3020
    %6834 = vmatpush1.bf16.msra.mxu0 %v3019
    %6835 = vmatprep.mubr.bf16.mxu0 %v6720
    %6836 = vmatmul.mubr.bf16.gmra.mrb[0].mxu0 %v6719
    %v6837 = vpop.f32.mrb[0].mxu0
    %v6838 = vadd.f32 0.0, %v6837
    %v6839 = vpop.f32.mrb[0].mxu0
    %v6840 = vadd.f32 0.0, %v6839
    %v6841 = vpop.f32.mrb[0].mxu0
    %v6842 = vpop.f32.mrb[0].mxu0
    %6843 = vdwg.mxu0
    %6844 = vmatprep.subr.bf16.mxu0 %v2902
    %6845 = vmatpush1.bf16.msra.mxu0 %v2901
    %6846 = vmatprep.subr.bf16.mxu0 %v2910
    %6847 = vmatpush1.bf16.msra.mxu0 %v2909
    %6848 = vmatprep.subr.bf16.mxu0 %v2918
    %6849 = vmatpush1.bf16.msra.mxu0 %v2917
    %6850 = vmatprep.subr.bf16.mxu0 %v2926
    %6851 = vmatpush1.bf16.msra.mxu0 %v2925
    %6852 = vmatprep.subr.bf16.mxu0 %v2934
    %6853 = vmatpush1.bf16.msra.mxu0 %v2933
    %6854 = vmatprep.subr.bf16.mxu0 %v2942
    %6855 = vmatpush1.bf16.msra.mxu0 %v2941
    %6856 = vmatprep.subr.bf16.mxu0 %v2950
    %6857 = vmatpush1.bf16.msra.mxu0 %v2949
    %6858 = vmatprep.subr.bf16.mxu0 %v2958
    %6859 = vmatpush1.bf16.msra.mxu0 %v2957
    %6860 = vmatprep.subr.bf16.mxu0 %v2966
    %6861 = vmatpush1.bf16.msra.mxu0 %v2965
    %6862 = vmatprep.subr.bf16.mxu0 %v2974
    %6863 = vmatpush1.bf16.msra.mxu0 %v2973
    %6864 = vmatprep.subr.bf16.mxu0 %v2982
    %6865 = vmatpush1.bf16.msra.mxu0 %v2981
    %6866 = vmatprep.subr.bf16.mxu0 %v2990
    %6867 = vmatpush1.bf16.msra.mxu0 %v2989
    %6868 = vmatprep.subr.bf16.mxu0 %v2998
    %6869 = vmatpush1.bf16.msra.mxu0 %v2997
    %6870 = vmatprep.subr.bf16.mxu0 %v3006
    %6871 = vmatpush1.bf16.msra.mxu0 %v3005
    %6872 = vmatprep.subr.bf16.mxu0 %v3014
    %6873 = vmatpush1.bf16.msra.mxu0 %v3013
    %6874 = vmatprep.subr.bf16.mxu0 %v3022
    %6875 = vmatpush1.bf16.msra.mxu0 %v3021
    %6876 = vmatprep.mubr.bf16.mxu0 %v6720
    %6877 = vmatmul.mubr.bf16.gmra.mrb[0].mxu0 %v6719
    %v6878 = vpop.f32.mrb[0].mxu0
    %v6879 = vadd.f32 0.0, %v6878
    %v6880 = vpop.f32.mrb[0].mxu0
    %v6881 = vadd.f32 0.0, %v6880
    %v6882 = vpop.f32.mrb[0].mxu0
    %v6883 = vpop.f32.mrb[0].mxu0
    %6884 = vdwg.mxu0
    %v6885 = vadd.f32 %v6407, %v6756
    %v6886 = vadd.f32 %v6409, %v6758
    %v6887 = vadd.f32 %v6448, %v6797
    %v6888 = vadd.f32 %v6450, %v6799
    %v6889 = vadd.f32 %v6489, %v6838
    %v6890 = vadd.f32 %v6491, %v6840
    %v6891 = vadd.f32 %v6530, %v6879
    %v6892 = vadd.f32 %v6532, %v6881
    %v6893 = vmul.f32 %v6711, 0.5
    %v6894 = vmul.f32 %v6712, 0.5
    %v6895 = vtanh.pop %v6893
    %v6896 = vtanh.pop %v6894
    %v6897 = vmul.f32 %v6895, 0.5
    %v6898 = vmul.f32 %v6896, 0.5
    %v6899 = vadd.f32 %v6897, 0.5
    %v6900 = vadd.f32 %v6898, 0.5
    %v6901 = vmul.f32 %v6713, 0.5
    %v6902 = vmul.f32 %v6714, 0.5
    %v6903 = vtanh.pop %v6901
    %v6904 = vtanh.pop %v6902
    %v6905 = vmul.f32 %v6903, 0.5
    %v6906 = vmul.f32 %v6904, 0.5
    %v6907 = vadd.f32 %v6905, 0.5
    %v6908 = vadd.f32 %v6906, 0.5
    %v6909 = vtanh.pop %v6715
    %v6910 = vtanh.pop %v6716
    %v6911 = vmul.f32 %v6717, 0.5
    %v6912 = vmul.f32 %v6718, 0.5
    %v6913 = vtanh.pop %v6911
    %v6914 = vtanh.pop %v6912
    %v6915 = vmul.f32 %v6913, 0.5
    %v6916 = vmul.f32 %v6914, 0.5
    %v6917 = vadd.f32 %v6915, 0.5
    %v6918 = vadd.f32 %v6916, 0.5
    %v6919 = vmul.f32 %v6907, %v6328
    %v6920 = vmul.f32 %v6908, %v6329
    %v6921 = vmul.f32 %v6899, %v6909
    %v6922 = vmul.f32 %v6900, %v6910
    %v6923 = vadd.f32 %v6919, %v6921
    %v6924 = vadd.f32 %v6920, %v6922
    %v6925 = vtanh.pop %v6923
    %v6926 = vtanh.pop %v6924
    %v6927 = vmul.f32 %v6917, %v6925
    %v6928 = vmul.f32 %v6918, %v6926
    %v6929 = vmul.f32 %v6885, 0.5
    %v6930 = vmul.f32 %v6886, 0.5
    %v6931 = vtanh.pop %v6929
    %v6932 = vtanh.pop %v6930
    %v6933 = vmul.f32 %v6931, 0.5
    %v6934 = vmul.f32 %v6932, 0.5
    %v6935 = vadd.f32 %v6933, 0.5
    %v6936 = vadd.f32 %v6934, 0.5
    %v6937 = vmul.f32 %v6887, 0.5
    %v6938 = vmul.f32 %v6888, 0.5
    %v6939 = vtanh.pop %v6937
    %v6940 = vtanh.pop %v6938
    %v6941 = vmul.f32 %v6939, 0.5
    %v6942 = vmul.f32 %v6940, 0.5
    %v6943 = vadd.f32 %v6941, 0.5
    %v6944 = vadd.f32 %v6942, 0.5
    %v6945 = vtanh.pop %v6889
    %v6946 = vtanh.pop %v6890
    %v6947 = vmul.f32 %v6891, 0.5
    %v6948 = vmul.f32 %v6892, 0.5
    %v6949 = vtanh.pop %v6947
    %v6950 = vtanh.pop %v6948
    %v6951 = vmul.f32 %v6949, 0.5
    %v6952 = vmul.f32 %v6950, 0.5
    %v6953 = vadd.f32 %v6951, 0.5
    %v6954 = vadd.f32 %v6952, 0.5
    %v6955 = vmul.f32 %v6943, %v6364
    %v6956 = vmul.f32 %v6944, %v6365
    %v6957 = vmul.f32 %v6935, %v6945
    %v6958 = vmul.f32 %v6936, %v6946
    %v6959 = vadd.f32 %v6955, %v6957
    %v6960 = vadd.f32 %v6956, %v6958
    %v6961 = vtanh.pop %v6959
    %v6962 = vtanh.pop %v6960
    %v6963 = vmul.f32 %v6953, %v6961
    %v6964 = vmul.f32 %v6954, %v6962
    %v6965 = vpack.c.bf16 %v6927, %v6927
    %v6966 = vpack.c.bf16 %v6928, %v6928
    %6967 = vmatprep.subr.bf16.mxu0 %v1013
    %6968 = vmatpush1.bf16.msra.mxu0 %v1012
    %6969 = vmatprep.subr.bf16.mxu0 %v1021
    %6970 = vmatpush1.bf16.msra.mxu0 %v1020
    %6971 = vmatprep.subr.bf16.mxu0 %v1029
    %6972 = vmatpush1.bf16.msra.mxu0 %v1028
    %6973 = vmatprep.subr.bf16.mxu0 %v1037
    %6974 = vmatpush1.bf16.msra.mxu0 %v1036
    %6975 = vmatprep.subr.bf16.mxu0 %v1045
    %6976 = vmatpush1.bf16.msra.mxu0 %v1044
    %6977 = vmatprep.subr.bf16.mxu0 %v1053
    %6978 = vmatpush1.bf16.msra.mxu0 %v1052
    %6979 = vmatprep.subr.bf16.mxu0 %v1061
    %6980 = vmatpush1.bf16.msra.mxu0 %v1060
    %6981 = vmatprep.subr.bf16.mxu0 %v1069
    %6982 = vmatpush1.bf16.msra.mxu0 %v1068
    %6983 = vmatprep.subr.bf16.mxu0 %v1077
    %6984 = vmatpush1.bf16.msra.mxu0 %v1076
    %6985 = vmatprep.subr.bf16.mxu0 %v1085
    %6986 = vmatpush1.bf16.msra.mxu0 %v1084
    %6987 = vmatprep.subr.bf16.mxu0 %v1093
    %6988 = vmatpush1.bf16.msra.mxu0 %v1092
    %6989 = vmatprep.subr.bf16.mxu0 %v1101
    %6990 = vmatpush1.bf16.msra.mxu0 %v1100
    %6991 = vmatprep.subr.bf16.mxu0 %v1109
    %6992 = vmatpush1.bf16.msra.mxu0 %v1108
    %6993 = vmatprep.subr.bf16.mxu0 %v1117
    %6994 = vmatpush1.bf16.msra.mxu0 %v1116
    %6995 = vmatprep.subr.bf16.mxu0 %v1125
    %6996 = vmatpush1.bf16.msra.mxu0 %v1124
    %6997 = vmatprep.subr.bf16.mxu0 %v1133
    %6998 = vmatpush1.bf16.msra.mxu0 %v1132
    %6999 = vmatprep.mubr.bf16.mxu0 %v6966
    %7000 = vmatmul.mubr.bf16.gmra.mrb[0].mxu0 %v6965
    %v7001 = vpop.f32.mrb[0].mxu0
    %v7002 = vadd.f32 %v417, %v7001
    %v7003 = vpop.f32.mrb[0].mxu0
    %v7004 = vadd.f32 %v421, %v7003
    %v7005 = vpop.f32.mrb[0].mxu0
    %v7006 = vpop.f32.mrb[0].mxu0
    %7007 = vdwg.mxu0
    %7008 = vmatprep.subr.bf16.mxu0 %v1015
    %7009 = vmatpush1.bf16.msra.mxu0 %v1014
    %7010 = vmatprep.subr.bf16.mxu0 %v1023
    %7011 = vmatpush1.bf16.msra.mxu0 %v1022
    %7012 = vmatprep.subr.bf16.mxu0 %v1031
    %7013 = vmatpush1.bf16.msra.mxu0 %v1030
    %7014 = vmatprep.subr.bf16.mxu0 %v1039
    %7015 = vmatpush1.bf16.msra.mxu0 %v1038
    %7016 = vmatprep.subr.bf16.mxu0 %v1047
    %7017 = vmatpush1.bf16.msra.mxu0 %v1046
    %7018 = vmatprep.subr.bf16.mxu0 %v1055
    %7019 = vmatpush1.bf16.msra.mxu0 %v1054
    %7020 = vmatprep.subr.bf16.mxu0 %v1063
    %7021 = vmatpush1.bf16.msra.mxu0 %v1062
    %7022 = vmatprep.subr.bf16.mxu0 %v1071
    %7023 = vmatpush1.bf16.msra.mxu0 %v1070
    %7024 = vmatprep.subr.bf16.mxu0 %v1079
    %7025 = vmatpush1.bf16.msra.mxu0 %v1078
    %7026 = vmatprep.subr.bf16.mxu0 %v1087
    %7027 = vmatpush1.bf16.msra.mxu0 %v1086
    %7028 = vmatprep.subr.bf16.mxu0 %v1095
    %7029 = vmatpush1.bf16.msra.mxu0 %v1094
    %7030 = vmatprep.subr.bf16.mxu0 %v1103
    %7031 = vmatpush1.bf16.msra.mxu0 %v1102
    %7032 = vmatprep.subr.bf16.mxu0 %v1111
    %7033 = vmatpush1.bf16.msra.mxu0 %v1110
    %7034 = vmatprep.subr.bf16.mxu0 %v1119
    %7035 = vmatpush1.bf16.msra.mxu0 %v1118
    %7036 = vmatprep.subr.bf16.mxu0 %v1127
    %7037 = vmatpush1.bf16.msra.mxu0 %v1126
    %7038 = vmatprep.subr.bf16.mxu0 %v1135
    %7039 = vmatpush1.bf16.msra.mxu0 %v1134
    %7040 = vmatprep.mubr.bf16.mxu0 %v6966
    %7041 = vmatmul.mubr.bf16.gmra.mrb[0].mxu0 %v6965
    %v7042 = vpop.f32.mrb[0].mxu0
    %v7043 = vadd.f32 %v425, %v7042
    %v7044 = vpop.f32.mrb[0].mxu0
    %v7045 = vadd.f32 %v429, %v7044
    %v7046 = vpop.f32.mrb[0].mxu0
    %v7047 = vpop.f32.mrb[0].mxu0
    %7048 = vdwg.mxu0
    %7049 = vmatprep.subr.bf16.mxu0 %v1017
    %7050 = vmatpush1.bf16.msra.mxu0 %v1016
    %7051 = vmatprep.subr.bf16.mxu0 %v1025
    %7052 = vmatpush1.bf16.msra.mxu0 %v1024
    %7053 = vmatprep.subr.bf16.mxu0 %v1033
    %7054 = vmatpush1.bf16.msra.mxu0 %v1032
    %7055 = vmatprep.subr.bf16.mxu0 %v1041
    %7056 = vmatpush1.bf16.msra.mxu0 %v1040
    %7057 = vmatprep.subr.bf16.mxu0 %v1049
    %7058 = vmatpush1.bf16.msra.mxu0 %v1048
    %7059 = vmatprep.subr.bf16.mxu0 %v1057
    %7060 = vmatpush1.bf16.msra.mxu0 %v1056
    %7061 = vmatprep.subr.bf16.mxu0 %v1065
    %7062 = vmatpush1.bf16.msra.mxu0 %v1064
    %7063 = vmatprep.subr.bf16.mxu0 %v1073
    %7064 = vmatpush1.bf16.msra.mxu0 %v1072
    %7065 = vmatprep.subr.bf16.mxu0 %v1081
    %7066 = vmatpush1.bf16.msra.mxu0 %v1080
    %7067 = vmatprep.subr.bf16.mxu0 %v1089
    %7068 = vmatpush1.bf16.msra.mxu0 %v1088
    %7069 = vmatprep.subr.bf16.mxu0 %v1097
    %7070 = vmatpush1.bf16.msra.mxu0 %v1096
    %7071 = vmatprep.subr.bf16.mxu0 %v1105
    %7072 = vmatpush1.bf16.msra.mxu0 %v1104
    %7073 = vmatprep.subr.bf16.mxu0 %v1113
    %7074 = vmatpush1.bf16.msra.mxu0 %v1112
    %7075 = vmatprep.subr.bf16.mxu0 %v1121
    %7076 = vmatpush1.bf16.msra.mxu0 %v1120
    %7077 = vmatprep.subr.bf16.mxu0 %v1129
    %7078 = vmatpush1.bf16.msra.mxu0 %v1128
    %7079 = vmatprep.subr.bf16.mxu0 %v1137
    %7080 = vmatpush1.bf16.msra.mxu0 %v1136
    %7081 = vmatprep.mubr.bf16.mxu0 %v6966
    %7082 = vmatmul.mubr.bf16.gmra.mrb[0].mxu0 %v6965
    %v7083 = vpop.f32.mrb[0].mxu0
    %v7084 = vadd.f32 %v433, %v7083
    %v7085 = vpop.f32.mrb[0].mxu0
    %v7086 = vadd.f32 %v437, %v7085
    %v7087 = vpop.f32.mrb[0].mxu0
    %v7088 = vpop.f32.mrb[0].mxu0
    %7089 = vdwg.mxu0
    %7090 = vmatprep.subr.bf16.mxu0 %v1019
    %7091 = vmatpush1.bf16.msra.mxu0 %v1018
    %7092 = vmatprep.subr.bf16.mxu0 %v1027
    %7093 = vmatpush1.bf16.msra.mxu0 %v1026
    %7094 = vmatprep.subr.bf16.mxu0 %v1035
    %7095 = vmatpush1.bf16.msra.mxu0 %v1034
    %7096 = vmatprep.subr.bf16.mxu0 %v1043
    %7097 = vmatpush1.bf16.msra.mxu0 %v1042
    %7098 = vmatprep.subr.bf16.mxu0 %v1051
    %7099 = vmatpush1.bf16.msra.mxu0 %v1050
    %7100 = vmatprep.subr.bf16.mxu0 %v1059
    %7101 = vmatpush1.bf16.msra.mxu0 %v1058
    %7102 = vmatprep.subr.bf16.mxu0 %v1067
    %7103 = vmatpush1.bf16.msra.mxu0 %v1066
    %7104 = vmatprep.subr.bf16.mxu0 %v1075
    %7105 = vmatpush1.bf16.msra.mxu0 %v1074
    %7106 = vmatprep.subr.bf16.mxu0 %v1083
    %7107 = vmatpush1.bf16.msra.mxu0 %v1082
    %7108 = vmatprep.subr.bf16.mxu0 %v1091
    %7109 = vmatpush1.bf16.msra.mxu0 %v1090
    %7110 = vmatprep.subr.bf16.mxu0 %v1099
    %7111 = vmatpush1.bf16.msra.mxu0 %v1098
    %7112 = vmatprep.subr.bf16.mxu0 %v1107
    %7113 = vmatpush1.bf16.msra.mxu0 %v1106
    %7114 = vmatprep.subr.bf16.mxu0 %v1115
    %7115 = vmatpush1.bf16.msra.mxu0 %v1114
    %7116 = vmatprep.subr.bf16.mxu0 %v1123
    %7117 = vmatpush1.bf16.msra.mxu0 %v1122
    %7118 = vmatprep.subr.bf16.mxu0 %v1131
    %7119 = vmatpush1.bf16.msra.mxu0 %v1130
    %7120 = vmatprep.subr.bf16.mxu0 %v1139
    %7121 = vmatpush1.bf16.msra.mxu0 %v1138
    %7122 = vmatprep.mubr.bf16.mxu0 %v6966
    %7123 = vmatmul.mubr.bf16.gmra.mrb[0].mxu0 %v6965
    %v7124 = vpop.f32.mrb[0].mxu0
    %v7125 = vadd.f32 %v441, %v7124
    %v7126 = vpop.f32.mrb[0].mxu0
    %v7127 = vadd.f32 %v445, %v7126
    %v7128 = vpop.f32.mrb[0].mxu0
    %v7129 = vpop.f32.mrb[0].mxu0
    %7130 = vdwg.mxu0
    %v7131 = vpack.c.bf16 %v6963, %v6963
    %v7132 = vpack.c.bf16 %v6964, %v6964
    %7133 = vmatprep.subr.bf16.mxu0 %v2896
    %7134 = vmatpush1.bf16.msra.mxu0 %v2895
    %7135 = vmatprep.subr.bf16.mxu0 %v2904
    %7136 = vmatpush1.bf16.msra.mxu0 %v2903
    %7137 = vmatprep.subr.bf16.mxu0 %v2912
    %7138 = vmatpush1.bf16.msra.mxu0 %v2911
    %7139 = vmatprep.subr.bf16.mxu0 %v2920
    %7140 = vmatpush1.bf16.msra.mxu0 %v2919
    %7141 = vmatprep.subr.bf16.mxu0 %v2928
    %7142 = vmatpush1.bf16.msra.mxu0 %v2927
    %7143 = vmatprep.subr.bf16.mxu0 %v2936
    %7144 = vmatpush1.bf16.msra.mxu0 %v2935
    %7145 = vmatprep.subr.bf16.mxu0 %v2944
    %7146 = vmatpush1.bf16.msra.mxu0 %v2943
    %7147 = vmatprep.subr.bf16.mxu0 %v2952
    %7148 = vmatpush1.bf16.msra.mxu0 %v2951
    %7149 = vmatprep.subr.bf16.mxu0 %v2960
    %7150 = vmatpush1.bf16.msra.mxu0 %v2959
    %7151 = vmatprep.subr.bf16.mxu0 %v2968
    %7152 = vmatpush1.bf16.msra.mxu0 %v2967
    %7153 = vmatprep.subr.bf16.mxu0 %v2976
    %7154 = vmatpush1.bf16.msra.mxu0 %v2975
    %7155 = vmatprep.subr.bf16.mxu0 %v2984
    %7156 = vmatpush1.bf16.msra.mxu0 %v2983
    %7157 = vmatprep.subr.bf16.mxu0 %v2992
    %7158 = vmatpush1.bf16.msra.mxu0 %v2991
    %7159 = vmatprep.subr.bf16.mxu0 %v3000
    %7160 = vmatpush1.bf16.msra.mxu0 %v2999
    %7161 = vmatprep.subr.bf16.mxu0 %v3008
    %7162 = vmatpush1.bf16.msra.mxu0 %v3007
    %7163 = vmatprep.subr.bf16.mxu0 %v3016
    %7164 = vmatpush1.bf16.msra.mxu0 %v3015
    %7165 = vmatprep.mubr.bf16.mxu0 %v7132
    %7166 = vmatmul.mubr.bf16.gmra.mrb[0].mxu0 %v7131
    %v7167 = vpop.f32.mrb[0].mxu0
    %v7168 = vadd.f32 0.0, %v7167
    %v7169 = vpop.f32.mrb[0].mxu0
    %v7170 = vadd.f32 0.0, %v7169
    %v7171 = vpop.f32.mrb[0].mxu0
    %v7172 = vpop.f32.mrb[0].mxu0
    %7173 = vdwg.mxu0
    %7174 = vmatprep.subr.bf16.mxu0 %v2898
    %7175 = vmatpush1.bf16.msra.mxu0 %v2897
    %7176 = vmatprep.subr.bf16.mxu0 %v2906
    %7177 = vmatpush1.bf16.msra.mxu0 %v2905
    %7178 = vmatprep.subr.bf16.mxu0 %v2914
    %7179 = vmatpush1.bf16.msra.mxu0 %v2913
    %7180 = vmatprep.subr.bf16.mxu0 %v2922
    %7181 = vmatpush1.bf16.msra.mxu0 %v2921
    %7182 = vmatprep.subr.bf16.mxu0 %v2930
    %7183 = vmatpush1.bf16.msra.mxu0 %v2929
    %7184 = vmatprep.subr.bf16.mxu0 %v2938
    %7185 = vmatpush1.bf16.msra.mxu0 %v2937
    %7186 = vmatprep.subr.bf16.mxu0 %v2946
    %7187 = vmatpush1.bf16.msra.mxu0 %v2945
    %7188 = vmatprep.subr.bf16.mxu0 %v2954
    %7189 = vmatpush1.bf16.msra.mxu0 %v2953
    %7190 = vmatprep.subr.bf16.mxu0 %v2962
    %7191 = vmatpush1.bf16.msra.mxu0 %v2961
    %7192 = vmatprep.subr.bf16.mxu0 %v2970
    %7193 = vmatpush1.bf16.msra.mxu0 %v2969
    %7194 = vmatprep.subr.bf16.mxu0 %v2978
    %7195 = vmatpush1.bf16.msra.mxu0 %v2977
    %7196 = vmatprep.subr.bf16.mxu0 %v2986
    %7197 = vmatpush1.bf16.msra.mxu0 %v2985
    %7198 = vmatprep.subr.bf16.mxu0 %v2994
    %7199 = vmatpush1.bf16.msra.mxu0 %v2993
    %7200 = vmatprep.subr.bf16.mxu0 %v3002
    %7201 = vmatpush1.bf16.msra.mxu0 %v3001
    %7202 = vmatprep.subr.bf16.mxu0 %v3010
    %7203 = vmatpush1.bf16.msra.mxu0 %v3009
    %7204 = vmatprep.subr.bf16.mxu0 %v3018
    %7205 = vmatpush1.bf16.msra.mxu0 %v3017
    %7206 = vmatprep.mubr.bf16.mxu0 %v7132
    %7207 = vmatmul.mubr.bf16.gmra.mrb[0].mxu0 %v7131
    %v7208 = vpop.f32.mrb[0].mxu0
    %v7209 = vadd.f32 0.0, %v7208
    %v7210 = vpop.f32.mrb[0].mxu0
    %v7211 = vadd.f32 0.0, %v7210
    %v7212 = vpop.f32.mrb[0].mxu0
    %v7213 = vpop.f32.mrb[0].mxu0
    %7214 = vdwg.mxu0
    %7215 = vmatprep.subr.bf16.mxu0 %v2900
    %7216 = vmatpush1.bf16.msra.mxu0 %v2899
    %7217 = vmatprep.subr.bf16.mxu0 %v2908
    %7218 = vmatpush1.bf16.msra.mxu0 %v2907
    %7219 = vmatprep.subr.bf16.mxu0 %v2916
    %7220 = vmatpush1.bf16.msra.mxu0 %v2915
    %7221 = vmatprep.subr.bf16.mxu0 %v2924
    %7222 = vmatpush1.bf16.msra.mxu0 %v2923
    %7223 = vmatprep.subr.bf16.mxu0 %v2932
    %7224 = vmatpush1.bf16.msra.mxu0 %v2931
    %7225 = vmatprep.subr.bf16.mxu0 %v2940
    %7226 = vmatpush1.bf16.msra.mxu0 %v2939
    %7227 = vmatprep.subr.bf16.mxu0 %v2948
    %7228 = vmatpush1.bf16.msra.mxu0 %v2947
    %7229 = vmatprep.subr.bf16.mxu0 %v2956
    %7230 = vmatpush1.bf16.msra.mxu0 %v2955
    %7231 = vmatprep.subr.bf16.mxu0 %v2964
    %7232 = vmatpush1.bf16.msra.mxu0 %v2963
    %7233 = vmatprep.subr.bf16.mxu0 %v2972
    %7234 = vmatpush1.bf16.msra.mxu0 %v2971
    %7235 = vmatprep.subr.bf16.mxu0 %v2980
    %7236 = vmatpush1.bf16.msra.mxu0 %v2979
    %7237 = vmatprep.subr.bf16.mxu0 %v2988
    %7238 = vmatpush1.bf16.msra.mxu0 %v2987
    %7239 = vmatprep.subr.bf16.mxu0 %v2996
    %7240 = vmatpush1.bf16.msra.mxu0 %v2995
    %7241 = vmatprep.subr.bf16.mxu0 %v3004
    %7242 = vmatpush1.bf16.msra.mxu0 %v3003
    %7243 = vmatprep.subr.bf16.mxu0 %v3012
    %7244 = vmatpush1.bf16.msra.mxu0 %v3011
    %7245 = vmatprep.subr.bf16.mxu0 %v3020
    %7246 = vmatpush1.bf16.msra.mxu0 %v3019
    %7247 = vmatprep.mubr.bf16.mxu0 %v7132
    %7248 = vmatmul.mubr.bf16.gmra.mrb[0].mxu0 %v7131
    %v7249 = vpop.f32.mrb[0].mxu0
    %v7250 = vadd.f32 0.0, %v7249
    %v7251 = vpop.f32.mrb[0].mxu0
    %v7252 = vadd.f32 0.0, %v7251
    %v7253 = vpop.f32.mrb[0].mxu0
    %v7254 = vpop.f32.mrb[0].mxu0
    %7255 = vdwg.mxu0
    %7256 = vmatprep.subr.bf16.mxu0 %v2902
    %7257 = vmatpush1.bf16.msra.mxu0 %v2901
    %7258 = vmatprep.subr.bf16.mxu0 %v2910
    %7259 = vmatpush1.bf16.msra.mxu0 %v2909
    %7260 = vmatprep.subr.bf16.mxu0 %v2918
    %7261 = vmatpush1.bf16.msra.mxu0 %v2917
    %7262 = vmatprep.subr.bf16.mxu0 %v2926
    %7263 = vmatpush1.bf16.msra.mxu0 %v2925
    %7264 = vmatprep.subr.bf16.mxu0 %v2934
    %7265 = vmatpush1.bf16.msra.mxu0 %v2933
    %7266 = vmatprep.subr.bf16.mxu0 %v2942
    %7267 = vmatpush1.bf16.msra.mxu0 %v2941
    %7268 = vmatprep.subr.bf16.mxu0 %v2950
    %7269 = vmatpush1.bf16.msra.mxu0 %v2949
    %7270 = vmatprep.subr.bf16.mxu0 %v2958
    %7271 = vmatpush1.bf16.msra.mxu0 %v2957
    %7272 = vmatprep.subr.bf16.mxu0 %v2966
    %7273 = vmatpush1.bf16.msra.mxu0 %v2965
    %7274 = vmatprep.subr.bf16.mxu0 %v2974
    %7275 = vmatpush1.bf16.msra.mxu0 %v2973
    %7276 = vmatprep.subr.bf16.mxu0 %v2982
    %7277 = vmatpush1.bf16.msra.mxu0 %v2981
    %7278 = vmatprep.subr.bf16.mxu0 %v2990
    %7279 = vmatpush1.bf16.msra.mxu0 %v2989
    %7280 = vmatprep.subr.bf16.mxu0 %v2998
    %7281 = vmatpush1.bf16.msra.mxu0 %v2997
    %7282 = vmatprep.subr.bf16.mxu0 %v3006
    %7283 = vmatpush1.bf16.msra.mxu0 %v3005
    %7284 = vmatprep.subr.bf16.mxu0 %v3014
    %7285 = vmatpush1.bf16.msra.mxu0 %v3013
    %7286 = vmatprep.subr.bf16.mxu0 %v3022
    %7287 = vmatpush1.bf16.msra.mxu0 %v3021
    %7288 = vmatprep.mubr.bf16.mxu0 %v7132
    %7289 = vmatmul.mubr.bf16.gmra.mrb[0].mxu0 %v7131
    %v7290 = vpop.f32.mrb[0].mxu0
    %v7291 = vadd.f32 0.0, %v7290
    %v7292 = vpop.f32.mrb[0].mxu0
    %v7293 = vadd.f32 0.0, %v7292
    %v7294 = vpop.f32.mrb[0].mxu0
    %v7295 = vpop.f32.mrb[0].mxu0
    %7296 = vdwg.mxu0
    %v7297 = vadd.f32 %v7002, %v7168
    %v7298 = vadd.f32 %v7004, %v7170
    %v7299 = vadd.f32 %v7043, %v7209
    %v7300 = vadd.f32 %v7045, %v7211
    %v7301 = vadd.f32 %v7084, %v7250
    %v7302 = vadd.f32 %v7086, %v7252
    %v7303 = vadd.f32 %v7125, %v7291
    %v7304 = vadd.f32 %v7127, %v7293
    %v7305 = vmul.f32 %v7297, 0.5
    %v7306 = vmul.f32 %v7298, 0.5
    %v7307 = vtanh.pop %v7305
    %v7308 = vtanh.pop %v7306
    %v7309 = vmul.f32 %v7307, 0.5
    %v7310 = vmul.f32 %v7308, 0.5
    %v7311 = vadd.f32 %v7309, 0.5
    %v7312 = vadd.f32 %v7310, 0.5
    %v7313 = vmul.f32 %v7299, 0.5
    %v7314 = vmul.f32 %v7300, 0.5
    %v7315 = vtanh.pop %v7313
    %v7316 = vtanh.pop %v7314
    %v7317 = vmul.f32 %v7315, 0.5
    %v7318 = vmul.f32 %v7316, 0.5
    %v7319 = vadd.f32 %v7317, 0.5
    %v7320 = vadd.f32 %v7318, 0.5
    %v7321 = vtanh.pop %v7301
    %v7322 = vtanh.pop %v7302
    %v7323 = vmul.f32 %v7303, 0.5
    %v7324 = vmul.f32 %v7304, 0.5
    %v7325 = vtanh.pop %v7323
    %v7326 = vtanh.pop %v7324
    %v7327 = vmul.f32 %v7325, 0.5
    %v7328 = vmul.f32 %v7326, 0.5
    %v7329 = vadd.f32 %v7327, 0.5
    %v7330 = vadd.f32 %v7328, 0.5
    %v7331 = vmul.f32 %v7319, %v6959
    %v7332 = vmul.f32 %v7320, %v6960
    %v7333 = vmul.f32 %v7311, %v7321
    %v7334 = vmul.f32 %v7312, %v7322
    %v7335 = vadd.f32 %v7331, %v7333
    %v7336 = vadd.f32 %v7332, %v7334
    %v7337 = vtanh.pop %v7335
    %v7338 = vtanh.pop %v7336
    %v7339 = vmul.f32 %v7329, %v7337
    %v7340 = vmul.f32 %v7330, %v7338
    %v7341 = vpack.c.bf16 %v7339, %v7339
    %v7342 = vpack.c.bf16 %v7340, %v7340
    %v7343 = vld [vmem:[#allocation8] sm:$0xf]
    %v7344 = vld [vmem:[#allocation8 + $0x4] sm:$0xf]
    %v7345 = vld [vmem:[#allocation8 + $0x8] sm:$0xf]
    %v7346 = vld [vmem:[#allocation8 + $0xc] sm:$0xf]
    %v7347 = vld [vmem:[#allocation8 + $0x10] sm:$0xf]
    %v7348 = vld [vmem:[#allocation8 + $0x14] sm:$0xf]
    %v7349 = vld [vmem:[#allocation8 + $0x18] sm:$0xf]
    %v7350 = vld [vmem:[#allocation8 + $0x1c] sm:$0xf]
    %v7351 = vld [vmem:[#allocation8 + $0x20] sm:$0xf]
    %v7352 = vld [vmem:[#allocation8 + $0x24] sm:$0xf]
    %v7353 = vld [vmem:[#allocation8 + $0x28] sm:$0xf]
    %v7354 = vld [vmem:[#allocation8 + $0x2c] sm:$0xf]
    %v7355 = vld [vmem:[#allocation8 + $0x30] sm:$0xf]
    %v7356 = vld [vmem:[#allocation8 + $0x34] sm:$0xf]
    %v7357 = vld [vmem:[#allocation8 + $0x38] sm:$0xf]
    %v7358 = vld [vmem:[#allocation8 + $0x3c] sm:$0xf]
    %v7359 = vld [vmem:[#allocation8 + $0x40] sm:$0xf]
    %v7360 = vld [vmem:[#allocation8 + $0x44] sm:$0xf]
    %v7361 = vld [vmem:[#allocation8 + $0x48] sm:$0xf]
    %v7362 = vld [vmem:[#allocation8 + $0x4c] sm:$0xf]
    %v7363 = vld [vmem:[#allocation8 + $0x50] sm:$0xf]
    %v7364 = vld [vmem:[#allocation8 + $0x54] sm:$0xf]
    %v7365 = vld [vmem:[#allocation8 + $0x58] sm:$0xf]
    %v7366 = vld [vmem:[#allocation8 + $0x5c] sm:$0xf]
    %v7367 = vld [vmem:[#allocation8 + $0x60] sm:$0xf]
    %v7368 = vld [vmem:[#allocation8 + $0x64] sm:$0xf]
    %v7369 = vld [vmem:[#allocation8 + $0x68] sm:$0xf]
    %v7370 = vld [vmem:[#allocation8 + $0x6c] sm:$0xf]
    %v7371 = vld [vmem:[#allocation8 + $0x70] sm:$0xf]
    %v7372 = vld [vmem:[#allocation8 + $0x74] sm:$0xf]
    %v7373 = vld [vmem:[#allocation8 + $0x78] sm:$0xf]
    %v7374 = vld [vmem:[#allocation8 + $0x7c] sm:$0xf]
    %v7375 = vld [vmem:[%s8] sm:$0x1]
    %v7377 = vlaneseq
    %v7378 = vshrl.u32 %v7377, 7
    %v7379 = vsub.s32 0, %v7378
    %v7380 = vrot.slane %v7375, %v7379
    %v7414 = vunpack.c.l.b16 %v7343
    %v7415 = vunpack.c.l.b16 %v7344
    %v7416 = vunpack.c.l.b16 %v7345
    %v7417 = vunpack.c.l.b16 %v7346
    %v7418 = vunpack.c.l.b16 %v7347
    %v7419 = vunpack.c.l.b16 %v7348
    %v7420 = vunpack.c.l.b16 %v7349
    %v7421 = vunpack.c.l.b16 %v7350
    %v7422 = vunpack.c.l.b16 %v7351
    %v7423 = vunpack.c.l.b16 %v7352
    %v7424 = vunpack.c.l.b16 %v7353
    %v7425 = vunpack.c.l.b16 %v7354
    %v7426 = vunpack.c.l.b16 %v7355
    %v7427 = vunpack.c.l.b16 %v7356
    %v7428 = vunpack.c.l.b16 %v7357
    %v7429 = vunpack.c.l.b16 %v7358
    %v7430 = vunpack.c.l.b16 %v7359
    %v7431 = vunpack.c.l.b16 %v7360
    %v7432 = vunpack.c.l.b16 %v7361
    %v7433 = vunpack.c.l.b16 %v7362
    %v7434 = vunpack.c.l.b16 %v7363
    %v7435 = vunpack.c.l.b16 %v7364
    %v7436 = vunpack.c.l.b16 %v7365
    %v7437 = vunpack.c.l.b16 %v7366
    %v7438 = vunpack.c.l.b16 %v7367
    %v7439 = vunpack.c.l.b16 %v7368
    %v7440 = vunpack.c.l.b16 %v7369
    %v7441 = vunpack.c.l.b16 %v7370
    %v7442 = vunpack.c.l.b16 %v7371
    %v7443 = vunpack.c.l.b16 %v7372
    %v7444 = vunpack.c.l.b16 %v7373
    %v7445 = vunpack.c.l.b16 %v7374
    %v7446 = vpack.c.b16 %v7415, %v7414
    %v7447 = vpack.c.b16 %v7417, %v7416
    %v7448 = vpack.c.b16 %v7419, %v7418
    %v7449 = vpack.c.b16 %v7421, %v7420
    %v7450 = vpack.c.b16 %v7423, %v7422
    %v7451 = vpack.c.b16 %v7425, %v7424
    %v7452 = vpack.c.b16 %v7427, %v7426
    %v7453 = vpack.c.b16 %v7429, %v7428
    %v7454 = vpack.c.b16 %v7431, %v7430
    %v7455 = vpack.c.b16 %v7433, %v7432
    %v7456 = vpack.c.b16 %v7435, %v7434
    %v7457 = vpack.c.b16 %v7437, %v7436
    %v7458 = vpack.c.b16 %v7439, %v7438
    %v7459 = vpack.c.b16 %v7441, %v7440
    %v7460 = vpack.c.b16 %v7443, %v7442
    %v7461 = vpack.c.b16 %v7445, %v7444
    %7478 = vmatprep.subr.bf16.mxu0 0
    %7479 = vmatpush1.bf16.msra.mxu0 %v7446
    %7480 = vmatprep.subr.bf16.mxu0 0
    %7481 = vmatpush1.bf16.msra.mxu0 %v7447
    %7482 = vmatprep.subr.bf16.mxu0 0
    %7483 = vmatpush1.bf16.msra.mxu0 %v7448
    %7484 = vmatprep.subr.bf16.mxu0 0
    %7485 = vmatpush1.bf16.msra.mxu0 %v7449
    %7486 = vmatprep.subr.bf16.mxu0 0
    %7487 = vmatpush1.bf16.msra.mxu0 %v7450
    %7488 = vmatprep.subr.bf16.mxu0 0
    %7489 = vmatpush1.bf16.msra.mxu0 %v7451
    %7490 = vmatprep.subr.bf16.mxu0 0
    %7491 = vmatpush1.bf16.msra.mxu0 %v7452
    %7492 = vmatprep.subr.bf16.mxu0 0
    %7493 = vmatpush1.bf16.msra.mxu0 %v7453
    %7494 = vmatprep.subr.bf16.mxu0 0
    %7495 = vmatpush1.bf16.msra.mxu0 %v7454
    %7496 = vmatprep.subr.bf16.mxu0 0
    %7497 = vmatpush1.bf16.msra.mxu0 %v7455
    %7498 = vmatprep.subr.bf16.mxu0 0
    %7499 = vmatpush1.bf16.msra.mxu0 %v7456
    %7500 = vmatprep.subr.bf16.mxu0 0
    %7501 = vmatpush1.bf16.msra.mxu0 %v7457
    %7502 = vmatprep.subr.bf16.mxu0 0
    %7503 = vmatpush1.bf16.msra.mxu0 %v7458
    %7504 = vmatprep.subr.bf16.mxu0 0
    %7505 = vmatpush1.bf16.msra.mxu0 %v7459
    %7506 = vmatprep.subr.bf16.mxu0 0
    %7507 = vmatpush1.bf16.msra.mxu0 %v7460
    %7508 = vmatprep.subr.bf16.mxu0 0
    %7509 = vmatpush1.bf16.msra.mxu0 %v7461
    %7510 = vmatprep.mubr.bf16.mxu0 %v7342
    %7511 = vmatmul.mubr.bf16.gmra.mrb[0].mxu0 %v7341
    %v7512 = vpop.f32.mrb[0].mxu0
    %v7513 = vadd.f32 %v7380, %v7512
    %v7514 = vpop.f32.mrb[0].mxu0
    %v7515 = vpop.f32.mrb[0].mxu0
    %v7516 = vpop.f32.mrb[0].mxu0
    %7517 = vdwg.mxu0
    %7518 = vst [vmem:[%s9] sm:$0xff] %v7513
    // Predicated region
    $region54: #{lstm_model_forward.1} parent=1 // pred_check
      _
    $region55: #{lstm_model_forward.1} parent=1 // pred_check_branch
      %7520 = sbr.rel (0) target = $region57
    $region56: #{lstm_model_forward.1} parent=1 // pred_region
      _
    $region57: #{lstm_model_forward.1} parent=1 // pred_fallthru
      _
    // Predicated region
    $region58: #{lstm_model_forward.1} parent=1 // pred_check
      _
    $region59: #{lstm_model_forward.1} parent=1 // pred_check_branch
      %7522 = sbr.rel (0) target = $region61
    $region60: #{lstm_model_forward.1} parent=1 // pred_region
      _
    $region61: #{lstm_model_forward.1} parent=1 // pred_fallthru
      _
    %7523 = vsyncpa [#allocation4], 1
    %7524 = vsyncpa [#allocation6], 1
    %7525 = vsyncpa [#allocation9], 1

</llo_original>
